<compile_context>
chip_gen: v6e
topology: v6e:2x2x1
jax: 0.10.0
libtpu: 0.0.40
codegen_flags: <defaults>
</compile_context>

<pallas_src>
import numpy as np
import jax
import jax.numpy as jnp
from jax.experimental import pallas as pl
from jax.experimental.pallas import tpu as pltpu

BN_EPS = 1e-5

# Static geometry implied by the module: fc expects 900 = 36 * 5 * 5 features,
# i.e. a 36x36 single-channel image through three 3x3 / stride-2 / pad-1 convs.
C = 36                  # conv output channels (all three layers)
NCLS = 8                # classifier outputs
H_IN = 36               # input spatial
H1, H2, H3 = 18, 9, 5   # conv1/2/3 output spatial
KTAPS = 9               # 3x3 taps
PLANE = 100             # one zero-padded 10x10 phase plane, flattened
ROWS1 = 4 * PLANE       # conv1 output rows per image in plane order (400)
SLAB = 89               # contiguous rows per conv2 tap window (= 10*8 + 8 + 1)
M3 = H3 * H3            # 25 conv3 output positions
FCW = M3 * NCLS         # 200 widened fc columns, col = s*8 + k

# (parity plane, +1 row offset) for kernel index kh/kw in {0,1,2}
_PHASE = ((1, 0), (0, 1), (1, 1))


def _conv2_tap_offsets():
    """Start row (within one image's 400-row act1 block) of the contiguous
    89-row window that feeds conv2 tap t = kh*3 + kw."""
    offs = []
    for kh in range(3):
        pr, oh = _PHASE[kh]
        for kw in range(3):
            pc, ow = _PHASE[kw]
            offs.append((2 * pr + pc) * PLANE + oh * 10 + ow)
    return tuple(offs)


_TAP2_OFF = _conv2_tap_offsets()


def _build_s3():
    """Stacked 0/1 gather (225, 89): row t*25 + s selects the act2 row (in its
    width-10 flat layout, row = 10*i2 + j2) feeding conv3 tap t at output s;
    all-zero rows encode the zero padding."""
    s3 = np.zeros((KTAPS, M3, SLAB), np.float32)
    for kh in range(3):
        for kw in range(3):
            t = kh * 3 + kw
            for i3 in range(H3):
                for j3 in range(H3):
                    i2 = 2 * i3 + kh - 1
                    j2 = 2 * j3 + kw - 1
                    if 0 <= i2 < H2 and 0 <= j2 < H2:
                        s3[t, i3 * H3 + j3, 10 * i2 + j2] = 1.0
    return s3.reshape(KTAPS * M3, SLAB)


_S3_STACK = _build_s3()


def _fc_helpers(b_blk):
    """Constant 0/1 matrices for the batched single-pass FC."""
    rr = np.arange(b_blk * M3)
    cc = np.arange(FCW)
    band = ((cc[None, :] // NCLS) == (rr[:, None] % M3)).astype(np.float32)
    pool = ((rr[None, :] // M3) == np.arange(b_blk)[:, None]).astype(np.float32)
    rsel = ((cc[:, None] % NCLS) == np.arange(NCLS)[None, :]).astype(np.float32)
    return band, pool, rsel


# ------------------------------ fused kernel ------------------------------- #

def _make_kernel(b_blk):
    def kernel(pat_ref, w1_ref, w2_ref, b2_ref, w3_ref, b3_ref,
               s3_ref, u_ref, band_ref, pool_ref, rsel_ref, bfc_ref,
               out_ref, act1_ref, act3_ref):
        f32 = jnp.float32

        # conv1 + BN1 for the whole batch block: ONE matmul.  The trailing 0/1
        # patch column carries the folded bias, so plane-padding rows are 0.
        act1_ref[...] = jnp.dot(pat_ref[...], w1_ref[...],
                                preferred_element_type=f32)

        # conv2 + BN2, conv3 + BN3: per image (static unroll, weights resident).
        for n in range(b_blk):
            base = n * ROWS1
            # conv2: each tap is a contiguous 89-row window of one phase plane.
            # Rows 10*i + 9 of acc2 are junk and are never read downstream.
            acc2 = jnp.zeros((SLAB, C), f32) + b2_ref[...]
            for t in range(KTAPS):
                slab = act1_ref[pl.ds(base + _TAP2_OFF[t], SLAB), :]
                acc2 = acc2 + jnp.dot(slab, w2_ref[t],
                                      preferred_element_type=f32)
            # conv3: one stacked 0/1 gather matmul, then 9 weight matmuls.
            g = jnp.dot(s3_ref[...], acc2, preferred_element_type=f32)  # (225,36)
            acc3 = jnp.zeros((M3, C), f32) + b3_ref[...]
            for t in range(KTAPS):
                acc3 = acc3 + jnp.dot(g[t * M3:(t + 1) * M3, :], w3_ref[t],
                                      preferred_element_type=f32)
            act3_ref[pl.ds(n * M3, M3), :] = acc3

        # fc(900 -> 8) + softmax, batched over the block (single pass, no
        # in-kernel reshape / 25-step serial chain):
        #   logits[n,k] = sum_{s,c} act3[n,s,c] * Wfc[k, c*25+s]
        tmp = jnp.dot(act3_ref[...], u_ref[...], preferred_element_type=f32)
        masked = tmp * band_ref[...]                      # keep s' == s band
        pre = jnp.dot(pool_ref[...], masked, preferred_element_type=f32)
        logits = jnp.dot(pre, rsel_ref[...],
                         preferred_element_type=f32) + bfc_ref[...]

        m = jnp.max(logits, axis=-1, keepdims=True)
        e = jnp.exp(logits - m)
        out_ref[...] = e / jnp.sum(e, axis=-1, keepdims=True)

    return kernel


# ------------------------------ JAX wrappers ------------------------------- #

def _conv1_patches_planeorder(x_nchw):
    """(N,1,36,36) -> (N, 400, 10): conv1 3x3/stride-2/pad-1 im2col patches plus
    a 0/1 bias column, with rows ordered by zero-padded phase planes so every
    conv2 tap is a contiguous 89-row window of the stored conv1 output."""
    n = x_nchw.shape[0]
    x = x_nchw[:, 0, :, :].astype(jnp.float32)
    xp = jnp.pad(x, ((0, 0), (1, 1), (1, 1)))                     # (N, 38, 38)
    cols = []
    for kh in range(3):
        for kw in range(3):
            cols.append(xp[:, kh:kh + 2 * (H1 - 1) + 1:2,
                              kw:kw + 2 * (H1 - 1) + 1:2])         # (N, 18, 18)
    pat = jnp.stack(cols, axis=-1)                                 # (N,18,18,9)
    pat = jnp.concatenate(
        [pat, jnp.ones((n, H1, H1, 1), jnp.float32)], axis=-1)    # (N,18,18,10)
    planes = []
    for pr in range(2):
        for pc in range(2):
            pp = pat[:, pr::2, pc::2, :]                           # (N,9,9,10)
            pp = jnp.pad(pp, ((0, 0), (1, 0), (1, 0), (0, 0)))     # (N,10,10,10)
            planes.append(pp)
    planes = jnp.stack(planes, axis=1)                             # (N,4,10,10,10)
    return planes.reshape(n, ROWS1, 10)


def _fold_conv_bn(p):
    """Fold eval-mode BN + conv bias into per-tap weights and one bias row."""
    cout, cin = p["w"].shape[0], p["w"].shape[1]
    scale = p["gamma"] / jnp.sqrt(p["var"] + BN_EPS)                    # (Cout,)
    w_taps = jnp.transpose(p["w"], (2, 3, 1, 0)).reshape(KTAPS, cin, cout)
    w_taps = w_taps * scale[None, None, :]
    bias = ((p["b"] - p["mean"]) * scale + p["beta"]).reshape(1, cout)
    return w_taps.astype(jnp.float32), bias.astype(jnp.float32)


def shape_classifier_forward(x_nchw, params, b_blk=None):
    n = x_nchw.shape[0]
    if b_blk is None:
        # Block of images per grid step.  Either the block equals the whole
        # (small) batch, or it is 8 (keeps the output block sublane-aligned and
        # keeps grid length >= 2 on large batches for v7x megacore).
        b_blk = n if n <= 8 else 8
    n_pad = -(-n // b_blk) * b_blk
    grid = n_pad // b_blk

    patches = _conv1_patches_planeorder(x_nchw)                     # (n, 400, 10)
    if n_pad != n:
        patches = jnp.pad(patches, ((0, n_pad - n), (0, 0), (0, 0)))
    patches = patches.reshape(n_pad * ROWS1, 10)

    w1_taps, b1 = _fold_conv_bn(params["conv1"])                    # (9,1,36),(1,36)
    w1_aug = jnp.concatenate([w1_taps.reshape(KTAPS, C), b1], axis=0)   # (10, 36)
    w2, b2 = _fold_conv_bn(params["conv2"])                         # (9,36,36)
    w3, b3 = _fold_conv_bn(params["conv3"])

    # PyTorch fc weight (8, 900), feature = c*25 + s  ->  U (36, 200), col=s*8+k
    u = jnp.transpose(params["fc"]["w"].reshape(NCLS, C, M3), (1, 2, 0))
    u = u.reshape(C, FCW).astype(jnp.float32)
    bfc = params["fc"]["b"].reshape(1, NCLS).astype(jnp.float32)

    s3 = jnp.asarray(_S3_STACK)
    band_np, pool_np, rsel_np = _fc_helpers(b_blk)
    band = jnp.asarray(band_np)
    pool = jnp.asarray(pool_np)
    rsel = jnp.asarray(rsel_np)

    flops_per_img = 2 * (ROWS1 * 10 * C + KTAPS * SLAB * C * C +
                         KTAPS * M3 * SLAB * C + KTAPS * M3 * C * C +
                         M3 * C * FCW + M3 * FCW + FCW * NCLS)
    const_bytes = 4 * (w1_aug.size + w2.size + b2.size + w3.size + b3.size +
                       s3.size + u.size + band.size + pool.size + rsel.size +
                       bfc.size)
    cost = pl.CostEstimate(
        flops=int(n_pad * flops_per_img),
        transcendentals=int(n_pad * NCLS),
        bytes_accessed=int(4 * patches.size + const_bytes + 4 * n_pad * NCLS))

    out = pl.pallas_call(
        _make_kernel(b_blk),
        out_shape=jax.ShapeDtypeStruct((n_pad, NCLS), jnp.float32),
        grid=(grid,),
        in_specs=[
            pl.BlockSpec((b_blk * ROWS1, 10), lambda i: (i, 0)),   # conv1 patches
            pl.BlockSpec((10, C), lambda i: (0, 0)),               # w1 (+ bias row)
            pl.BlockSpec((KTAPS, C, C), lambda i: (0, 0, 0)),      # w2 taps (BN folded)
            pl.BlockSpec((1, C), lambda i: (0, 0)),                # b2
            pl.BlockSpec((KTAPS, C, C), lambda i: (0, 0, 0)),      # w3 taps
            pl.BlockSpec((1, C), lambda i: (0, 0)),                # b3
            pl.BlockSpec((KTAPS * M3, SLAB), lambda i: (0, 0)),    # conv3 gather
            pl.BlockSpec((C, FCW), lambda i: (0, 0)),              # fc U (36, 200)
            pl.BlockSpec((b_blk * M3, FCW), lambda i: (0, 0)),     # fc band mask
            pl.BlockSpec((b_blk, b_blk * M3), lambda i: (0, 0)),   # per-image pool
            pl.BlockSpec((FCW, NCLS), lambda i: (0, 0)),           # k-select
            pl.BlockSpec((1, NCLS), lambda i: (0, 0)),             # fc bias
        ],
        out_specs=pl.BlockSpec((b_blk, NCLS), lambda i: (i, 0)),
        scratch_shapes=[
            pltpu.VMEM((b_blk * ROWS1, C), jnp.float32),   # act1 (phase-plane order)
            pltpu.VMEM((b_blk * M3, C), jnp.float32),      # act3 assembly buffer
        ],
        compiler_params=pltpu.CompilerParams(
            dimension_semantics=("parallel",)),
        cost_estimate=cost,
    )(patches, w1_aug, w2, b2, w3, b3, s3, u, band, pool, rsel, bfc)

    return out[:n]


# ----------------------- pure-JAX reference (for check) --------------------- #

def _reference_forward(x_nchw, params):
    def conv_bn(x, p):
        y = jax.lax.conv_general_dilated(
            x, p["w"], window_strides=(2, 2), padding=((1, 1), (1, 1)),
            dimension_numbers=("NCHW", "OIHW", "NCHW"),
            precision=jax.lax.Precision.HIGHEST)
        y = y + p["b"][None, :, None, None]
        scale = p["gamma"] / jnp.sqrt(p["var"] + BN_EPS)
        shift = p["beta"] - p["mean"] * scale
        return y * scale[None, :, None, None] + shift[None, :, None, None]

    n = x_nchw.shape[0]
    y = conv_bn(x_nchw, params["conv1"])
    y = conv_bn(y, params["conv2"])
    y = conv_bn(y, params["conv3"])
    feat = y.reshape(n, -1)                        # PyTorch NCHW flatten
    logits = jnp.dot(feat, params["fc"]["w"].T,
                     precision=jax.lax.Precision.HIGHEST) + params["fc"]["b"]
    return jax.nn.softmax(logits, axis=-1)


# --------------------------- deterministic params --------------------------- #

def init_params(key):
    ks = jax.random.split(key, 5)

    def conv_p(k, cin, cout):
        k1, k2, k3, k4 = jax.random.split(k, 4)
        return dict(
            w=0.1 * jax.random.normal(k1, (cout, cin, 3, 3), jnp.float32),
            b=0.1 * jax.random.normal(k2, (cout,), jnp.float32),
            gamma=1.0 + 0.1 * jax.random.normal(k3, (cout,), jnp.float32),
            beta=0.05 * jax.random.normal(k4, (cout,), jnp.float32),
            mean=jnp.zeros((cout,), jnp.float32),
            var=jnp.ones((cout,), jnp.float32),
        )

    k1, k2 = jax.random.split(ks[3], 2)
    return dict(
        conv1=conv_p(ks[0], 1, C),
        conv2=conv_p(ks[1], C, C),
        conv3=conv_p(ks[2], C, C),
        fc=dict(
            w=0.05 * jax.random.normal(k1, (NCLS, 900), jnp.float32),
            b=0.05 * jax.random.normal(k2, (NCLS,), jnp.float32),
        ),
    )


# ---------------------------------- main ------------------------------------ #

if __name__ == "__main__":
    key = jax.random.PRNGKey(0)
    k_x, k_p = jax.random.split(key)

    # fc expects 900 = 36 * 5 * 5 features -> 36x36 single-channel input.
    x = jax.random.normal(k_x, (2, 1, H_IN, H_IN), jnp.float32)
    params = init_params(k_p)

    fwd = jax.jit(shape_classifier_forward)
    out = fwd(x, params)
    out = jax.block_until_ready(out)

    assert out.shape == (2, NCLS), out.shape
    row_sums = jnp.sum(out, axis=1)
    assert bool(jnp.all(jnp.abs(row_sums - 1.0) < 1e-4)), row_sums

    ref = _reference_forward(x, params)
    max_err = float(jnp.max(jnp.abs(out - ref)))
    assert max_err < 2e-3, (max_err, out, ref)

    print("KERNEL_OK")
</pallas_src>

<mosaic_0001>
module attributes {stable_mosaic.version = 11 : i64} {
  func.func @kernel(%arg0: i32, %arg1: memref<800x10xf32, #tpu.memory_space<vmem>>, %arg2: memref<10x36xf32, #tpu.memory_space<vmem>>, %arg3: memref<9x36x36xf32, #tpu.memory_space<vmem>>, %arg4: memref<1x36xf32, #tpu.memory_space<vmem>>, %arg5: memref<9x36x36xf32, #tpu.memory_space<vmem>>, %arg6: memref<1x36xf32, #tpu.memory_space<vmem>>, %arg7: memref<225x89xf32, #tpu.memory_space<vmem>>, %arg8: memref<36x200xf32, #tpu.memory_space<vmem>>, %arg9: memref<50x200xf32, #tpu.memory_space<vmem>>, %arg10: memref<2x50xf32, #tpu.memory_space<vmem>>, %arg11: memref<200x8xf32, #tpu.memory_space<vmem>>, %arg12: memref<1x8xf32, #tpu.memory_space<vmem>>, %arg13: memref<2x8xf32, #tpu.memory_space<vmem>>, %arg14: memref<800x36xf32, #tpu.memory_space<vmem>>, %arg15: memref<50x36xf32, #tpu.memory_space<vmem>>) attributes {dimension_semantics = [#tpu.dimension_semantics<parallel>], iteration_bounds = array<i64: 1>, scalar_prefetch = 0 : i64, scratch_operands = 2 : i64, tpu.core_type = #tpu.core_type<tc>, window_params = [{transform_indices = @transform_0, window_bounds = array<i64: 800, 10>}, {pipeline_mode = #tpu.pipeline_mode<synchronous>, transform_indices = @transform_1, window_bounds = array<i64: 10, 36>}, {pipeline_mode = #tpu.pipeline_mode<synchronous>, transform_indices = @transform_2, window_bounds = array<i64: 9, 36, 36>}, {pipeline_mode = #tpu.pipeline_mode<synchronous>, transform_indices = @transform_3, window_bounds = array<i64: 1, 36>}, {pipeline_mode = #tpu.pipeline_mode<synchronous>, transform_indices = @transform_4, window_bounds = array<i64: 9, 36, 36>}, {pipeline_mode = #tpu.pipeline_mode<synchronous>, transform_indices = @transform_5, window_bounds = array<i64: 1, 36>}, {pipeline_mode = #tpu.pipeline_mode<synchronous>, transform_indices = @transform_6, window_bounds = array<i64: 225, 89>}, {pipeline_mode = #tpu.pipeline_mode<synchronous>, transform_indices = @transform_7, window_bounds = array<i64: 36, 200>}, {pipeline_mode = #tpu.pipeline_mode<synchronous>, transform_indices = @transform_8, window_bounds = array<i64: 50, 200>}, {pipeline_mode = #tpu.pipeline_mode<synchronous>, transform_indices = @transform_9, window_bounds = array<i64: 2, 50>}, {pipeline_mode = #tpu.pipeline_mode<synchronous>, transform_indices = @transform_10, window_bounds = array<i64: 200, 8>}, {pipeline_mode = #tpu.pipeline_mode<synchronous>, transform_indices = @transform_11, window_bounds = array<i64: 1, 8>}, {transform_indices = @transform_12, window_bounds = array<i64: 2, 8>}]} {
    %c0 = arith.constant 0 : index
    %c0_0 = arith.constant 0 : index
    %0 = vector.load %arg1[%c0, %c0_0] : memref<800x10xf32, #tpu.memory_space<vmem>>, vector<800x10xf32>
    %c0_1 = arith.constant 0 : index
    %c0_2 = arith.constant 0 : index
    %1 = vector.load %arg2[%c0_1, %c0_2] : memref<10x36xf32, #tpu.memory_space<vmem>>, vector<10x36xf32>
    %cst = arith.constant dense<0.000000e+00> : vector<800x36xf32>
    %2 = tpu.matmul %0, %1, %cst {dimension_numbers = #tpu.dot_dimension_numbers<[1], [0], [0], [1], [0, 0, 1, 1], [], []>} : vector<800x10xf32>, vector<10x36xf32>, vector<800x36xf32> -> vector<800x36xf32>
    %c0_3 = arith.constant 0 : index
    %c0_4 = arith.constant 0 : index
    %3 = vector.load %arg14[%c0_3, %c0_4] : memref<800x36xf32, #tpu.memory_space<vmem>>, vector<800x36xf32>
    tpu.vector_store %arg14[%c0_3, %c0_4], %2 {strides = array<i32>} : memref<800x36xf32, #tpu.memory_space<vmem>>, vector<800x36xf32>,
    %cst_5 = arith.constant 0.000000e+00 : f32
    %4 = vector.broadcast %cst_5 : f32 to vector<89x36xf32>
    %c0_6 = arith.constant 0 : index
    %c0_7 = arith.constant 0 : index
    %5 = vector.load %arg4[%c0_6, %c0_7] : memref<1x36xf32, #tpu.memory_space<vmem>>, vector<1x36xf32>
    %6 = vector.broadcast %5 : vector<1x36xf32> to vector<89x36xf32>
    %7 = arith.addf %4, %6 : vector<89x36xf32>
    %c300 = arith.constant 300 : index
    %c0_8 = arith.constant 0 : index
    %8 = vector.load %arg14[%c300, %c0_8] : memref<800x36xf32, #tpu.memory_space<vmem>>, vector<89x36xf32>
    %c0_9 = arith.constant 0 : index
    %c0_10 = arith.constant 0 : index
    %c0_11 = arith.constant 0 : index
    %9 = vector.load %arg3[%c0_9, %c0_10, %c0_11] : memref<9x36x36xf32, #tpu.memory_space<vmem>>, vector<1x36x36xf32>
    %10 = vector.shape_cast %9 : vector<1x36x36xf32> to vector<36x36xf32>
    %cst_12 = arith.constant dense<0.000000e+00> : vector<89x36xf32>
    %11 = tpu.matmul %8, %10, %cst_12 {dimension_numbers = #tpu.dot_dimension_numbers<[1], [0], [0], [1], [0, 0, 1, 1], [], []>} : vector<89x36xf32>, vector<36x36xf32>, vector<89x36xf32> -> vector<89x36xf32>
    %12 = arith.addf %7, %11 : vector<89x36xf32>
    %c201 = arith.constant 201 : index
    %c0_13 = arith.constant 0 : index
    %13 = vector.load %arg14[%c201, %c0_13] : memref<800x36xf32, #tpu.memory_space<vmem>>, vector<89x36xf32>
    %c1 = arith.constant 1 : index
    %c0_14 = arith.constant 0 : index
    %c0_15 = arith.constant 0 : index
    %14 = vector.load %arg3[%c1, %c0_14, %c0_15] : memref<9x36x36xf32, #tpu.memory_space<vmem>>, vector<1x36x36xf32>
    %15 = vector.shape_cast %14 : vector<1x36x36xf32> to vector<36x36xf32>
    %cst_16 = arith.constant dense<0.000000e+00> : vector<89x36xf32>
    %16 = tpu.matmul %13, %15, %cst_16 {dimension_numbers = #tpu.dot_dimension_numbers<[1], [0], [0], [1], [0, 0, 1, 1], [], []>} : vector<89x36xf32>, vector<36x36xf32>, vector<89x36xf32> -> vector<89x36xf32>
    %17 = arith.addf %12, %16 : vector<89x36xf32>
    %c301 = arith.constant 301 : index
    %c0_17 = arith.constant 0 : index
    %18 = vector.load %arg14[%c301, %c0_17] : memref<800x36xf32, #tpu.memory_space<vmem>>, vector<89x36xf32>
    %c2 = arith.constant 2 : index
    %c0_18 = arith.constant 0 : index
    %c0_19 = arith.constant 0 : index
    %19 = vector.load %arg3[%c2, %c0_18, %c0_19] : memref<9x36x36xf32, #tpu.memory_space<vmem>>, vector<1x36x36xf32>
    %20 = vector.shape_cast %19 : vector<1x36x36xf32> to vector<36x36xf32>
    %cst_20 = arith.constant dense<0.000000e+00> : vector<89x36xf32>
    %21 = tpu.matmul %18, %20, %cst_20 {dimension_numbers = #tpu.dot_dimension_numbers<[1], [0], [0], [1], [0, 0, 1, 1], [], []>} : vector<89x36xf32>, vector<36x36xf32>, vector<89x36xf32> -> vector<89x36xf32>
    %22 = arith.addf %17, %21 : vector<89x36xf32>
    %c110 = arith.constant 110 : index
    %c0_21 = arith.constant 0 : index
    %23 = vector.load %arg14[%c110, %c0_21] : memref<800x36xf32, #tpu.memory_space<vmem>>, vector<89x36xf32>
    %c3 = arith.constant 3 : index
    %c0_22 = arith.constant 0 : index
    %c0_23 = arith.constant 0 : index
    %24 = vector.load %arg3[%c3, %c0_22, %c0_23] : memref<9x36x36xf32, #tpu.memory_space<vmem>>, vector<1x36x36xf32>
    %25 = vector.shape_cast %24 : vector<1x36x36xf32> to vector<36x36xf32>
    %cst_24 = arith.constant dense<0.000000e+00> : vector<89x36xf32>
    %26 = tpu.matmul %23, %25, %cst_24 {dimension_numbers = #tpu.dot_dimension_numbers<[1], [0], [0], [1], [0, 0, 1, 1], [], []>} : vector<89x36xf32>, vector<36x36xf32>, vector<89x36xf32> -> vector<89x36xf32>
    %27 = arith.addf %22, %26 : vector<89x36xf32>
    %c11 = arith.constant 11 : index
    %c0_25 = arith.constant 0 : index
    %28 = vector.load %arg14[%c11, %c0_25] : memref<800x36xf32, #tpu.memory_space<vmem>>, vector<89x36xf32>
    %c4 = arith.constant 4 : index
    %c0_26 = arith.constant 0 : index
    %c0_27 = arith.constant 0 : index
    %29 = vector.load %arg3[%c4, %c0_26, %c0_27] : memref<9x36x36xf32, #tpu.memory_space<vmem>>, vector<1x36x36xf32>
    %30 = vector.shape_cast %29 : vector<1x36x36xf32> to vector<36x36xf32>
    %cst_28 = arith.constant dense<0.000000e+00> : vector<89x36xf32>
    %31 = tpu.matmul %28, %30, %cst_28 {dimension_numbers = #tpu.dot_dimension_numbers<[1], [0], [0], [1], [0, 0, 1, 1], [], []>} : vector<89x36xf32>, vector<36x36xf32>, vector<89x36xf32> -> vector<89x36xf32>
    %32 = arith.addf %27, %31 : vector<89x36xf32>
    %c111 = arith.constant 111 : index
    %c0_29 = arith.constant 0 : index
    %33 = vector.load %arg14[%c111, %c0_29] : memref<800x36xf32, #tpu.memory_space<vmem>>, vector<89x36xf32>
    %c5 = arith.constant 5 : index
    %c0_30 = arith.constant 0 : index
    %c0_31 = arith.constant 0 : index
    %34 = vector.load %arg3[%c5, %c0_30, %c0_31] : memref<9x36x36xf32, #tpu.memory_space<vmem>>, vector<1x36x36xf32>
    %35 = vector.shape_cast %34 : vector<1x36x36xf32> to vector<36x36xf32>
    %cst_32 = arith.constant dense<0.000000e+00> : vector<89x36xf32>
    %36 = tpu.matmul %33, %35, %cst_32 {dimension_numbers = #tpu.dot_dimension_numbers<[1], [0], [0], [1], [0, 0, 1, 1], [], []>} : vector<89x36xf32>, vector<36x36xf32>, vector<89x36xf32> -> vector<89x36xf32>
    %37 = arith.addf %32, %36 : vector<89x36xf32>
    %c310 = arith.constant 310 : index
    %c0_33 = arith.constant 0 : index
    %38 = vector.load %arg14[%c310, %c0_33] : memref<800x36xf32, #tpu.memory_space<vmem>>, vector<89x36xf32>
    %c6 = arith.constant 6 : index
    %c0_34 = arith.constant 0 : index
    %c0_35 = arith.constant 0 : index
    %39 = vector.load %arg3[%c6, %c0_34, %c0_35] : memref<9x36x36xf32, #tpu.memory_space<vmem>>, vector<1x36x36xf32>
    %40 = vector.shape_cast %39 : vector<1x36x36xf32> to vector<36x36xf32>
    %cst_36 = arith.constant dense<0.000000e+00> : vector<89x36xf32>
    %41 = tpu.matmul %38, %40, %cst_36 {dimension_numbers = #tpu.dot_dimension_numbers<[1], [0], [0], [1], [0, 0, 1, 1], [], []>} : vector<89x36xf32>, vector<36x36xf32>, vector<89x36xf32> -> vector<89x36xf32>
    %42 = arith.addf %37, %41 : vector<89x36xf32>
    %c211 = arith.constant 211 : index
    %c0_37 = arith.constant 0 : index
    %43 = vector.load %arg14[%c211, %c0_37] : memref<800x36xf32, #tpu.memory_space<vmem>>, vector<89x36xf32>
    %c7 = arith.constant 7 : index
    %c0_38 = arith.constant 0 : index
    %c0_39 = arith.constant 0 : index
    %44 = vector.load %arg3[%c7, %c0_38, %c0_39] : memref<9x36x36xf32, #tpu.memory_space<vmem>>, vector<1x36x36xf32>
    %45 = vector.shape_cast %44 : vector<1x36x36xf32> to vector<36x36xf32>
    %cst_40 = arith.constant dense<0.000000e+00> : vector<89x36xf32>
    %46 = tpu.matmul %43, %45, %cst_40 {dimension_numbers = #tpu.dot_dimension_numbers<[1], [0], [0], [1], [0, 0, 1, 1], [], []>} : vector<89x36xf32>, vector<36x36xf32>, vector<89x36xf32> -> vector<89x36xf32>
    %47 = arith.addf %42, %46 : vector<89x36xf32>
    %c311 = arith.constant 311 : index
    %c0_41 = arith.constant 0 : index
    %48 = vector.load %arg14[%c311, %c0_41] : memref<800x36xf32, #tpu.memory_space<vmem>>, vector<89x36xf32>
    %c8 = arith.constant 8 : index
    %c0_42 = arith.constant 0 : index
    %c0_43 = arith.constant 0 : index
    %49 = vector.load %arg3[%c8, %c0_42, %c0_43] : memref<9x36x36xf32, #tpu.memory_space<vmem>>, vector<1x36x36xf32>
    %50 = vector.shape_cast %49 : vector<1x36x36xf32> to vector<36x36xf32>
    %cst_44 = arith.constant dense<0.000000e+00> : vector<89x36xf32>
    %51 = tpu.matmul %48, %50, %cst_44 {dimension_numbers = #tpu.dot_dimension_numbers<[1], [0], [0], [1], [0, 0, 1, 1], [], []>} : vector<89x36xf32>, vector<36x36xf32>, vector<89x36xf32> -> vector<89x36xf32>
    %52 = arith.addf %47, %51 : vector<89x36xf32>
    %c0_45 = arith.constant 0 : index
    %c0_46 = arith.constant 0 : index
    %53 = vector.load %arg7[%c0_45, %c0_46] : memref<225x89xf32, #tpu.memory_space<vmem>>, vector<225x89xf32>
    %cst_47 = arith.constant dense<0.000000e+00> : vector<225x36xf32>
    %54 = tpu.matmul %53, %52, %cst_47 {dimension_numbers = #tpu.dot_dimension_numbers<[1], [0], [0], [1], [0, 0, 1, 1], [], []>} : vector<225x89xf32>, vector<89x36xf32>, vector<225x36xf32> -> vector<225x36xf32>
    %cst_48 = arith.constant 0.000000e+00 : f32
    %55 = vector.broadcast %cst_48 : f32 to vector<25x36xf32>
    %c0_49 = arith.constant 0 : index
    %c0_50 = arith.constant 0 : index
    %56 = vector.load %arg6[%c0_49, %c0_50] : memref<1x36xf32, #tpu.memory_space<vmem>>, vector<1x36xf32>
    %57 = vector.broadcast %56 : vector<1x36xf32> to vector<25x36xf32>
    %58 = arith.addf %55, %57 : vector<25x36xf32>
    %59 = vector.extract_strided_slice %54 {offsets = [0, 0], sizes = [25, 36], strides = [1, 1]} : vector<225x36xf32> to vector<25x36xf32>
    %c0_51 = arith.constant 0 : index
    %c0_52 = arith.constant 0 : index
    %c0_53 = arith.constant 0 : index
    %60 = vector.load %arg5[%c0_51, %c0_52, %c0_53] : memref<9x36x36xf32, #tpu.memory_space<vmem>>, vector<1x36x36xf32>
    %61 = vector.shape_cast %60 : vector<1x36x36xf32> to vector<36x36xf32>
    %cst_54 = arith.constant dense<0.000000e+00> : vector<25x36xf32>
    %62 = tpu.matmul %59, %61, %cst_54 {dimension_numbers = #tpu.dot_dimension_numbers<[1], [0], [0], [1], [0, 0, 1, 1], [], []>} : vector<25x36xf32>, vector<36x36xf32>, vector<25x36xf32> -> vector<25x36xf32>
    %63 = arith.addf %58, %62 : vector<25x36xf32>
    %64 = vector.extract_strided_slice %54 {offsets = [25, 0], sizes = [25, 36], strides = [1, 1]} : vector<225x36xf32> to vector<25x36xf32>
    %c1_55 = arith.constant 1 : index
    %c0_56 = arith.constant 0 : index
    %c0_57 = arith.constant 0 : index
    %65 = vector.load %arg5[%c1_55, %c0_56, %c0_57] : memref<9x36x36xf32, #tpu.memory_space<vmem>>, vector<1x36x36xf32>
    %66 = vector.shape_cast %65 : vector<1x36x36xf32> to vector<36x36xf32>
    %cst_58 = arith.constant dense<0.000000e+00> : vector<25x36xf32>
    %67 = tpu.matmul %64, %66, %cst_58 {dimension_numbers = #tpu.dot_dimension_numbers<[1], [0], [0], [1], [0, 0, 1, 1], [], []>} : vector<25x36xf32>, vector<36x36xf32>, vector<25x36xf32> -> vector<25x36xf32>
    %68 = arith.addf %63, %67 : vector<25x36xf32>
    %69 = vector.extract_strided_slice %54 {offsets = [50, 0], sizes = [25, 36], strides = [1, 1]} : vector<225x36xf32> to vector<25x36xf32>
    %c2_59 = arith.constant 2 : index
    %c0_60 = arith.constant 0 : index
    %c0_61 = arith.constant 0 : index
    %70 = vector.load %arg5[%c2_59, %c0_60, %c0_61] : memref<9x36x36xf32, #tpu.memory_space<vmem>>, vector<1x36x36xf32>
    %71 = vector.shape_cast %70 : vector<1x36x36xf32> to vector<36x36xf32>
    %cst_62 = arith.constant dense<0.000000e+00> : vector<25x36xf32>
    %72 = tpu.matmul %69, %71, %cst_62 {dimension_numbers = #tpu.dot_dimension_numbers<[1], [0], [0], [1], [0, 0, 1, 1], [], []>} : vector<25x36xf32>, vector<36x36xf32>, vector<25x36xf32> -> vector<25x36xf32>
    %73 = arith.addf %68, %72 : vector<25x36xf32>
    %74 = vector.extract_strided_slice %54 {offsets = [75, 0], sizes = [25, 36], strides = [1, 1]} : vector<225x36xf32> to vector<25x36xf32>
    %c3_63 = arith.constant 3 : index
    %c0_64 = arith.constant 0 : index
    %c0_65 = arith.constant 0 : index
    %75 = vector.load %arg5[%c3_63, %c0_64, %c0_65] : memref<9x36x36xf32, #tpu.memory_space<vmem>>, vector<1x36x36xf32>
    %76 = vector.shape_cast %75 : vector<1x36x36xf32> to vector<36x36xf32>
    %cst_66 = arith.constant dense<0.000000e+00> : vector<25x36xf32>
    %77 = tpu.matmul %74, %76, %cst_66 {dimension_numbers = #tpu.dot_dimension_numbers<[1], [0], [0], [1], [0, 0, 1, 1], [], []>} : vector<25x36xf32>, vector<36x36xf32>, vector<25x36xf32> -> vector<25x36xf32>
    %78 = arith.addf %73, %77 : vector<25x36xf32>
    %79 = vector.extract_strided_slice %54 {offsets = [100, 0], sizes = [25, 36], strides = [1, 1]} : vector<225x36xf32> to vector<25x36xf32>
    %c4_67 = arith.constant 4 : index
    %c0_68 = arith.constant 0 : index
    %c0_69 = arith.constant 0 : index
    %80 = vector.load %arg5[%c4_67, %c0_68, %c0_69] : memref<9x36x36xf32, #tpu.memory_space<vmem>>, vector<1x36x36xf32>
    %81 = vector.shape_cast %80 : vector<1x36x36xf32> to vector<36x36xf32>
    %cst_70 = arith.constant dense<0.000000e+00> : vector<25x36xf32>
    %82 = tpu.matmul %79, %81, %cst_70 {dimension_numbers = #tpu.dot_dimension_numbers<[1], [0], [0], [1], [0, 0, 1, 1], [], []>} : vector<25x36xf32>, vector<36x36xf32>, vector<25x36xf32> -> vector<25x36xf32>
    %83 = arith.addf %78, %82 : vector<25x36xf32>
    %84 = vector.extract_strided_slice %54 {offsets = [125, 0], sizes = [25, 36], strides = [1, 1]} : vector<225x36xf32> to vector<25x36xf32>
    %c5_71 = arith.constant 5 : index
    %c0_72 = arith.constant 0 : index
    %c0_73 = arith.constant 0 : index
    %85 = vector.load %arg5[%c5_71, %c0_72, %c0_73] : memref<9x36x36xf32, #tpu.memory_space<vmem>>, vector<1x36x36xf32>
    %86 = vector.shape_cast %85 : vector<1x36x36xf32> to vector<36x36xf32>
    %cst_74 = arith.constant dense<0.000000e+00> : vector<25x36xf32>
    %87 = tpu.matmul %84, %86, %cst_74 {dimension_numbers = #tpu.dot_dimension_numbers<[1], [0], [0], [1], [0, 0, 1, 1], [], []>} : vector<25x36xf32>, vector<36x36xf32>, vector<25x36xf32> -> vector<25x36xf32>
    %88 = arith.addf %83, %87 : vector<25x36xf32>
    %89 = vector.extract_strided_slice %54 {offsets = [150, 0], sizes = [25, 36], strides = [1, 1]} : vector<225x36xf32> to vector<25x36xf32>
    %c6_75 = arith.constant 6 : index
    %c0_76 = arith.constant 0 : index
    %c0_77 = arith.constant 0 : index
    %90 = vector.load %arg5[%c6_75, %c0_76, %c0_77] : memref<9x36x36xf32, #tpu.memory_space<vmem>>, vector<1x36x36xf32>
    %91 = vector.shape_cast %90 : vector<1x36x36xf32> to vector<36x36xf32>
    %cst_78 = arith.constant dense<0.000000e+00> : vector<25x36xf32>
    %92 = tpu.matmul %89, %91, %cst_78 {dimension_numbers = #tpu.dot_dimension_numbers<[1], [0], [0], [1], [0, 0, 1, 1], [], []>} : vector<25x36xf32>, vector<36x36xf32>, vector<25x36xf32> -> vector<25x36xf32>
    %93 = arith.addf %88, %92 : vector<25x36xf32>
    %94 = vector.extract_strided_slice %54 {offsets = [175, 0], sizes = [25, 36], strides = [1, 1]} : vector<225x36xf32> to vector<25x36xf32>
    %c7_79 = arith.constant 7 : index
    %c0_80 = arith.constant 0 : index
    %c0_81 = arith.constant 0 : index
    %95 = vector.load %arg5[%c7_79, %c0_80, %c0_81] : memref<9x36x36xf32, #tpu.memory_space<vmem>>, vector<1x36x36xf32>
    %96 = vector.shape_cast %95 : vector<1x36x36xf32> to vector<36x36xf32>
    %cst_82 = arith.constant dense<0.000000e+00> : vector<25x36xf32>
    %97 = tpu.matmul %94, %96, %cst_82 {dimension_numbers = #tpu.dot_dimension_numbers<[1], [0], [0], [1], [0, 0, 1, 1], [], []>} : vector<25x36xf32>, vector<36x36xf32>, vector<25x36xf32> -> vector<25x36xf32>
    %98 = arith.addf %93, %97 : vector<25x36xf32>
    %99 = vector.extract_strided_slice %54 {offsets = [200, 0], sizes = [25, 36], strides = [1, 1]} : vector<225x36xf32> to vector<25x36xf32>
    %c8_83 = arith.constant 8 : index
    %c0_84 = arith.constant 0 : index
    %c0_85 = arith.constant 0 : index
    %100 = vector.load %arg5[%c8_83, %c0_84, %c0_85] : memref<9x36x36xf32, #tpu.memory_space<vmem>>, vector<1x36x36xf32>
    %101 = vector.shape_cast %100 : vector<1x36x36xf32> to vector<36x36xf32>
    %cst_86 = arith.constant dense<0.000000e+00> : vector<25x36xf32>
    %102 = tpu.matmul %99, %101, %cst_86 {dimension_numbers = #tpu.dot_dimension_numbers<[1], [0], [0], [1], [0, 0, 1, 1], [], []>} : vector<25x36xf32>, vector<36x36xf32>, vector<25x36xf32> -> vector<25x36xf32>
    %103 = arith.addf %98, %102 : vector<25x36xf32>
    %c0_87 = arith.constant 0 : index
    %c0_88 = arith.constant 0 : index
    %104 = vector.load %arg15[%c0_87, %c0_88] : memref<50x36xf32, #tpu.memory_space<vmem>>, vector<25x36xf32>
    tpu.vector_store %arg15[%c0_87, %c0_88], %103 {strides = array<i32>} : memref<50x36xf32, #tpu.memory_space<vmem>>, vector<25x36xf32>,
    %cst_89 = arith.constant 0.000000e+00 : f32
    %105 = vector.broadcast %cst_89 : f32 to vector<89x36xf32>
    %c0_90 = arith.constant 0 : index
    %c0_91 = arith.constant 0 : index
    %106 = vector.load %arg4[%c0_90, %c0_91] : memref<1x36xf32, #tpu.memory_space<vmem>>, vector<1x36xf32>
    %107 = vector.broadcast %106 : vector<1x36xf32> to vector<89x36xf32>
    %108 = arith.addf %105, %107 : vector<89x36xf32>
    %c700 = arith.constant 700 : index
    %c0_92 = arith.constant 0 : index
    %109 = vector.load %arg14[%c700, %c0_92] : memref<800x36xf32, #tpu.memory_space<vmem>>, vector<89x36xf32>
    %c0_93 = arith.constant 0 : index
    %c0_94 = arith.constant 0 : index
    %c0_95 = arith.constant 0 : index
    %110 = vector.load %arg3[%c0_93, %c0_94, %c0_95] : memref<9x36x36xf32, #tpu.memory_space<vmem>>, vector<1x36x36xf32>
    %111 = vector.shape_cast %110 : vector<1x36x36xf32> to vector<36x36xf32>
    %cst_96 = arith.constant dense<0.000000e+00> : vector<89x36xf32>
    %112 = tpu.matmul %109, %111, %cst_96 {dimension_numbers = #tpu.dot_dimension_numbers<[1], [0], [0], [1], [0, 0, 1, 1], [], []>} : vector<89x36xf32>, vector<36x36xf32>, vector<89x36xf32> -> vector<89x36xf32>
    %113 = arith.addf %108, %112 : vector<89x36xf32>
    %c601 = arith.constant 601 : index
    %c0_97 = arith.constant 0 : index
    %114 = vector.load %arg14[%c601, %c0_97] : memref<800x36xf32, #tpu.memory_space<vmem>>, vector<89x36xf32>
    %c1_98 = arith.constant 1 : index
    %c0_99 = arith.constant 0 : index
    %c0_100 = arith.constant 0 : index
    %115 = vector.load %arg3[%c1_98, %c0_99, %c0_100] : memref<9x36x36xf32, #tpu.memory_space<vmem>>, vector<1x36x36xf32>
    %116 = vector.shape_cast %115 : vector<1x36x36xf32> to vector<36x36xf32>
    %cst_101 = arith.constant dense<0.000000e+00> : vector<89x36xf32>
    %117 = tpu.matmul %114, %116, %cst_101 {dimension_numbers = #tpu.dot_dimension_numbers<[1], [0], [0], [1], [0, 0, 1, 1], [], []>} : vector<89x36xf32>, vector<36x36xf32>, vector<89x36xf32> -> vector<89x36xf32>
    %118 = arith.addf %113, %117 : vector<89x36xf32>
    %c701 = arith.constant 701 : index
    %c0_102 = arith.constant 0 : index
    %119 = vector.load %arg14[%c701, %c0_102] : memref<800x36xf32, #tpu.memory_space<vmem>>, vector<89x36xf32>
    %c2_103 = arith.constant 2 : index
    %c0_104 = arith.constant 0 : index
    %c0_105 = arith.constant 0 : index
    %120 = vector.load %arg3[%c2_103, %c0_104, %c0_105] : memref<9x36x36xf32, #tpu.memory_space<vmem>>, vector<1x36x36xf32>
    %121 = vector.shape_cast %120 : vector<1x36x36xf32> to vector<36x36xf32>
    %cst_106 = arith.constant dense<0.000000e+00> : vector<89x36xf32>
    %122 = tpu.matmul %119, %121, %cst_106 {dimension_numbers = #tpu.dot_dimension_numbers<[1], [0], [0], [1], [0, 0, 1, 1], [], []>} : vector<89x36xf32>, vector<36x36xf32>, vector<89x36xf32> -> vector<89x36xf32>
    %123 = arith.addf %118, %122 : vector<89x36xf32>
    %c510 = arith.constant 510 : index
    %c0_107 = arith.constant 0 : index
    %124 = vector.load %arg14[%c510, %c0_107] : memref<800x36xf32, #tpu.memory_space<vmem>>, vector<89x36xf32>
    %c3_108 = arith.constant 3 : index
    %c0_109 = arith.constant 0 : index
    %c0_110 = arith.constant 0 : index
    %125 = vector.load %arg3[%c3_108, %c0_109, %c0_110] : memref<9x36x36xf32, #tpu.memory_space<vmem>>, vector<1x36x36xf32>
    %126 = vector.shape_cast %125 : vector<1x36x36xf32> to vector<36x36xf32>
    %cst_111 = arith.constant dense<0.000000e+00> : vector<89x36xf32>
    %127 = tpu.matmul %124, %126, %cst_111 {dimension_numbers = #tpu.dot_dimension_numbers<[1], [0], [0], [1], [0, 0, 1, 1], [], []>} : vector<89x36xf32>, vector<36x36xf32>, vector<89x36xf32> -> vector<89x36xf32>
    %128 = arith.addf %123, %127 : vector<89x36xf32>
    %c411 = arith.constant 411 : index
    %c0_112 = arith.constant 0 : index
    %129 = vector.load %arg14[%c411, %c0_112] : memref<800x36xf32, #tpu.memory_space<vmem>>, vector<89x36xf32>
    %c4_113 = arith.constant 4 : index
    %c0_114 = arith.constant 0 : index
    %c0_115 = arith.constant 0 : index
    %130 = vector.load %arg3[%c4_113, %c0_114, %c0_115] : memref<9x36x36xf32, #tpu.memory_space<vmem>>, vector<1x36x36xf32>
    %131 = vector.shape_cast %130 : vector<1x36x36xf32> to vector<36x36xf32>
    %cst_116 = arith.constant dense<0.000000e+00> : vector<89x36xf32>
    %132 = tpu.matmul %129, %131, %cst_116 {dimension_numbers = #tpu.dot_dimension_numbers<[1], [0], [0], [1], [0, 0, 1, 1], [], []>} : vector<89x36xf32>, vector<36x36xf32>, vector<89x36xf32> -> vector<89x36xf32>
    %133 = arith.addf %128, %132 : vector<89x36xf32>
    %c511 = arith.constant 511 : index
    %c0_117 = arith.constant 0 : index
    %134 = vector.load %arg14[%c511, %c0_117] : memref<800x36xf32, #tpu.memory_space<vmem>>, vector<89x36xf32>
    %c5_118 = arith.constant 5 : index
    %c0_119 = arith.constant 0 : index
    %c0_120 = arith.constant 0 : index
    %135 = vector.load %arg3[%c5_118, %c0_119, %c0_120] : memref<9x36x36xf32, #tpu.memory_space<vmem>>, vector<1x36x36xf32>
    %136 = vector.shape_cast %135 : vector<1x36x36xf32> to vector<36x36xf32>
    %cst_121 = arith.constant dense<0.000000e+00> : vector<89x36xf32>
    %137 = tpu.matmul %134, %136, %cst_121 {dimension_numbers = #tpu.dot_dimension_numbers<[1], [0], [0], [1], [0, 0, 1, 1], [], []>} : vector<89x36xf32>, vector<36x36xf32>, vector<89x36xf32> -> vector<89x36xf32>
    %138 = arith.addf %133, %137 : vector<89x36xf32>
    %c710 = arith.constant 710 : index
    %c0_122 = arith.constant 0 : index
    %139 = vector.load %arg14[%c710, %c0_122] : memref<800x36xf32, #tpu.memory_space<vmem>>, vector<89x36xf32>
    %c6_123 = arith.constant 6 : index
    %c0_124 = arith.constant 0 : index
    %c0_125 = arith.constant 0 : index
    %140 = vector.load %arg3[%c6_123, %c0_124, %c0_125] : memref<9x36x36xf32, #tpu.memory_space<vmem>>, vector<1x36x36xf32>
    %141 = vector.shape_cast %140 : vector<1x36x36xf32> to vector<36x36xf32>
    %cst_126 = arith.constant dense<0.000000e+00> : vector<89x36xf32>
    %142 = tpu.matmul %139, %141, %cst_126 {dimension_numbers = #tpu.dot_dimension_numbers<[1], [0], [0], [1], [0, 0, 1, 1], [], []>} : vector<89x36xf32>, vector<36x36xf32>, vector<89x36xf32> -> vector<89x36xf32>
    %143 = arith.addf %138, %142 : vector<89x36xf32>
    %c611 = arith.constant 611 : index
    %c0_127 = arith.constant 0 : index
    %144 = vector.load %arg14[%c611, %c0_127] : memref<800x36xf32, #tpu.memory_space<vmem>>, vector<89x36xf32>
    %c7_128 = arith.constant 7 : index
    %c0_129 = arith.constant 0 : index
    %c0_130 = arith.constant 0 : index
    %145 = vector.load %arg3[%c7_128, %c0_129, %c0_130] : memref<9x36x36xf32, #tpu.memory_space<vmem>>, vector<1x36x36xf32>
    %146 = vector.shape_cast %145 : vector<1x36x36xf32> to vector<36x36xf32>
    %cst_131 = arith.constant dense<0.000000e+00> : vector<89x36xf32>
    %147 = tpu.matmul %144, %146, %cst_131 {dimension_numbers = #tpu.dot_dimension_numbers<[1], [0], [0], [1], [0, 0, 1, 1], [], []>} : vector<89x36xf32>, vector<36x36xf32>, vector<89x36xf32> -> vector<89x36xf32>
    %148 = arith.addf %143, %147 : vector<89x36xf32>
    %c711 = arith.constant 711 : index
    %c0_132 = arith.constant 0 : index
    %149 = vector.load %arg14[%c711, %c0_132] : memref<800x36xf32, #tpu.memory_space<vmem>>, vector<89x36xf32>
    %c8_133 = arith.constant 8 : index
    %c0_134 = arith.constant 0 : index
    %c0_135 = arith.constant 0 : index
    %150 = vector.load %arg3[%c8_133, %c0_134, %c0_135] : memref<9x36x36xf32, #tpu.memory_space<vmem>>, vector<1x36x36xf32>
    %151 = vector.shape_cast %150 : vector<1x36x36xf32> to vector<36x36xf32>
    %cst_136 = arith.constant dense<0.000000e+00> : vector<89x36xf32>
    %152 = tpu.matmul %149, %151, %cst_136 {dimension_numbers = #tpu.dot_dimension_numbers<[1], [0], [0], [1], [0, 0, 1, 1], [], []>} : vector<89x36xf32>, vector<36x36xf32>, vector<89x36xf32> -> vector<89x36xf32>
    %153 = arith.addf %148, %152 : vector<89x36xf32>
    %c0_137 = arith.constant 0 : index
    %c0_138 = arith.constant 0 : index
    %154 = vector.load %arg7[%c0_137, %c0_138] : memref<225x89xf32, #tpu.memory_space<vmem>>, vector<225x89xf32>
    %cst_139 = arith.constant dense<0.000000e+00> : vector<225x36xf32>
    %155 = tpu.matmul %154, %153, %cst_139 {dimension_numbers = #tpu.dot_dimension_numbers<[1], [0], [0], [1], [0, 0, 1, 1], [], []>} : vector<225x89xf32>, vector<89x36xf32>, vector<225x36xf32> -> vector<225x36xf32>
    %cst_140 = arith.constant 0.000000e+00 : f32
    %156 = vector.broadcast %cst_140 : f32 to vector<25x36xf32>
    %c0_141 = arith.constant 0 : index
    %c0_142 = arith.constant 0 : index
    %157 = vector.load %arg6[%c0_141, %c0_142] : memref<1x36xf32, #tpu.memory_space<vmem>>, vector<1x36xf32>
    %158 = vector.broadcast %157 : vector<1x36xf32> to vector<25x36xf32>
    %159 = arith.addf %156, %158 : vector<25x36xf32>
    %160 = vector.extract_strided_slice %155 {offsets = [0, 0], sizes = [25, 36], strides = [1, 1]} : vector<225x36xf32> to vector<25x36xf32>
    %c0_143 = arith.constant 0 : index
    %c0_144 = arith.constant 0 : index
    %c0_145 = arith.constant 0 : index
    %161 = vector.load %arg5[%c0_143, %c0_144, %c0_145] : memref<9x36x36xf32, #tpu.memory_space<vmem>>, vector<1x36x36xf32>
    %162 = vector.shape_cast %161 : vector<1x36x36xf32> to vector<36x36xf32>
    %cst_146 = arith.constant dense<0.000000e+00> : vector<25x36xf32>
    %163 = tpu.matmul %160, %162, %cst_146 {dimension_numbers = #tpu.dot_dimension_numbers<[1], [0], [0], [1], [0, 0, 1, 1], [], []>} : vector<25x36xf32>, vector<36x36xf32>, vector<25x36xf32> -> vector<25x36xf32>
    %164 = arith.addf %159, %163 : vector<25x36xf32>
    %165 = vector.extract_strided_slice %155 {offsets = [25, 0], sizes = [25, 36], strides = [1, 1]} : vector<225x36xf32> to vector<25x36xf32>
    %c1_147 = arith.constant 1 : index
    %c0_148 = arith.constant 0 : index
    %c0_149 = arith.constant 0 : index
    %166 = vector.load %arg5[%c1_147, %c0_148, %c0_149] : memref<9x36x36xf32, #tpu.memory_space<vmem>>, vector<1x36x36xf32>
    %167 = vector.shape_cast %166 : vector<1x36x36xf32> to vector<36x36xf32>
    %cst_150 = arith.constant dense<0.000000e+00> : vector<25x36xf32>
    %168 = tpu.matmul %165, %167, %cst_150 {dimension_numbers = #tpu.dot_dimension_numbers<[1], [0], [0], [1], [0, 0, 1, 1], [], []>} : vector<25x36xf32>, vector<36x36xf32>, vector<25x36xf32> -> vector<25x36xf32>
    %169 = arith.addf %164, %168 : vector<25x36xf32>
    %170 = vector.extract_strided_slice %155 {offsets = [50, 0], sizes = [25, 36], strides = [1, 1]} : vector<225x36xf32> to vector<25x36xf32>
    %c2_151 = arith.constant 2 : index
    %c0_152 = arith.constant 0 : index
    %c0_153 = arith.constant 0 : index
    %171 = vector.load %arg5[%c2_151, %c0_152, %c0_153] : memref<9x36x36xf32, #tpu.memory_space<vmem>>, vector<1x36x36xf32>
    %172 = vector.shape_cast %171 : vector<1x36x36xf32> to vector<36x36xf32>
    %cst_154 = arith.constant dense<0.000000e+00> : vector<25x36xf32>
    %173 = tpu.matmul %170, %172, %cst_154 {dimension_numbers = #tpu.dot_dimension_numbers<[1], [0], [0], [1], [0, 0, 1, 1], [], []>} : vector<25x36xf32>, vector<36x36xf32>, vector<25x36xf32> -> vector<25x36xf32>
    %174 = arith.addf %169, %173 : vector<25x36xf32>
    %175 = vector.extract_strided_slice %155 {offsets = [75, 0], sizes = [25, 36], strides = [1, 1]} : vector<225x36xf32> to vector<25x36xf32>
    %c3_155 = arith.constant 3 : index
    %c0_156 = arith.constant 0 : index
    %c0_157 = arith.constant 0 : index
    %176 = vector.load %arg5[%c3_155, %c0_156, %c0_157] : memref<9x36x36xf32, #tpu.memory_space<vmem>>, vector<1x36x36xf32>
    %177 = vector.shape_cast %176 : vector<1x36x36xf32> to vector<36x36xf32>
    %cst_158 = arith.constant dense<0.000000e+00> : vector<25x36xf32>
    %178 = tpu.matmul %175, %177, %cst_158 {dimension_numbers = #tpu.dot_dimension_numbers<[1], [0], [0], [1], [0, 0, 1, 1], [], []>} : vector<25x36xf32>, vector<36x36xf32>, vector<25x36xf32> -> vector<25x36xf32>
    %179 = arith.addf %174, %178 : vector<25x36xf32>
    %180 = vector.extract_strided_slice %155 {offsets = [100, 0], sizes = [25, 36], strides = [1, 1]} : vector<225x36xf32> to vector<25x36xf32>
    %c4_159 = arith.constant 4 : index
    %c0_160 = arith.constant 0 : index
    %c0_161 = arith.constant 0 : index
    %181 = vector.load %arg5[%c4_159, %c0_160, %c0_161] : memref<9x36x36xf32, #tpu.memory_space<vmem>>, vector<1x36x36xf32>
    %182 = vector.shape_cast %181 : vector<1x36x36xf32> to vector<36x36xf32>
    %cst_162 = arith.constant dense<0.000000e+00> : vector<25x36xf32>
    %183 = tpu.matmul %180, %182, %cst_162 {dimension_numbers = #tpu.dot_dimension_numbers<[1], [0], [0], [1], [0, 0, 1, 1], [], []>} : vector<25x36xf32>, vector<36x36xf32>, vector<25x36xf32> -> vector<25x36xf32>
    %184 = arith.addf %179, %183 : vector<25x36xf32>
    %185 = vector.extract_strided_slice %155 {offsets = [125, 0], sizes = [25, 36], strides = [1, 1]} : vector<225x36xf32> to vector<25x36xf32>
    %c5_163 = arith.constant 5 : index
    %c0_164 = arith.constant 0 : index
    %c0_165 = arith.constant 0 : index
    %186 = vector.load %arg5[%c5_163, %c0_164, %c0_165] : memref<9x36x36xf32, #tpu.memory_space<vmem>>, vector<1x36x36xf32>
    %187 = vector.shape_cast %186 : vector<1x36x36xf32> to vector<36x36xf32>
    %cst_166 = arith.constant dense<0.000000e+00> : vector<25x36xf32>
    %188 = tpu.matmul %185, %187, %cst_166 {dimension_numbers = #tpu.dot_dimension_numbers<[1], [0], [0], [1], [0, 0, 1, 1], [], []>} : vector<25x36xf32>, vector<36x36xf32>, vector<25x36xf32> -> vector<25x36xf32>
    %189 = arith.addf %184, %188 : vector<25x36xf32>
    %190 = vector.extract_strided_slice %155 {offsets = [150, 0], sizes = [25, 36], strides = [1, 1]} : vector<225x36xf32> to vector<25x36xf32>
    %c6_167 = arith.constant 6 : index
    %c0_168 = arith.constant 0 : index
    %c0_169 = arith.constant 0 : index
    %191 = vector.load %arg5[%c6_167, %c0_168, %c0_169] : memref<9x36x36xf32, #tpu.memory_space<vmem>>, vector<1x36x36xf32>
    %192 = vector.shape_cast %191 : vector<1x36x36xf32> to vector<36x36xf32>
    %cst_170 = arith.constant dense<0.000000e+00> : vector<25x36xf32>
    %193 = tpu.matmul %190, %192, %cst_170 {dimension_numbers = #tpu.dot_dimension_numbers<[1], [0], [0], [1], [0, 0, 1, 1], [], []>} : vector<25x36xf32>, vector<36x36xf32>, vector<25x36xf32> -> vector<25x36xf32>
    %194 = arith.addf %189, %193 : vector<25x36xf32>
    %195 = vector.extract_strided_slice %155 {offsets = [175, 0], sizes = [25, 36], strides = [1, 1]} : vector<225x36xf32> to vector<25x36xf32>
    %c7_171 = arith.constant 7 : index
    %c0_172 = arith.constant 0 : index
    %c0_173 = arith.constant 0 : index
    %196 = vector.load %arg5[%c7_171, %c0_172, %c0_173] : memref<9x36x36xf32, #tpu.memory_space<vmem>>, vector<1x36x36xf32>
    %197 = vector.shape_cast %196 : vector<1x36x36xf32> to vector<36x36xf32>
    %cst_174 = arith.constant dense<0.000000e+00> : vector<25x36xf32>
    %198 = tpu.matmul %195, %197, %cst_174 {dimension_numbers = #tpu.dot_dimension_numbers<[1], [0], [0], [1], [0, 0, 1, 1], [], []>} : vector<25x36xf32>, vector<36x36xf32>, vector<25x36xf32> -> vector<25x36xf32>
    %199 = arith.addf %194, %198 : vector<25x36xf32>
    %200 = vector.extract_strided_slice %155 {offsets = [200, 0], sizes = [25, 36], strides = [1, 1]} : vector<225x36xf32> to vector<25x36xf32>
    %c8_175 = arith.constant 8 : index
    %c0_176 = arith.constant 0 : index
    %c0_177 = arith.constant 0 : index
    %201 = vector.load %arg5[%c8_175, %c0_176, %c0_177] : memref<9x36x36xf32, #tpu.memory_space<vmem>>, vector<1x36x36xf32>
    %202 = vector.shape_cast %201 : vector<1x36x36xf32> to vector<36x36xf32>
    %cst_178 = arith.constant dense<0.000000e+00> : vector<25x36xf32>
    %203 = tpu.matmul %200, %202, %cst_178 {dimension_numbers = #tpu.dot_dimension_numbers<[1], [0], [0], [1], [0, 0, 1, 1], [], []>} : vector<25x36xf32>, vector<36x36xf32>, vector<25x36xf32> -> vector<25x36xf32>
    %204 = arith.addf %199, %203 : vector<25x36xf32>
    %c25 = arith.constant 25 : index
    %c0_179 = arith.constant 0 : index
    %205 = vector.load %arg15[%c25, %c0_179] : memref<50x36xf32, #tpu.memory_space<vmem>>, vector<25x36xf32>
    tpu.vector_store %arg15[%c25, %c0_179], %204 {strides = array<i32>} : memref<50x36xf32, #tpu.memory_space<vmem>>, vector<25x36xf32>,
    %c0_180 = arith.constant 0 : index
    %c0_181 = arith.constant 0 : index
    %206 = vector.load %arg15[%c0_180, %c0_181] : memref<50x36xf32, #tpu.memory_space<vmem>>, vector<50x36xf32>
    %c0_182 = arith.constant 0 : index
    %c0_183 = arith.constant 0 : index
    %207 = vector.load %arg8[%c0_182, %c0_183] : memref<36x200xf32, #tpu.memory_space<vmem>>, vector<36x200xf32>
    %cst_184 = arith.constant dense<0.000000e+00> : vector<50x200xf32>
    %208 = tpu.matmul %206, %207, %cst_184 {dimension_numbers = #tpu.dot_dimension_numbers<[1], [0], [0], [1], [0, 0, 1, 1], [], []>} : vector<50x36xf32>, vector<36x200xf32>, vector<50x200xf32> -> vector<50x200xf32>
    %c0_185 = arith.constant 0 : index
    %c0_186 = arith.constant 0 : index
    %209 = vector.load %arg9[%c0_185, %c0_186] : memref<50x200xf32, #tpu.memory_space<vmem>>, vector<50x200xf32>
    %210 = arith.mulf %208, %209 : vector<50x200xf32>
    %c0_187 = arith.constant 0 : index
    %c0_188 = arith.constant 0 : index
    %211 = vector.load %arg10[%c0_187, %c0_188] : memref<2x50xf32, #tpu.memory_space<vmem>>, vector<2x50xf32>
    %cst_189 = arith.constant dense<0.000000e+00> : vector<2x200xf32>
    %212 = tpu.matmul %211, %210, %cst_189 {dimension_numbers = #tpu.dot_dimension_numbers<[1], [0], [0], [1], [0, 0, 1, 1], [], []>} : vector<2x50xf32>, vector<50x200xf32>, vector<2x200xf32> -> vector<2x200xf32>
    %c0_190 = arith.constant 0 : index
    %c0_191 = arith.constant 0 : index
    %213 = vector.load %arg11[%c0_190, %c0_191] : memref<200x8xf32, #tpu.memory_space<vmem>>, vector<200x8xf32>
    %cst_192 = arith.constant dense<0.000000e+00> : vector<2x8xf32>
    %214 = tpu.matmul %212, %213, %cst_192 {dimension_numbers = #tpu.dot_dimension_numbers<[1], [0], [0], [1], [0, 0, 1, 1], [], []>} : vector<2x200xf32>, vector<200x8xf32>, vector<2x8xf32> -> vector<2x8xf32>
    %c0_193 = arith.constant 0 : index
    %c0_194 = arith.constant 0 : index
    %215 = vector.load %arg12[%c0_193, %c0_194] : memref<1x8xf32, #tpu.memory_space<vmem>>, vector<1x8xf32>
    %216 = vector.broadcast %215 : vector<1x8xf32> to vector<2x8xf32>
    %217 = arith.addf %214, %216 : vector<2x8xf32>
    %cst_195 = arith.constant dense<0xFF800000> : vector<2xf32>
    %218 = vector.multi_reduction <maximumf>, %217, %cst_195 [1] : vector<2x8xf32> to vector<2xf32>
    %219 = vector.shape_cast %218 : vector<2xf32> to vector<2x1xf32>
    %220 = vector.broadcast %219 : vector<2x1xf32> to vector<2x8xf32>
    %221 = arith.subf %217, %220 : vector<2x8xf32>
    %222 = math.exp %221 : vector<2x8xf32>
    %cst_196 = arith.constant dense<0.000000e+00> : vector<2xf32>
    %223 = vector.multi_reduction <add>, %222, %cst_196 [1] : vector<2x8xf32> to vector<2xf32>
    %224 = vector.shape_cast %223 : vector<2xf32> to vector<2x1xf32>
    %225 = vector.broadcast %224 : vector<2x1xf32> to vector<2x8xf32>
    %226 = arith.divf %222, %225 : vector<2x8xf32>
    %c0_197 = arith.constant 0 : index
    %c0_198 = arith.constant 0 : index
    %227 = vector.load %arg13[%c0_197, %c0_198] : memref<2x8xf32, #tpu.memory_space<vmem>>, vector<2x8xf32>
    tpu.vector_store %arg13[%c0_197, %c0_198], %226 {strides = array<i32>} : memref<2x8xf32, #tpu.memory_space<vmem>>, vector<2x8xf32>,
    return
  }
  func.func @transform_0(%arg0: i32) -> (i32, i32) {
    %c0_i32 = arith.constant 0 : i32
    %c0_i32_0 = arith.constant 0 : i32
    return %arg0, %c0_i32 : i32, i32
  }
  func.func @transform_1(%arg0: i32) -> (i32, i32) {
    %c0_i32 = arith.constant 0 : i32
    %c0_i32_0 = arith.constant 0 : i32
    %c0_i32_1 = arith.constant 0 : i32
    return %c0_i32, %c0_i32_0 : i32, i32
  }
  func.func @transform_2(%arg0: i32) -> (i32, i32, i32) {
    %c0_i32 = arith.constant 0 : i32
    %c0_i32_0 = arith.constant 0 : i32
    %c0_i32_1 = arith.constant 0 : i32
    %c0_i32_2 = arith.constant 0 : i32
    return %c0_i32, %c0_i32_0, %c0_i32_1 : i32, i32, i32
  }
  func.func @transform_3(%arg0: i32) -> (i32, i32) {
    %c0_i32 = arith.constant 0 : i32
    %c0_i32_0 = arith.constant 0 : i32
    %c0_i32_1 = arith.constant 0 : i32
    return %c0_i32, %c0_i32_0 : i32, i32
  }
  func.func @transform_4(%arg0: i32) -> (i32, i32, i32) {
    %c0_i32 = arith.constant 0 : i32
    %c0_i32_0 = arith.constant 0 : i32
    %c0_i32_1 = arith.constant 0 : i32
    %c0_i32_2 = arith.constant 0 : i32
    return %c0_i32, %c0_i32_0, %c0_i32_1 : i32, i32, i32
  }
  func.func @transform_5(%arg0: i32) -> (i32, i32) {
    %c0_i32 = arith.constant 0 : i32
    %c0_i32_0 = arith.constant 0 : i32
    %c0_i32_1 = arith.constant 0 : i32
    return %c0_i32, %c0_i32_0 : i32, i32
  }
  func.func @transform_6(%arg0: i32) -> (i32, i32) {
    %c0_i32 = arith.constant 0 : i32
    %c0_i32_0 = arith.constant 0 : i32
    %c0_i32_1 = arith.constant 0 : i32
    return %c0_i32, %c0_i32_0 : i32, i32
  }
  func.func @transform_7(%arg0: i32) -> (i32, i32) {
    %c0_i32 = arith.constant 0 : i32
    %c0_i32_0 = arith.constant 0 : i32
    %c0_i32_1 = arith.constant 0 : i32
    return %c0_i32, %c0_i32_0 : i32, i32
  }
  func.func @transform_8(%arg0: i32) -> (i32, i32) {
    %c0_i32 = arith.constant 0 : i32
    %c0_i32_0 = arith.constant 0 : i32
    %c0_i32_1 = arith.constant 0 : i32
    return %c0_i32, %c0_i32_0 : i32, i32
  }
  func.func @transform_9(%arg0: i32) -> (i32, i32) {
    %c0_i32 = arith.constant 0 : i32
    %c0_i32_0 = arith.constant 0 : i32
    %c0_i32_1 = arith.constant 0 : i32
    return %c0_i32, %c0_i32_0 : i32, i32
  }
  func.func @transform_10(%arg0: i32) -> (i32, i32) {
    %c0_i32 = arith.constant 0 : i32
    %c0_i32_0 = arith.constant 0 : i32
    %c0_i32_1 = arith.constant 0 : i32
    return %c0_i32, %c0_i32_0 : i32, i32
  }
  func.func @transform_11(%arg0: i32) -> (i32, i32) {
    %c0_i32 = arith.constant 0 : i32
    %c0_i32_0 = arith.constant 0 : i32
    %c0_i32_1 = arith.constant 0 : i32
    return %c0_i32, %c0_i32_0 : i32, i32
  }
  func.func @transform_12(%arg0: i32) -> (i32, i32) {
    %c0_i32 = arith.constant 0 : i32
    %c0_i32_0 = arith.constant 0 : i32
    return %arg0, %c0_i32 : i32, i32
  }
}

</mosaic_0001>

<llo_original>
// kernel: shape_classifier_forward.1
$region0: #{shape_classifier_forward.1}
  #allocation0 [shape = 'u32[]', space=smem, size = 0x4, offset = 0x4, fixed_abs, tag = 'smem constant byte address 0x4 - core index']
  #allocation1 [shape = 'u32[144,128]{1,0:T(1,128)}', space=vmem, size = 0x12000, scoped, tag = 'internal scratch']
  #allocation2 [shape = 'f32[800,36]{1,0:T(8,128)}', space=vmem, size = 0x64000, scoped, tag = 'scratch operand']
  #allocation3 [shape = 'f32[50,36]{1,0:T(8,128)}', space=vmem, size = 0x7000, scoped, tag = 'scratch operand']
  %s0 = inlined_call_operand.vmem [shape: f32[800,10], index: 0, kind: input, shape index: {}]
  %s1 = inlined_call_operand.vmem [shape: f32[10,36], index: 1, kind: input, shape index: {}]
  %s2 = inlined_call_operand.vmem [shape: f32[9,36,36], index: 2, kind: input, shape index: {}]
  %s3 = inlined_call_operand.vmem [shape: f32[1,36], index: 3, kind: input, shape index: {}]
  %s4 = inlined_call_operand.vmem [shape: f32[9,36,36], index: 4, kind: input, shape index: {}]
  %s5 = inlined_call_operand.vmem [shape: f32[1,36], index: 5, kind: input, shape index: {}]
  %s6 = inlined_call_operand.vmem [shape: f32[225,89], index: 6, kind: input, shape index: {}]
  %s7 = inlined_call_operand.vmem [shape: f32[36,200], index: 7, kind: input, shape index: {}]
  %s8 = inlined_call_operand.vmem [shape: f32[50,200], index: 8, kind: input, shape index: {}]
  %s9 = inlined_call_operand.vmem [shape: f32[2,50], index: 9, kind: input, shape index: {}]
  %s10 = inlined_call_operand.vmem [shape: f32[200,8], index: 10, kind: input, shape index: {}]
  %s11 = inlined_call_operand.vmem [shape: f32[1,8], index: 11, kind: input, shape index: {}]
  %s12 = inlined_call_operand.hbm [shape: f32[2,8], index: 12, kind: output, shape index: {}]
  %s13 = sld [smem:[#allocation0]]
  $region58: #{shape_classifier_forward.1} parent=0
    _
  %s15 = ssub.s32 1, %s13
  %s16 = scalar_select 0, %s15, %s13
  $region1: #{shape_classifier_forward.1} parent=0
    #allocation4 [shape = 'u8[1024]{0}', space=vmem, size = 0x400, scoped, tag = 'output window, operand 0, single buffered']
    #allocation5 [shape = 's32[1]{0}', space=sflag, size = 0x4, scoped, tag = 'scoped memory for shape_classifier_forward.1']
    %17 = vsyncpa [#allocation5], 0
    // Predicated region
    $region2: #{shape_classifier_forward.1} parent=1 // pred_check
      _
    $region3: #{shape_classifier_forward.1} parent=1 // pred_check_branch
      %19 = sbr.rel (0) target = $region5
    $region4: #{shape_classifier_forward.1} parent=1 // pred_region
      _
    $region5: #{shape_classifier_forward.1} parent=1 // pred_fallthru
      _
    // Predicated region
    $region6: #{shape_classifier_forward.1} parent=1 // pred_check
      _
    $region7: #{shape_classifier_forward.1} parent=1 // pred_check_branch
      %21 = sbr.rel (0) target = $region9
    $region8: #{shape_classifier_forward.1} parent=1 // pred_region
      _
    $region9: #{shape_classifier_forward.1} parent=1 // pred_fallthru
      _
    // Predicated region
    $region10: #{shape_classifier_forward.1} parent=1 // pred_check
      _
    $region11: #{shape_classifier_forward.1} parent=1 // pred_check_branch
      %23 = sbr.rel (0) target = $region13
    $region12: #{shape_classifier_forward.1} parent=1 // pred_region
      _
    $region13: #{shape_classifier_forward.1} parent=1 // pred_fallthru
      _
    // Predicated region
    $region14: #{shape_classifier_forward.1} parent=1 // pred_check
      _
    $region15: #{shape_classifier_forward.1} parent=1 // pred_check_branch
      %25 = sbr.rel (0) target = $region17
    $region16: #{shape_classifier_forward.1} parent=1 // pred_region
      _
    $region17: #{shape_classifier_forward.1} parent=1 // pred_fallthru
      _
    // Predicated region
    $region18: #{shape_classifier_forward.1} parent=1 // pred_check
      _
    $region19: #{shape_classifier_forward.1} parent=1 // pred_check_branch
      %27 = sbr.rel (0) target = $region21
    $region20: #{shape_classifier_forward.1} parent=1 // pred_region
      _
    $region21: #{shape_classifier_forward.1} parent=1 // pred_fallthru
      _
    // Predicated region
    $region22: #{shape_classifier_forward.1} parent=1 // pred_check
      _
    $region23: #{shape_classifier_forward.1} parent=1 // pred_check_branch
      %29 = sbr.rel (0) target = $region25
    $region24: #{shape_classifier_forward.1} parent=1 // pred_region
      _
    $region25: #{shape_classifier_forward.1} parent=1 // pred_fallthru
      _
    // Predicated region
    $region26: #{shape_classifier_forward.1} parent=1 // pred_check
      _
    $region27: #{shape_classifier_forward.1} parent=1 // pred_check_branch
      %31 = sbr.rel (0) target = $region29
    $region28: #{shape_classifier_forward.1} parent=1 // pred_region
      _
    $region29: #{shape_classifier_forward.1} parent=1 // pred_fallthru
      _
    // Predicated region
    $region30: #{shape_classifier_forward.1} parent=1 // pred_check
      _
    $region31: #{shape_classifier_forward.1} parent=1 // pred_check_branch
      %33 = sbr.rel (0) target = $region33
    $region32: #{shape_classifier_forward.1} parent=1 // pred_region
      _
    $region33: #{shape_classifier_forward.1} parent=1 // pred_fallthru
      _
    // Predicated region
    $region34: #{shape_classifier_forward.1} parent=1 // pred_check
      _
    $region35: #{shape_classifier_forward.1} parent=1 // pred_check_branch
      %35 = sbr.rel (0) target = $region37
    $region36: #{shape_classifier_forward.1} parent=1 // pred_region
      _
    $region37: #{shape_classifier_forward.1} parent=1 // pred_fallthru
      _
    // Predicated region
    $region38: #{shape_classifier_forward.1} parent=1 // pred_check
      _
    $region39: #{shape_classifier_forward.1} parent=1 // pred_check_branch
      %37 = sbr.rel (0) target = $region41
    $region40: #{shape_classifier_forward.1} parent=1 // pred_region
      _
    $region41: #{shape_classifier_forward.1} parent=1 // pred_fallthru
      _
    // Predicated region
    $region42: #{shape_classifier_forward.1} parent=1 // pred_check
      _
    $region43: #{shape_classifier_forward.1} parent=1 // pred_check_branch
      %39 = sbr.rel (0) target = $region45
    $region44: #{shape_classifier_forward.1} parent=1 // pred_region
      _
    $region45: #{shape_classifier_forward.1} parent=1 // pred_fallthru
      _
    // Predicated region
    $region46: #{shape_classifier_forward.1} parent=1 // pred_check
      _
    $region47: #{shape_classifier_forward.1} parent=1 // pred_check_branch
      %41 = sbr.rel (0) target = $region49
    $region48: #{shape_classifier_forward.1} parent=1 // pred_region
      _
    $region49: #{shape_classifier_forward.1} parent=1 // pred_fallthru
      _
    %v42 = vld [vmem:[%s0] sm:$0xff]
    %v43 = vld [vmem:[%s0 + $0x8] sm:$0xff]
    %v44 = vld [vmem:[%s0 + $0x10] sm:$0xff]
    %v45 = vld [vmem:[%s0 + $0x18] sm:$0xff]
    %v46 = vld [vmem:[%s0 + $0x20] sm:$0xff]
    %v47 = vld [vmem:[%s0 + $0x28] sm:$0xff]
    %v48 = vld [vmem:[%s0 + $0x30] sm:$0xff]
    %v49 = vld [vmem:[%s0 + $0x38] sm:$0xff]
    %v50 = vld [vmem:[%s0 + $0x40] sm:$0xff]
    %v51 = vld [vmem:[%s0 + $0x48] sm:$0xff]
    %v52 = vld [vmem:[%s0 + $0x50] sm:$0xff]
    %v53 = vld [vmem:[%s0 + $0x58] sm:$0xff]
    %v54 = vld [vmem:[%s0 + $0x60] sm:$0xff]
    %v55 = vld [vmem:[%s0 + $0x68] sm:$0xff]
    %v56 = vld [vmem:[%s0 + $0x70] sm:$0xff]
    %v57 = vld [vmem:[%s0 + $0x78] sm:$0xff]
    %v58 = vld [vmem:[%s0 + $0x80] sm:$0xff]
    %v59 = vld [vmem:[%s0 + $0x88] sm:$0xff]
    %v60 = vld [vmem:[%s0 + $0x90] sm:$0xff]
    %v61 = vld [vmem:[%s0 + $0x98] sm:$0xff]
    %v62 = vld [vmem:[%s0 + $0xa0] sm:$0xff]
    %v63 = vld [vmem:[%s0 + $0xa8] sm:$0xff]
    %v64 = vld [vmem:[%s0 + $0xb0] sm:$0xff]
    %v65 = vld [vmem:[%s0 + $0xb8] sm:$0xff]
    %v66 = vld [vmem:[%s0 + $0xc0] sm:$0xff]
    %v67 = vld [vmem:[%s0 + $0xc8] sm:$0xff]
    %v68 = vld [vmem:[%s0 + $0xd0] sm:$0xff]
    %v69 = vld [vmem:[%s0 + $0xd8] sm:$0xff]
    %v70 = vld [vmem:[%s0 + $0xe0] sm:$0xff]
    %v71 = vld [vmem:[%s0 + $0xe8] sm:$0xff]
    %v72 = vld [vmem:[%s0 + $0xf0] sm:$0xff]
    %v73 = vld [vmem:[%s0 + $0xf8] sm:$0xff]
    %v74 = vld [vmem:[%s0 + $0x100] sm:$0xff]
    %v75 = vld [vmem:[%s0 + $0x108] sm:$0xff]
    %v76 = vld [vmem:[%s0 + $0x110] sm:$0xff]
    %v77 = vld [vmem:[%s0 + $0x118] sm:$0xff]
    %v78 = vld [vmem:[%s0 + $0x120] sm:$0xff]
    %v79 = vld [vmem:[%s0 + $0x128] sm:$0xff]
    %v80 = vld [vmem:[%s0 + $0x130] sm:$0xff]
    %v81 = vld [vmem:[%s0 + $0x138] sm:$0xff]
    %v82 = vld [vmem:[%s0 + $0x140] sm:$0xff]
    %v83 = vld [vmem:[%s0 + $0x148] sm:$0xff]
    %v84 = vld [vmem:[%s0 + $0x150] sm:$0xff]
    %v85 = vld [vmem:[%s0 + $0x158] sm:$0xff]
    %v86 = vld [vmem:[%s0 + $0x160] sm:$0xff]
    %v87 = vld [vmem:[%s0 + $0x168] sm:$0xff]
    %v88 = vld [vmem:[%s0 + $0x170] sm:$0xff]
    %v89 = vld [vmem:[%s0 + $0x178] sm:$0xff]
    %v90 = vld [vmem:[%s0 + $0x180] sm:$0xff]
    %v91 = vld [vmem:[%s0 + $0x188] sm:$0xff]
    %v92 = vld [vmem:[%s0 + $0x190] sm:$0xff]
    %v93 = vld [vmem:[%s0 + $0x198] sm:$0xff]
    %v94 = vld [vmem:[%s0 + $0x1a0] sm:$0xff]
    %v95 = vld [vmem:[%s0 + $0x1a8] sm:$0xff]
    %v96 = vld [vmem:[%s0 + $0x1b0] sm:$0xff]
    %v97 = vld [vmem:[%s0 + $0x1b8] sm:$0xff]
    %v98 = vld [vmem:[%s0 + $0x1c0] sm:$0xff]
    %v99 = vld [vmem:[%s0 + $0x1c8] sm:$0xff]
    %v100 = vld [vmem:[%s0 + $0x1d0] sm:$0xff]
    %v101 = vld [vmem:[%s0 + $0x1d8] sm:$0xff]
    %v102 = vld [vmem:[%s0 + $0x1e0] sm:$0xff]
    %v103 = vld [vmem:[%s0 + $0x1e8] sm:$0xff]
    %v104 = vld [vmem:[%s0 + $0x1f0] sm:$0xff]
    %v105 = vld [vmem:[%s0 + $0x1f8] sm:$0xff]
    %v106 = vld [vmem:[%s0 + $0x200] sm:$0xff]
    %v107 = vld [vmem:[%s0 + $0x208] sm:$0xff]
    %v108 = vld [vmem:[%s0 + $0x210] sm:$0xff]
    %v109 = vld [vmem:[%s0 + $0x218] sm:$0xff]
    %v110 = vld [vmem:[%s0 + $0x220] sm:$0xff]
    %v111 = vld [vmem:[%s0 + $0x228] sm:$0xff]
    %v112 = vld [vmem:[%s0 + $0x230] sm:$0xff]
    %v113 = vld [vmem:[%s0 + $0x238] sm:$0xff]
    %v114 = vld [vmem:[%s0 + $0x240] sm:$0xff]
    %v115 = vld [vmem:[%s0 + $0x248] sm:$0xff]
    %v116 = vld [vmem:[%s0 + $0x250] sm:$0xff]
    %v117 = vld [vmem:[%s0 + $0x258] sm:$0xff]
    %v118 = vld [vmem:[%s0 + $0x260] sm:$0xff]
    %v119 = vld [vmem:[%s0 + $0x268] sm:$0xff]
    %v120 = vld [vmem:[%s0 + $0x270] sm:$0xff]
    %v121 = vld [vmem:[%s0 + $0x278] sm:$0xff]
    %v122 = vld [vmem:[%s0 + $0x280] sm:$0xff]
    %v123 = vld [vmem:[%s0 + $0x288] sm:$0xff]
    %v124 = vld [vmem:[%s0 + $0x290] sm:$0xff]
    %v125 = vld [vmem:[%s0 + $0x298] sm:$0xff]
    %v126 = vld [vmem:[%s0 + $0x2a0] sm:$0xff]
    %v127 = vld [vmem:[%s0 + $0x2a8] sm:$0xff]
    %v128 = vld [vmem:[%s0 + $0x2b0] sm:$0xff]
    %v129 = vld [vmem:[%s0 + $0x2b8] sm:$0xff]
    %v130 = vld [vmem:[%s0 + $0x2c0] sm:$0xff]
    %v131 = vld [vmem:[%s0 + $0x2c8] sm:$0xff]
    %v132 = vld [vmem:[%s0 + $0x2d0] sm:$0xff]
    %v133 = vld [vmem:[%s0 + $0x2d8] sm:$0xff]
    %v134 = vld [vmem:[%s0 + $0x2e0] sm:$0xff]
    %v135 = vld [vmem:[%s0 + $0x2e8] sm:$0xff]
    %v136 = vld [vmem:[%s0 + $0x2f0] sm:$0xff]
    %v137 = vld [vmem:[%s0 + $0x2f8] sm:$0xff]
    %v138 = vld [vmem:[%s0 + $0x300] sm:$0xff]
    %v139 = vld [vmem:[%s0 + $0x308] sm:$0xff]
    %v140 = vld [vmem:[%s0 + $0x310] sm:$0xff]
    %v141 = vld [vmem:[%s0 + $0x318] sm:$0xff]
    %v142 = vld [vmem:[%s1] sm:$0xff]
    %v143 = vld [vmem:[%s1 + $0x8] sm:$0x3]
    %vm144 = vcmask 80896
    %v146 = vsel %vm144, %v42, 0
    %v149 = vsel %vm144, %v43, 0
    %v152 = vsel %vm144, %v44, 0
    %v155 = vsel %vm144, %v45, 0
    %v158 = vsel %vm144, %v46, 0
    %v161 = vsel %vm144, %v47, 0
    %v164 = vsel %vm144, %v48, 0
    %v167 = vsel %vm144, %v49, 0
    %v170 = vsel %vm144, %v50, 0
    %v173 = vsel %vm144, %v51, 0
    %v176 = vsel %vm144, %v52, 0
    %v179 = vsel %vm144, %v53, 0
    %v182 = vsel %vm144, %v54, 0
    %v185 = vsel %vm144, %v55, 0
    %v188 = vsel %vm144, %v56, 0
    %v191 = vsel %vm144, %v57, 0
    %v194 = vsel %vm144, %v58, 0
    %v197 = vsel %vm144, %v59, 0
    %v200 = vsel %vm144, %v60, 0
    %v203 = vsel %vm144, %v61, 0
    %v206 = vsel %vm144, %v62, 0
    %v209 = vsel %vm144, %v63, 0
    %v212 = vsel %vm144, %v64, 0
    %v215 = vsel %vm144, %v65, 0
    %v218 = vsel %vm144, %v66, 0
    %v221 = vsel %vm144, %v67, 0
    %v224 = vsel %vm144, %v68, 0
    %v227 = vsel %vm144, %v69, 0
    %v230 = vsel %vm144, %v70, 0
    %v233 = vsel %vm144, %v71, 0
    %v236 = vsel %vm144, %v72, 0
    %v239 = vsel %vm144, %v73, 0
    %v242 = vsel %vm144, %v74, 0
    %v245 = vsel %vm144, %v75, 0
    %v248 = vsel %vm144, %v76, 0
    %v251 = vsel %vm144, %v77, 0
    %v254 = vsel %vm144, %v78, 0
    %v257 = vsel %vm144, %v79, 0
    %v260 = vsel %vm144, %v80, 0
    %v263 = vsel %vm144, %v81, 0
    %v266 = vsel %vm144, %v82, 0
    %v269 = vsel %vm144, %v83, 0
    %v272 = vsel %vm144, %v84, 0
    %v275 = vsel %vm144, %v85, 0
    %v278 = vsel %vm144, %v86, 0
    %v281 = vsel %vm144, %v87, 0
    %v284 = vsel %vm144, %v88, 0
    %v287 = vsel %vm144, %v89, 0
    %v290 = vsel %vm144, %v90, 0
    %v293 = vsel %vm144, %v91, 0
    %v296 = vsel %vm144, %v92, 0
    %v299 = vsel %vm144, %v93, 0
    %v302 = vsel %vm144, %v94, 0
    %v305 = vsel %vm144, %v95, 0
    %v308 = vsel %vm144, %v96, 0
    %v311 = vsel %vm144, %v97, 0
    %v314 = vsel %vm144, %v98, 0
    %v317 = vsel %vm144, %v99, 0
    %v320 = vsel %vm144, %v100, 0
    %v323 = vsel %vm144, %v101, 0
    %v326 = vsel %vm144, %v102, 0
    %v329 = vsel %vm144, %v103, 0
    %v332 = vsel %vm144, %v104, 0
    %v335 = vsel %vm144, %v105, 0
    %v338 = vsel %vm144, %v106, 0
    %v341 = vsel %vm144, %v107, 0
    %v344 = vsel %vm144, %v108, 0
    %v347 = vsel %vm144, %v109, 0
    %v350 = vsel %vm144, %v110, 0
    %v353 = vsel %vm144, %v111, 0
    %v356 = vsel %vm144, %v112, 0
    %v359 = vsel %vm144, %v113, 0
    %v362 = vsel %vm144, %v114, 0
    %v365 = vsel %vm144, %v115, 0
    %v368 = vsel %vm144, %v116, 0
    %v371 = vsel %vm144, %v117, 0
    %v374 = vsel %vm144, %v118, 0
    %v377 = vsel %vm144, %v119, 0
    %v380 = vsel %vm144, %v120, 0
    %v383 = vsel %vm144, %v121, 0
    %v386 = vsel %vm144, %v122, 0
    %v389 = vsel %vm144, %v123, 0
    %v392 = vsel %vm144, %v124, 0
    %v395 = vsel %vm144, %v125, 0
    %v398 = vsel %vm144, %v126, 0
    %v401 = vsel %vm144, %v127, 0
    %v404 = vsel %vm144, %v128, 0
    %v407 = vsel %vm144, %v129, 0
    %v410 = vsel %vm144, %v130, 0
    %v413 = vsel %vm144, %v131, 0
    %v416 = vsel %vm144, %v132, 0
    %v419 = vsel %vm144, %v133, 0
    %v422 = vsel %vm144, %v134, 0
    %v425 = vsel %vm144, %v135, 0
    %v428 = vsel %vm144, %v136, 0
    %v431 = vsel %vm144, %v137, 0
    %v434 = vsel %vm144, %v138, 0
    %v437 = vsel %vm144, %v139, 0
    %v440 = vsel %vm144, %v140, 0
    %v443 = vsel %vm144, %v141, 0
    %vm445 = vcmask 1041408
    %v447 = vsel %vm445, %v143, 0
    %449 = vmatprep.subr.mxu0 0.0
    %450 = vmatpush1.msra.mxu0 0.0
    %451 = vmatprep.subr.mxu0 0.0
    %452 = vmatpush1.msra.mxu0 0.0
    %453 = vmatprep.subr.mxu0 0.0
    %454 = vmatpush1.msra.mxu0 0.0
    %455 = vmatprep.subr.mxu0 0.0
    %456 = vmatpush1.msra.mxu0 0.0
    %457 = vmatprep.subr.mxu0 0.0
    %458 = vmatpush1.msra.mxu0 0.0
    %459 = vmatprep.subr.mxu0 0.0
    %460 = vmatpush1.msra.mxu0 0.0
    %461 = vmatprep.subr.mxu0 0.0
    %462 = vmatpush1.msra.mxu0 0.0
    %463 = vmatprep.subr.mxu0 0.0
    %464 = vmatpush1.msra.mxu0 0.0
    %465 = vmatprep.subr.mxu0 0.0
    %466 = vmatpush1.msra.mxu0 0.0
    %467 = vmatprep.subr.mxu0 0.0
    %468 = vmatpush1.msra.mxu0 0.0
    %469 = vmatprep.subr.mxu0 0.0
    %470 = vmatpush1.msra.mxu0 0.0
    %471 = vmatprep.subr.mxu0 0.0
    %472 = vmatpush1.msra.mxu0 0.0
    %473 = vmatprep.subr.mxu0 0.0
    %474 = vmatpush1.msra.mxu0 0.0
    %475 = vmatprep.subr.mxu0 0.0
    %476 = vmatpush1.msra.mxu0 0.0
    %477 = vmatprep.subr.mxu0 0.0
    %478 = vmatpush1.msra.mxu0 %v447
    %479 = vmatprep.subr.mxu0 0.0
    %480 = vmatpush1.msra.mxu0 %v142
    %481 = vmatprep.subr.mxu0 0.0
    %482 = vmatpush2.msra.mxu0 0.0
    %483 = vmatprep.subr.mxu0 0.0
    %484 = vmatpush2.msra.mxu0 0.0
    %485 = vmatprep.subr.mxu0 0.0
    %486 = vmatpush2.msra.mxu0 0.0
    %487 = vmatprep.subr.mxu0 0.0
    %488 = vmatpush2.msra.mxu0 0.0
    %489 = vmatprep.subr.mxu0 0.0
    %490 = vmatpush2.msra.mxu0 0.0
    %491 = vmatprep.subr.mxu0 0.0
    %492 = vmatpush2.msra.mxu0 0.0
    %493 = vmatprep.subr.mxu0 0.0
    %494 = vmatpush2.msra.mxu0 0.0
    %495 = vmatprep.subr.mxu0 0.0
    %496 = vmatpush2.msra.mxu0 0.0
    %497 = vmatprep.subr.mxu0 0.0
    %498 = vmatpush2.msra.mxu0 0.0
    %499 = vmatprep.subr.mxu0 0.0
    %500 = vmatpush2.msra.mxu0 0.0
    %501 = vmatprep.subr.mxu0 0.0
    %502 = vmatpush2.msra.mxu0 0.0
    %503 = vmatprep.subr.mxu0 0.0
    %504 = vmatpush2.msra.mxu0 0.0
    %505 = vmatprep.subr.mxu0 0.0
    %506 = vmatpush2.msra.mxu0 0.0
    %507 = vmatprep.subr.mxu0 0.0
    %508 = vmatpush2.msra.mxu0 0.0
    %509 = vmatprep.subr.mxu0 0.0
    %510 = vmatpush2.msra.mxu0 0.0
    %511 = vmatprep.subr.mxu0 0.0
    %512 = vmatpush2.msra.mxu0 0.0
    %513 = vmatprep.mubr.f32.mxu0 0.0
    %514 = vmatmul.mubr.f32.gmra.mxu0 %v146
    %v515 = vpop.f32.mrf.mxu0
    %v516 = vadd.f32 0.0, %v515
    %v517 = vpop.f32.mrf.mxu0
    %518 = vmatprep.mubr.f32.mxu0 0.0
    %519 = vmatmul.mubr.f32.gmra.mxu0 %v149
    %v520 = vpop.f32.mrf.mxu0
    %v521 = vadd.f32 0.0, %v520
    %v522 = vpop.f32.mrf.mxu0
    %523 = vmatprep.mubr.f32.mxu0 0.0
    %524 = vmatmul.mubr.f32.gmra.mxu0 %v152
    %v525 = vpop.f32.mrf.mxu0
    %v526 = vadd.f32 0.0, %v525
    %v527 = vpop.f32.mrf.mxu0
    %528 = vmatprep.mubr.f32.mxu0 0.0
    %529 = vmatmul.mubr.f32.gmra.mxu0 %v155
    %v530 = vpop.f32.mrf.mxu0
    %v531 = vadd.f32 0.0, %v530
    %v532 = vpop.f32.mrf.mxu0
    %533 = vmatprep.mubr.f32.mxu0 0.0
    %534 = vmatmul.mubr.f32.gmra.mxu0 %v158
    %v535 = vpop.f32.mrf.mxu0
    %v536 = vadd.f32 0.0, %v535
    %v537 = vpop.f32.mrf.mxu0
    %538 = vmatprep.mubr.f32.mxu0 0.0
    %539 = vmatmul.mubr.f32.gmra.mxu0 %v161
    %v540 = vpop.f32.mrf.mxu0
    %v541 = vadd.f32 0.0, %v540
    %v542 = vpop.f32.mrf.mxu0
    %543 = vmatprep.mubr.f32.mxu0 0.0
    %544 = vmatmul.mubr.f32.gmra.mxu0 %v164
    %v545 = vpop.f32.mrf.mxu0
    %v546 = vadd.f32 0.0, %v545
    %v547 = vpop.f32.mrf.mxu0
    %548 = vmatprep.mubr.f32.mxu0 0.0
    %549 = vmatmul.mubr.f32.gmra.mxu0 %v167
    %v550 = vpop.f32.mrf.mxu0
    %v551 = vadd.f32 0.0, %v550
    %v552 = vpop.f32.mrf.mxu0
    %553 = vmatprep.mubr.f32.mxu0 0.0
    %554 = vmatmul.mubr.f32.gmra.mxu0 %v170
    %v555 = vpop.f32.mrf.mxu0
    %v556 = vadd.f32 0.0, %v555
    %v557 = vpop.f32.mrf.mxu0
    %558 = vmatprep.mubr.f32.mxu0 0.0
    %559 = vmatmul.mubr.f32.gmra.mxu0 %v173
    %v560 = vpop.f32.mrf.mxu0
    %v561 = vadd.f32 0.0, %v560
    %v562 = vpop.f32.mrf.mxu0
    %563 = vmatprep.mubr.f32.mxu0 0.0
    %564 = vmatmul.mubr.f32.gmra.mxu0 %v176
    %v565 = vpop.f32.mrf.mxu0
    %v566 = vadd.f32 0.0, %v565
    %v567 = vpop.f32.mrf.mxu0
    %568 = vmatprep.mubr.f32.mxu0 0.0
    %569 = vmatmul.mubr.f32.gmra.mxu0 %v179
    %v570 = vpop.f32.mrf.mxu0
    %v571 = vadd.f32 0.0, %v570
    %v572 = vpop.f32.mrf.mxu0
    %573 = vmatprep.mubr.f32.mxu0 0.0
    %574 = vmatmul.mubr.f32.gmra.mxu0 %v182
    %v575 = vpop.f32.mrf.mxu0
    %v576 = vadd.f32 0.0, %v575
    %v577 = vpop.f32.mrf.mxu0
    %578 = vmatprep.mubr.f32.mxu0 0.0
    %579 = vmatmul.mubr.f32.gmra.mxu0 %v185
    %v580 = vpop.f32.mrf.mxu0
    %v581 = vadd.f32 0.0, %v580
    %v582 = vpop.f32.mrf.mxu0
    %583 = vmatprep.mubr.f32.mxu0 0.0
    %584 = vmatmul.mubr.f32.gmra.mxu0 %v188
    %v585 = vpop.f32.mrf.mxu0
    %v586 = vadd.f32 0.0, %v585
    %v587 = vpop.f32.mrf.mxu0
    %588 = vmatprep.mubr.f32.mxu0 0.0
    %589 = vmatmul.mubr.f32.gmra.mxu0 %v191
    %v590 = vpop.f32.mrf.mxu0
    %v591 = vadd.f32 0.0, %v590
    %v592 = vpop.f32.mrf.mxu0
    %593 = vmatprep.mubr.f32.mxu0 0.0
    %594 = vmatmul.mubr.f32.gmra.mxu0 %v194
    %v595 = vpop.f32.mrf.mxu0
    %v596 = vadd.f32 0.0, %v595
    %v597 = vpop.f32.mrf.mxu0
    %598 = vmatprep.mubr.f32.mxu0 0.0
    %599 = vmatmul.mubr.f32.gmra.mxu0 %v197
    %v600 = vpop.f32.mrf.mxu0
    %v601 = vadd.f32 0.0, %v600
    %v602 = vpop.f32.mrf.mxu0
    %603 = vmatprep.mubr.f32.mxu0 0.0
    %604 = vmatmul.mubr.f32.gmra.mxu0 %v200
    %v605 = vpop.f32.mrf.mxu0
    %v606 = vadd.f32 0.0, %v605
    %v607 = vpop.f32.mrf.mxu0
    %608 = vmatprep.mubr.f32.mxu0 0.0
    %609 = vmatmul.mubr.f32.gmra.mxu0 %v203
    %v610 = vpop.f32.mrf.mxu0
    %v611 = vadd.f32 0.0, %v610
    %v612 = vpop.f32.mrf.mxu0
    %613 = vmatprep.mubr.f32.mxu0 0.0
    %614 = vmatmul.mubr.f32.gmra.mxu0 %v206
    %v615 = vpop.f32.mrf.mxu0
    %v616 = vadd.f32 0.0, %v615
    %v617 = vpop.f32.mrf.mxu0
    %618 = vmatprep.mubr.f32.mxu0 0.0
    %619 = vmatmul.mubr.f32.gmra.mxu0 %v209
    %v620 = vpop.f32.mrf.mxu0
    %v621 = vadd.f32 0.0, %v620
    %v622 = vpop.f32.mrf.mxu0
    %623 = vmatprep.mubr.f32.mxu0 0.0
    %624 = vmatmul.mubr.f32.gmra.mxu0 %v212
    %v625 = vpop.f32.mrf.mxu0
    %v626 = vadd.f32 0.0, %v625
    %v627 = vpop.f32.mrf.mxu0
    %628 = vmatprep.mubr.f32.mxu0 0.0
    %629 = vmatmul.mubr.f32.gmra.mxu0 %v215
    %v630 = vpop.f32.mrf.mxu0
    %v631 = vadd.f32 0.0, %v630
    %v632 = vpop.f32.mrf.mxu0
    %633 = vmatprep.mubr.f32.mxu0 0.0
    %634 = vmatmul.mubr.f32.gmra.mxu0 %v218
    %v635 = vpop.f32.mrf.mxu0
    %v636 = vadd.f32 0.0, %v635
    %v637 = vpop.f32.mrf.mxu0
    %638 = vmatprep.mubr.f32.mxu0 0.0
    %639 = vmatmul.mubr.f32.gmra.mxu0 %v221
    %v640 = vpop.f32.mrf.mxu0
    %v641 = vadd.f32 0.0, %v640
    %v642 = vpop.f32.mrf.mxu0
    %643 = vmatprep.mubr.f32.mxu0 0.0
    %644 = vmatmul.mubr.f32.gmra.mxu0 %v224
    %v645 = vpop.f32.mrf.mxu0
    %v646 = vadd.f32 0.0, %v645
    %v647 = vpop.f32.mrf.mxu0
    %648 = vmatprep.mubr.f32.mxu0 0.0
    %649 = vmatmul.mubr.f32.gmra.mxu0 %v227
    %v650 = vpop.f32.mrf.mxu0
    %v651 = vadd.f32 0.0, %v650
    %v652 = vpop.f32.mrf.mxu0
    %653 = vmatprep.mubr.f32.mxu0 0.0
    %654 = vmatmul.mubr.f32.gmra.mxu0 %v230
    %v655 = vpop.f32.mrf.mxu0
    %v656 = vadd.f32 0.0, %v655
    %v657 = vpop.f32.mrf.mxu0
    %658 = vmatprep.mubr.f32.mxu0 0.0
    %659 = vmatmul.mubr.f32.gmra.mxu0 %v233
    %v660 = vpop.f32.mrf.mxu0
    %v661 = vadd.f32 0.0, %v660
    %v662 = vpop.f32.mrf.mxu0
    %663 = vmatprep.mubr.f32.mxu0 0.0
    %664 = vmatmul.mubr.f32.gmra.mxu0 %v236
    %v665 = vpop.f32.mrf.mxu0
    %v666 = vadd.f32 0.0, %v665
    %v667 = vpop.f32.mrf.mxu0
    %668 = vmatprep.mubr.f32.mxu0 0.0
    %669 = vmatmul.mubr.f32.gmra.mxu0 %v239
    %v670 = vpop.f32.mrf.mxu0
    %v671 = vadd.f32 0.0, %v670
    %v672 = vpop.f32.mrf.mxu0
    %673 = vmatprep.mubr.f32.mxu0 0.0
    %674 = vmatmul.mubr.f32.gmra.mxu0 %v242
    %v675 = vpop.f32.mrf.mxu0
    %v676 = vadd.f32 0.0, %v675
    %v677 = vpop.f32.mrf.mxu0
    %678 = vmatprep.mubr.f32.mxu0 0.0
    %679 = vmatmul.mubr.f32.gmra.mxu0 %v245
    %v680 = vpop.f32.mrf.mxu0
    %v681 = vadd.f32 0.0, %v680
    %v682 = vpop.f32.mrf.mxu0
    %683 = vmatprep.mubr.f32.mxu0 0.0
    %684 = vmatmul.mubr.f32.gmra.mxu0 %v248
    %v685 = vpop.f32.mrf.mxu0
    %v686 = vadd.f32 0.0, %v685
    %v687 = vpop.f32.mrf.mxu0
    %688 = vmatprep.mubr.f32.mxu0 0.0
    %689 = vmatmul.mubr.f32.gmra.mxu0 %v251
    %v690 = vpop.f32.mrf.mxu0
    %v691 = vadd.f32 0.0, %v690
    %v692 = vpop.f32.mrf.mxu0
    %693 = vmatprep.mubr.f32.mxu0 0.0
    %694 = vmatmul.mubr.f32.gmra.mxu0 %v254
    %v695 = vpop.f32.mrf.mxu0
    %v696 = vadd.f32 0.0, %v695
    %v697 = vpop.f32.mrf.mxu0
    %698 = vmatprep.mubr.f32.mxu0 0.0
    %699 = vmatmul.mubr.f32.gmra.mxu0 %v257
    %v700 = vpop.f32.mrf.mxu0
    %v701 = vadd.f32 0.0, %v700
    %v702 = vpop.f32.mrf.mxu0
    %703 = vmatprep.mubr.f32.mxu0 0.0
    %704 = vmatmul.mubr.f32.gmra.mxu0 %v260
    %v705 = vpop.f32.mrf.mxu0
    %v706 = vadd.f32 0.0, %v705
    %v707 = vpop.f32.mrf.mxu0
    %708 = vmatprep.mubr.f32.mxu0 0.0
    %709 = vmatmul.mubr.f32.gmra.mxu0 %v263
    %v710 = vpop.f32.mrf.mxu0
    %v711 = vadd.f32 0.0, %v710
    %v712 = vpop.f32.mrf.mxu0
    %713 = vmatprep.mubr.f32.mxu0 0.0
    %714 = vmatmul.mubr.f32.gmra.mxu0 %v266
    %v715 = vpop.f32.mrf.mxu0
    %v716 = vadd.f32 0.0, %v715
    %v717 = vpop.f32.mrf.mxu0
    %718 = vmatprep.mubr.f32.mxu0 0.0
    %719 = vmatmul.mubr.f32.gmra.mxu0 %v269
    %v720 = vpop.f32.mrf.mxu0
    %v721 = vadd.f32 0.0, %v720
    %v722 = vpop.f32.mrf.mxu0
    %723 = vmatprep.mubr.f32.mxu0 0.0
    %724 = vmatmul.mubr.f32.gmra.mxu0 %v272
    %v725 = vpop.f32.mrf.mxu0
    %v726 = vadd.f32 0.0, %v725
    %v727 = vpop.f32.mrf.mxu0
    %728 = vmatprep.mubr.f32.mxu0 0.0
    %729 = vmatmul.mubr.f32.gmra.mxu0 %v275
    %v730 = vpop.f32.mrf.mxu0
    %v731 = vadd.f32 0.0, %v730
    %v732 = vpop.f32.mrf.mxu0
    %733 = vmatprep.mubr.f32.mxu0 0.0
    %734 = vmatmul.mubr.f32.gmra.mxu0 %v278
    %v735 = vpop.f32.mrf.mxu0
    %v736 = vadd.f32 0.0, %v735
    %v737 = vpop.f32.mrf.mxu0
    %738 = vmatprep.mubr.f32.mxu0 0.0
    %739 = vmatmul.mubr.f32.gmra.mxu0 %v281
    %v740 = vpop.f32.mrf.mxu0
    %v741 = vadd.f32 0.0, %v740
    %v742 = vpop.f32.mrf.mxu0
    %743 = vmatprep.mubr.f32.mxu0 0.0
    %744 = vmatmul.mubr.f32.gmra.mxu0 %v284
    %v745 = vpop.f32.mrf.mxu0
    %v746 = vadd.f32 0.0, %v745
    %v747 = vpop.f32.mrf.mxu0
    %748 = vmatprep.mubr.f32.mxu0 0.0
    %749 = vmatmul.mubr.f32.gmra.mxu0 %v287
    %v750 = vpop.f32.mrf.mxu0
    %v751 = vadd.f32 0.0, %v750
    %v752 = vpop.f32.mrf.mxu0
    %753 = vmatprep.mubr.f32.mxu0 0.0
    %754 = vmatmul.mubr.f32.gmra.mxu0 %v290
    %v755 = vpop.f32.mrf.mxu0
    %v756 = vadd.f32 0.0, %v755
    %v757 = vpop.f32.mrf.mxu0
    %758 = vmatprep.mubr.f32.mxu0 0.0
    %759 = vmatmul.mubr.f32.gmra.mxu0 %v293
    %v760 = vpop.f32.mrf.mxu0
    %v761 = vadd.f32 0.0, %v760
    %v762 = vpop.f32.mrf.mxu0
    %763 = vmatprep.mubr.f32.mxu0 0.0
    %764 = vmatmul.mubr.f32.gmra.mxu0 %v296
    %v765 = vpop.f32.mrf.mxu0
    %v766 = vadd.f32 0.0, %v765
    %v767 = vpop.f32.mrf.mxu0
    %768 = vmatprep.mubr.f32.mxu0 0.0
    %769 = vmatmul.mubr.f32.gmra.mxu0 %v299
    %v770 = vpop.f32.mrf.mxu0
    %v771 = vadd.f32 0.0, %v770
    %v772 = vpop.f32.mrf.mxu0
    %773 = vmatprep.mubr.f32.mxu0 0.0
    %774 = vmatmul.mubr.f32.gmra.mxu0 %v302
    %v775 = vpop.f32.mrf.mxu0
    %v776 = vadd.f32 0.0, %v775
    %v777 = vpop.f32.mrf.mxu0
    %778 = vmatprep.mubr.f32.mxu0 0.0
    %779 = vmatmul.mubr.f32.gmra.mxu0 %v305
    %v780 = vpop.f32.mrf.mxu0
    %v781 = vadd.f32 0.0, %v780
    %v782 = vpop.f32.mrf.mxu0
    %783 = vmatprep.mubr.f32.mxu0 0.0
    %784 = vmatmul.mubr.f32.gmra.mxu0 %v308
    %v785 = vpop.f32.mrf.mxu0
    %v786 = vadd.f32 0.0, %v785
    %v787 = vpop.f32.mrf.mxu0
    %788 = vmatprep.mubr.f32.mxu0 0.0
    %789 = vmatmul.mubr.f32.gmra.mxu0 %v311
    %v790 = vpop.f32.mrf.mxu0
    %v791 = vadd.f32 0.0, %v790
    %v792 = vpop.f32.mrf.mxu0
    %793 = vmatprep.mubr.f32.mxu0 0.0
    %794 = vmatmul.mubr.f32.gmra.mxu0 %v314
    %v795 = vpop.f32.mrf.mxu0
    %v796 = vadd.f32 0.0, %v795
    %v797 = vpop.f32.mrf.mxu0
    %798 = vmatprep.mubr.f32.mxu0 0.0
    %799 = vmatmul.mubr.f32.gmra.mxu0 %v317
    %v800 = vpop.f32.mrf.mxu0
    %v801 = vadd.f32 0.0, %v800
    %v802 = vpop.f32.mrf.mxu0
    %803 = vmatprep.mubr.f32.mxu0 0.0
    %804 = vmatmul.mubr.f32.gmra.mxu0 %v320
    %v805 = vpop.f32.mrf.mxu0
    %v806 = vadd.f32 0.0, %v805
    %v807 = vpop.f32.mrf.mxu0
    %808 = vmatprep.mubr.f32.mxu0 0.0
    %809 = vmatmul.mubr.f32.gmra.mxu0 %v323
    %v810 = vpop.f32.mrf.mxu0
    %v811 = vadd.f32 0.0, %v810
    %v812 = vpop.f32.mrf.mxu0
    %813 = vmatprep.mubr.f32.mxu0 0.0
    %814 = vmatmul.mubr.f32.gmra.mxu0 %v326
    %v815 = vpop.f32.mrf.mxu0
    %v816 = vadd.f32 0.0, %v815
    %v817 = vpop.f32.mrf.mxu0
    %818 = vmatprep.mubr.f32.mxu0 0.0
    %819 = vmatmul.mubr.f32.gmra.mxu0 %v329
    %v820 = vpop.f32.mrf.mxu0
    %v821 = vadd.f32 0.0, %v820
    %v822 = vpop.f32.mrf.mxu0
    %823 = vmatprep.mubr.f32.mxu0 0.0
    %824 = vmatmul.mubr.f32.gmra.mxu0 %v332
    %v825 = vpop.f32.mrf.mxu0
    %v826 = vadd.f32 0.0, %v825
    %v827 = vpop.f32.mrf.mxu0
    %828 = vmatprep.mubr.f32.mxu0 0.0
    %829 = vmatmul.mubr.f32.gmra.mxu0 %v335
    %v830 = vpop.f32.mrf.mxu0
    %v831 = vadd.f32 0.0, %v830
    %v832 = vpop.f32.mrf.mxu0
    %833 = vmatprep.mubr.f32.mxu0 0.0
    %834 = vmatmul.mubr.f32.gmra.mxu0 %v338
    %v835 = vpop.f32.mrf.mxu0
    %v836 = vadd.f32 0.0, %v835
    %v837 = vpop.f32.mrf.mxu0
    %838 = vmatprep.mubr.f32.mxu0 0.0
    %839 = vmatmul.mubr.f32.gmra.mxu0 %v341
    %v840 = vpop.f32.mrf.mxu0
    %v841 = vadd.f32 0.0, %v840
    %v842 = vpop.f32.mrf.mxu0
    %843 = vmatprep.mubr.f32.mxu0 0.0
    %844 = vmatmul.mubr.f32.gmra.mxu0 %v344
    %v845 = vpop.f32.mrf.mxu0
    %v846 = vadd.f32 0.0, %v845
    %v847 = vpop.f32.mrf.mxu0
    %848 = vmatprep.mubr.f32.mxu0 0.0
    %849 = vmatmul.mubr.f32.gmra.mxu0 %v347
    %v850 = vpop.f32.mrf.mxu0
    %v851 = vadd.f32 0.0, %v850
    %v852 = vpop.f32.mrf.mxu0
    %853 = vmatprep.mubr.f32.mxu0 0.0
    %854 = vmatmul.mubr.f32.gmra.mxu0 %v350
    %v855 = vpop.f32.mrf.mxu0
    %v856 = vadd.f32 0.0, %v855
    %v857 = vpop.f32.mrf.mxu0
    %858 = vmatprep.mubr.f32.mxu0 0.0
    %859 = vmatmul.mubr.f32.gmra.mxu0 %v353
    %v860 = vpop.f32.mrf.mxu0
    %v861 = vadd.f32 0.0, %v860
    %v862 = vpop.f32.mrf.mxu0
    %863 = vmatprep.mubr.f32.mxu0 0.0
    %864 = vmatmul.mubr.f32.gmra.mxu0 %v356
    %v865 = vpop.f32.mrf.mxu0
    %v866 = vadd.f32 0.0, %v865
    %v867 = vpop.f32.mrf.mxu0
    %868 = vmatprep.mubr.f32.mxu0 0.0
    %869 = vmatmul.mubr.f32.gmra.mxu0 %v359
    %v870 = vpop.f32.mrf.mxu0
    %v871 = vadd.f32 0.0, %v870
    %v872 = vpop.f32.mrf.mxu0
    %873 = vmatprep.mubr.f32.mxu0 0.0
    %874 = vmatmul.mubr.f32.gmra.mxu0 %v362
    %v875 = vpop.f32.mrf.mxu0
    %v876 = vadd.f32 0.0, %v875
    %v877 = vpop.f32.mrf.mxu0
    %878 = vmatprep.mubr.f32.mxu0 0.0
    %879 = vmatmul.mubr.f32.gmra.mxu0 %v365
    %v880 = vpop.f32.mrf.mxu0
    %v881 = vadd.f32 0.0, %v880
    %v882 = vpop.f32.mrf.mxu0
    %883 = vmatprep.mubr.f32.mxu0 0.0
    %884 = vmatmul.mubr.f32.gmra.mxu0 %v368
    %v885 = vpop.f32.mrf.mxu0
    %v886 = vadd.f32 0.0, %v885
    %v887 = vpop.f32.mrf.mxu0
    %888 = vmatprep.mubr.f32.mxu0 0.0
    %889 = vmatmul.mubr.f32.gmra.mxu0 %v371
    %v890 = vpop.f32.mrf.mxu0
    %v891 = vadd.f32 0.0, %v890
    %v892 = vpop.f32.mrf.mxu0
    %893 = vmatprep.mubr.f32.mxu0 0.0
    %894 = vmatmul.mubr.f32.gmra.mxu0 %v374
    %v895 = vpop.f32.mrf.mxu0
    %v896 = vadd.f32 0.0, %v895
    %v897 = vpop.f32.mrf.mxu0
    %898 = vmatprep.mubr.f32.mxu0 0.0
    %899 = vmatmul.mubr.f32.gmra.mxu0 %v377
    %v900 = vpop.f32.mrf.mxu0
    %v901 = vadd.f32 0.0, %v900
    %v902 = vpop.f32.mrf.mxu0
    %903 = vmatprep.mubr.f32.mxu0 0.0
    %904 = vmatmul.mubr.f32.gmra.mxu0 %v380
    %v905 = vpop.f32.mrf.mxu0
    %v906 = vadd.f32 0.0, %v905
    %v907 = vpop.f32.mrf.mxu0
    %908 = vmatprep.mubr.f32.mxu0 0.0
    %909 = vmatmul.mubr.f32.gmra.mxu0 %v383
    %v910 = vpop.f32.mrf.mxu0
    %v911 = vadd.f32 0.0, %v910
    %v912 = vpop.f32.mrf.mxu0
    %913 = vmatprep.mubr.f32.mxu0 0.0
    %914 = vmatmul.mubr.f32.gmra.mxu0 %v386
    %v915 = vpop.f32.mrf.mxu0
    %v916 = vadd.f32 0.0, %v915
    %v917 = vpop.f32.mrf.mxu0
    %918 = vmatprep.mubr.f32.mxu0 0.0
    %919 = vmatmul.mubr.f32.gmra.mxu0 %v389
    %v920 = vpop.f32.mrf.mxu0
    %v921 = vadd.f32 0.0, %v920
    %v922 = vpop.f32.mrf.mxu0
    %923 = vmatprep.mubr.f32.mxu0 0.0
    %924 = vmatmul.mubr.f32.gmra.mxu0 %v392
    %v925 = vpop.f32.mrf.mxu0
    %v926 = vadd.f32 0.0, %v925
    %v927 = vpop.f32.mrf.mxu0
    %928 = vmatprep.mubr.f32.mxu0 0.0
    %929 = vmatmul.mubr.f32.gmra.mxu0 %v395
    %v930 = vpop.f32.mrf.mxu0
    %v931 = vadd.f32 0.0, %v930
    %v932 = vpop.f32.mrf.mxu0
    %933 = vmatprep.mubr.f32.mxu0 0.0
    %934 = vmatmul.mubr.f32.gmra.mxu0 %v398
    %v935 = vpop.f32.mrf.mxu0
    %v936 = vadd.f32 0.0, %v935
    %v937 = vpop.f32.mrf.mxu0
    %938 = vmatprep.mubr.f32.mxu0 0.0
    %939 = vmatmul.mubr.f32.gmra.mxu0 %v401
    %v940 = vpop.f32.mrf.mxu0
    %v941 = vadd.f32 0.0, %v940
    %v942 = vpop.f32.mrf.mxu0
    %943 = vmatprep.mubr.f32.mxu0 0.0
    %944 = vmatmul.mubr.f32.gmra.mxu0 %v404
    %v945 = vpop.f32.mrf.mxu0
    %v946 = vadd.f32 0.0, %v945
    %v947 = vpop.f32.mrf.mxu0
    %948 = vmatprep.mubr.f32.mxu0 0.0
    %949 = vmatmul.mubr.f32.gmra.mxu0 %v407
    %v950 = vpop.f32.mrf.mxu0
    %v951 = vadd.f32 0.0, %v950
    %v952 = vpop.f32.mrf.mxu0
    %953 = vmatprep.mubr.f32.mxu0 0.0
    %954 = vmatmul.mubr.f32.gmra.mxu0 %v410
    %v955 = vpop.f32.mrf.mxu0
    %v956 = vadd.f32 0.0, %v955
    %v957 = vpop.f32.mrf.mxu0
    %958 = vmatprep.mubr.f32.mxu0 0.0
    %959 = vmatmul.mubr.f32.gmra.mxu0 %v413
    %v960 = vpop.f32.mrf.mxu0
    %v961 = vadd.f32 0.0, %v960
    %v962 = vpop.f32.mrf.mxu0
    %963 = vmatprep.mubr.f32.mxu0 0.0
    %964 = vmatmul.mubr.f32.gmra.mxu0 %v416
    %v965 = vpop.f32.mrf.mxu0
    %v966 = vadd.f32 0.0, %v965
    %v967 = vpop.f32.mrf.mxu0
    %968 = vmatprep.mubr.f32.mxu0 0.0
    %969 = vmatmul.mubr.f32.gmra.mxu0 %v419
    %v970 = vpop.f32.mrf.mxu0
    %v971 = vadd.f32 0.0, %v970
    %v972 = vpop.f32.mrf.mxu0
    %973 = vmatprep.mubr.f32.mxu0 0.0
    %974 = vmatmul.mubr.f32.gmra.mxu0 %v422
    %v975 = vpop.f32.mrf.mxu0
    %v976 = vadd.f32 0.0, %v975
    %v977 = vpop.f32.mrf.mxu0
    %978 = vmatprep.mubr.f32.mxu0 0.0
    %979 = vmatmul.mubr.f32.gmra.mxu0 %v425
    %v980 = vpop.f32.mrf.mxu0
    %v981 = vadd.f32 0.0, %v980
    %v982 = vpop.f32.mrf.mxu0
    %983 = vmatprep.mubr.f32.mxu0 0.0
    %984 = vmatmul.mubr.f32.gmra.mxu0 %v428
    %v985 = vpop.f32.mrf.mxu0
    %v986 = vadd.f32 0.0, %v985
    %v987 = vpop.f32.mrf.mxu0
    %988 = vmatprep.mubr.f32.mxu0 0.0
    %989 = vmatmul.mubr.f32.gmra.mxu0 %v431
    %v990 = vpop.f32.mrf.mxu0
    %v991 = vadd.f32 0.0, %v990
    %v992 = vpop.f32.mrf.mxu0
    %993 = vmatprep.mubr.f32.mxu0 0.0
    %994 = vmatmul.mubr.f32.gmra.mxu0 %v434
    %v995 = vpop.f32.mrf.mxu0
    %v996 = vadd.f32 0.0, %v995
    %v997 = vpop.f32.mrf.mxu0
    %998 = vmatprep.mubr.f32.mxu0 0.0
    %999 = vmatmul.mubr.f32.gmra.mxu0 %v437
    %v1000 = vpop.f32.mrf.mxu0
    %v1001 = vadd.f32 0.0, %v1000
    %v1002 = vpop.f32.mrf.mxu0
    %1003 = vmatprep.mubr.f32.mxu0 0.0
    %1004 = vmatmul.mubr.f32.gmra.mxu0 %v440
    %v1005 = vpop.f32.mrf.mxu0
    %v1006 = vadd.f32 0.0, %v1005
    %v1007 = vpop.f32.mrf.mxu0
    %1008 = vmatprep.mubr.f32.mxu0 0.0
    %1009 = vmatmul.mubr.f32.gmra.mxu0 %v443
    %v1010 = vpop.f32.mrf.mxu0
    %v1011 = vadd.f32 0.0, %v1010
    %v1012 = vpop.f32.mrf.mxu0
    %1013 = vdwg.mxu0
    %vm1014 = vcmask 293888
    %1015 = vst.msk [vmem:[#allocation2] sm:$0xff] %vm1014, %v516
    %1016 = vst.msk [vmem:[#allocation2 + $0x8] sm:$0xff] %vm1014, %v521
    %1017 = vst.msk [vmem:[#allocation2 + $0x10] sm:$0xff] %vm1014, %v526
    %1018 = vst.msk [vmem:[#allocation2 + $0x18] sm:$0xff] %vm1014, %v531
    %1019 = vst.msk [vmem:[#allocation2 + $0x20] sm:$0xff] %vm1014, %v536
    %1020 = vst.msk [vmem:[#allocation2 + $0x28] sm:$0xff] %vm1014, %v541
    %1021 = vst.msk [vmem:[#allocation2 + $0x30] sm:$0xff] %vm1014, %v546
    %1022 = vst.msk [vmem:[#allocation2 + $0x38] sm:$0xff] %vm1014, %v551
    %1023 = vst.msk [vmem:[#allocation2 + $0x40] sm:$0xff] %vm1014, %v556
    %1024 = vst.msk [vmem:[#allocation2 + $0x48] sm:$0xff] %vm1014, %v561
    %1025 = vst.msk [vmem:[#allocation2 + $0x50] sm:$0xff] %vm1014, %v566
    %1026 = vst.msk [vmem:[#allocation2 + $0x58] sm:$0xff] %vm1014, %v571
    %1027 = vst.msk [vmem:[#allocation2 + $0x60] sm:$0xff] %vm1014, %v576
    %1028 = vst.msk [vmem:[#allocation2 + $0x68] sm:$0xff] %vm1014, %v581
    %1029 = vst.msk [vmem:[#allocation2 + $0x70] sm:$0xff] %vm1014, %v586
    %1030 = vst.msk [vmem:[#allocation2 + $0x78] sm:$0xff] %vm1014, %v591
    %1031 = vst.msk [vmem:[#allocation2 + $0x80] sm:$0xff] %vm1014, %v596
    %1032 = vst.msk [vmem:[#allocation2 + $0x88] sm:$0xff] %vm1014, %v601
    %1033 = vst.msk [vmem:[#allocation2 + $0x90] sm:$0xff] %vm1014, %v606
    %1034 = vst.msk [vmem:[#allocation2 + $0x98] sm:$0xff] %vm1014, %v611
    %1035 = vst.msk [vmem:[#allocation2 + $0xa0] sm:$0xff] %vm1014, %v616
    %1036 = vst.msk [vmem:[#allocation2 + $0xa8] sm:$0xff] %vm1014, %v621
    %1037 = vst.msk [vmem:[#allocation2 + $0xb0] sm:$0xff] %vm1014, %v626
    %1038 = vst.msk [vmem:[#allocation2 + $0xb8] sm:$0xff] %vm1014, %v631
    %1039 = vst.msk [vmem:[#allocation2 + $0xc0] sm:$0xff] %vm1014, %v636
    %1040 = vst.msk [vmem:[#allocation2 + $0xc8] sm:$0xff] %vm1014, %v641
    %1041 = vst.msk [vmem:[#allocation2 + $0xd0] sm:$0xff] %vm1014, %v646
    %1042 = vst.msk [vmem:[#allocation2 + $0xd8] sm:$0xff] %vm1014, %v651
    %1043 = vst.msk [vmem:[#allocation2 + $0xe0] sm:$0xff] %vm1014, %v656
    %1044 = vst.msk [vmem:[#allocation2 + $0xe8] sm:$0xff] %vm1014, %v661
    %1045 = vst.msk [vmem:[#allocation2 + $0xf0] sm:$0xff] %vm1014, %v666
    %1046 = vst.msk [vmem:[#allocation2 + $0xf8] sm:$0xff] %vm1014, %v671
    %1047 = vst.msk [vmem:[#allocation2 + $0x100] sm:$0xff] %vm1014, %v676
    %1048 = vst.msk [vmem:[#allocation2 + $0x108] sm:$0xff] %vm1014, %v681
    %1049 = vst.msk [vmem:[#allocation2 + $0x110] sm:$0xff] %vm1014, %v686
    %1050 = vst.msk [vmem:[#allocation2 + $0x118] sm:$0xff] %vm1014, %v691
    %1051 = vst.msk [vmem:[#allocation2 + $0x120] sm:$0xff] %vm1014, %v696
    %1052 = vst.msk [vmem:[#allocation2 + $0x128] sm:$0xff] %vm1014, %v701
    %1053 = vst.msk [vmem:[#allocation2 + $0x130] sm:$0xff] %vm1014, %v706
    %1054 = vst.msk [vmem:[#allocation2 + $0x138] sm:$0xff] %vm1014, %v711
    %1055 = vst.msk [vmem:[#allocation2 + $0x140] sm:$0xff] %vm1014, %v716
    %1056 = vst.msk [vmem:[#allocation2 + $0x148] sm:$0xff] %vm1014, %v721
    %1057 = vst.msk [vmem:[#allocation2 + $0x150] sm:$0xff] %vm1014, %v726
    %1058 = vst.msk [vmem:[#allocation2 + $0x158] sm:$0xff] %vm1014, %v731
    %1059 = vst.msk [vmem:[#allocation2 + $0x160] sm:$0xff] %vm1014, %v736
    %1060 = vst.msk [vmem:[#allocation2 + $0x168] sm:$0xff] %vm1014, %v741
    %1061 = vst.msk [vmem:[#allocation2 + $0x170] sm:$0xff] %vm1014, %v746
    %1062 = vst.msk [vmem:[#allocation2 + $0x178] sm:$0xff] %vm1014, %v751
    %1063 = vst.msk [vmem:[#allocation2 + $0x180] sm:$0xff] %vm1014, %v756
    %1064 = vst.msk [vmem:[#allocation2 + $0x188] sm:$0xff] %vm1014, %v761
    %1065 = vst.msk [vmem:[#allocation2 + $0x190] sm:$0xff] %vm1014, %v766
    %1066 = vst.msk [vmem:[#allocation2 + $0x198] sm:$0xff] %vm1014, %v771
    %1067 = vst.msk [vmem:[#allocation2 + $0x1a0] sm:$0xff] %vm1014, %v776
    %1068 = vst.msk [vmem:[#allocation2 + $0x1a8] sm:$0xff] %vm1014, %v781
    %1069 = vst.msk [vmem:[#allocation2 + $0x1b0] sm:$0xff] %vm1014, %v786
    %1070 = vst.msk [vmem:[#allocation2 + $0x1b8] sm:$0xff] %vm1014, %v791
    %1071 = vst.msk [vmem:[#allocation2 + $0x1c0] sm:$0xff] %vm1014, %v796
    %1072 = vst.msk [vmem:[#allocation2 + $0x1c8] sm:$0xff] %vm1014, %v801
    %1073 = vst.msk [vmem:[#allocation2 + $0x1d0] sm:$0xff] %vm1014, %v806
    %1074 = vst.msk [vmem:[#allocation2 + $0x1d8] sm:$0xff] %vm1014, %v811
    %1075 = vst.msk [vmem:[#allocation2 + $0x1e0] sm:$0xff] %vm1014, %v816
    %1076 = vst.msk [vmem:[#allocation2 + $0x1e8] sm:$0xff] %vm1014, %v821
    %1077 = vst.msk [vmem:[#allocation2 + $0x1f0] sm:$0xff] %vm1014, %v826
    %1078 = vst.msk [vmem:[#allocation2 + $0x1f8] sm:$0xff] %vm1014, %v831
    %1079 = vst.msk [vmem:[#allocation2 + $0x200] sm:$0xff] %vm1014, %v836
    %1080 = vst.msk [vmem:[#allocation2 + $0x208] sm:$0xff] %vm1014, %v841
    %1081 = vst.msk [vmem:[#allocation2 + $0x210] sm:$0xff] %vm1014, %v846
    %1082 = vst.msk [vmem:[#allocation2 + $0x218] sm:$0xff] %vm1014, %v851
    %1083 = vst.msk [vmem:[#allocation2 + $0x220] sm:$0xff] %vm1014, %v856
    %1084 = vst.msk [vmem:[#allocation2 + $0x228] sm:$0xff] %vm1014, %v861
    %1085 = vst.msk [vmem:[#allocation2 + $0x230] sm:$0xff] %vm1014, %v866
    %1086 = vst.msk [vmem:[#allocation2 + $0x238] sm:$0xff] %vm1014, %v871
    %1087 = vst.msk [vmem:[#allocation2 + $0x240] sm:$0xff] %vm1014, %v876
    %1088 = vst.msk [vmem:[#allocation2 + $0x248] sm:$0xff] %vm1014, %v881
    %1089 = vst.msk [vmem:[#allocation2 + $0x250] sm:$0xff] %vm1014, %v886
    %1090 = vst.msk [vmem:[#allocation2 + $0x258] sm:$0xff] %vm1014, %v891
    %1091 = vst.msk [vmem:[#allocation2 + $0x260] sm:$0xff] %vm1014, %v896
    %1092 = vst.msk [vmem:[#allocation2 + $0x268] sm:$0xff] %vm1014, %v901
    %1093 = vst.msk [vmem:[#allocation2 + $0x270] sm:$0xff] %vm1014, %v906
    %1094 = vst.msk [vmem:[#allocation2 + $0x278] sm:$0xff] %vm1014, %v911
    %1095 = vst.msk [vmem:[#allocation2 + $0x280] sm:$0xff] %vm1014, %v916
    %1096 = vst.msk [vmem:[#allocation2 + $0x288] sm:$0xff] %vm1014, %v921
    %1097 = vst.msk [vmem:[#allocation2 + $0x290] sm:$0xff] %vm1014, %v926
    %1098 = vst.msk [vmem:[#allocation2 + $0x298] sm:$0xff] %vm1014, %v931
    %1099 = vst.msk [vmem:[#allocation2 + $0x2a0] sm:$0xff] %vm1014, %v936
    %1100 = vst.msk [vmem:[#allocation2 + $0x2a8] sm:$0xff] %vm1014, %v941
    %1101 = vst.msk [vmem:[#allocation2 + $0x2b0] sm:$0xff] %vm1014, %v946
    %1102 = vst.msk [vmem:[#allocation2 + $0x2b8] sm:$0xff] %vm1014, %v951
    %1103 = vst.msk [vmem:[#allocation2 + $0x2c0] sm:$0xff] %vm1014, %v956
    %1104 = vst.msk [vmem:[#allocation2 + $0x2c8] sm:$0xff] %vm1014, %v961
    %1105 = vst.msk [vmem:[#allocation2 + $0x2d0] sm:$0xff] %vm1014, %v966
    %1106 = vst.msk [vmem:[#allocation2 + $0x2d8] sm:$0xff] %vm1014, %v971
    %1107 = vst.msk [vmem:[#allocation2 + $0x2e0] sm:$0xff] %vm1014, %v976
    %1108 = vst.msk [vmem:[#allocation2 + $0x2e8] sm:$0xff] %vm1014, %v981
    %1109 = vst.msk [vmem:[#allocation2 + $0x2f0] sm:$0xff] %vm1014, %v986
    %1110 = vst.msk [vmem:[#allocation2 + $0x2f8] sm:$0xff] %vm1014, %v991
    %1111 = vst.msk [vmem:[#allocation2 + $0x300] sm:$0xff] %vm1014, %v996
    %1112 = vst.msk [vmem:[#allocation2 + $0x308] sm:$0xff] %vm1014, %v1001
    %1113 = vst.msk [vmem:[#allocation2 + $0x310] sm:$0xff] %vm1014, %v1006
    %1114 = vst.msk [vmem:[#allocation2 + $0x318] sm:$0xff] %vm1014, %v1011
    %v1115 = vld [vmem:[%s3] sm:$0x1]
    %v1117 = vlaneseq
    %v1118 = vshrl.u32 %v1117, 7
    %v1119 = vsub.s32 0, %v1118
    %v1120 = vrot.slane %v1115, %v1119
    %v1122 = vadd.f32 %v1120, 0.0
    %v1123 = vld [vmem:[#allocation2 + $0x12c] sm:$0xff]
    %v1124 = vld [vmem:[#allocation2 + $0x134] sm:$0xff]
    %v1125 = vld [vmem:[#allocation2 + $0x13c] sm:$0xff]
    %v1126 = vld [vmem:[#allocation2 + $0x144] sm:$0xff]
    %v1127 = vld [vmem:[#allocation2 + $0x14c] sm:$0xff]
    %v1128 = vld [vmem:[#allocation2 + $0x154] sm:$0xff]
    %v1129 = vld [vmem:[#allocation2 + $0x15c] sm:$0xff]
    %v1130 = vld [vmem:[#allocation2 + $0x164] sm:$0xff]
    %v1131 = vld [vmem:[#allocation2 + $0x16c] sm:$0xff]
    %v1132 = vld [vmem:[#allocation2 + $0x174] sm:$0xff]
    %v1133 = vld [vmem:[#allocation2 + $0x17c] sm:$0xff]
    %v1134 = vld [vmem:[#allocation2 + $0x184] sm:$0x1]
    %v1135 = vld [vmem:[%s2] sm:$0xff]
    %v1136 = vld [vmem:[%s2 + $0x8] sm:$0xff]
    %v1137 = vld [vmem:[%s2 + $0x10] sm:$0xff]
    %v1138 = vld [vmem:[%s2 + $0x18] sm:$0xff]
    %v1139 = vld [vmem:[%s2 + $0x20] sm:$0xf]
    %v1141 = vsel %vm1014, %v1123, 0
    %v1144 = vsel %vm1014, %v1124, 0
    %v1147 = vsel %vm1014, %v1125, 0
    %v1150 = vsel %vm1014, %v1126, 0
    %v1153 = vsel %vm1014, %v1127, 0
    %v1156 = vsel %vm1014, %v1128, 0
    %v1159 = vsel %vm1014, %v1129, 0
    %v1162 = vsel %vm1014, %v1130, 0
    %v1165 = vsel %vm1014, %v1131, 0
    %v1168 = vsel %vm1014, %v1132, 0
    %v1171 = vsel %vm1014, %v1133, 0
    %v1174 = vsel %vm1014, %v1134, 0
    %vm1176 = vcmask 1043456
    %v1178 = vsel %vm1176, %v1139, 0
    %1180 = vmatprep.subr.mxu0 0.0
    %1181 = vmatpush1.msra.mxu0 0.0
    %1182 = vmatprep.subr.mxu0 0.0
    %1183 = vmatpush1.msra.mxu0 0.0
    %1184 = vmatprep.subr.mxu0 0.0
    %1185 = vmatpush1.msra.mxu0 0.0
    %1186 = vmatprep.subr.mxu0 0.0
    %1187 = vmatpush1.msra.mxu0 0.0
    %1188 = vmatprep.subr.mxu0 0.0
    %1189 = vmatpush1.msra.mxu0 0.0
    %1190 = vmatprep.subr.mxu0 0.0
    %1191 = vmatpush1.msra.mxu0 0.0
    %1192 = vmatprep.subr.mxu0 0.0
    %1193 = vmatpush1.msra.mxu0 0.0
    %1194 = vmatprep.subr.mxu0 0.0
    %1195 = vmatpush1.msra.mxu0 0.0
    %1196 = vmatprep.subr.mxu0 0.0
    %1197 = vmatpush1.msra.mxu0 0.0
    %1198 = vmatprep.subr.mxu0 0.0
    %1199 = vmatpush1.msra.mxu0 0.0
    %1200 = vmatprep.subr.mxu0 0.0
    %1201 = vmatpush1.msra.mxu0 0.0
    %1202 = vmatprep.subr.mxu0 0.0
    %1203 = vmatpush1.msra.mxu0 %v1178
    %1204 = vmatprep.subr.mxu0 0.0
    %1205 = vmatpush1.msra.mxu0 %v1138
    %1206 = vmatprep.subr.mxu0 0.0
    %1207 = vmatpush1.msra.mxu0 %v1137
    %1208 = vmatprep.subr.mxu0 0.0
    %1209 = vmatpush1.msra.mxu0 %v1136
    %1210 = vmatprep.subr.mxu0 0.0
    %1211 = vmatpush1.msra.mxu0 %v1135
    %1212 = vmatprep.subr.mxu0 0.0
    %1213 = vmatpush2.msra.mxu0 0.0
    %1214 = vmatprep.subr.mxu0 0.0
    %1215 = vmatpush2.msra.mxu0 0.0
    %1216 = vmatprep.subr.mxu0 0.0
    %1217 = vmatpush2.msra.mxu0 0.0
    %1218 = vmatprep.subr.mxu0 0.0
    %1219 = vmatpush2.msra.mxu0 0.0
    %1220 = vmatprep.subr.mxu0 0.0
    %1221 = vmatpush2.msra.mxu0 0.0
    %1222 = vmatprep.subr.mxu0 0.0
    %1223 = vmatpush2.msra.mxu0 0.0
    %1224 = vmatprep.subr.mxu0 0.0
    %1225 = vmatpush2.msra.mxu0 0.0
    %1226 = vmatprep.subr.mxu0 0.0
    %1227 = vmatpush2.msra.mxu0 0.0
    %1228 = vmatprep.subr.mxu0 0.0
    %1229 = vmatpush2.msra.mxu0 0.0
    %1230 = vmatprep.subr.mxu0 0.0
    %1231 = vmatpush2.msra.mxu0 0.0
    %1232 = vmatprep.subr.mxu0 0.0
    %1233 = vmatpush2.msra.mxu0 0.0
    %1234 = vmatprep.subr.mxu0 0.0
    %1235 = vmatpush2.msra.mxu0 0.0
    %1236 = vmatprep.subr.mxu0 0.0
    %1237 = vmatpush2.msra.mxu0 0.0
    %1238 = vmatprep.subr.mxu0 0.0
    %1239 = vmatpush2.msra.mxu0 0.0
    %1240 = vmatprep.subr.mxu0 0.0
    %1241 = vmatpush2.msra.mxu0 0.0
    %1242 = vmatprep.subr.mxu0 0.0
    %1243 = vmatpush2.msra.mxu0 0.0
    %1244 = vmatprep.mubr.f32.mxu0 0.0
    %1245 = vmatmul.mubr.f32.gmra.mxu0 %v1141
    %v1246 = vpop.f32.mrf.mxu0
    %v1247 = vadd.f32 0.0, %v1246
    %v1248 = vpop.f32.mrf.mxu0
    %1249 = vmatprep.mubr.f32.mxu0 0.0
    %1250 = vmatmul.mubr.f32.gmra.mxu0 %v1144
    %v1251 = vpop.f32.mrf.mxu0
    %v1252 = vadd.f32 0.0, %v1251
    %v1253 = vpop.f32.mrf.mxu0
    %1254 = vmatprep.mubr.f32.mxu0 0.0
    %1255 = vmatmul.mubr.f32.gmra.mxu0 %v1147
    %v1256 = vpop.f32.mrf.mxu0
    %v1257 = vadd.f32 0.0, %v1256
    %v1258 = vpop.f32.mrf.mxu0
    %1259 = vmatprep.mubr.f32.mxu0 0.0
    %1260 = vmatmul.mubr.f32.gmra.mxu0 %v1150
    %v1261 = vpop.f32.mrf.mxu0
    %v1262 = vadd.f32 0.0, %v1261
    %v1263 = vpop.f32.mrf.mxu0
    %1264 = vmatprep.mubr.f32.mxu0 0.0
    %1265 = vmatmul.mubr.f32.gmra.mxu0 %v1153
    %v1266 = vpop.f32.mrf.mxu0
    %v1267 = vadd.f32 0.0, %v1266
    %v1268 = vpop.f32.mrf.mxu0
    %1269 = vmatprep.mubr.f32.mxu0 0.0
    %1270 = vmatmul.mubr.f32.gmra.mxu0 %v1156
    %v1271 = vpop.f32.mrf.mxu0
    %v1272 = vadd.f32 0.0, %v1271
    %v1273 = vpop.f32.mrf.mxu0
    %1274 = vmatprep.mubr.f32.mxu0 0.0
    %1275 = vmatmul.mubr.f32.gmra.mxu0 %v1159
    %v1276 = vpop.f32.mrf.mxu0
    %v1277 = vadd.f32 0.0, %v1276
    %v1278 = vpop.f32.mrf.mxu0
    %1279 = vmatprep.mubr.f32.mxu0 0.0
    %1280 = vmatmul.mubr.f32.gmra.mxu0 %v1162
    %v1281 = vpop.f32.mrf.mxu0
    %v1282 = vadd.f32 0.0, %v1281
    %v1283 = vpop.f32.mrf.mxu0
    %1284 = vmatprep.mubr.f32.mxu0 0.0
    %1285 = vmatmul.mubr.f32.gmra.mxu0 %v1165
    %v1286 = vpop.f32.mrf.mxu0
    %v1287 = vadd.f32 0.0, %v1286
    %v1288 = vpop.f32.mrf.mxu0
    %1289 = vmatprep.mubr.f32.mxu0 0.0
    %1290 = vmatmul.mubr.f32.gmra.mxu0 %v1168
    %v1291 = vpop.f32.mrf.mxu0
    %v1292 = vadd.f32 0.0, %v1291
    %v1293 = vpop.f32.mrf.mxu0
    %1294 = vmatprep.mubr.f32.mxu0 0.0
    %1295 = vmatmul.mubr.f32.gmra.mxu0 %v1171
    %v1296 = vpop.f32.mrf.mxu0
    %v1297 = vadd.f32 0.0, %v1296
    %v1298 = vpop.f32.mrf.mxu0
    %1299 = vmatprep.mubr.f32.mxu0 0.0
    %1300 = vmatmul.mubr.f32.gmra.mxu0 %v1174
    %v1301 = vpop.f32.mrf.mxu0
    %v1302 = vadd.f32 0.0, %v1301
    %v1303 = vpop.f32.mrf.mxu0
    %1304 = vdwg.mxu0
    %v1305 = vadd.f32 %v1122, %v1247
    %v1306 = vadd.f32 %v1122, %v1252
    %v1307 = vadd.f32 %v1122, %v1257
    %v1308 = vadd.f32 %v1122, %v1262
    %v1309 = vadd.f32 %v1122, %v1267
    %v1310 = vadd.f32 %v1122, %v1272
    %v1311 = vadd.f32 %v1122, %v1277
    %v1312 = vadd.f32 %v1122, %v1282
    %v1313 = vadd.f32 %v1122, %v1287
    %v1314 = vadd.f32 %v1122, %v1292
    %v1315 = vadd.f32 %v1122, %v1297
    %v1316 = vadd.f32 %v1122, %v1302
    %v1317 = vld [vmem:[#allocation2 + $0xc9] sm:$0xff]
    %v1318 = vld [vmem:[#allocation2 + $0xd1] sm:$0xff]
    %v1319 = vld [vmem:[#allocation2 + $0xd9] sm:$0xff]
    %v1320 = vld [vmem:[#allocation2 + $0xe1] sm:$0xff]
    %v1321 = vld [vmem:[#allocation2 + $0xe9] sm:$0xff]
    %v1322 = vld [vmem:[#allocation2 + $0xf1] sm:$0xff]
    %v1323 = vld [vmem:[#allocation2 + $0xf9] sm:$0xff]
    %v1324 = vld [vmem:[#allocation2 + $0x101] sm:$0xff]
    %v1325 = vld [vmem:[#allocation2 + $0x109] sm:$0xff]
    %v1326 = vld [vmem:[#allocation2 + $0x111] sm:$0xff]
    %v1327 = vld [vmem:[#allocation2 + $0x119] sm:$0xff]
    %v1328 = vld [vmem:[#allocation2 + $0x121] sm:$0x1]
    %s1329 = scalar_lea.vmem %s2, 40
    %v1330 = vld [vmem:[%s1329] sm:$0xff]
    %v1331 = vld [vmem:[%s1329 + $0x8] sm:$0xff]
    %v1332 = vld [vmem:[%s1329 + $0x10] sm:$0xff]
    %v1333 = vld [vmem:[%s1329 + $0x18] sm:$0xff]
    %v1334 = vld [vmem:[%s1329 + $0x20] sm:$0xf]
    %v1336 = vsel %vm1014, %v1317, 0
    %v1339 = vsel %vm1014, %v1318, 0
    %v1342 = vsel %vm1014, %v1319, 0
    %v1345 = vsel %vm1014, %v1320, 0
    %v1348 = vsel %vm1014, %v1321, 0
    %v1351 = vsel %vm1014, %v1322, 0
    %v1354 = vsel %vm1014, %v1323, 0
    %v1357 = vsel %vm1014, %v1324, 0
    %v1360 = vsel %vm1014, %v1325, 0
    %v1363 = vsel %vm1014, %v1326, 0
    %v1366 = vsel %vm1014, %v1327, 0
    %v1369 = vsel %vm1014, %v1328, 0
    %v1372 = vsel %vm1176, %v1334, 0
    %1374 = vmatprep.subr.mxu0 0.0
    %1375 = vmatpush1.msra.mxu0 0.0
    %1376 = vmatprep.subr.mxu0 0.0
    %1377 = vmatpush1.msra.mxu0 0.0
    %1378 = vmatprep.subr.mxu0 0.0
    %1379 = vmatpush1.msra.mxu0 0.0
    %1380 = vmatprep.subr.mxu0 0.0
    %1381 = vmatpush1.msra.mxu0 0.0
    %1382 = vmatprep.subr.mxu0 0.0
    %1383 = vmatpush1.msra.mxu0 0.0
    %1384 = vmatprep.subr.mxu0 0.0
    %1385 = vmatpush1.msra.mxu0 0.0
    %1386 = vmatprep.subr.mxu0 0.0
    %1387 = vmatpush1.msra.mxu0 0.0
    %1388 = vmatprep.subr.mxu0 0.0
    %1389 = vmatpush1.msra.mxu0 0.0
    %1390 = vmatprep.subr.mxu0 0.0
    %1391 = vmatpush1.msra.mxu0 0.0
    %1392 = vmatprep.subr.mxu0 0.0
    %1393 = vmatpush1.msra.mxu0 0.0
    %1394 = vmatprep.subr.mxu0 0.0
    %1395 = vmatpush1.msra.mxu0 0.0
    %1396 = vmatprep.subr.mxu0 0.0
    %1397 = vmatpush1.msra.mxu0 %v1372
    %1398 = vmatprep.subr.mxu0 0.0
    %1399 = vmatpush1.msra.mxu0 %v1333
    %1400 = vmatprep.subr.mxu0 0.0
    %1401 = vmatpush1.msra.mxu0 %v1332
    %1402 = vmatprep.subr.mxu0 0.0
    %1403 = vmatpush1.msra.mxu0 %v1331
    %1404 = vmatprep.subr.mxu0 0.0
    %1405 = vmatpush1.msra.mxu0 %v1330
    %1406 = vmatprep.subr.mxu0 0.0
    %1407 = vmatpush2.msra.mxu0 0.0
    %1408 = vmatprep.subr.mxu0 0.0
    %1409 = vmatpush2.msra.mxu0 0.0
    %1410 = vmatprep.subr.mxu0 0.0
    %1411 = vmatpush2.msra.mxu0 0.0
    %1412 = vmatprep.subr.mxu0 0.0
    %1413 = vmatpush2.msra.mxu0 0.0
    %1414 = vmatprep.subr.mxu0 0.0
    %1415 = vmatpush2.msra.mxu0 0.0
    %1416 = vmatprep.subr.mxu0 0.0
    %1417 = vmatpush2.msra.mxu0 0.0
    %1418 = vmatprep.subr.mxu0 0.0
    %1419 = vmatpush2.msra.mxu0 0.0
    %1420 = vmatprep.subr.mxu0 0.0
    %1421 = vmatpush2.msra.mxu0 0.0
    %1422 = vmatprep.subr.mxu0 0.0
    %1423 = vmatpush2.msra.mxu0 0.0
    %1424 = vmatprep.subr.mxu0 0.0
    %1425 = vmatpush2.msra.mxu0 0.0
    %1426 = vmatprep.subr.mxu0 0.0
    %1427 = vmatpush2.msra.mxu0 0.0
    %1428 = vmatprep.subr.mxu0 0.0
    %1429 = vmatpush2.msra.mxu0 0.0
    %1430 = vmatprep.subr.mxu0 0.0
    %1431 = vmatpush2.msra.mxu0 0.0
    %1432 = vmatprep.subr.mxu0 0.0
    %1433 = vmatpush2.msra.mxu0 0.0
    %1434 = vmatprep.subr.mxu0 0.0
    %1435 = vmatpush2.msra.mxu0 0.0
    %1436 = vmatprep.subr.mxu0 0.0
    %1437 = vmatpush2.msra.mxu0 0.0
    %1438 = vmatprep.mubr.f32.mxu0 0.0
    %1439 = vmatmul.mubr.f32.gmra.mxu0 %v1336
    %v1440 = vpop.f32.mrf.mxu0
    %v1441 = vadd.f32 0.0, %v1440
    %v1442 = vpop.f32.mrf.mxu0
    %1443 = vmatprep.mubr.f32.mxu0 0.0
    %1444 = vmatmul.mubr.f32.gmra.mxu0 %v1339
    %v1445 = vpop.f32.mrf.mxu0
    %v1446 = vadd.f32 0.0, %v1445
    %v1447 = vpop.f32.mrf.mxu0
    %1448 = vmatprep.mubr.f32.mxu0 0.0
    %1449 = vmatmul.mubr.f32.gmra.mxu0 %v1342
    %v1450 = vpop.f32.mrf.mxu0
    %v1451 = vadd.f32 0.0, %v1450
    %v1452 = vpop.f32.mrf.mxu0
    %1453 = vmatprep.mubr.f32.mxu0 0.0
    %1454 = vmatmul.mubr.f32.gmra.mxu0 %v1345
    %v1455 = vpop.f32.mrf.mxu0
    %v1456 = vadd.f32 0.0, %v1455
    %v1457 = vpop.f32.mrf.mxu0
    %1458 = vmatprep.mubr.f32.mxu0 0.0
    %1459 = vmatmul.mubr.f32.gmra.mxu0 %v1348
    %v1460 = vpop.f32.mrf.mxu0
    %v1461 = vadd.f32 0.0, %v1460
    %v1462 = vpop.f32.mrf.mxu0
    %1463 = vmatprep.mubr.f32.mxu0 0.0
    %1464 = vmatmul.mubr.f32.gmra.mxu0 %v1351
    %v1465 = vpop.f32.mrf.mxu0
    %v1466 = vadd.f32 0.0, %v1465
    %v1467 = vpop.f32.mrf.mxu0
    %1468 = vmatprep.mubr.f32.mxu0 0.0
    %1469 = vmatmul.mubr.f32.gmra.mxu0 %v1354
    %v1470 = vpop.f32.mrf.mxu0
    %v1471 = vadd.f32 0.0, %v1470
    %v1472 = vpop.f32.mrf.mxu0
    %1473 = vmatprep.mubr.f32.mxu0 0.0
    %1474 = vmatmul.mubr.f32.gmra.mxu0 %v1357
    %v1475 = vpop.f32.mrf.mxu0
    %v1476 = vadd.f32 0.0, %v1475
    %v1477 = vpop.f32.mrf.mxu0
    %1478 = vmatprep.mubr.f32.mxu0 0.0
    %1479 = vmatmul.mubr.f32.gmra.mxu0 %v1360
    %v1480 = vpop.f32.mrf.mxu0
    %v1481 = vadd.f32 0.0, %v1480
    %v1482 = vpop.f32.mrf.mxu0
    %1483 = vmatprep.mubr.f32.mxu0 0.0
    %1484 = vmatmul.mubr.f32.gmra.mxu0 %v1363
    %v1485 = vpop.f32.mrf.mxu0
    %v1486 = vadd.f32 0.0, %v1485
    %v1487 = vpop.f32.mrf.mxu0
    %1488 = vmatprep.mubr.f32.mxu0 0.0
    %1489 = vmatmul.mubr.f32.gmra.mxu0 %v1366
    %v1490 = vpop.f32.mrf.mxu0
    %v1491 = vadd.f32 0.0, %v1490
    %v1492 = vpop.f32.mrf.mxu0
    %1493 = vmatprep.mubr.f32.mxu0 0.0
    %1494 = vmatmul.mubr.f32.gmra.mxu0 %v1369
    %v1495 = vpop.f32.mrf.mxu0
    %v1496 = vadd.f32 0.0, %v1495
    %v1497 = vpop.f32.mrf.mxu0
    %1498 = vdwg.mxu0
    %v1499 = vadd.f32 %v1305, %v1441
    %v1500 = vadd.f32 %v1306, %v1446
    %v1501 = vadd.f32 %v1307, %v1451
    %v1502 = vadd.f32 %v1308, %v1456
    %v1503 = vadd.f32 %v1309, %v1461
    %v1504 = vadd.f32 %v1310, %v1466
    %v1505 = vadd.f32 %v1311, %v1471
    %v1506 = vadd.f32 %v1312, %v1476
    %v1507 = vadd.f32 %v1313, %v1481
    %v1508 = vadd.f32 %v1314, %v1486
    %v1509 = vadd.f32 %v1315, %v1491
    %v1510 = vadd.f32 %v1316, %v1496
    %v1511 = vld [vmem:[#allocation2 + $0x12d] sm:$0xff]
    %v1512 = vld [vmem:[#allocation2 + $0x135] sm:$0xff]
    %v1513 = vld [vmem:[#allocation2 + $0x13d] sm:$0xff]
    %v1514 = vld [vmem:[#allocation2 + $0x145] sm:$0xff]
    %v1515 = vld [vmem:[#allocation2 + $0x14d] sm:$0xff]
    %v1516 = vld [vmem:[#allocation2 + $0x155] sm:$0xff]
    %v1517 = vld [vmem:[#allocation2 + $0x15d] sm:$0xff]
    %v1518 = vld [vmem:[#allocation2 + $0x165] sm:$0xff]
    %v1519 = vld [vmem:[#allocation2 + $0x16d] sm:$0xff]
    %v1520 = vld [vmem:[#allocation2 + $0x175] sm:$0xff]
    %v1521 = vld [vmem:[#allocation2 + $0x17d] sm:$0xff]
    %v1522 = vld [vmem:[#allocation2 + $0x185] sm:$0x1]
    %s1523 = scalar_lea.vmem %s2, 80
    %v1524 = vld [vmem:[%s1523] sm:$0xff]
    %v1525 = vld [vmem:[%s1523 + $0x8] sm:$0xff]
    %v1526 = vld [vmem:[%s1523 + $0x10] sm:$0xff]
    %v1527 = vld [vmem:[%s1523 + $0x18] sm:$0xff]
    %v1528 = vld [vmem:[%s1523 + $0x20] sm:$0xf]
    %v1530 = vsel %vm1014, %v1511, 0
    %v1533 = vsel %vm1014, %v1512, 0
    %v1536 = vsel %vm1014, %v1513, 0
    %v1539 = vsel %vm1014, %v1514, 0
    %v1542 = vsel %vm1014, %v1515, 0
    %v1545 = vsel %vm1014, %v1516, 0
    %v1548 = vsel %vm1014, %v1517, 0
    %v1551 = vsel %vm1014, %v1518, 0
    %v1554 = vsel %vm1014, %v1519, 0
    %v1557 = vsel %vm1014, %v1520, 0
    %v1560 = vsel %vm1014, %v1521, 0
    %v1563 = vsel %vm1014, %v1522, 0
    %v1566 = vsel %vm1176, %v1528, 0
    %1568 = vmatprep.subr.mxu0 0.0
    %1569 = vmatpush1.msra.mxu0 0.0
    %1570 = vmatprep.subr.mxu0 0.0
    %1571 = vmatpush1.msra.mxu0 0.0
    %1572 = vmatprep.subr.mxu0 0.0
    %1573 = vmatpush1.msra.mxu0 0.0
    %1574 = vmatprep.subr.mxu0 0.0
    %1575 = vmatpush1.msra.mxu0 0.0
    %1576 = vmatprep.subr.mxu0 0.0
    %1577 = vmatpush1.msra.mxu0 0.0
    %1578 = vmatprep.subr.mxu0 0.0
    %1579 = vmatpush1.msra.mxu0 0.0
    %1580 = vmatprep.subr.mxu0 0.0
    %1581 = vmatpush1.msra.mxu0 0.0
    %1582 = vmatprep.subr.mxu0 0.0
    %1583 = vmatpush1.msra.mxu0 0.0
    %1584 = vmatprep.subr.mxu0 0.0
    %1585 = vmatpush1.msra.mxu0 0.0
    %1586 = vmatprep.subr.mxu0 0.0
    %1587 = vmatpush1.msra.mxu0 0.0
    %1588 = vmatprep.subr.mxu0 0.0
    %1589 = vmatpush1.msra.mxu0 0.0
    %1590 = vmatprep.subr.mxu0 0.0
    %1591 = vmatpush1.msra.mxu0 %v1566
    %1592 = vmatprep.subr.mxu0 0.0
    %1593 = vmatpush1.msra.mxu0 %v1527
    %1594 = vmatprep.subr.mxu0 0.0
    %1595 = vmatpush1.msra.mxu0 %v1526
    %1596 = vmatprep.subr.mxu0 0.0
    %1597 = vmatpush1.msra.mxu0 %v1525
    %1598 = vmatprep.subr.mxu0 0.0
    %1599 = vmatpush1.msra.mxu0 %v1524
    %1600 = vmatprep.subr.mxu0 0.0
    %1601 = vmatpush2.msra.mxu0 0.0
    %1602 = vmatprep.subr.mxu0 0.0
    %1603 = vmatpush2.msra.mxu0 0.0
    %1604 = vmatprep.subr.mxu0 0.0
    %1605 = vmatpush2.msra.mxu0 0.0
    %1606 = vmatprep.subr.mxu0 0.0
    %1607 = vmatpush2.msra.mxu0 0.0
    %1608 = vmatprep.subr.mxu0 0.0
    %1609 = vmatpush2.msra.mxu0 0.0
    %1610 = vmatprep.subr.mxu0 0.0
    %1611 = vmatpush2.msra.mxu0 0.0
    %1612 = vmatprep.subr.mxu0 0.0
    %1613 = vmatpush2.msra.mxu0 0.0
    %1614 = vmatprep.subr.mxu0 0.0
    %1615 = vmatpush2.msra.mxu0 0.0
    %1616 = vmatprep.subr.mxu0 0.0
    %1617 = vmatpush2.msra.mxu0 0.0
    %1618 = vmatprep.subr.mxu0 0.0
    %1619 = vmatpush2.msra.mxu0 0.0
    %1620 = vmatprep.subr.mxu0 0.0
    %1621 = vmatpush2.msra.mxu0 0.0
    %1622 = vmatprep.subr.mxu0 0.0
    %1623 = vmatpush2.msra.mxu0 0.0
    %1624 = vmatprep.subr.mxu0 0.0
    %1625 = vmatpush2.msra.mxu0 0.0
    %1626 = vmatprep.subr.mxu0 0.0
    %1627 = vmatpush2.msra.mxu0 0.0
    %1628 = vmatprep.subr.mxu0 0.0
    %1629 = vmatpush2.msra.mxu0 0.0
    %1630 = vmatprep.subr.mxu0 0.0
    %1631 = vmatpush2.msra.mxu0 0.0
    %1632 = vmatprep.mubr.f32.mxu0 0.0
    %1633 = vmatmul.mubr.f32.gmra.mxu0 %v1530
    %v1634 = vpop.f32.mrf.mxu0
    %v1635 = vadd.f32 0.0, %v1634
    %v1636 = vpop.f32.mrf.mxu0
    %1637 = vmatprep.mubr.f32.mxu0 0.0
    %1638 = vmatmul.mubr.f32.gmra.mxu0 %v1533
    %v1639 = vpop.f32.mrf.mxu0
    %v1640 = vadd.f32 0.0, %v1639
    %v1641 = vpop.f32.mrf.mxu0
    %1642 = vmatprep.mubr.f32.mxu0 0.0
    %1643 = vmatmul.mubr.f32.gmra.mxu0 %v1536
    %v1644 = vpop.f32.mrf.mxu0
    %v1645 = vadd.f32 0.0, %v1644
    %v1646 = vpop.f32.mrf.mxu0
    %1647 = vmatprep.mubr.f32.mxu0 0.0
    %1648 = vmatmul.mubr.f32.gmra.mxu0 %v1539
    %v1649 = vpop.f32.mrf.mxu0
    %v1650 = vadd.f32 0.0, %v1649
    %v1651 = vpop.f32.mrf.mxu0
    %1652 = vmatprep.mubr.f32.mxu0 0.0
    %1653 = vmatmul.mubr.f32.gmra.mxu0 %v1542
    %v1654 = vpop.f32.mrf.mxu0
    %v1655 = vadd.f32 0.0, %v1654
    %v1656 = vpop.f32.mrf.mxu0
    %1657 = vmatprep.mubr.f32.mxu0 0.0
    %1658 = vmatmul.mubr.f32.gmra.mxu0 %v1545
    %v1659 = vpop.f32.mrf.mxu0
    %v1660 = vadd.f32 0.0, %v1659
    %v1661 = vpop.f32.mrf.mxu0
    %1662 = vmatprep.mubr.f32.mxu0 0.0
    %1663 = vmatmul.mubr.f32.gmra.mxu0 %v1548
    %v1664 = vpop.f32.mrf.mxu0
    %v1665 = vadd.f32 0.0, %v1664
    %v1666 = vpop.f32.mrf.mxu0
    %1667 = vmatprep.mubr.f32.mxu0 0.0
    %1668 = vmatmul.mubr.f32.gmra.mxu0 %v1551
    %v1669 = vpop.f32.mrf.mxu0
    %v1670 = vadd.f32 0.0, %v1669
    %v1671 = vpop.f32.mrf.mxu0
    %1672 = vmatprep.mubr.f32.mxu0 0.0
    %1673 = vmatmul.mubr.f32.gmra.mxu0 %v1554
    %v1674 = vpop.f32.mrf.mxu0
    %v1675 = vadd.f32 0.0, %v1674
    %v1676 = vpop.f32.mrf.mxu0
    %1677 = vmatprep.mubr.f32.mxu0 0.0
    %1678 = vmatmul.mubr.f32.gmra.mxu0 %v1557
    %v1679 = vpop.f32.mrf.mxu0
    %v1680 = vadd.f32 0.0, %v1679
    %v1681 = vpop.f32.mrf.mxu0
    %1682 = vmatprep.mubr.f32.mxu0 0.0
    %1683 = vmatmul.mubr.f32.gmra.mxu0 %v1560
    %v1684 = vpop.f32.mrf.mxu0
    %v1685 = vadd.f32 0.0, %v1684
    %v1686 = vpop.f32.mrf.mxu0
    %1687 = vmatprep.mubr.f32.mxu0 0.0
    %1688 = vmatmul.mubr.f32.gmra.mxu0 %v1563
    %v1689 = vpop.f32.mrf.mxu0
    %v1690 = vadd.f32 0.0, %v1689
    %v1691 = vpop.f32.mrf.mxu0
    %1692 = vdwg.mxu0
    %v1693 = vadd.f32 %v1499, %v1635
    %v1694 = vadd.f32 %v1500, %v1640
    %v1695 = vadd.f32 %v1501, %v1645
    %v1696 = vadd.f32 %v1502, %v1650
    %v1697 = vadd.f32 %v1503, %v1655
    %v1698 = vadd.f32 %v1504, %v1660
    %v1699 = vadd.f32 %v1505, %v1665
    %v1700 = vadd.f32 %v1506, %v1670
    %v1701 = vadd.f32 %v1507, %v1675
    %v1702 = vadd.f32 %v1508, %v1680
    %v1703 = vadd.f32 %v1509, %v1685
    %v1704 = vadd.f32 %v1510, %v1690
    %v1705 = vld [vmem:[#allocation2 + $0x6e] sm:$0xff]
    %v1706 = vld [vmem:[#allocation2 + $0x76] sm:$0xff]
    %v1707 = vld [vmem:[#allocation2 + $0x7e] sm:$0xff]
    %v1708 = vld [vmem:[#allocation2 + $0x86] sm:$0xff]
    %v1709 = vld [vmem:[#allocation2 + $0x8e] sm:$0xff]
    %v1710 = vld [vmem:[#allocation2 + $0x96] sm:$0xff]
    %v1711 = vld [vmem:[#allocation2 + $0x9e] sm:$0xff]
    %v1712 = vld [vmem:[#allocation2 + $0xa6] sm:$0xff]
    %v1713 = vld [vmem:[#allocation2 + $0xae] sm:$0xff]
    %v1714 = vld [vmem:[#allocation2 + $0xb6] sm:$0xff]
    %v1715 = vld [vmem:[#allocation2 + $0xbe] sm:$0xff]
    %v1716 = vld [vmem:[#allocation2 + $0xc6] sm:$0x1]
    %s1717 = scalar_lea.vmem %s2, 120
    %v1718 = vld [vmem:[%s1717] sm:$0xff]
    %v1719 = vld [vmem:[%s1717 + $0x8] sm:$0xff]
    %v1720 = vld [vmem:[%s1717 + $0x10] sm:$0xff]
    %v1721 = vld [vmem:[%s1717 + $0x18] sm:$0xff]
    %v1722 = vld [vmem:[%s1717 + $0x20] sm:$0xf]
    %v1724 = vsel %vm1014, %v1705, 0
    %v1727 = vsel %vm1014, %v1706, 0
    %v1730 = vsel %vm1014, %v1707, 0
    %v1733 = vsel %vm1014, %v1708, 0
    %v1736 = vsel %vm1014, %v1709, 0
    %v1739 = vsel %vm1014, %v1710, 0
    %v1742 = vsel %vm1014, %v1711, 0
    %v1745 = vsel %vm1014, %v1712, 0
    %v1748 = vsel %vm1014, %v1713, 0
    %v1751 = vsel %vm1014, %v1714, 0
    %v1754 = vsel %vm1014, %v1715, 0
    %v1757 = vsel %vm1014, %v1716, 0
    %v1760 = vsel %vm1176, %v1722, 0
    %1762 = vmatprep.subr.mxu0 0.0
    %1763 = vmatpush1.msra.mxu0 0.0
    %1764 = vmatprep.subr.mxu0 0.0
    %1765 = vmatpush1.msra.mxu0 0.0
    %1766 = vmatprep.subr.mxu0 0.0
    %1767 = vmatpush1.msra.mxu0 0.0
    %1768 = vmatprep.subr.mxu0 0.0
    %1769 = vmatpush1.msra.mxu0 0.0
    %1770 = vmatprep.subr.mxu0 0.0
    %1771 = vmatpush1.msra.mxu0 0.0
    %1772 = vmatprep.subr.mxu0 0.0
    %1773 = vmatpush1.msra.mxu0 0.0
    %1774 = vmatprep.subr.mxu0 0.0
    %1775 = vmatpush1.msra.mxu0 0.0
    %1776 = vmatprep.subr.mxu0 0.0
    %1777 = vmatpush1.msra.mxu0 0.0
    %1778 = vmatprep.subr.mxu0 0.0
    %1779 = vmatpush1.msra.mxu0 0.0
    %1780 = vmatprep.subr.mxu0 0.0
    %1781 = vmatpush1.msra.mxu0 0.0
    %1782 = vmatprep.subr.mxu0 0.0
    %1783 = vmatpush1.msra.mxu0 0.0
    %1784 = vmatprep.subr.mxu0 0.0
    %1785 = vmatpush1.msra.mxu0 %v1760
    %1786 = vmatprep.subr.mxu0 0.0
    %1787 = vmatpush1.msra.mxu0 %v1721
    %1788 = vmatprep.subr.mxu0 0.0
    %1789 = vmatpush1.msra.mxu0 %v1720
    %1790 = vmatprep.subr.mxu0 0.0
    %1791 = vmatpush1.msra.mxu0 %v1719
    %1792 = vmatprep.subr.mxu0 0.0
    %1793 = vmatpush1.msra.mxu0 %v1718
    %1794 = vmatprep.subr.mxu0 0.0
    %1795 = vmatpush2.msra.mxu0 0.0
    %1796 = vmatprep.subr.mxu0 0.0
    %1797 = vmatpush2.msra.mxu0 0.0
    %1798 = vmatprep.subr.mxu0 0.0
    %1799 = vmatpush2.msra.mxu0 0.0
    %1800 = vmatprep.subr.mxu0 0.0
    %1801 = vmatpush2.msra.mxu0 0.0
    %1802 = vmatprep.subr.mxu0 0.0
    %1803 = vmatpush2.msra.mxu0 0.0
    %1804 = vmatprep.subr.mxu0 0.0
    %1805 = vmatpush2.msra.mxu0 0.0
    %1806 = vmatprep.subr.mxu0 0.0
    %1807 = vmatpush2.msra.mxu0 0.0
    %1808 = vmatprep.subr.mxu0 0.0
    %1809 = vmatpush2.msra.mxu0 0.0
    %1810 = vmatprep.subr.mxu0 0.0
    %1811 = vmatpush2.msra.mxu0 0.0
    %1812 = vmatprep.subr.mxu0 0.0
    %1813 = vmatpush2.msra.mxu0 0.0
    %1814 = vmatprep.subr.mxu0 0.0
    %1815 = vmatpush2.msra.mxu0 0.0
    %1816 = vmatprep.subr.mxu0 0.0
    %1817 = vmatpush2.msra.mxu0 0.0
    %1818 = vmatprep.subr.mxu0 0.0
    %1819 = vmatpush2.msra.mxu0 0.0
    %1820 = vmatprep.subr.mxu0 0.0
    %1821 = vmatpush2.msra.mxu0 0.0
    %1822 = vmatprep.subr.mxu0 0.0
    %1823 = vmatpush2.msra.mxu0 0.0
    %1824 = vmatprep.subr.mxu0 0.0
    %1825 = vmatpush2.msra.mxu0 0.0
    %1826 = vmatprep.mubr.f32.mxu0 0.0
    %1827 = vmatmul.mubr.f32.gmra.mxu0 %v1724
    %v1828 = vpop.f32.mrf.mxu0
    %v1829 = vadd.f32 0.0, %v1828
    %v1830 = vpop.f32.mrf.mxu0
    %1831 = vmatprep.mubr.f32.mxu0 0.0
    %1832 = vmatmul.mubr.f32.gmra.mxu0 %v1727
    %v1833 = vpop.f32.mrf.mxu0
    %v1834 = vadd.f32 0.0, %v1833
    %v1835 = vpop.f32.mrf.mxu0
    %1836 = vmatprep.mubr.f32.mxu0 0.0
    %1837 = vmatmul.mubr.f32.gmra.mxu0 %v1730
    %v1838 = vpop.f32.mrf.mxu0
    %v1839 = vadd.f32 0.0, %v1838
    %v1840 = vpop.f32.mrf.mxu0
    %1841 = vmatprep.mubr.f32.mxu0 0.0
    %1842 = vmatmul.mubr.f32.gmra.mxu0 %v1733
    %v1843 = vpop.f32.mrf.mxu0
    %v1844 = vadd.f32 0.0, %v1843
    %v1845 = vpop.f32.mrf.mxu0
    %1846 = vmatprep.mubr.f32.mxu0 0.0
    %1847 = vmatmul.mubr.f32.gmra.mxu0 %v1736
    %v1848 = vpop.f32.mrf.mxu0
    %v1849 = vadd.f32 0.0, %v1848
    %v1850 = vpop.f32.mrf.mxu0
    %1851 = vmatprep.mubr.f32.mxu0 0.0
    %1852 = vmatmul.mubr.f32.gmra.mxu0 %v1739
    %v1853 = vpop.f32.mrf.mxu0
    %v1854 = vadd.f32 0.0, %v1853
    %v1855 = vpop.f32.mrf.mxu0
    %1856 = vmatprep.mubr.f32.mxu0 0.0
    %1857 = vmatmul.mubr.f32.gmra.mxu0 %v1742
    %v1858 = vpop.f32.mrf.mxu0
    %v1859 = vadd.f32 0.0, %v1858
    %v1860 = vpop.f32.mrf.mxu0
    %1861 = vmatprep.mubr.f32.mxu0 0.0
    %1862 = vmatmul.mubr.f32.gmra.mxu0 %v1745
    %v1863 = vpop.f32.mrf.mxu0
    %v1864 = vadd.f32 0.0, %v1863
    %v1865 = vpop.f32.mrf.mxu0
    %1866 = vmatprep.mubr.f32.mxu0 0.0
    %1867 = vmatmul.mubr.f32.gmra.mxu0 %v1748
    %v1868 = vpop.f32.mrf.mxu0
    %v1869 = vadd.f32 0.0, %v1868
    %v1870 = vpop.f32.mrf.mxu0
    %1871 = vmatprep.mubr.f32.mxu0 0.0
    %1872 = vmatmul.mubr.f32.gmra.mxu0 %v1751
    %v1873 = vpop.f32.mrf.mxu0
    %v1874 = vadd.f32 0.0, %v1873
    %v1875 = vpop.f32.mrf.mxu0
    %1876 = vmatprep.mubr.f32.mxu0 0.0
    %1877 = vmatmul.mubr.f32.gmra.mxu0 %v1754
    %v1878 = vpop.f32.mrf.mxu0
    %v1879 = vadd.f32 0.0, %v1878
    %v1880 = vpop.f32.mrf.mxu0
    %1881 = vmatprep.mubr.f32.mxu0 0.0
    %1882 = vmatmul.mubr.f32.gmra.mxu0 %v1757
    %v1883 = vpop.f32.mrf.mxu0
    %v1884 = vadd.f32 0.0, %v1883
    %v1885 = vpop.f32.mrf.mxu0
    %1886 = vdwg.mxu0
    %v1887 = vadd.f32 %v1693, %v1829
    %v1888 = vadd.f32 %v1694, %v1834
    %v1889 = vadd.f32 %v1695, %v1839
    %v1890 = vadd.f32 %v1696, %v1844
    %v1891 = vadd.f32 %v1697, %v1849
    %v1892 = vadd.f32 %v1698, %v1854
    %v1893 = vadd.f32 %v1699, %v1859
    %v1894 = vadd.f32 %v1700, %v1864
    %v1895 = vadd.f32 %v1701, %v1869
    %v1896 = vadd.f32 %v1702, %v1874
    %v1897 = vadd.f32 %v1703, %v1879
    %v1898 = vadd.f32 %v1704, %v1884
    %v1899 = vld [vmem:[#allocation2 + $0xb] sm:$0xff]
    %v1900 = vld [vmem:[#allocation2 + $0x13] sm:$0xff]
    %v1901 = vld [vmem:[#allocation2 + $0x1b] sm:$0xff]
    %v1902 = vld [vmem:[#allocation2 + $0x23] sm:$0xff]
    %v1903 = vld [vmem:[#allocation2 + $0x2b] sm:$0xff]
    %v1904 = vld [vmem:[#allocation2 + $0x33] sm:$0xff]
    %v1905 = vld [vmem:[#allocation2 + $0x3b] sm:$0xff]
    %v1906 = vld [vmem:[#allocation2 + $0x43] sm:$0xff]
    %v1907 = vld [vmem:[#allocation2 + $0x4b] sm:$0xff]
    %v1908 = vld [vmem:[#allocation2 + $0x53] sm:$0xff]
    %v1909 = vld [vmem:[#allocation2 + $0x5b] sm:$0xff]
    %v1910 = vld [vmem:[#allocation2 + $0x63] sm:$0x1]
    %s1911 = scalar_lea.vmem %s2, 160
    %v1912 = vld [vmem:[%s1911] sm:$0xff]
    %v1913 = vld [vmem:[%s1911 + $0x8] sm:$0xff]
    %v1914 = vld [vmem:[%s1911 + $0x10] sm:$0xff]
    %v1915 = vld [vmem:[%s1911 + $0x18] sm:$0xff]
    %v1916 = vld [vmem:[%s1911 + $0x20] sm:$0xf]
    %v1918 = vsel %vm1014, %v1899, 0
    %v1921 = vsel %vm1014, %v1900, 0
    %v1924 = vsel %vm1014, %v1901, 0
    %v1927 = vsel %vm1014, %v1902, 0
    %v1930 = vsel %vm1014, %v1903, 0
    %v1933 = vsel %vm1014, %v1904, 0
    %v1936 = vsel %vm1014, %v1905, 0
    %v1939 = vsel %vm1014, %v1906, 0
    %v1942 = vsel %vm1014, %v1907, 0
    %v1945 = vsel %vm1014, %v1908, 0
    %v1948 = vsel %vm1014, %v1909, 0
    %v1951 = vsel %vm1014, %v1910, 0
    %v1954 = vsel %vm1176, %v1916, 0
    %1956 = vmatprep.subr.mxu0 0.0
    %1957 = vmatpush1.msra.mxu0 0.0
    %1958 = vmatprep.subr.mxu0 0.0
    %1959 = vmatpush1.msra.mxu0 0.0
    %1960 = vmatprep.subr.mxu0 0.0
    %1961 = vmatpush1.msra.mxu0 0.0
    %1962 = vmatprep.subr.mxu0 0.0
    %1963 = vmatpush1.msra.mxu0 0.0
    %1964 = vmatprep.subr.mxu0 0.0
    %1965 = vmatpush1.msra.mxu0 0.0
    %1966 = vmatprep.subr.mxu0 0.0
    %1967 = vmatpush1.msra.mxu0 0.0
    %1968 = vmatprep.subr.mxu0 0.0
    %1969 = vmatpush1.msra.mxu0 0.0
    %1970 = vmatprep.subr.mxu0 0.0
    %1971 = vmatpush1.msra.mxu0 0.0
    %1972 = vmatprep.subr.mxu0 0.0
    %1973 = vmatpush1.msra.mxu0 0.0
    %1974 = vmatprep.subr.mxu0 0.0
    %1975 = vmatpush1.msra.mxu0 0.0
    %1976 = vmatprep.subr.mxu0 0.0
    %1977 = vmatpush1.msra.mxu0 0.0
    %1978 = vmatprep.subr.mxu0 0.0
    %1979 = vmatpush1.msra.mxu0 %v1954
    %1980 = vmatprep.subr.mxu0 0.0
    %1981 = vmatpush1.msra.mxu0 %v1915
    %1982 = vmatprep.subr.mxu0 0.0
    %1983 = vmatpush1.msra.mxu0 %v1914
    %1984 = vmatprep.subr.mxu0 0.0
    %1985 = vmatpush1.msra.mxu0 %v1913
    %1986 = vmatprep.subr.mxu0 0.0
    %1987 = vmatpush1.msra.mxu0 %v1912
    %1988 = vmatprep.subr.mxu0 0.0
    %1989 = vmatpush2.msra.mxu0 0.0
    %1990 = vmatprep.subr.mxu0 0.0
    %1991 = vmatpush2.msra.mxu0 0.0
    %1992 = vmatprep.subr.mxu0 0.0
    %1993 = vmatpush2.msra.mxu0 0.0
    %1994 = vmatprep.subr.mxu0 0.0
    %1995 = vmatpush2.msra.mxu0 0.0
    %1996 = vmatprep.subr.mxu0 0.0
    %1997 = vmatpush2.msra.mxu0 0.0
    %1998 = vmatprep.subr.mxu0 0.0
    %1999 = vmatpush2.msra.mxu0 0.0
    %2000 = vmatprep.subr.mxu0 0.0
    %2001 = vmatpush2.msra.mxu0 0.0
    %2002 = vmatprep.subr.mxu0 0.0
    %2003 = vmatpush2.msra.mxu0 0.0
    %2004 = vmatprep.subr.mxu0 0.0
    %2005 = vmatpush2.msra.mxu0 0.0
    %2006 = vmatprep.subr.mxu0 0.0
    %2007 = vmatpush2.msra.mxu0 0.0
    %2008 = vmatprep.subr.mxu0 0.0
    %2009 = vmatpush2.msra.mxu0 0.0
    %2010 = vmatprep.subr.mxu0 0.0
    %2011 = vmatpush2.msra.mxu0 0.0
    %2012 = vmatprep.subr.mxu0 0.0
    %2013 = vmatpush2.msra.mxu0 0.0
    %2014 = vmatprep.subr.mxu0 0.0
    %2015 = vmatpush2.msra.mxu0 0.0
    %2016 = vmatprep.subr.mxu0 0.0
    %2017 = vmatpush2.msra.mxu0 0.0
    %2018 = vmatprep.subr.mxu0 0.0
    %2019 = vmatpush2.msra.mxu0 0.0
    %2020 = vmatprep.mubr.f32.mxu0 0.0
    %2021 = vmatmul.mubr.f32.gmra.mxu0 %v1918
    %v2022 = vpop.f32.mrf.mxu0
    %v2023 = vadd.f32 0.0, %v2022
    %v2024 = vpop.f32.mrf.mxu0
    %2025 = vmatprep.mubr.f32.mxu0 0.0
    %2026 = vmatmul.mubr.f32.gmra.mxu0 %v1921
    %v2027 = vpop.f32.mrf.mxu0
    %v2028 = vadd.f32 0.0, %v2027
    %v2029 = vpop.f32.mrf.mxu0
    %2030 = vmatprep.mubr.f32.mxu0 0.0
    %2031 = vmatmul.mubr.f32.gmra.mxu0 %v1924
    %v2032 = vpop.f32.mrf.mxu0
    %v2033 = vadd.f32 0.0, %v2032
    %v2034 = vpop.f32.mrf.mxu0
    %2035 = vmatprep.mubr.f32.mxu0 0.0
    %2036 = vmatmul.mubr.f32.gmra.mxu0 %v1927
    %v2037 = vpop.f32.mrf.mxu0
    %v2038 = vadd.f32 0.0, %v2037
    %v2039 = vpop.f32.mrf.mxu0
    %2040 = vmatprep.mubr.f32.mxu0 0.0
    %2041 = vmatmul.mubr.f32.gmra.mxu0 %v1930
    %v2042 = vpop.f32.mrf.mxu0
    %v2043 = vadd.f32 0.0, %v2042
    %v2044 = vpop.f32.mrf.mxu0
    %2045 = vmatprep.mubr.f32.mxu0 0.0
    %2046 = vmatmul.mubr.f32.gmra.mxu0 %v1933
    %v2047 = vpop.f32.mrf.mxu0
    %v2048 = vadd.f32 0.0, %v2047
    %v2049 = vpop.f32.mrf.mxu0
    %2050 = vmatprep.mubr.f32.mxu0 0.0
    %2051 = vmatmul.mubr.f32.gmra.mxu0 %v1936
    %v2052 = vpop.f32.mrf.mxu0
    %v2053 = vadd.f32 0.0, %v2052
    %v2054 = vpop.f32.mrf.mxu0
    %2055 = vmatprep.mubr.f32.mxu0 0.0
    %2056 = vmatmul.mubr.f32.gmra.mxu0 %v1939
    %v2057 = vpop.f32.mrf.mxu0
    %v2058 = vadd.f32 0.0, %v2057
    %v2059 = vpop.f32.mrf.mxu0
    %2060 = vmatprep.mubr.f32.mxu0 0.0
    %2061 = vmatmul.mubr.f32.gmra.mxu0 %v1942
    %v2062 = vpop.f32.mrf.mxu0
    %v2063 = vadd.f32 0.0, %v2062
    %v2064 = vpop.f32.mrf.mxu0
    %2065 = vmatprep.mubr.f32.mxu0 0.0
    %2066 = vmatmul.mubr.f32.gmra.mxu0 %v1945
    %v2067 = vpop.f32.mrf.mxu0
    %v2068 = vadd.f32 0.0, %v2067
    %v2069 = vpop.f32.mrf.mxu0
    %2070 = vmatprep.mubr.f32.mxu0 0.0
    %2071 = vmatmul.mubr.f32.gmra.mxu0 %v1948
    %v2072 = vpop.f32.mrf.mxu0
    %v2073 = vadd.f32 0.0, %v2072
    %v2074 = vpop.f32.mrf.mxu0
    %2075 = vmatprep.mubr.f32.mxu0 0.0
    %2076 = vmatmul.mubr.f32.gmra.mxu0 %v1951
    %v2077 = vpop.f32.mrf.mxu0
    %v2078 = vadd.f32 0.0, %v2077
    %v2079 = vpop.f32.mrf.mxu0
    %2080 = vdwg.mxu0
    %v2081 = vadd.f32 %v1887, %v2023
    %v2082 = vadd.f32 %v1888, %v2028
    %v2083 = vadd.f32 %v1889, %v2033
    %v2084 = vadd.f32 %v1890, %v2038
    %v2085 = vadd.f32 %v1891, %v2043
    %v2086 = vadd.f32 %v1892, %v2048
    %v2087 = vadd.f32 %v1893, %v2053
    %v2088 = vadd.f32 %v1894, %v2058
    %v2089 = vadd.f32 %v1895, %v2063
    %v2090 = vadd.f32 %v1896, %v2068
    %v2091 = vadd.f32 %v1897, %v2073
    %v2092 = vadd.f32 %v1898, %v2078
    %v2093 = vld [vmem:[#allocation2 + $0x6f] sm:$0xff]
    %v2094 = vld [vmem:[#allocation2 + $0x77] sm:$0xff]
    %v2095 = vld [vmem:[#allocation2 + $0x7f] sm:$0xff]
    %v2096 = vld [vmem:[#allocation2 + $0x87] sm:$0xff]
    %v2097 = vld [vmem:[#allocation2 + $0x8f] sm:$0xff]
    %v2098 = vld [vmem:[#allocation2 + $0x97] sm:$0xff]
    %v2099 = vld [vmem:[#allocation2 + $0x9f] sm:$0xff]
    %v2100 = vld [vmem:[#allocation2 + $0xa7] sm:$0xff]
    %v2101 = vld [vmem:[#allocation2 + $0xaf] sm:$0xff]
    %v2102 = vld [vmem:[#allocation2 + $0xb7] sm:$0xff]
    %v2103 = vld [vmem:[#allocation2 + $0xbf] sm:$0xff]
    %v2104 = vld [vmem:[#allocation2 + $0xc7] sm:$0x1]
    %s2105 = scalar_lea.vmem %s2, 200
    %v2106 = vld [vmem:[%s2105] sm:$0xff]
    %v2107 = vld [vmem:[%s2105 + $0x8] sm:$0xff]
    %v2108 = vld [vmem:[%s2105 + $0x10] sm:$0xff]
    %v2109 = vld [vmem:[%s2105 + $0x18] sm:$0xff]
    %v2110 = vld [vmem:[%s2105 + $0x20] sm:$0xf]
    %v2112 = vsel %vm1014, %v2093, 0
    %v2115 = vsel %vm1014, %v2094, 0
    %v2118 = vsel %vm1014, %v2095, 0
    %v2121 = vsel %vm1014, %v2096, 0
    %v2124 = vsel %vm1014, %v2097, 0
    %v2127 = vsel %vm1014, %v2098, 0
    %v2130 = vsel %vm1014, %v2099, 0
    %v2133 = vsel %vm1014, %v2100, 0
    %v2136 = vsel %vm1014, %v2101, 0
    %v2139 = vsel %vm1014, %v2102, 0
    %v2142 = vsel %vm1014, %v2103, 0
    %v2145 = vsel %vm1014, %v2104, 0
    %v2148 = vsel %vm1176, %v2110, 0
    %2150 = vmatprep.subr.mxu0 0.0
    %2151 = vmatpush1.msra.mxu0 0.0
    %2152 = vmatprep.subr.mxu0 0.0
    %2153 = vmatpush1.msra.mxu0 0.0
    %2154 = vmatprep.subr.mxu0 0.0
    %2155 = vmatpush1.msra.mxu0 0.0
    %2156 = vmatprep.subr.mxu0 0.0
    %2157 = vmatpush1.msra.mxu0 0.0
    %2158 = vmatprep.subr.mxu0 0.0
    %2159 = vmatpush1.msra.mxu0 0.0
    %2160 = vmatprep.subr.mxu0 0.0
    %2161 = vmatpush1.msra.mxu0 0.0
    %2162 = vmatprep.subr.mxu0 0.0
    %2163 = vmatpush1.msra.mxu0 0.0
    %2164 = vmatprep.subr.mxu0 0.0
    %2165 = vmatpush1.msra.mxu0 0.0
    %2166 = vmatprep.subr.mxu0 0.0
    %2167 = vmatpush1.msra.mxu0 0.0
    %2168 = vmatprep.subr.mxu0 0.0
    %2169 = vmatpush1.msra.mxu0 0.0
    %2170 = vmatprep.subr.mxu0 0.0
    %2171 = vmatpush1.msra.mxu0 0.0
    %2172 = vmatprep.subr.mxu0 0.0
    %2173 = vmatpush1.msra.mxu0 %v2148
    %2174 = vmatprep.subr.mxu0 0.0
    %2175 = vmatpush1.msra.mxu0 %v2109
    %2176 = vmatprep.subr.mxu0 0.0
    %2177 = vmatpush1.msra.mxu0 %v2108
    %2178 = vmatprep.subr.mxu0 0.0
    %2179 = vmatpush1.msra.mxu0 %v2107
    %2180 = vmatprep.subr.mxu0 0.0
    %2181 = vmatpush1.msra.mxu0 %v2106
    %2182 = vmatprep.subr.mxu0 0.0
    %2183 = vmatpush2.msra.mxu0 0.0
    %2184 = vmatprep.subr.mxu0 0.0
    %2185 = vmatpush2.msra.mxu0 0.0
    %2186 = vmatprep.subr.mxu0 0.0
    %2187 = vmatpush2.msra.mxu0 0.0
    %2188 = vmatprep.subr.mxu0 0.0
    %2189 = vmatpush2.msra.mxu0 0.0
    %2190 = vmatprep.subr.mxu0 0.0
    %2191 = vmatpush2.msra.mxu0 0.0
    %2192 = vmatprep.subr.mxu0 0.0
    %2193 = vmatpush2.msra.mxu0 0.0
    %2194 = vmatprep.subr.mxu0 0.0
    %2195 = vmatpush2.msra.mxu0 0.0
    %2196 = vmatprep.subr.mxu0 0.0
    %2197 = vmatpush2.msra.mxu0 0.0
    %2198 = vmatprep.subr.mxu0 0.0
    %2199 = vmatpush2.msra.mxu0 0.0
    %2200 = vmatprep.subr.mxu0 0.0
    %2201 = vmatpush2.msra.mxu0 0.0
    %2202 = vmatprep.subr.mxu0 0.0
    %2203 = vmatpush2.msra.mxu0 0.0
    %2204 = vmatprep.subr.mxu0 0.0
    %2205 = vmatpush2.msra.mxu0 0.0
    %2206 = vmatprep.subr.mxu0 0.0
    %2207 = vmatpush2.msra.mxu0 0.0
    %2208 = vmatprep.subr.mxu0 0.0
    %2209 = vmatpush2.msra.mxu0 0.0
    %2210 = vmatprep.subr.mxu0 0.0
    %2211 = vmatpush2.msra.mxu0 0.0
    %2212 = vmatprep.subr.mxu0 0.0
    %2213 = vmatpush2.msra.mxu0 0.0
    %2214 = vmatprep.mubr.f32.mxu0 0.0
    %2215 = vmatmul.mubr.f32.gmra.mxu0 %v2112
    %v2216 = vpop.f32.mrf.mxu0
    %v2217 = vadd.f32 0.0, %v2216
    %v2218 = vpop.f32.mrf.mxu0
    %2219 = vmatprep.mubr.f32.mxu0 0.0
    %2220 = vmatmul.mubr.f32.gmra.mxu0 %v2115
    %v2221 = vpop.f32.mrf.mxu0
    %v2222 = vadd.f32 0.0, %v2221
    %v2223 = vpop.f32.mrf.mxu0
    %2224 = vmatprep.mubr.f32.mxu0 0.0
    %2225 = vmatmul.mubr.f32.gmra.mxu0 %v2118
    %v2226 = vpop.f32.mrf.mxu0
    %v2227 = vadd.f32 0.0, %v2226
    %v2228 = vpop.f32.mrf.mxu0
    %2229 = vmatprep.mubr.f32.mxu0 0.0
    %2230 = vmatmul.mubr.f32.gmra.mxu0 %v2121
    %v2231 = vpop.f32.mrf.mxu0
    %v2232 = vadd.f32 0.0, %v2231
    %v2233 = vpop.f32.mrf.mxu0
    %2234 = vmatprep.mubr.f32.mxu0 0.0
    %2235 = vmatmul.mubr.f32.gmra.mxu0 %v2124
    %v2236 = vpop.f32.mrf.mxu0
    %v2237 = vadd.f32 0.0, %v2236
    %v2238 = vpop.f32.mrf.mxu0
    %2239 = vmatprep.mubr.f32.mxu0 0.0
    %2240 = vmatmul.mubr.f32.gmra.mxu0 %v2127
    %v2241 = vpop.f32.mrf.mxu0
    %v2242 = vadd.f32 0.0, %v2241
    %v2243 = vpop.f32.mrf.mxu0
    %2244 = vmatprep.mubr.f32.mxu0 0.0
    %2245 = vmatmul.mubr.f32.gmra.mxu0 %v2130
    %v2246 = vpop.f32.mrf.mxu0
    %v2247 = vadd.f32 0.0, %v2246
    %v2248 = vpop.f32.mrf.mxu0
    %2249 = vmatprep.mubr.f32.mxu0 0.0
    %2250 = vmatmul.mubr.f32.gmra.mxu0 %v2133
    %v2251 = vpop.f32.mrf.mxu0
    %v2252 = vadd.f32 0.0, %v2251
    %v2253 = vpop.f32.mrf.mxu0
    %2254 = vmatprep.mubr.f32.mxu0 0.0
    %2255 = vmatmul.mubr.f32.gmra.mxu0 %v2136
    %v2256 = vpop.f32.mrf.mxu0
    %v2257 = vadd.f32 0.0, %v2256
    %v2258 = vpop.f32.mrf.mxu0
    %2259 = vmatprep.mubr.f32.mxu0 0.0
    %2260 = vmatmul.mubr.f32.gmra.mxu0 %v2139
    %v2261 = vpop.f32.mrf.mxu0
    %v2262 = vadd.f32 0.0, %v2261
    %v2263 = vpop.f32.mrf.mxu0
    %2264 = vmatprep.mubr.f32.mxu0 0.0
    %2265 = vmatmul.mubr.f32.gmra.mxu0 %v2142
    %v2266 = vpop.f32.mrf.mxu0
    %v2267 = vadd.f32 0.0, %v2266
    %v2268 = vpop.f32.mrf.mxu0
    %2269 = vmatprep.mubr.f32.mxu0 0.0
    %2270 = vmatmul.mubr.f32.gmra.mxu0 %v2145
    %v2271 = vpop.f32.mrf.mxu0
    %v2272 = vadd.f32 0.0, %v2271
    %v2273 = vpop.f32.mrf.mxu0
    %2274 = vdwg.mxu0
    %v2275 = vadd.f32 %v2081, %v2217
    %v2276 = vadd.f32 %v2082, %v2222
    %v2277 = vadd.f32 %v2083, %v2227
    %v2278 = vadd.f32 %v2084, %v2232
    %v2279 = vadd.f32 %v2085, %v2237
    %v2280 = vadd.f32 %v2086, %v2242
    %v2281 = vadd.f32 %v2087, %v2247
    %v2282 = vadd.f32 %v2088, %v2252
    %v2283 = vadd.f32 %v2089, %v2257
    %v2284 = vadd.f32 %v2090, %v2262
    %v2285 = vadd.f32 %v2091, %v2267
    %v2286 = vadd.f32 %v2092, %v2272
    %v2287 = vld [vmem:[#allocation2 + $0x136] sm:$0xff]
    %v2288 = vld [vmem:[#allocation2 + $0x13e] sm:$0xff]
    %v2289 = vld [vmem:[#allocation2 + $0x146] sm:$0xff]
    %v2290 = vld [vmem:[#allocation2 + $0x14e] sm:$0xff]
    %v2291 = vld [vmem:[#allocation2 + $0x156] sm:$0xff]
    %v2292 = vld [vmem:[#allocation2 + $0x15e] sm:$0xff]
    %v2293 = vld [vmem:[#allocation2 + $0x166] sm:$0xff]
    %v2294 = vld [vmem:[#allocation2 + $0x16e] sm:$0xff]
    %v2295 = vld [vmem:[#allocation2 + $0x176] sm:$0xff]
    %v2296 = vld [vmem:[#allocation2 + $0x17e] sm:$0xff]
    %v2297 = vld [vmem:[#allocation2 + $0x186] sm:$0xff]
    %v2298 = vld [vmem:[#allocation2 + $0x18e] sm:$0x1]
    %s2299 = scalar_lea.vmem %s2, 240
    %v2300 = vld [vmem:[%s2299] sm:$0xff]
    %v2301 = vld [vmem:[%s2299 + $0x8] sm:$0xff]
    %v2302 = vld [vmem:[%s2299 + $0x10] sm:$0xff]
    %v2303 = vld [vmem:[%s2299 + $0x18] sm:$0xff]
    %v2304 = vld [vmem:[%s2299 + $0x20] sm:$0xf]
    %v2306 = vsel %vm1014, %v2287, 0
    %v2309 = vsel %vm1014, %v2288, 0
    %v2312 = vsel %vm1014, %v2289, 0
    %v2315 = vsel %vm1014, %v2290, 0
    %v2318 = vsel %vm1014, %v2291, 0
    %v2321 = vsel %vm1014, %v2292, 0
    %v2324 = vsel %vm1014, %v2293, 0
    %v2327 = vsel %vm1014, %v2294, 0
    %v2330 = vsel %vm1014, %v2295, 0
    %v2333 = vsel %vm1014, %v2296, 0
    %v2336 = vsel %vm1014, %v2297, 0
    %v2339 = vsel %vm1014, %v2298, 0
    %v2342 = vsel %vm1176, %v2304, 0
    %2344 = vmatprep.subr.mxu0 0.0
    %2345 = vmatpush1.msra.mxu0 0.0
    %2346 = vmatprep.subr.mxu0 0.0
    %2347 = vmatpush1.msra.mxu0 0.0
    %2348 = vmatprep.subr.mxu0 0.0
    %2349 = vmatpush1.msra.mxu0 0.0
    %2350 = vmatprep.subr.mxu0 0.0
    %2351 = vmatpush1.msra.mxu0 0.0
    %2352 = vmatprep.subr.mxu0 0.0
    %2353 = vmatpush1.msra.mxu0 0.0
    %2354 = vmatprep.subr.mxu0 0.0
    %2355 = vmatpush1.msra.mxu0 0.0
    %2356 = vmatprep.subr.mxu0 0.0
    %2357 = vmatpush1.msra.mxu0 0.0
    %2358 = vmatprep.subr.mxu0 0.0
    %2359 = vmatpush1.msra.mxu0 0.0
    %2360 = vmatprep.subr.mxu0 0.0
    %2361 = vmatpush1.msra.mxu0 0.0
    %2362 = vmatprep.subr.mxu0 0.0
    %2363 = vmatpush1.msra.mxu0 0.0
    %2364 = vmatprep.subr.mxu0 0.0
    %2365 = vmatpush1.msra.mxu0 0.0
    %2366 = vmatprep.subr.mxu0 0.0
    %2367 = vmatpush1.msra.mxu0 %v2342
    %2368 = vmatprep.subr.mxu0 0.0
    %2369 = vmatpush1.msra.mxu0 %v2303
    %2370 = vmatprep.subr.mxu0 0.0
    %2371 = vmatpush1.msra.mxu0 %v2302
    %2372 = vmatprep.subr.mxu0 0.0
    %2373 = vmatpush1.msra.mxu0 %v2301
    %2374 = vmatprep.subr.mxu0 0.0
    %2375 = vmatpush1.msra.mxu0 %v2300
    %2376 = vmatprep.subr.mxu0 0.0
    %2377 = vmatpush2.msra.mxu0 0.0
    %2378 = vmatprep.subr.mxu0 0.0
    %2379 = vmatpush2.msra.mxu0 0.0
    %2380 = vmatprep.subr.mxu0 0.0
    %2381 = vmatpush2.msra.mxu0 0.0
    %2382 = vmatprep.subr.mxu0 0.0
    %2383 = vmatpush2.msra.mxu0 0.0
    %2384 = vmatprep.subr.mxu0 0.0
    %2385 = vmatpush2.msra.mxu0 0.0
    %2386 = vmatprep.subr.mxu0 0.0
    %2387 = vmatpush2.msra.mxu0 0.0
    %2388 = vmatprep.subr.mxu0 0.0
    %2389 = vmatpush2.msra.mxu0 0.0
    %2390 = vmatprep.subr.mxu0 0.0
    %2391 = vmatpush2.msra.mxu0 0.0
    %2392 = vmatprep.subr.mxu0 0.0
    %2393 = vmatpush2.msra.mxu0 0.0
    %2394 = vmatprep.subr.mxu0 0.0
    %2395 = vmatpush2.msra.mxu0 0.0
    %2396 = vmatprep.subr.mxu0 0.0
    %2397 = vmatpush2.msra.mxu0 0.0
    %2398 = vmatprep.subr.mxu0 0.0
    %2399 = vmatpush2.msra.mxu0 0.0
    %2400 = vmatprep.subr.mxu0 0.0
    %2401 = vmatpush2.msra.mxu0 0.0
    %2402 = vmatprep.subr.mxu0 0.0
    %2403 = vmatpush2.msra.mxu0 0.0
    %2404 = vmatprep.subr.mxu0 0.0
    %2405 = vmatpush2.msra.mxu0 0.0
    %2406 = vmatprep.subr.mxu0 0.0
    %2407 = vmatpush2.msra.mxu0 0.0
    %2408 = vmatprep.mubr.f32.mxu0 0.0
    %2409 = vmatmul.mubr.f32.gmra.mxu0 %v2306
    %v2410 = vpop.f32.mrf.mxu0
    %v2411 = vadd.f32 0.0, %v2410
    %v2412 = vpop.f32.mrf.mxu0
    %2413 = vmatprep.mubr.f32.mxu0 0.0
    %2414 = vmatmul.mubr.f32.gmra.mxu0 %v2309
    %v2415 = vpop.f32.mrf.mxu0
    %v2416 = vadd.f32 0.0, %v2415
    %v2417 = vpop.f32.mrf.mxu0
    %2418 = vmatprep.mubr.f32.mxu0 0.0
    %2419 = vmatmul.mubr.f32.gmra.mxu0 %v2312
    %v2420 = vpop.f32.mrf.mxu0
    %v2421 = vadd.f32 0.0, %v2420
    %v2422 = vpop.f32.mrf.mxu0
    %2423 = vmatprep.mubr.f32.mxu0 0.0
    %2424 = vmatmul.mubr.f32.gmra.mxu0 %v2315
    %v2425 = vpop.f32.mrf.mxu0
    %v2426 = vadd.f32 0.0, %v2425
    %v2427 = vpop.f32.mrf.mxu0
    %2428 = vmatprep.mubr.f32.mxu0 0.0
    %2429 = vmatmul.mubr.f32.gmra.mxu0 %v2318
    %v2430 = vpop.f32.mrf.mxu0
    %v2431 = vadd.f32 0.0, %v2430
    %v2432 = vpop.f32.mrf.mxu0
    %2433 = vmatprep.mubr.f32.mxu0 0.0
    %2434 = vmatmul.mubr.f32.gmra.mxu0 %v2321
    %v2435 = vpop.f32.mrf.mxu0
    %v2436 = vadd.f32 0.0, %v2435
    %v2437 = vpop.f32.mrf.mxu0
    %2438 = vmatprep.mubr.f32.mxu0 0.0
    %2439 = vmatmul.mubr.f32.gmra.mxu0 %v2324
    %v2440 = vpop.f32.mrf.mxu0
    %v2441 = vadd.f32 0.0, %v2440
    %v2442 = vpop.f32.mrf.mxu0
    %2443 = vmatprep.mubr.f32.mxu0 0.0
    %2444 = vmatmul.mubr.f32.gmra.mxu0 %v2327
    %v2445 = vpop.f32.mrf.mxu0
    %v2446 = vadd.f32 0.0, %v2445
    %v2447 = vpop.f32.mrf.mxu0
    %2448 = vmatprep.mubr.f32.mxu0 0.0
    %2449 = vmatmul.mubr.f32.gmra.mxu0 %v2330
    %v2450 = vpop.f32.mrf.mxu0
    %v2451 = vadd.f32 0.0, %v2450
    %v2452 = vpop.f32.mrf.mxu0
    %2453 = vmatprep.mubr.f32.mxu0 0.0
    %2454 = vmatmul.mubr.f32.gmra.mxu0 %v2333
    %v2455 = vpop.f32.mrf.mxu0
    %v2456 = vadd.f32 0.0, %v2455
    %v2457 = vpop.f32.mrf.mxu0
    %2458 = vmatprep.mubr.f32.mxu0 0.0
    %2459 = vmatmul.mubr.f32.gmra.mxu0 %v2336
    %v2460 = vpop.f32.mrf.mxu0
    %v2461 = vadd.f32 0.0, %v2460
    %v2462 = vpop.f32.mrf.mxu0
    %2463 = vmatprep.mubr.f32.mxu0 0.0
    %2464 = vmatmul.mubr.f32.gmra.mxu0 %v2339
    %v2465 = vpop.f32.mrf.mxu0
    %v2466 = vadd.f32 0.0, %v2465
    %v2467 = vpop.f32.mrf.mxu0
    %2468 = vdwg.mxu0
    %v2469 = vadd.f32 %v2275, %v2411
    %v2470 = vadd.f32 %v2276, %v2416
    %v2471 = vadd.f32 %v2277, %v2421
    %v2472 = vadd.f32 %v2278, %v2426
    %v2473 = vadd.f32 %v2279, %v2431
    %v2474 = vadd.f32 %v2280, %v2436
    %v2475 = vadd.f32 %v2281, %v2441
    %v2476 = vadd.f32 %v2282, %v2446
    %v2477 = vadd.f32 %v2283, %v2451
    %v2478 = vadd.f32 %v2284, %v2456
    %v2479 = vadd.f32 %v2285, %v2461
    %v2480 = vadd.f32 %v2286, %v2466
    %v2481 = vld [vmem:[#allocation2 + $0xd3] sm:$0xff]
    %v2482 = vld [vmem:[#allocation2 + $0xdb] sm:$0xff]
    %v2483 = vld [vmem:[#allocation2 + $0xe3] sm:$0xff]
    %v2484 = vld [vmem:[#allocation2 + $0xeb] sm:$0xff]
    %v2485 = vld [vmem:[#allocation2 + $0xf3] sm:$0xff]
    %v2486 = vld [vmem:[#allocation2 + $0xfb] sm:$0xff]
    %v2487 = vld [vmem:[#allocation2 + $0x103] sm:$0xff]
    %v2488 = vld [vmem:[#allocation2 + $0x10b] sm:$0xff]
    %v2489 = vld [vmem:[#allocation2 + $0x113] sm:$0xff]
    %v2490 = vld [vmem:[#allocation2 + $0x11b] sm:$0xff]
    %v2491 = vld [vmem:[#allocation2 + $0x123] sm:$0xff]
    %v2492 = vld [vmem:[#allocation2 + $0x12b] sm:$0x1]
    %s2493 = scalar_lea.vmem %s2, 280
    %v2494 = vld [vmem:[%s2493] sm:$0xff]
    %v2495 = vld [vmem:[%s2493 + $0x8] sm:$0xff]
    %v2496 = vld [vmem:[%s2493 + $0x10] sm:$0xff]
    %v2497 = vld [vmem:[%s2493 + $0x18] sm:$0xff]
    %v2498 = vld [vmem:[%s2493 + $0x20] sm:$0xf]
    %v2500 = vsel %vm1014, %v2481, 0
    %v2503 = vsel %vm1014, %v2482, 0
    %v2506 = vsel %vm1014, %v2483, 0
    %v2509 = vsel %vm1014, %v2484, 0
    %v2512 = vsel %vm1014, %v2485, 0
    %v2515 = vsel %vm1014, %v2486, 0
    %v2518 = vsel %vm1014, %v2487, 0
    %v2521 = vsel %vm1014, %v2488, 0
    %v2524 = vsel %vm1014, %v2489, 0
    %v2527 = vsel %vm1014, %v2490, 0
    %v2530 = vsel %vm1014, %v2491, 0
    %v2533 = vsel %vm1014, %v2492, 0
    %v2536 = vsel %vm1176, %v2498, 0
    %2538 = vmatprep.subr.mxu0 0.0
    %2539 = vmatpush1.msra.mxu0 0.0
    %2540 = vmatprep.subr.mxu0 0.0
    %2541 = vmatpush1.msra.mxu0 0.0
    %2542 = vmatprep.subr.mxu0 0.0
    %2543 = vmatpush1.msra.mxu0 0.0
    %2544 = vmatprep.subr.mxu0 0.0
    %2545 = vmatpush1.msra.mxu0 0.0
    %2546 = vmatprep.subr.mxu0 0.0
    %2547 = vmatpush1.msra.mxu0 0.0
    %2548 = vmatprep.subr.mxu0 0.0
    %2549 = vmatpush1.msra.mxu0 0.0
    %2550 = vmatprep.subr.mxu0 0.0
    %2551 = vmatpush1.msra.mxu0 0.0
    %2552 = vmatprep.subr.mxu0 0.0
    %2553 = vmatpush1.msra.mxu0 0.0
    %2554 = vmatprep.subr.mxu0 0.0
    %2555 = vmatpush1.msra.mxu0 0.0
    %2556 = vmatprep.subr.mxu0 0.0
    %2557 = vmatpush1.msra.mxu0 0.0
    %2558 = vmatprep.subr.mxu0 0.0
    %2559 = vmatpush1.msra.mxu0 0.0
    %2560 = vmatprep.subr.mxu0 0.0
    %2561 = vmatpush1.msra.mxu0 %v2536
    %2562 = vmatprep.subr.mxu0 0.0
    %2563 = vmatpush1.msra.mxu0 %v2497
    %2564 = vmatprep.subr.mxu0 0.0
    %2565 = vmatpush1.msra.mxu0 %v2496
    %2566 = vmatprep.subr.mxu0 0.0
    %2567 = vmatpush1.msra.mxu0 %v2495
    %2568 = vmatprep.subr.mxu0 0.0
    %2569 = vmatpush1.msra.mxu0 %v2494
    %2570 = vmatprep.subr.mxu0 0.0
    %2571 = vmatpush2.msra.mxu0 0.0
    %2572 = vmatprep.subr.mxu0 0.0
    %2573 = vmatpush2.msra.mxu0 0.0
    %2574 = vmatprep.subr.mxu0 0.0
    %2575 = vmatpush2.msra.mxu0 0.0
    %2576 = vmatprep.subr.mxu0 0.0
    %2577 = vmatpush2.msra.mxu0 0.0
    %2578 = vmatprep.subr.mxu0 0.0
    %2579 = vmatpush2.msra.mxu0 0.0
    %2580 = vmatprep.subr.mxu0 0.0
    %2581 = vmatpush2.msra.mxu0 0.0
    %2582 = vmatprep.subr.mxu0 0.0
    %2583 = vmatpush2.msra.mxu0 0.0
    %2584 = vmatprep.subr.mxu0 0.0
    %2585 = vmatpush2.msra.mxu0 0.0
    %2586 = vmatprep.subr.mxu0 0.0
    %2587 = vmatpush2.msra.mxu0 0.0
    %2588 = vmatprep.subr.mxu0 0.0
    %2589 = vmatpush2.msra.mxu0 0.0
    %2590 = vmatprep.subr.mxu0 0.0
    %2591 = vmatpush2.msra.mxu0 0.0
    %2592 = vmatprep.subr.mxu0 0.0
    %2593 = vmatpush2.msra.mxu0 0.0
    %2594 = vmatprep.subr.mxu0 0.0
    %2595 = vmatpush2.msra.mxu0 0.0
    %2596 = vmatprep.subr.mxu0 0.0
    %2597 = vmatpush2.msra.mxu0 0.0
    %2598 = vmatprep.subr.mxu0 0.0
    %2599 = vmatpush2.msra.mxu0 0.0
    %2600 = vmatprep.subr.mxu0 0.0
    %2601 = vmatpush2.msra.mxu0 0.0
    %2602 = vmatprep.mubr.f32.mxu0 0.0
    %2603 = vmatmul.mubr.f32.gmra.mxu0 %v2500
    %v2604 = vpop.f32.mrf.mxu0
    %v2605 = vadd.f32 0.0, %v2604
    %v2606 = vpop.f32.mrf.mxu0
    %2607 = vmatprep.mubr.f32.mxu0 0.0
    %2608 = vmatmul.mubr.f32.gmra.mxu0 %v2503
    %v2609 = vpop.f32.mrf.mxu0
    %v2610 = vadd.f32 0.0, %v2609
    %v2611 = vpop.f32.mrf.mxu0
    %2612 = vmatprep.mubr.f32.mxu0 0.0
    %2613 = vmatmul.mubr.f32.gmra.mxu0 %v2506
    %v2614 = vpop.f32.mrf.mxu0
    %v2615 = vadd.f32 0.0, %v2614
    %v2616 = vpop.f32.mrf.mxu0
    %2617 = vmatprep.mubr.f32.mxu0 0.0
    %2618 = vmatmul.mubr.f32.gmra.mxu0 %v2509
    %v2619 = vpop.f32.mrf.mxu0
    %v2620 = vadd.f32 0.0, %v2619
    %v2621 = vpop.f32.mrf.mxu0
    %2622 = vmatprep.mubr.f32.mxu0 0.0
    %2623 = vmatmul.mubr.f32.gmra.mxu0 %v2512
    %v2624 = vpop.f32.mrf.mxu0
    %v2625 = vadd.f32 0.0, %v2624
    %v2626 = vpop.f32.mrf.mxu0
    %2627 = vmatprep.mubr.f32.mxu0 0.0
    %2628 = vmatmul.mubr.f32.gmra.mxu0 %v2515
    %v2629 = vpop.f32.mrf.mxu0
    %v2630 = vadd.f32 0.0, %v2629
    %v2631 = vpop.f32.mrf.mxu0
    %2632 = vmatprep.mubr.f32.mxu0 0.0
    %2633 = vmatmul.mubr.f32.gmra.mxu0 %v2518
    %v2634 = vpop.f32.mrf.mxu0
    %v2635 = vadd.f32 0.0, %v2634
    %v2636 = vpop.f32.mrf.mxu0
    %2637 = vmatprep.mubr.f32.mxu0 0.0
    %2638 = vmatmul.mubr.f32.gmra.mxu0 %v2521
    %v2639 = vpop.f32.mrf.mxu0
    %v2640 = vadd.f32 0.0, %v2639
    %v2641 = vpop.f32.mrf.mxu0
    %2642 = vmatprep.mubr.f32.mxu0 0.0
    %2643 = vmatmul.mubr.f32.gmra.mxu0 %v2524
    %v2644 = vpop.f32.mrf.mxu0
    %v2645 = vadd.f32 0.0, %v2644
    %v2646 = vpop.f32.mrf.mxu0
    %2647 = vmatprep.mubr.f32.mxu0 0.0
    %2648 = vmatmul.mubr.f32.gmra.mxu0 %v2527
    %v2649 = vpop.f32.mrf.mxu0
    %v2650 = vadd.f32 0.0, %v2649
    %v2651 = vpop.f32.mrf.mxu0
    %2652 = vmatprep.mubr.f32.mxu0 0.0
    %2653 = vmatmul.mubr.f32.gmra.mxu0 %v2530
    %v2654 = vpop.f32.mrf.mxu0
    %v2655 = vadd.f32 0.0, %v2654
    %v2656 = vpop.f32.mrf.mxu0
    %2657 = vmatprep.mubr.f32.mxu0 0.0
    %2658 = vmatmul.mubr.f32.gmra.mxu0 %v2533
    %v2659 = vpop.f32.mrf.mxu0
    %v2660 = vadd.f32 0.0, %v2659
    %v2661 = vpop.f32.mrf.mxu0
    %2662 = vdwg.mxu0
    %v2663 = vadd.f32 %v2469, %v2605
    %v2664 = vadd.f32 %v2470, %v2610
    %v2665 = vadd.f32 %v2471, %v2615
    %v2666 = vadd.f32 %v2472, %v2620
    %v2667 = vadd.f32 %v2473, %v2625
    %v2668 = vadd.f32 %v2474, %v2630
    %v2669 = vadd.f32 %v2475, %v2635
    %v2670 = vadd.f32 %v2476, %v2640
    %v2671 = vadd.f32 %v2477, %v2645
    %v2672 = vadd.f32 %v2478, %v2650
    %v2673 = vadd.f32 %v2479, %v2655
    %v2674 = vadd.f32 %v2480, %v2660
    %v2675 = vld [vmem:[#allocation2 + $0x137] sm:$0xff]
    %v2676 = vld [vmem:[#allocation2 + $0x13f] sm:$0xff]
    %v2677 = vld [vmem:[#allocation2 + $0x147] sm:$0xff]
    %v2678 = vld [vmem:[#allocation2 + $0x14f] sm:$0xff]
    %v2679 = vld [vmem:[#allocation2 + $0x157] sm:$0xff]
    %v2680 = vld [vmem:[#allocation2 + $0x15f] sm:$0xff]
    %v2681 = vld [vmem:[#allocation2 + $0x167] sm:$0xff]
    %v2682 = vld [vmem:[#allocation2 + $0x16f] sm:$0xff]
    %v2683 = vld [vmem:[#allocation2 + $0x177] sm:$0xff]
    %v2684 = vld [vmem:[#allocation2 + $0x17f] sm:$0xff]
    %v2685 = vld [vmem:[#allocation2 + $0x187] sm:$0xff]
    %v2686 = vld [vmem:[#allocation2 + $0x18f] sm:$0x1]
    %s2687 = scalar_lea.vmem %s2, 320
    %v2688 = vld [vmem:[%s2687] sm:$0xff]
    %v2689 = vld [vmem:[%s2687 + $0x8] sm:$0xff]
    %v2690 = vld [vmem:[%s2687 + $0x10] sm:$0xff]
    %v2691 = vld [vmem:[%s2687 + $0x18] sm:$0xff]
    %v2692 = vld [vmem:[%s2687 + $0x20] sm:$0xf]
    %v2694 = vsel %vm1014, %v2675, 0
    %v2697 = vsel %vm1014, %v2676, 0
    %v2700 = vsel %vm1014, %v2677, 0
    %v2703 = vsel %vm1014, %v2678, 0
    %v2706 = vsel %vm1014, %v2679, 0
    %v2709 = vsel %vm1014, %v2680, 0
    %v2712 = vsel %vm1014, %v2681, 0
    %v2715 = vsel %vm1014, %v2682, 0
    %v2718 = vsel %vm1014, %v2683, 0
    %v2721 = vsel %vm1014, %v2684, 0
    %v2724 = vsel %vm1014, %v2685, 0
    %v2727 = vsel %vm1014, %v2686, 0
    %v2730 = vsel %vm1176, %v2692, 0
    %2732 = vmatprep.subr.mxu0 0.0
    %2733 = vmatpush1.msra.mxu0 0.0
    %2734 = vmatprep.subr.mxu0 0.0
    %2735 = vmatpush1.msra.mxu0 0.0
    %2736 = vmatprep.subr.mxu0 0.0
    %2737 = vmatpush1.msra.mxu0 0.0
    %2738 = vmatprep.subr.mxu0 0.0
    %2739 = vmatpush1.msra.mxu0 0.0
    %2740 = vmatprep.subr.mxu0 0.0
    %2741 = vmatpush1.msra.mxu0 0.0
    %2742 = vmatprep.subr.mxu0 0.0
    %2743 = vmatpush1.msra.mxu0 0.0
    %2744 = vmatprep.subr.mxu0 0.0
    %2745 = vmatpush1.msra.mxu0 0.0
    %2746 = vmatprep.subr.mxu0 0.0
    %2747 = vmatpush1.msra.mxu0 0.0
    %2748 = vmatprep.subr.mxu0 0.0
    %2749 = vmatpush1.msra.mxu0 0.0
    %2750 = vmatprep.subr.mxu0 0.0
    %2751 = vmatpush1.msra.mxu0 0.0
    %2752 = vmatprep.subr.mxu0 0.0
    %2753 = vmatpush1.msra.mxu0 0.0
    %2754 = vmatprep.subr.mxu0 0.0
    %2755 = vmatpush1.msra.mxu0 %v2730
    %2756 = vmatprep.subr.mxu0 0.0
    %2757 = vmatpush1.msra.mxu0 %v2691
    %2758 = vmatprep.subr.mxu0 0.0
    %2759 = vmatpush1.msra.mxu0 %v2690
    %2760 = vmatprep.subr.mxu0 0.0
    %2761 = vmatpush1.msra.mxu0 %v2689
    %2762 = vmatprep.subr.mxu0 0.0
    %2763 = vmatpush1.msra.mxu0 %v2688
    %2764 = vmatprep.subr.mxu0 0.0
    %2765 = vmatpush2.msra.mxu0 0.0
    %2766 = vmatprep.subr.mxu0 0.0
    %2767 = vmatpush2.msra.mxu0 0.0
    %2768 = vmatprep.subr.mxu0 0.0
    %2769 = vmatpush2.msra.mxu0 0.0
    %2770 = vmatprep.subr.mxu0 0.0
    %2771 = vmatpush2.msra.mxu0 0.0
    %2772 = vmatprep.subr.mxu0 0.0
    %2773 = vmatpush2.msra.mxu0 0.0
    %2774 = vmatprep.subr.mxu0 0.0
    %2775 = vmatpush2.msra.mxu0 0.0
    %2776 = vmatprep.subr.mxu0 0.0
    %2777 = vmatpush2.msra.mxu0 0.0
    %2778 = vmatprep.subr.mxu0 0.0
    %2779 = vmatpush2.msra.mxu0 0.0
    %2780 = vmatprep.subr.mxu0 0.0
    %2781 = vmatpush2.msra.mxu0 0.0
    %2782 = vmatprep.subr.mxu0 0.0
    %2783 = vmatpush2.msra.mxu0 0.0
    %2784 = vmatprep.subr.mxu0 0.0
    %2785 = vmatpush2.msra.mxu0 0.0
    %2786 = vmatprep.subr.mxu0 0.0
    %2787 = vmatpush2.msra.mxu0 0.0
    %2788 = vmatprep.subr.mxu0 0.0
    %2789 = vmatpush2.msra.mxu0 0.0
    %2790 = vmatprep.subr.mxu0 0.0
    %2791 = vmatpush2.msra.mxu0 0.0
    %2792 = vmatprep.subr.mxu0 0.0
    %2793 = vmatpush2.msra.mxu0 0.0
    %2794 = vmatprep.subr.mxu0 0.0
    %2795 = vmatpush2.msra.mxu0 0.0
    %2796 = vmatprep.mubr.f32.mxu0 0.0
    %2797 = vmatmul.mubr.f32.gmra.mxu0 %v2694
    %v2798 = vpop.f32.mrf.mxu0
    %v2799 = vadd.f32 0.0, %v2798
    %v2800 = vpop.f32.mrf.mxu0
    %2801 = vmatprep.mubr.f32.mxu0 0.0
    %2802 = vmatmul.mubr.f32.gmra.mxu0 %v2697
    %v2803 = vpop.f32.mrf.mxu0
    %v2804 = vadd.f32 0.0, %v2803
    %v2805 = vpop.f32.mrf.mxu0
    %2806 = vmatprep.mubr.f32.mxu0 0.0
    %2807 = vmatmul.mubr.f32.gmra.mxu0 %v2700
    %v2808 = vpop.f32.mrf.mxu0
    %v2809 = vadd.f32 0.0, %v2808
    %v2810 = vpop.f32.mrf.mxu0
    %2811 = vmatprep.mubr.f32.mxu0 0.0
    %2812 = vmatmul.mubr.f32.gmra.mxu0 %v2703
    %v2813 = vpop.f32.mrf.mxu0
    %v2814 = vadd.f32 0.0, %v2813
    %v2815 = vpop.f32.mrf.mxu0
    %2816 = vmatprep.mubr.f32.mxu0 0.0
    %2817 = vmatmul.mubr.f32.gmra.mxu0 %v2706
    %v2818 = vpop.f32.mrf.mxu0
    %v2819 = vadd.f32 0.0, %v2818
    %v2820 = vpop.f32.mrf.mxu0
    %2821 = vmatprep.mubr.f32.mxu0 0.0
    %2822 = vmatmul.mubr.f32.gmra.mxu0 %v2709
    %v2823 = vpop.f32.mrf.mxu0
    %v2824 = vadd.f32 0.0, %v2823
    %v2825 = vpop.f32.mrf.mxu0
    %2826 = vmatprep.mubr.f32.mxu0 0.0
    %2827 = vmatmul.mubr.f32.gmra.mxu0 %v2712
    %v2828 = vpop.f32.mrf.mxu0
    %v2829 = vadd.f32 0.0, %v2828
    %v2830 = vpop.f32.mrf.mxu0
    %2831 = vmatprep.mubr.f32.mxu0 0.0
    %2832 = vmatmul.mubr.f32.gmra.mxu0 %v2715
    %v2833 = vpop.f32.mrf.mxu0
    %v2834 = vadd.f32 0.0, %v2833
    %v2835 = vpop.f32.mrf.mxu0
    %2836 = vmatprep.mubr.f32.mxu0 0.0
    %2837 = vmatmul.mubr.f32.gmra.mxu0 %v2718
    %v2838 = vpop.f32.mrf.mxu0
    %v2839 = vadd.f32 0.0, %v2838
    %v2840 = vpop.f32.mrf.mxu0
    %2841 = vmatprep.mubr.f32.mxu0 0.0
    %2842 = vmatmul.mubr.f32.gmra.mxu0 %v2721
    %v2843 = vpop.f32.mrf.mxu0
    %v2844 = vadd.f32 0.0, %v2843
    %v2845 = vpop.f32.mrf.mxu0
    %2846 = vmatprep.mubr.f32.mxu0 0.0
    %2847 = vmatmul.mubr.f32.gmra.mxu0 %v2724
    %v2848 = vpop.f32.mrf.mxu0
    %v2849 = vadd.f32 0.0, %v2848
    %v2850 = vpop.f32.mrf.mxu0
    %2851 = vmatprep.mubr.f32.mxu0 0.0
    %2852 = vmatmul.mubr.f32.gmra.mxu0 %v2727
    %v2853 = vpop.f32.mrf.mxu0
    %v2854 = vadd.f32 0.0, %v2853
    %v2855 = vpop.f32.mrf.mxu0
    %2856 = vdwg.mxu0
    %v2857 = vadd.f32 %v2663, %v2799
    %v2858 = vadd.f32 %v2664, %v2804
    %v2859 = vadd.f32 %v2665, %v2809
    %v2860 = vadd.f32 %v2666, %v2814
    %v2861 = vadd.f32 %v2667, %v2819
    %v2862 = vadd.f32 %v2668, %v2824
    %v2863 = vadd.f32 %v2669, %v2829
    %v2864 = vadd.f32 %v2670, %v2834
    %v2865 = vadd.f32 %v2671, %v2839
    %v2866 = vadd.f32 %v2672, %v2844
    %v2867 = vadd.f32 %v2673, %v2849
    %v2868 = vadd.f32 %v2674, %v2854
    %v2869 = vld [vmem:[%s6] sm:$0xff]
    %v2870 = vld [vmem:[%s6 + $0x8] sm:$0xff]
    %v2871 = vld [vmem:[%s6 + $0x10] sm:$0xff]
    %v2872 = vld [vmem:[%s6 + $0x18] sm:$0xff]
    %v2873 = vld [vmem:[%s6 + $0x20] sm:$0xff]
    %v2874 = vld [vmem:[%s6 + $0x28] sm:$0xff]
    %v2875 = vld [vmem:[%s6 + $0x30] sm:$0xff]
    %v2876 = vld [vmem:[%s6 + $0x38] sm:$0xff]
    %v2877 = vld [vmem:[%s6 + $0x40] sm:$0xff]
    %v2878 = vld [vmem:[%s6 + $0x48] sm:$0xff]
    %v2879 = vld [vmem:[%s6 + $0x50] sm:$0xff]
    %v2880 = vld [vmem:[%s6 + $0x58] sm:$0xff]
    %v2881 = vld [vmem:[%s6 + $0x60] sm:$0xff]
    %v2882 = vld [vmem:[%s6 + $0x68] sm:$0xff]
    %v2883 = vld [vmem:[%s6 + $0x70] sm:$0xff]
    %v2884 = vld [vmem:[%s6 + $0x78] sm:$0xff]
    %v2885 = vld [vmem:[%s6 + $0x80] sm:$0xff]
    %v2886 = vld [vmem:[%s6 + $0x88] sm:$0xff]
    %v2887 = vld [vmem:[%s6 + $0x90] sm:$0xff]
    %v2888 = vld [vmem:[%s6 + $0x98] sm:$0xff]
    %v2889 = vld [vmem:[%s6 + $0xa0] sm:$0xff]
    %v2890 = vld [vmem:[%s6 + $0xa8] sm:$0xff]
    %v2891 = vld [vmem:[%s6 + $0xb0] sm:$0xff]
    %v2892 = vld [vmem:[%s6 + $0xb8] sm:$0xff]
    %v2893 = vld [vmem:[%s6 + $0xc0] sm:$0xff]
    %v2894 = vld [vmem:[%s6 + $0xc8] sm:$0xff]
    %v2895 = vld [vmem:[%s6 + $0xd0] sm:$0xff]
    %v2896 = vld [vmem:[%s6 + $0xd8] sm:$0xff]
    %v2897 = vld [vmem:[%s6 + $0xe0] sm:$0x1]
    %vm2898 = vcmask 728064
    %v2900 = vsel %vm2898, %v2869, 0
    %v2903 = vsel %vm2898, %v2870, 0
    %v2906 = vsel %vm2898, %v2871, 0
    %v2909 = vsel %vm2898, %v2872, 0
    %v2912 = vsel %vm2898, %v2873, 0
    %v2915 = vsel %vm2898, %v2874, 0
    %v2918 = vsel %vm2898, %v2875, 0
    %v2921 = vsel %vm2898, %v2876, 0
    %v2924 = vsel %vm2898, %v2877, 0
    %v2927 = vsel %vm2898, %v2878, 0
    %v2930 = vsel %vm2898, %v2879, 0
    %v2933 = vsel %vm2898, %v2880, 0
    %v2936 = vsel %vm2898, %v2881, 0
    %v2939 = vsel %vm2898, %v2882, 0
    %v2942 = vsel %vm2898, %v2883, 0
    %v2945 = vsel %vm2898, %v2884, 0
    %v2948 = vsel %vm2898, %v2885, 0
    %v2951 = vsel %vm2898, %v2886, 0
    %v2954 = vsel %vm2898, %v2887, 0
    %v2957 = vsel %vm2898, %v2888, 0
    %v2960 = vsel %vm2898, %v2889, 0
    %v2963 = vsel %vm2898, %v2890, 0
    %v2966 = vsel %vm2898, %v2891, 0
    %v2969 = vsel %vm2898, %v2892, 0
    %v2972 = vsel %vm2898, %v2893, 0
    %v2975 = vsel %vm2898, %v2894, 0
    %v2978 = vsel %vm2898, %v2895, 0
    %v2981 = vsel %vm2898, %v2896, 0
    %v2984 = vsel %vm2898, %v2897, 0
    %vm2986 = vcmask 1040384
    %v2988 = vsel %vm2986, %v2868, 0
    %2990 = vmatprep.subr.mxu0 0.0
    %2991 = vmatpush1.msra.mxu0 0.0
    %2992 = vmatprep.subr.mxu0 0.0
    %2993 = vmatpush1.msra.mxu0 0.0
    %2994 = vmatprep.subr.mxu0 0.0
    %2995 = vmatpush1.msra.mxu0 0.0
    %2996 = vmatprep.subr.mxu0 0.0
    %2997 = vmatpush1.msra.mxu0 0.0
    %2998 = vmatprep.subr.mxu0 0.0
    %2999 = vmatpush1.msra.mxu0 %v2988
    %3000 = vmatprep.subr.mxu0 0.0
    %3001 = vmatpush1.msra.mxu0 %v2867
    %3002 = vmatprep.subr.mxu0 0.0
    %3003 = vmatpush1.msra.mxu0 %v2866
    %3004 = vmatprep.subr.mxu0 0.0
    %3005 = vmatpush1.msra.mxu0 %v2865
    %3006 = vmatprep.subr.mxu0 0.0
    %3007 = vmatpush1.msra.mxu0 %v2864
    %3008 = vmatprep.subr.mxu0 0.0
    %3009 = vmatpush1.msra.mxu0 %v2863
    %3010 = vmatprep.subr.mxu0 0.0
    %3011 = vmatpush1.msra.mxu0 %v2862
    %3012 = vmatprep.subr.mxu0 0.0
    %3013 = vmatpush1.msra.mxu0 %v2861
    %3014 = vmatprep.subr.mxu0 0.0
    %3015 = vmatpush1.msra.mxu0 %v2860
    %3016 = vmatprep.subr.mxu0 0.0
    %3017 = vmatpush1.msra.mxu0 %v2859
    %3018 = vmatprep.subr.mxu0 0.0
    %3019 = vmatpush1.msra.mxu0 %v2858
    %3020 = vmatprep.subr.mxu0 0.0
    %3021 = vmatpush1.msra.mxu0 %v2857
    %3022 = vmatprep.subr.mxu0 0.0
    %3023 = vmatpush2.msra.mxu0 0.0
    %3024 = vmatprep.subr.mxu0 0.0
    %3025 = vmatpush2.msra.mxu0 0.0
    %3026 = vmatprep.subr.mxu0 0.0
    %3027 = vmatpush2.msra.mxu0 0.0
    %3028 = vmatprep.subr.mxu0 0.0
    %3029 = vmatpush2.msra.mxu0 0.0
    %3030 = vmatprep.subr.mxu0 0.0
    %3031 = vmatpush2.msra.mxu0 0.0
    %3032 = vmatprep.subr.mxu0 0.0
    %3033 = vmatpush2.msra.mxu0 0.0
    %3034 = vmatprep.subr.mxu0 0.0
    %3035 = vmatpush2.msra.mxu0 0.0
    %3036 = vmatprep.subr.mxu0 0.0
    %3037 = vmatpush2.msra.mxu0 0.0
    %3038 = vmatprep.subr.mxu0 0.0
    %3039 = vmatpush2.msra.mxu0 0.0
    %3040 = vmatprep.subr.mxu0 0.0
    %3041 = vmatpush2.msra.mxu0 0.0
    %3042 = vmatprep.subr.mxu0 0.0
    %3043 = vmatpush2.msra.mxu0 0.0
    %3044 = vmatprep.subr.mxu0 0.0
    %3045 = vmatpush2.msra.mxu0 0.0
    %3046 = vmatprep.subr.mxu0 0.0
    %3047 = vmatpush2.msra.mxu0 0.0
    %3048 = vmatprep.subr.mxu0 0.0
    %3049 = vmatpush2.msra.mxu0 0.0
    %3050 = vmatprep.subr.mxu0 0.0
    %3051 = vmatpush2.msra.mxu0 0.0
    %3052 = vmatprep.subr.mxu0 0.0
    %3053 = vmatpush2.msra.mxu0 0.0
    %3054 = vmatprep.mubr.f32.mxu0 0.0
    %3055 = vmatmul.mubr.f32.gmra.mxu0 %v2900
    %v3056 = vpop.f32.mrf.mxu0
    %v3057 = vadd.f32 0.0, %v3056
    %v3058 = vpop.f32.mrf.mxu0
    %3059 = vmatprep.mubr.f32.mxu0 0.0
    %3060 = vmatmul.mubr.f32.gmra.mxu0 %v2903
    %v3061 = vpop.f32.mrf.mxu0
    %v3062 = vadd.f32 0.0, %v3061
    %v3063 = vpop.f32.mrf.mxu0
    %3064 = vmatprep.mubr.f32.mxu0 0.0
    %3065 = vmatmul.mubr.f32.gmra.mxu0 %v2906
    %v3066 = vpop.f32.mrf.mxu0
    %v3067 = vadd.f32 0.0, %v3066
    %v3068 = vpop.f32.mrf.mxu0
    %3069 = vmatprep.mubr.f32.mxu0 0.0
    %3070 = vmatmul.mubr.f32.gmra.mxu0 %v2909
    %v3071 = vpop.f32.mrf.mxu0
    %v3072 = vadd.f32 0.0, %v3071
    %v3073 = vpop.f32.mrf.mxu0
    %3074 = vmatprep.mubr.f32.mxu0 0.0
    %3075 = vmatmul.mubr.f32.gmra.mxu0 %v2912
    %v3076 = vpop.f32.mrf.mxu0
    %v3077 = vadd.f32 0.0, %v3076
    %v3078 = vpop.f32.mrf.mxu0
    %3079 = vmatprep.mubr.f32.mxu0 0.0
    %3080 = vmatmul.mubr.f32.gmra.mxu0 %v2915
    %v3081 = vpop.f32.mrf.mxu0
    %v3082 = vadd.f32 0.0, %v3081
    %v3083 = vpop.f32.mrf.mxu0
    %3084 = vmatprep.mubr.f32.mxu0 0.0
    %3085 = vmatmul.mubr.f32.gmra.mxu0 %v2918
    %v3086 = vpop.f32.mrf.mxu0
    %v3087 = vadd.f32 0.0, %v3086
    %v3088 = vpop.f32.mrf.mxu0
    %3089 = vmatprep.mubr.f32.mxu0 0.0
    %3090 = vmatmul.mubr.f32.gmra.mxu0 %v2921
    %v3091 = vpop.f32.mrf.mxu0
    %v3092 = vadd.f32 0.0, %v3091
    %v3093 = vpop.f32.mrf.mxu0
    %3094 = vmatprep.mubr.f32.mxu0 0.0
    %3095 = vmatmul.mubr.f32.gmra.mxu0 %v2924
    %v3096 = vpop.f32.mrf.mxu0
    %v3097 = vadd.f32 0.0, %v3096
    %v3098 = vpop.f32.mrf.mxu0
    %3099 = vmatprep.mubr.f32.mxu0 0.0
    %3100 = vmatmul.mubr.f32.gmra.mxu0 %v2927
    %v3101 = vpop.f32.mrf.mxu0
    %v3102 = vadd.f32 0.0, %v3101
    %v3103 = vpop.f32.mrf.mxu0
    %3104 = vmatprep.mubr.f32.mxu0 0.0
    %3105 = vmatmul.mubr.f32.gmra.mxu0 %v2930
    %v3106 = vpop.f32.mrf.mxu0
    %v3107 = vadd.f32 0.0, %v3106
    %v3108 = vpop.f32.mrf.mxu0
    %3109 = vmatprep.mubr.f32.mxu0 0.0
    %3110 = vmatmul.mubr.f32.gmra.mxu0 %v2933
    %v3111 = vpop.f32.mrf.mxu0
    %v3112 = vadd.f32 0.0, %v3111
    %v3113 = vpop.f32.mrf.mxu0
    %3114 = vmatprep.mubr.f32.mxu0 0.0
    %3115 = vmatmul.mubr.f32.gmra.mxu0 %v2936
    %v3116 = vpop.f32.mrf.mxu0
    %v3117 = vadd.f32 0.0, %v3116
    %v3118 = vpop.f32.mrf.mxu0
    %3119 = vmatprep.mubr.f32.mxu0 0.0
    %3120 = vmatmul.mubr.f32.gmra.mxu0 %v2939
    %v3121 = vpop.f32.mrf.mxu0
    %v3122 = vadd.f32 0.0, %v3121
    %v3123 = vpop.f32.mrf.mxu0
    %3124 = vmatprep.mubr.f32.mxu0 0.0
    %3125 = vmatmul.mubr.f32.gmra.mxu0 %v2942
    %v3126 = vpop.f32.mrf.mxu0
    %v3127 = vadd.f32 0.0, %v3126
    %v3128 = vpop.f32.mrf.mxu0
    %3129 = vmatprep.mubr.f32.mxu0 0.0
    %3130 = vmatmul.mubr.f32.gmra.mxu0 %v2945
    %v3131 = vpop.f32.mrf.mxu0
    %v3132 = vadd.f32 0.0, %v3131
    %v3133 = vpop.f32.mrf.mxu0
    %3134 = vmatprep.mubr.f32.mxu0 0.0
    %3135 = vmatmul.mubr.f32.gmra.mxu0 %v2948
    %v3136 = vpop.f32.mrf.mxu0
    %v3137 = vadd.f32 0.0, %v3136
    %v3138 = vpop.f32.mrf.mxu0
    %3139 = vmatprep.mubr.f32.mxu0 0.0
    %3140 = vmatmul.mubr.f32.gmra.mxu0 %v2951
    %v3141 = vpop.f32.mrf.mxu0
    %v3142 = vadd.f32 0.0, %v3141
    %v3143 = vpop.f32.mrf.mxu0
    %3144 = vmatprep.mubr.f32.mxu0 0.0
    %3145 = vmatmul.mubr.f32.gmra.mxu0 %v2954
    %v3146 = vpop.f32.mrf.mxu0
    %v3147 = vadd.f32 0.0, %v3146
    %v3148 = vpop.f32.mrf.mxu0
    %3149 = vmatprep.mubr.f32.mxu0 0.0
    %3150 = vmatmul.mubr.f32.gmra.mxu0 %v2957
    %v3151 = vpop.f32.mrf.mxu0
    %v3152 = vadd.f32 0.0, %v3151
    %v3153 = vpop.f32.mrf.mxu0
    %3154 = vmatprep.mubr.f32.mxu0 0.0
    %3155 = vmatmul.mubr.f32.gmra.mxu0 %v2960
    %v3156 = vpop.f32.mrf.mxu0
    %v3157 = vadd.f32 0.0, %v3156
    %v3158 = vpop.f32.mrf.mxu0
    %3159 = vmatprep.mubr.f32.mxu0 0.0
    %3160 = vmatmul.mubr.f32.gmra.mxu0 %v2963
    %v3161 = vpop.f32.mrf.mxu0
    %v3162 = vadd.f32 0.0, %v3161
    %v3163 = vpop.f32.mrf.mxu0
    %3164 = vmatprep.mubr.f32.mxu0 0.0
    %3165 = vmatmul.mubr.f32.gmra.mxu0 %v2966
    %v3166 = vpop.f32.mrf.mxu0
    %v3167 = vadd.f32 0.0, %v3166
    %v3168 = vpop.f32.mrf.mxu0
    %3169 = vmatprep.mubr.f32.mxu0 0.0
    %3170 = vmatmul.mubr.f32.gmra.mxu0 %v2969
    %v3171 = vpop.f32.mrf.mxu0
    %v3172 = vadd.f32 0.0, %v3171
    %v3173 = vpop.f32.mrf.mxu0
    %3174 = vmatprep.mubr.f32.mxu0 0.0
    %3175 = vmatmul.mubr.f32.gmra.mxu0 %v2972
    %v3176 = vpop.f32.mrf.mxu0
    %v3177 = vadd.f32 0.0, %v3176
    %v3178 = vpop.f32.mrf.mxu0
    %3179 = vmatprep.mubr.f32.mxu0 0.0
    %3180 = vmatmul.mubr.f32.gmra.mxu0 %v2975
    %v3181 = vpop.f32.mrf.mxu0
    %v3182 = vadd.f32 0.0, %v3181
    %v3183 = vpop.f32.mrf.mxu0
    %3184 = vmatprep.mubr.f32.mxu0 0.0
    %3185 = vmatmul.mubr.f32.gmra.mxu0 %v2978
    %v3186 = vpop.f32.mrf.mxu0
    %v3187 = vadd.f32 0.0, %v3186
    %v3188 = vpop.f32.mrf.mxu0
    %3189 = vmatprep.mubr.f32.mxu0 0.0
    %3190 = vmatmul.mubr.f32.gmra.mxu0 %v2981
    %v3191 = vpop.f32.mrf.mxu0
    %v3192 = vadd.f32 0.0, %v3191
    %v3193 = vpop.f32.mrf.mxu0
    %3194 = vmatprep.mubr.f32.mxu0 0.0
    %3195 = vmatmul.mubr.f32.gmra.mxu0 %v2984
    %v3196 = vpop.f32.mrf.mxu0
    %v3197 = vadd.f32 0.0, %v3196
    %v3198 = vpop.f32.mrf.mxu0
    %3199 = vdwg.mxu0
    %v3200 = vld [vmem:[%s5] sm:$0x1]
    %v3202 = vlaneseq
    %v3203 = vshrl.u32 %v3202, 7
    %v3204 = vsub.s32 0, %v3203
    %v3205 = vrot.slane %v3200, %v3204
    %v3207 = vadd.f32 %v3205, 0.0
    %v3208 = vld [vmem:[%s4] sm:$0xff]
    %v3209 = vld [vmem:[%s4 + $0x8] sm:$0xff]
    %v3210 = vld [vmem:[%s4 + $0x10] sm:$0xff]
    %v3211 = vld [vmem:[%s4 + $0x18] sm:$0xff]
    %v3212 = vld [vmem:[%s4 + $0x20] sm:$0xf]
    %v3214 = vsel %vm1014, %v3057, 0
    %v3217 = vsel %vm1014, %v3062, 0
    %v3220 = vsel %vm1014, %v3067, 0
    %v3223 = vsel %vm1014, %v3072, 0
    %v3226 = vsel %vm1176, %v3212, 0
    %3228 = vmatprep.subr.mxu0 0.0
    %3229 = vmatpush1.msra.mxu0 0.0
    %3230 = vmatprep.subr.mxu0 0.0
    %3231 = vmatpush1.msra.mxu0 0.0
    %3232 = vmatprep.subr.mxu0 0.0
    %3233 = vmatpush1.msra.mxu0 0.0
    %3234 = vmatprep.subr.mxu0 0.0
    %3235 = vmatpush1.msra.mxu0 0.0
    %3236 = vmatprep.subr.mxu0 0.0
    %3237 = vmatpush1.msra.mxu0 0.0
    %3238 = vmatprep.subr.mxu0 0.0
    %3239 = vmatpush1.msra.mxu0 0.0
    %3240 = vmatprep.subr.mxu0 0.0
    %3241 = vmatpush1.msra.mxu0 0.0
    %3242 = vmatprep.subr.mxu0 0.0
    %3243 = vmatpush1.msra.mxu0 0.0
    %3244 = vmatprep.subr.mxu0 0.0
    %3245 = vmatpush1.msra.mxu0 0.0
    %3246 = vmatprep.subr.mxu0 0.0
    %3247 = vmatpush1.msra.mxu0 0.0
    %3248 = vmatprep.subr.mxu0 0.0
    %3249 = vmatpush1.msra.mxu0 0.0
    %3250 = vmatprep.subr.mxu0 0.0
    %3251 = vmatpush1.msra.mxu0 %v3226
    %3252 = vmatprep.subr.mxu0 0.0
    %3253 = vmatpush1.msra.mxu0 %v3211
    %3254 = vmatprep.subr.mxu0 0.0
    %3255 = vmatpush1.msra.mxu0 %v3210
    %3256 = vmatprep.subr.mxu0 0.0
    %3257 = vmatpush1.msra.mxu0 %v3209
    %3258 = vmatprep.subr.mxu0 0.0
    %3259 = vmatpush1.msra.mxu0 %v3208
    %3260 = vmatprep.subr.mxu0 0.0
    %3261 = vmatpush2.msra.mxu0 0.0
    %3262 = vmatprep.subr.mxu0 0.0
    %3263 = vmatpush2.msra.mxu0 0.0
    %3264 = vmatprep.subr.mxu0 0.0
    %3265 = vmatpush2.msra.mxu0 0.0
    %3266 = vmatprep.subr.mxu0 0.0
    %3267 = vmatpush2.msra.mxu0 0.0
    %3268 = vmatprep.subr.mxu0 0.0
    %3269 = vmatpush2.msra.mxu0 0.0
    %3270 = vmatprep.subr.mxu0 0.0
    %3271 = vmatpush2.msra.mxu0 0.0
    %3272 = vmatprep.subr.mxu0 0.0
    %3273 = vmatpush2.msra.mxu0 0.0
    %3274 = vmatprep.subr.mxu0 0.0
    %3275 = vmatpush2.msra.mxu0 0.0
    %3276 = vmatprep.subr.mxu0 0.0
    %3277 = vmatpush2.msra.mxu0 0.0
    %3278 = vmatprep.subr.mxu0 0.0
    %3279 = vmatpush2.msra.mxu0 0.0
    %3280 = vmatprep.subr.mxu0 0.0
    %3281 = vmatpush2.msra.mxu0 0.0
    %3282 = vmatprep.subr.mxu0 0.0
    %3283 = vmatpush2.msra.mxu0 0.0
    %3284 = vmatprep.subr.mxu0 0.0
    %3285 = vmatpush2.msra.mxu0 0.0
    %3286 = vmatprep.subr.mxu0 0.0
    %3287 = vmatpush2.msra.mxu0 0.0
    %3288 = vmatprep.subr.mxu0 0.0
    %3289 = vmatpush2.msra.mxu0 0.0
    %3290 = vmatprep.subr.mxu0 0.0
    %3291 = vmatpush2.msra.mxu0 0.0
    %3292 = vmatprep.mubr.f32.mxu0 0.0
    %3293 = vmatmul.mubr.f32.gmra.mxu0 %v3214
    %v3294 = vpop.f32.mrf.mxu0
    %v3295 = vadd.f32 0.0, %v3294
    %v3296 = vpop.f32.mrf.mxu0
    %3297 = vmatprep.mubr.f32.mxu0 0.0
    %3298 = vmatmul.mubr.f32.gmra.mxu0 %v3217
    %v3299 = vpop.f32.mrf.mxu0
    %v3300 = vadd.f32 0.0, %v3299
    %v3301 = vpop.f32.mrf.mxu0
    %3302 = vmatprep.mubr.f32.mxu0 0.0
    %3303 = vmatmul.mubr.f32.gmra.mxu0 %v3220
    %v3304 = vpop.f32.mrf.mxu0
    %v3305 = vadd.f32 0.0, %v3304
    %v3306 = vpop.f32.mrf.mxu0
    %3307 = vmatprep.mubr.f32.mxu0 0.0
    %3308 = vmatmul.mubr.f32.gmra.mxu0 %v3223
    %v3309 = vpop.f32.mrf.mxu0
    %v3310 = vadd.f32 0.0, %v3309
    %v3311 = vpop.f32.mrf.mxu0
    %3312 = vdwg.mxu0
    %v3313 = vadd.f32 %v3207, %v3295
    %v3314 = vadd.f32 %v3207, %v3300
    %v3315 = vadd.f32 %v3207, %v3305
    %v3316 = vadd.f32 %v3207, %v3310
    %s3317 = scalar_lea.vmem %s4, 40
    %v3318 = vld [vmem:[%s3317] sm:$0xff]
    %v3319 = vld [vmem:[%s3317 + $0x8] sm:$0xff]
    %v3320 = vld [vmem:[%s3317 + $0x10] sm:$0xff]
    %v3321 = vld [vmem:[%s3317 + $0x18] sm:$0xff]
    %v3322 = vld [vmem:[%s3317 + $0x20] sm:$0xf]
    %vm3326 = vcmask 1046528
    %v3327 = vrot.slane %v3072, 1
    %v3328 = vrot.slane %v3077, 1
    %v3329 = vsel %vm3326, %v3327, %v3328
    %v3330 = vrot.slane %v3082, 1
    %v3331 = vsel %vm3326, %v3328, %v3330
    %v3332 = vrot.slane %v3087, 1
    %v3333 = vsel %vm3326, %v3330, %v3332
    %v3334 = vsel %vm1014, %v3329, 0
    %v3336 = vsel %vm1014, %v3331, 0
    %v3338 = vsel %vm1014, %v3333, 0
    %v3340 = vsel %vm1014, %v3332, 0
    %v3343 = vsel %vm1176, %v3322, 0
    %3345 = vmatprep.subr.mxu0 0.0
    %3346 = vmatpush1.msra.mxu0 0.0
    %3347 = vmatprep.subr.mxu0 0.0
    %3348 = vmatpush1.msra.mxu0 0.0
    %3349 = vmatprep.subr.mxu0 0.0
    %3350 = vmatpush1.msra.mxu0 0.0
    %3351 = vmatprep.subr.mxu0 0.0
    %3352 = vmatpush1.msra.mxu0 0.0
    %3353 = vmatprep.subr.mxu0 0.0
    %3354 = vmatpush1.msra.mxu0 0.0
    %3355 = vmatprep.subr.mxu0 0.0
    %3356 = vmatpush1.msra.mxu0 0.0
    %3357 = vmatprep.subr.mxu0 0.0
    %3358 = vmatpush1.msra.mxu0 0.0
    %3359 = vmatprep.subr.mxu0 0.0
    %3360 = vmatpush1.msra.mxu0 0.0
    %3361 = vmatprep.subr.mxu0 0.0
    %3362 = vmatpush1.msra.mxu0 0.0
    %3363 = vmatprep.subr.mxu0 0.0
    %3364 = vmatpush1.msra.mxu0 0.0
    %3365 = vmatprep.subr.mxu0 0.0
    %3366 = vmatpush1.msra.mxu0 0.0
    %3367 = vmatprep.subr.mxu0 0.0
    %3368 = vmatpush1.msra.mxu0 %v3343
    %3369 = vmatprep.subr.mxu0 0.0
    %3370 = vmatpush1.msra.mxu0 %v3321
    %3371 = vmatprep.subr.mxu0 0.0
    %3372 = vmatpush1.msra.mxu0 %v3320
    %3373 = vmatprep.subr.mxu0 0.0
    %3374 = vmatpush1.msra.mxu0 %v3319
    %3375 = vmatprep.subr.mxu0 0.0
    %3376 = vmatpush1.msra.mxu0 %v3318
    %3377 = vmatprep.subr.mxu0 0.0
    %3378 = vmatpush2.msra.mxu0 0.0
    %3379 = vmatprep.subr.mxu0 0.0
    %3380 = vmatpush2.msra.mxu0 0.0
    %3381 = vmatprep.subr.mxu0 0.0
    %3382 = vmatpush2.msra.mxu0 0.0
    %3383 = vmatprep.subr.mxu0 0.0
    %3384 = vmatpush2.msra.mxu0 0.0
    %3385 = vmatprep.subr.mxu0 0.0
    %3386 = vmatpush2.msra.mxu0 0.0
    %3387 = vmatprep.subr.mxu0 0.0
    %3388 = vmatpush2.msra.mxu0 0.0
    %3389 = vmatprep.subr.mxu0 0.0
    %3390 = vmatpush2.msra.mxu0 0.0
    %3391 = vmatprep.subr.mxu0 0.0
    %3392 = vmatpush2.msra.mxu0 0.0
    %3393 = vmatprep.subr.mxu0 0.0
    %3394 = vmatpush2.msra.mxu0 0.0
    %3395 = vmatprep.subr.mxu0 0.0
    %3396 = vmatpush2.msra.mxu0 0.0
    %3397 = vmatprep.subr.mxu0 0.0
    %3398 = vmatpush2.msra.mxu0 0.0
    %3399 = vmatprep.subr.mxu0 0.0
    %3400 = vmatpush2.msra.mxu0 0.0
    %3401 = vmatprep.subr.mxu0 0.0
    %3402 = vmatpush2.msra.mxu0 0.0
    %3403 = vmatprep.subr.mxu0 0.0
    %3404 = vmatpush2.msra.mxu0 0.0
    %3405 = vmatprep.subr.mxu0 0.0
    %3406 = vmatpush2.msra.mxu0 0.0
    %3407 = vmatprep.subr.mxu0 0.0
    %3408 = vmatpush2.msra.mxu0 0.0
    %3409 = vmatprep.mubr.f32.mxu0 0.0
    %3410 = vmatmul.mubr.f32.gmra.mxu0 %v3334
    %v3411 = vpop.f32.mrf.mxu0
    %v3412 = vadd.f32 0.0, %v3411
    %v3413 = vpop.f32.mrf.mxu0
    %3414 = vmatprep.mubr.f32.mxu0 0.0
    %3415 = vmatmul.mubr.f32.gmra.mxu0 %v3336
    %v3416 = vpop.f32.mrf.mxu0
    %v3417 = vadd.f32 0.0, %v3416
    %v3418 = vpop.f32.mrf.mxu0
    %3419 = vmatprep.mubr.f32.mxu0 0.0
    %3420 = vmatmul.mubr.f32.gmra.mxu0 %v3338
    %v3421 = vpop.f32.mrf.mxu0
    %v3422 = vadd.f32 0.0, %v3421
    %v3423 = vpop.f32.mrf.mxu0
    %3424 = vmatprep.mubr.f32.mxu0 0.0
    %3425 = vmatmul.mubr.f32.gmra.mxu0 %v3340
    %v3426 = vpop.f32.mrf.mxu0
    %v3427 = vadd.f32 0.0, %v3426
    %v3428 = vpop.f32.mrf.mxu0
    %3429 = vdwg.mxu0
    %v3430 = vadd.f32 %v3313, %v3412
    %v3431 = vadd.f32 %v3314, %v3417
    %v3432 = vadd.f32 %v3315, %v3422
    %v3433 = vadd.f32 %v3316, %v3427
    %s3434 = scalar_lea.vmem %s4, 80
    %v3435 = vld [vmem:[%s3434] sm:$0xff]
    %v3436 = vld [vmem:[%s3434 + $0x8] sm:$0xff]
    %v3437 = vld [vmem:[%s3434 + $0x10] sm:$0xff]
    %v3438 = vld [vmem:[%s3434 + $0x18] sm:$0xff]
    %v3439 = vld [vmem:[%s3434 + $0x20] sm:$0xf]
    %vm3443 = vcmask 1045504
    %v3444 = vrot.slane %v3087, 2
    %v3445 = vrot.slane %v3092, 2
    %v3446 = vsel %vm3443, %v3444, %v3445
    %v3447 = vrot.slane %v3097, 2
    %v3448 = vsel %vm3443, %v3445, %v3447
    %v3449 = vrot.slane %v3102, 2
    %v3450 = vsel %vm3443, %v3447, %v3449
    %v3451 = vsel %vm1014, %v3446, 0
    %v3453 = vsel %vm1014, %v3448, 0
    %v3455 = vsel %vm1014, %v3450, 0
    %v3457 = vsel %vm1014, %v3449, 0
    %v3460 = vsel %vm1176, %v3439, 0
    %3462 = vmatprep.subr.mxu0 0.0
    %3463 = vmatpush1.msra.mxu0 0.0
    %3464 = vmatprep.subr.mxu0 0.0
    %3465 = vmatpush1.msra.mxu0 0.0
    %3466 = vmatprep.subr.mxu0 0.0
    %3467 = vmatpush1.msra.mxu0 0.0
    %3468 = vmatprep.subr.mxu0 0.0
    %3469 = vmatpush1.msra.mxu0 0.0
    %3470 = vmatprep.subr.mxu0 0.0
    %3471 = vmatpush1.msra.mxu0 0.0
    %3472 = vmatprep.subr.mxu0 0.0
    %3473 = vmatpush1.msra.mxu0 0.0
    %3474 = vmatprep.subr.mxu0 0.0
    %3475 = vmatpush1.msra.mxu0 0.0
    %3476 = vmatprep.subr.mxu0 0.0
    %3477 = vmatpush1.msra.mxu0 0.0
    %3478 = vmatprep.subr.mxu0 0.0
    %3479 = vmatpush1.msra.mxu0 0.0
    %3480 = vmatprep.subr.mxu0 0.0
    %3481 = vmatpush1.msra.mxu0 0.0
    %3482 = vmatprep.subr.mxu0 0.0
    %3483 = vmatpush1.msra.mxu0 0.0
    %3484 = vmatprep.subr.mxu0 0.0
    %3485 = vmatpush1.msra.mxu0 %v3460
    %3486 = vmatprep.subr.mxu0 0.0
    %3487 = vmatpush1.msra.mxu0 %v3438
    %3488 = vmatprep.subr.mxu0 0.0
    %3489 = vmatpush1.msra.mxu0 %v3437
    %3490 = vmatprep.subr.mxu0 0.0
    %3491 = vmatpush1.msra.mxu0 %v3436
    %3492 = vmatprep.subr.mxu0 0.0
    %3493 = vmatpush1.msra.mxu0 %v3435
    %3494 = vmatprep.subr.mxu0 0.0
    %3495 = vmatpush2.msra.mxu0 0.0
    %3496 = vmatprep.subr.mxu0 0.0
    %3497 = vmatpush2.msra.mxu0 0.0
    %3498 = vmatprep.subr.mxu0 0.0
    %3499 = vmatpush2.msra.mxu0 0.0
    %3500 = vmatprep.subr.mxu0 0.0
    %3501 = vmatpush2.msra.mxu0 0.0
    %3502 = vmatprep.subr.mxu0 0.0
    %3503 = vmatpush2.msra.mxu0 0.0
    %3504 = vmatprep.subr.mxu0 0.0
    %3505 = vmatpush2.msra.mxu0 0.0
    %3506 = vmatprep.subr.mxu0 0.0
    %3507 = vmatpush2.msra.mxu0 0.0
    %3508 = vmatprep.subr.mxu0 0.0
    %3509 = vmatpush2.msra.mxu0 0.0
    %3510 = vmatprep.subr.mxu0 0.0
    %3511 = vmatpush2.msra.mxu0 0.0
    %3512 = vmatprep.subr.mxu0 0.0
    %3513 = vmatpush2.msra.mxu0 0.0
    %3514 = vmatprep.subr.mxu0 0.0
    %3515 = vmatpush2.msra.mxu0 0.0
    %3516 = vmatprep.subr.mxu0 0.0
    %3517 = vmatpush2.msra.mxu0 0.0
    %3518 = vmatprep.subr.mxu0 0.0
    %3519 = vmatpush2.msra.mxu0 0.0
    %3520 = vmatprep.subr.mxu0 0.0
    %3521 = vmatpush2.msra.mxu0 0.0
    %3522 = vmatprep.subr.mxu0 0.0
    %3523 = vmatpush2.msra.mxu0 0.0
    %3524 = vmatprep.subr.mxu0 0.0
    %3525 = vmatpush2.msra.mxu0 0.0
    %3526 = vmatprep.mubr.f32.mxu0 0.0
    %3527 = vmatmul.mubr.f32.gmra.mxu0 %v3451
    %v3528 = vpop.f32.mrf.mxu0
    %v3529 = vadd.f32 0.0, %v3528
    %v3530 = vpop.f32.mrf.mxu0
    %3531 = vmatprep.mubr.f32.mxu0 0.0
    %3532 = vmatmul.mubr.f32.gmra.mxu0 %v3453
    %v3533 = vpop.f32.mrf.mxu0
    %v3534 = vadd.f32 0.0, %v3533
    %v3535 = vpop.f32.mrf.mxu0
    %3536 = vmatprep.mubr.f32.mxu0 0.0
    %3537 = vmatmul.mubr.f32.gmra.mxu0 %v3455
    %v3538 = vpop.f32.mrf.mxu0
    %v3539 = vadd.f32 0.0, %v3538
    %v3540 = vpop.f32.mrf.mxu0
    %3541 = vmatprep.mubr.f32.mxu0 0.0
    %3542 = vmatmul.mubr.f32.gmra.mxu0 %v3457
    %v3543 = vpop.f32.mrf.mxu0
    %v3544 = vadd.f32 0.0, %v3543
    %v3545 = vpop.f32.mrf.mxu0
    %3546 = vdwg.mxu0
    %v3547 = vadd.f32 %v3430, %v3529
    %v3548 = vadd.f32 %v3431, %v3534
    %v3549 = vadd.f32 %v3432, %v3539
    %v3550 = vadd.f32 %v3433, %v3544
    %s3551 = scalar_lea.vmem %s4, 120
    %v3552 = vld [vmem:[%s3551] sm:$0xff]
    %v3553 = vld [vmem:[%s3551 + $0x8] sm:$0xff]
    %v3554 = vld [vmem:[%s3551 + $0x10] sm:$0xff]
    %v3555 = vld [vmem:[%s3551 + $0x18] sm:$0xff]
    %v3556 = vld [vmem:[%s3551 + $0x20] sm:$0xf]
    %vm3560 = vcmask 1044480
    %v3561 = vrot.slane %v3102, 3
    %v3562 = vrot.slane %v3107, 3
    %v3563 = vsel %vm3560, %v3561, %v3562
    %v3564 = vrot.slane %v3112, 3
    %v3565 = vsel %vm3560, %v3562, %v3564
    %v3566 = vrot.slane %v3117, 3
    %v3567 = vsel %vm3560, %v3564, %v3566
    %v3568 = vsel %vm1014, %v3563, 0
    %v3570 = vsel %vm1014, %v3565, 0
    %v3572 = vsel %vm1014, %v3567, 0
    %v3574 = vsel %vm1014, %v3566, 0
    %v3577 = vsel %vm1176, %v3556, 0
    %3579 = vmatprep.subr.mxu0 0.0
    %3580 = vmatpush1.msra.mxu0 0.0
    %3581 = vmatprep.subr.mxu0 0.0
    %3582 = vmatpush1.msra.mxu0 0.0
    %3583 = vmatprep.subr.mxu0 0.0
    %3584 = vmatpush1.msra.mxu0 0.0
    %3585 = vmatprep.subr.mxu0 0.0
    %3586 = vmatpush1.msra.mxu0 0.0
    %3587 = vmatprep.subr.mxu0 0.0
    %3588 = vmatpush1.msra.mxu0 0.0
    %3589 = vmatprep.subr.mxu0 0.0
    %3590 = vmatpush1.msra.mxu0 0.0
    %3591 = vmatprep.subr.mxu0 0.0
    %3592 = vmatpush1.msra.mxu0 0.0
    %3593 = vmatprep.subr.mxu0 0.0
    %3594 = vmatpush1.msra.mxu0 0.0
    %3595 = vmatprep.subr.mxu0 0.0
    %3596 = vmatpush1.msra.mxu0 0.0
    %3597 = vmatprep.subr.mxu0 0.0
    %3598 = vmatpush1.msra.mxu0 0.0
    %3599 = vmatprep.subr.mxu0 0.0
    %3600 = vmatpush1.msra.mxu0 0.0
    %3601 = vmatprep.subr.mxu0 0.0
    %3602 = vmatpush1.msra.mxu0 %v3577
    %3603 = vmatprep.subr.mxu0 0.0
    %3604 = vmatpush1.msra.mxu0 %v3555
    %3605 = vmatprep.subr.mxu0 0.0
    %3606 = vmatpush1.msra.mxu0 %v3554
    %3607 = vmatprep.subr.mxu0 0.0
    %3608 = vmatpush1.msra.mxu0 %v3553
    %3609 = vmatprep.subr.mxu0 0.0
    %3610 = vmatpush1.msra.mxu0 %v3552
    %3611 = vmatprep.subr.mxu0 0.0
    %3612 = vmatpush2.msra.mxu0 0.0
    %3613 = vmatprep.subr.mxu0 0.0
    %3614 = vmatpush2.msra.mxu0 0.0
    %3615 = vmatprep.subr.mxu0 0.0
    %3616 = vmatpush2.msra.mxu0 0.0
    %3617 = vmatprep.subr.mxu0 0.0
    %3618 = vmatpush2.msra.mxu0 0.0
    %3619 = vmatprep.subr.mxu0 0.0
    %3620 = vmatpush2.msra.mxu0 0.0
    %3621 = vmatprep.subr.mxu0 0.0
    %3622 = vmatpush2.msra.mxu0 0.0
    %3623 = vmatprep.subr.mxu0 0.0
    %3624 = vmatpush2.msra.mxu0 0.0
    %3625 = vmatprep.subr.mxu0 0.0
    %3626 = vmatpush2.msra.mxu0 0.0
    %3627 = vmatprep.subr.mxu0 0.0
    %3628 = vmatpush2.msra.mxu0 0.0
    %3629 = vmatprep.subr.mxu0 0.0
    %3630 = vmatpush2.msra.mxu0 0.0
    %3631 = vmatprep.subr.mxu0 0.0
    %3632 = vmatpush2.msra.mxu0 0.0
    %3633 = vmatprep.subr.mxu0 0.0
    %3634 = vmatpush2.msra.mxu0 0.0
    %3635 = vmatprep.subr.mxu0 0.0
    %3636 = vmatpush2.msra.mxu0 0.0
    %3637 = vmatprep.subr.mxu0 0.0
    %3638 = vmatpush2.msra.mxu0 0.0
    %3639 = vmatprep.subr.mxu0 0.0
    %3640 = vmatpush2.msra.mxu0 0.0
    %3641 = vmatprep.subr.mxu0 0.0
    %3642 = vmatpush2.msra.mxu0 0.0
    %3643 = vmatprep.mubr.f32.mxu0 0.0
    %3644 = vmatmul.mubr.f32.gmra.mxu0 %v3568
    %v3645 = vpop.f32.mrf.mxu0
    %v3646 = vadd.f32 0.0, %v3645
    %v3647 = vpop.f32.mrf.mxu0
    %3648 = vmatprep.mubr.f32.mxu0 0.0
    %3649 = vmatmul.mubr.f32.gmra.mxu0 %v3570
    %v3650 = vpop.f32.mrf.mxu0
    %v3651 = vadd.f32 0.0, %v3650
    %v3652 = vpop.f32.mrf.mxu0
    %3653 = vmatprep.mubr.f32.mxu0 0.0
    %3654 = vmatmul.mubr.f32.gmra.mxu0 %v3572
    %v3655 = vpop.f32.mrf.mxu0
    %v3656 = vadd.f32 0.0, %v3655
    %v3657 = vpop.f32.mrf.mxu0
    %3658 = vmatprep.mubr.f32.mxu0 0.0
    %3659 = vmatmul.mubr.f32.gmra.mxu0 %v3574
    %v3660 = vpop.f32.mrf.mxu0
    %v3661 = vadd.f32 0.0, %v3660
    %v3662 = vpop.f32.mrf.mxu0
    %3663 = vdwg.mxu0
    %v3664 = vadd.f32 %v3547, %v3646
    %v3665 = vadd.f32 %v3548, %v3651
    %v3666 = vadd.f32 %v3549, %v3656
    %v3667 = vadd.f32 %v3550, %v3661
    %s3668 = scalar_lea.vmem %s4, 160
    %v3669 = vld [vmem:[%s3668] sm:$0xff]
    %v3670 = vld [vmem:[%s3668 + $0x8] sm:$0xff]
    %v3671 = vld [vmem:[%s3668 + $0x10] sm:$0xff]
    %v3672 = vld [vmem:[%s3668 + $0x18] sm:$0xff]
    %v3673 = vld [vmem:[%s3668 + $0x20] sm:$0xf]
    %v3677 = vrot.slane %v3117, 4
    %v3678 = vrot.slane %v3122, 4
    %v3679 = vsel %vm1176, %v3677, %v3678
    %v3680 = vrot.slane %v3127, 4
    %v3681 = vsel %vm1176, %v3678, %v3680
    %v3682 = vrot.slane %v3132, 4
    %v3683 = vsel %vm1176, %v3680, %v3682
    %v3684 = vsel %vm1014, %v3679, 0
    %v3686 = vsel %vm1014, %v3681, 0
    %v3688 = vsel %vm1014, %v3683, 0
    %v3690 = vsel %vm1014, %v3682, 0
    %v3693 = vsel %vm1176, %v3673, 0
    %3695 = vmatprep.subr.mxu0 0.0
    %3696 = vmatpush1.msra.mxu0 0.0
    %3697 = vmatprep.subr.mxu0 0.0
    %3698 = vmatpush1.msra.mxu0 0.0
    %3699 = vmatprep.subr.mxu0 0.0
    %3700 = vmatpush1.msra.mxu0 0.0
    %3701 = vmatprep.subr.mxu0 0.0
    %3702 = vmatpush1.msra.mxu0 0.0
    %3703 = vmatprep.subr.mxu0 0.0
    %3704 = vmatpush1.msra.mxu0 0.0
    %3705 = vmatprep.subr.mxu0 0.0
    %3706 = vmatpush1.msra.mxu0 0.0
    %3707 = vmatprep.subr.mxu0 0.0
    %3708 = vmatpush1.msra.mxu0 0.0
    %3709 = vmatprep.subr.mxu0 0.0
    %3710 = vmatpush1.msra.mxu0 0.0
    %3711 = vmatprep.subr.mxu0 0.0
    %3712 = vmatpush1.msra.mxu0 0.0
    %3713 = vmatprep.subr.mxu0 0.0
    %3714 = vmatpush1.msra.mxu0 0.0
    %3715 = vmatprep.subr.mxu0 0.0
    %3716 = vmatpush1.msra.mxu0 0.0
    %3717 = vmatprep.subr.mxu0 0.0
    %3718 = vmatpush1.msra.mxu0 %v3693
    %3719 = vmatprep.subr.mxu0 0.0
    %3720 = vmatpush1.msra.mxu0 %v3672
    %3721 = vmatprep.subr.mxu0 0.0
    %3722 = vmatpush1.msra.mxu0 %v3671
    %3723 = vmatprep.subr.mxu0 0.0
    %3724 = vmatpush1.msra.mxu0 %v3670
    %3725 = vmatprep.subr.mxu0 0.0
    %3726 = vmatpush1.msra.mxu0 %v3669
    %3727 = vmatprep.subr.mxu0 0.0
    %3728 = vmatpush2.msra.mxu0 0.0
    %3729 = vmatprep.subr.mxu0 0.0
    %3730 = vmatpush2.msra.mxu0 0.0
    %3731 = vmatprep.subr.mxu0 0.0
    %3732 = vmatpush2.msra.mxu0 0.0
    %3733 = vmatprep.subr.mxu0 0.0
    %3734 = vmatpush2.msra.mxu0 0.0
    %3735 = vmatprep.subr.mxu0 0.0
    %3736 = vmatpush2.msra.mxu0 0.0
    %3737 = vmatprep.subr.mxu0 0.0
    %3738 = vmatpush2.msra.mxu0 0.0
    %3739 = vmatprep.subr.mxu0 0.0
    %3740 = vmatpush2.msra.mxu0 0.0
    %3741 = vmatprep.subr.mxu0 0.0
    %3742 = vmatpush2.msra.mxu0 0.0
    %3743 = vmatprep.subr.mxu0 0.0
    %3744 = vmatpush2.msra.mxu0 0.0
    %3745 = vmatprep.subr.mxu0 0.0
    %3746 = vmatpush2.msra.mxu0 0.0
    %3747 = vmatprep.subr.mxu0 0.0
    %3748 = vmatpush2.msra.mxu0 0.0
    %3749 = vmatprep.subr.mxu0 0.0
    %3750 = vmatpush2.msra.mxu0 0.0
    %3751 = vmatprep.subr.mxu0 0.0
    %3752 = vmatpush2.msra.mxu0 0.0
    %3753 = vmatprep.subr.mxu0 0.0
    %3754 = vmatpush2.msra.mxu0 0.0
    %3755 = vmatprep.subr.mxu0 0.0
    %3756 = vmatpush2.msra.mxu0 0.0
    %3757 = vmatprep.subr.mxu0 0.0
    %3758 = vmatpush2.msra.mxu0 0.0
    %3759 = vmatprep.mubr.f32.mxu0 0.0
    %3760 = vmatmul.mubr.f32.gmra.mxu0 %v3684
    %v3761 = vpop.f32.mrf.mxu0
    %v3762 = vadd.f32 0.0, %v3761
    %v3763 = vpop.f32.mrf.mxu0
    %3764 = vmatprep.mubr.f32.mxu0 0.0
    %3765 = vmatmul.mubr.f32.gmra.mxu0 %v3686
    %v3766 = vpop.f32.mrf.mxu0
    %v3767 = vadd.f32 0.0, %v3766
    %v3768 = vpop.f32.mrf.mxu0
    %3769 = vmatprep.mubr.f32.mxu0 0.0
    %3770 = vmatmul.mubr.f32.gmra.mxu0 %v3688
    %v3771 = vpop.f32.mrf.mxu0
    %v3772 = vadd.f32 0.0, %v3771
    %v3773 = vpop.f32.mrf.mxu0
    %3774 = vmatprep.mubr.f32.mxu0 0.0
    %3775 = vmatmul.mubr.f32.gmra.mxu0 %v3690
    %v3776 = vpop.f32.mrf.mxu0
    %v3777 = vadd.f32 0.0, %v3776
    %v3778 = vpop.f32.mrf.mxu0
    %3779 = vdwg.mxu0
    %v3780 = vadd.f32 %v3664, %v3762
    %v3781 = vadd.f32 %v3665, %v3767
    %v3782 = vadd.f32 %v3666, %v3772
    %v3783 = vadd.f32 %v3667, %v3777
    %s3784 = scalar_lea.vmem %s4, 200
    %v3785 = vld [vmem:[%s3784] sm:$0xff]
    %v3786 = vld [vmem:[%s3784 + $0x8] sm:$0xff]
    %v3787 = vld [vmem:[%s3784 + $0x10] sm:$0xff]
    %v3788 = vld [vmem:[%s3784 + $0x18] sm:$0xff]
    %v3789 = vld [vmem:[%s3784 + $0x20] sm:$0xf]
    %vm3793 = vcmask 1042432
    %v3794 = vrot.slane %v3132, 5
    %v3795 = vrot.slane %v3137, 5
    %v3796 = vsel %vm3793, %v3794, %v3795
    %v3797 = vrot.slane %v3142, 5
    %v3798 = vsel %vm3793, %v3795, %v3797
    %v3799 = vrot.slane %v3147, 5
    %v3800 = vsel %vm3793, %v3797, %v3799
    %v3801 = vsel %vm1014, %v3796, 0
    %v3803 = vsel %vm1014, %v3798, 0
    %v3805 = vsel %vm1014, %v3800, 0
    %v3807 = vsel %vm1014, %v3799, 0
    %v3810 = vsel %vm1176, %v3789, 0
    %3812 = vmatprep.subr.mxu0 0.0
    %3813 = vmatpush1.msra.mxu0 0.0
    %3814 = vmatprep.subr.mxu0 0.0
    %3815 = vmatpush1.msra.mxu0 0.0
    %3816 = vmatprep.subr.mxu0 0.0
    %3817 = vmatpush1.msra.mxu0 0.0
    %3818 = vmatprep.subr.mxu0 0.0
    %3819 = vmatpush1.msra.mxu0 0.0
    %3820 = vmatprep.subr.mxu0 0.0
    %3821 = vmatpush1.msra.mxu0 0.0
    %3822 = vmatprep.subr.mxu0 0.0
    %3823 = vmatpush1.msra.mxu0 0.0
    %3824 = vmatprep.subr.mxu0 0.0
    %3825 = vmatpush1.msra.mxu0 0.0
    %3826 = vmatprep.subr.mxu0 0.0
    %3827 = vmatpush1.msra.mxu0 0.0
    %3828 = vmatprep.subr.mxu0 0.0
    %3829 = vmatpush1.msra.mxu0 0.0
    %3830 = vmatprep.subr.mxu0 0.0
    %3831 = vmatpush1.msra.mxu0 0.0
    %3832 = vmatprep.subr.mxu0 0.0
    %3833 = vmatpush1.msra.mxu0 0.0
    %3834 = vmatprep.subr.mxu0 0.0
    %3835 = vmatpush1.msra.mxu0 %v3810
    %3836 = vmatprep.subr.mxu0 0.0
    %3837 = vmatpush1.msra.mxu0 %v3788
    %3838 = vmatprep.subr.mxu0 0.0
    %3839 = vmatpush1.msra.mxu0 %v3787
    %3840 = vmatprep.subr.mxu0 0.0
    %3841 = vmatpush1.msra.mxu0 %v3786
    %3842 = vmatprep.subr.mxu0 0.0
    %3843 = vmatpush1.msra.mxu0 %v3785
    %3844 = vmatprep.subr.mxu0 0.0
    %3845 = vmatpush2.msra.mxu0 0.0
    %3846 = vmatprep.subr.mxu0 0.0
    %3847 = vmatpush2.msra.mxu0 0.0
    %3848 = vmatprep.subr.mxu0 0.0
    %3849 = vmatpush2.msra.mxu0 0.0
    %3850 = vmatprep.subr.mxu0 0.0
    %3851 = vmatpush2.msra.mxu0 0.0
    %3852 = vmatprep.subr.mxu0 0.0
    %3853 = vmatpush2.msra.mxu0 0.0
    %3854 = vmatprep.subr.mxu0 0.0
    %3855 = vmatpush2.msra.mxu0 0.0
    %3856 = vmatprep.subr.mxu0 0.0
    %3857 = vmatpush2.msra.mxu0 0.0
    %3858 = vmatprep.subr.mxu0 0.0
    %3859 = vmatpush2.msra.mxu0 0.0
    %3860 = vmatprep.subr.mxu0 0.0
    %3861 = vmatpush2.msra.mxu0 0.0
    %3862 = vmatprep.subr.mxu0 0.0
    %3863 = vmatpush2.msra.mxu0 0.0
    %3864 = vmatprep.subr.mxu0 0.0
    %3865 = vmatpush2.msra.mxu0 0.0
    %3866 = vmatprep.subr.mxu0 0.0
    %3867 = vmatpush2.msra.mxu0 0.0
    %3868 = vmatprep.subr.mxu0 0.0
    %3869 = vmatpush2.msra.mxu0 0.0
    %3870 = vmatprep.subr.mxu0 0.0
    %3871 = vmatpush2.msra.mxu0 0.0
    %3872 = vmatprep.subr.mxu0 0.0
    %3873 = vmatpush2.msra.mxu0 0.0
    %3874 = vmatprep.subr.mxu0 0.0
    %3875 = vmatpush2.msra.mxu0 0.0
    %3876 = vmatprep.mubr.f32.mxu0 0.0
    %3877 = vmatmul.mubr.f32.gmra.mxu0 %v3801
    %v3878 = vpop.f32.mrf.mxu0
    %v3879 = vadd.f32 0.0, %v3878
    %v3880 = vpop.f32.mrf.mxu0
    %3881 = vmatprep.mubr.f32.mxu0 0.0
    %3882 = vmatmul.mubr.f32.gmra.mxu0 %v3803
    %v3883 = vpop.f32.mrf.mxu0
    %v3884 = vadd.f32 0.0, %v3883
    %v3885 = vpop.f32.mrf.mxu0
    %3886 = vmatprep.mubr.f32.mxu0 0.0
    %3887 = vmatmul.mubr.f32.gmra.mxu0 %v3805
    %v3888 = vpop.f32.mrf.mxu0
    %v3889 = vadd.f32 0.0, %v3888
    %v3890 = vpop.f32.mrf.mxu0
    %3891 = vmatprep.mubr.f32.mxu0 0.0
    %3892 = vmatmul.mubr.f32.gmra.mxu0 %v3807
    %v3893 = vpop.f32.mrf.mxu0
    %v3894 = vadd.f32 0.0, %v3893
    %v3895 = vpop.f32.mrf.mxu0
    %3896 = vdwg.mxu0
    %v3897 = vadd.f32 %v3780, %v3879
    %v3898 = vadd.f32 %v3781, %v3884
    %v3899 = vadd.f32 %v3782, %v3889
    %v3900 = vadd.f32 %v3783, %v3894
    %s3901 = scalar_lea.vmem %s4, 240
    %v3902 = vld [vmem:[%s3901] sm:$0xff]
    %v3903 = vld [vmem:[%s3901 + $0x8] sm:$0xff]
    %v3904 = vld [vmem:[%s3901 + $0x10] sm:$0xff]
    %v3905 = vld [vmem:[%s3901 + $0x18] sm:$0xff]
    %v3906 = vld [vmem:[%s3901 + $0x20] sm:$0xf]
    %v3910 = vrot.slane %v3147, 6
    %v3911 = vrot.slane %v3152, 6
    %v3912 = vsel %vm445, %v3910, %v3911
    %v3913 = vrot.slane %v3157, 6
    %v3914 = vsel %vm445, %v3911, %v3913
    %v3915 = vrot.slane %v3162, 6
    %v3916 = vsel %vm445, %v3913, %v3915
    %v3917 = vsel %vm1014, %v3912, 0
    %v3919 = vsel %vm1014, %v3914, 0
    %v3921 = vsel %vm1014, %v3916, 0
    %v3923 = vsel %vm1014, %v3915, 0
    %v3926 = vsel %vm1176, %v3906, 0
    %3928 = vmatprep.subr.mxu0 0.0
    %3929 = vmatpush1.msra.mxu0 0.0
    %3930 = vmatprep.subr.mxu0 0.0
    %3931 = vmatpush1.msra.mxu0 0.0
    %3932 = vmatprep.subr.mxu0 0.0
    %3933 = vmatpush1.msra.mxu0 0.0
    %3934 = vmatprep.subr.mxu0 0.0
    %3935 = vmatpush1.msra.mxu0 0.0
    %3936 = vmatprep.subr.mxu0 0.0
    %3937 = vmatpush1.msra.mxu0 0.0
    %3938 = vmatprep.subr.mxu0 0.0
    %3939 = vmatpush1.msra.mxu0 0.0
    %3940 = vmatprep.subr.mxu0 0.0
    %3941 = vmatpush1.msra.mxu0 0.0
    %3942 = vmatprep.subr.mxu0 0.0
    %3943 = vmatpush1.msra.mxu0 0.0
    %3944 = vmatprep.subr.mxu0 0.0
    %3945 = vmatpush1.msra.mxu0 0.0
    %3946 = vmatprep.subr.mxu0 0.0
    %3947 = vmatpush1.msra.mxu0 0.0
    %3948 = vmatprep.subr.mxu0 0.0
    %3949 = vmatpush1.msra.mxu0 0.0
    %3950 = vmatprep.subr.mxu0 0.0
    %3951 = vmatpush1.msra.mxu0 %v3926
    %3952 = vmatprep.subr.mxu0 0.0
    %3953 = vmatpush1.msra.mxu0 %v3905
    %3954 = vmatprep.subr.mxu0 0.0
    %3955 = vmatpush1.msra.mxu0 %v3904
    %3956 = vmatprep.subr.mxu0 0.0
    %3957 = vmatpush1.msra.mxu0 %v3903
    %3958 = vmatprep.subr.mxu0 0.0
    %3959 = vmatpush1.msra.mxu0 %v3902
    %3960 = vmatprep.subr.mxu0 0.0
    %3961 = vmatpush2.msra.mxu0 0.0
    %3962 = vmatprep.subr.mxu0 0.0
    %3963 = vmatpush2.msra.mxu0 0.0
    %3964 = vmatprep.subr.mxu0 0.0
    %3965 = vmatpush2.msra.mxu0 0.0
    %3966 = vmatprep.subr.mxu0 0.0
    %3967 = vmatpush2.msra.mxu0 0.0
    %3968 = vmatprep.subr.mxu0 0.0
    %3969 = vmatpush2.msra.mxu0 0.0
    %3970 = vmatprep.subr.mxu0 0.0
    %3971 = vmatpush2.msra.mxu0 0.0
    %3972 = vmatprep.subr.mxu0 0.0
    %3973 = vmatpush2.msra.mxu0 0.0
    %3974 = vmatprep.subr.mxu0 0.0
    %3975 = vmatpush2.msra.mxu0 0.0
    %3976 = vmatprep.subr.mxu0 0.0
    %3977 = vmatpush2.msra.mxu0 0.0
    %3978 = vmatprep.subr.mxu0 0.0
    %3979 = vmatpush2.msra.mxu0 0.0
    %3980 = vmatprep.subr.mxu0 0.0
    %3981 = vmatpush2.msra.mxu0 0.0
    %3982 = vmatprep.subr.mxu0 0.0
    %3983 = vmatpush2.msra.mxu0 0.0
    %3984 = vmatprep.subr.mxu0 0.0
    %3985 = vmatpush2.msra.mxu0 0.0
    %3986 = vmatprep.subr.mxu0 0.0
    %3987 = vmatpush2.msra.mxu0 0.0
    %3988 = vmatprep.subr.mxu0 0.0
    %3989 = vmatpush2.msra.mxu0 0.0
    %3990 = vmatprep.subr.mxu0 0.0
    %3991 = vmatpush2.msra.mxu0 0.0
    %3992 = vmatprep.mubr.f32.mxu0 0.0
    %3993 = vmatmul.mubr.f32.gmra.mxu0 %v3917
    %v3994 = vpop.f32.mrf.mxu0
    %v3995 = vadd.f32 0.0, %v3994
    %v3996 = vpop.f32.mrf.mxu0
    %3997 = vmatprep.mubr.f32.mxu0 0.0
    %3998 = vmatmul.mubr.f32.gmra.mxu0 %v3919
    %v3999 = vpop.f32.mrf.mxu0
    %v4000 = vadd.f32 0.0, %v3999
    %v4001 = vpop.f32.mrf.mxu0
    %4002 = vmatprep.mubr.f32.mxu0 0.0
    %4003 = vmatmul.mubr.f32.gmra.mxu0 %v3921
    %v4004 = vpop.f32.mrf.mxu0
    %v4005 = vadd.f32 0.0, %v4004
    %v4006 = vpop.f32.mrf.mxu0
    %4007 = vmatprep.mubr.f32.mxu0 0.0
    %4008 = vmatmul.mubr.f32.gmra.mxu0 %v3923
    %v4009 = vpop.f32.mrf.mxu0
    %v4010 = vadd.f32 0.0, %v4009
    %v4011 = vpop.f32.mrf.mxu0
    %4012 = vdwg.mxu0
    %v4013 = vadd.f32 %v3897, %v3995
    %v4014 = vadd.f32 %v3898, %v4000
    %v4015 = vadd.f32 %v3899, %v4005
    %v4016 = vadd.f32 %v3900, %v4010
    %s4017 = scalar_lea.vmem %s4, 280
    %v4018 = vld [vmem:[%s4017] sm:$0xff]
    %v4019 = vld [vmem:[%s4017 + $0x8] sm:$0xff]
    %v4020 = vld [vmem:[%s4017 + $0x10] sm:$0xff]
    %v4021 = vld [vmem:[%s4017 + $0x18] sm:$0xff]
    %v4022 = vld [vmem:[%s4017 + $0x20] sm:$0xf]
    %v4026 = vrot.slane %v3162, 7
    %v4027 = vrot.slane %v3167, 7
    %v4028 = vsel %vm2986, %v4026, %v4027
    %v4029 = vrot.slane %v3172, 7
    %v4030 = vsel %vm2986, %v4027, %v4029
    %v4031 = vrot.slane %v3177, 7
    %v4032 = vsel %vm2986, %v4029, %v4031
    %v4033 = vsel %vm1014, %v4028, 0
    %v4035 = vsel %vm1014, %v4030, 0
    %v4037 = vsel %vm1014, %v4032, 0
    %v4039 = vsel %vm1014, %v4031, 0
    %v4042 = vsel %vm1176, %v4022, 0
    %4044 = vmatprep.subr.mxu0 0.0
    %4045 = vmatpush1.msra.mxu0 0.0
    %4046 = vmatprep.subr.mxu0 0.0
    %4047 = vmatpush1.msra.mxu0 0.0
    %4048 = vmatprep.subr.mxu0 0.0
    %4049 = vmatpush1.msra.mxu0 0.0
    %4050 = vmatprep.subr.mxu0 0.0
    %4051 = vmatpush1.msra.mxu0 0.0
    %4052 = vmatprep.subr.mxu0 0.0
    %4053 = vmatpush1.msra.mxu0 0.0
    %4054 = vmatprep.subr.mxu0 0.0
    %4055 = vmatpush1.msra.mxu0 0.0
    %4056 = vmatprep.subr.mxu0 0.0
    %4057 = vmatpush1.msra.mxu0 0.0
    %4058 = vmatprep.subr.mxu0 0.0
    %4059 = vmatpush1.msra.mxu0 0.0
    %4060 = vmatprep.subr.mxu0 0.0
    %4061 = vmatpush1.msra.mxu0 0.0
    %4062 = vmatprep.subr.mxu0 0.0
    %4063 = vmatpush1.msra.mxu0 0.0
    %4064 = vmatprep.subr.mxu0 0.0
    %4065 = vmatpush1.msra.mxu0 0.0
    %4066 = vmatprep.subr.mxu0 0.0
    %4067 = vmatpush1.msra.mxu0 %v4042
    %4068 = vmatprep.subr.mxu0 0.0
    %4069 = vmatpush1.msra.mxu0 %v4021
    %4070 = vmatprep.subr.mxu0 0.0
    %4071 = vmatpush1.msra.mxu0 %v4020
    %4072 = vmatprep.subr.mxu0 0.0
    %4073 = vmatpush1.msra.mxu0 %v4019
    %4074 = vmatprep.subr.mxu0 0.0
    %4075 = vmatpush1.msra.mxu0 %v4018
    %4076 = vmatprep.subr.mxu0 0.0
    %4077 = vmatpush2.msra.mxu0 0.0
    %4078 = vmatprep.subr.mxu0 0.0
    %4079 = vmatpush2.msra.mxu0 0.0
    %4080 = vmatprep.subr.mxu0 0.0
    %4081 = vmatpush2.msra.mxu0 0.0
    %4082 = vmatprep.subr.mxu0 0.0
    %4083 = vmatpush2.msra.mxu0 0.0
    %4084 = vmatprep.subr.mxu0 0.0
    %4085 = vmatpush2.msra.mxu0 0.0
    %4086 = vmatprep.subr.mxu0 0.0
    %4087 = vmatpush2.msra.mxu0 0.0
    %4088 = vmatprep.subr.mxu0 0.0
    %4089 = vmatpush2.msra.mxu0 0.0
    %4090 = vmatprep.subr.mxu0 0.0
    %4091 = vmatpush2.msra.mxu0 0.0
    %4092 = vmatprep.subr.mxu0 0.0
    %4093 = vmatpush2.msra.mxu0 0.0
    %4094 = vmatprep.subr.mxu0 0.0
    %4095 = vmatpush2.msra.mxu0 0.0
    %4096 = vmatprep.subr.mxu0 0.0
    %4097 = vmatpush2.msra.mxu0 0.0
    %4098 = vmatprep.subr.mxu0 0.0
    %4099 = vmatpush2.msra.mxu0 0.0
    %4100 = vmatprep.subr.mxu0 0.0
    %4101 = vmatpush2.msra.mxu0 0.0
    %4102 = vmatprep.subr.mxu0 0.0
    %4103 = vmatpush2.msra.mxu0 0.0
    %4104 = vmatprep.subr.mxu0 0.0
    %4105 = vmatpush2.msra.mxu0 0.0
    %4106 = vmatprep.subr.mxu0 0.0
    %4107 = vmatpush2.msra.mxu0 0.0
    %4108 = vmatprep.mubr.f32.mxu0 0.0
    %4109 = vmatmul.mubr.f32.gmra.mxu0 %v4033
    %v4110 = vpop.f32.mrf.mxu0
    %v4111 = vadd.f32 0.0, %v4110
    %v4112 = vpop.f32.mrf.mxu0
    %4113 = vmatprep.mubr.f32.mxu0 0.0
    %4114 = vmatmul.mubr.f32.gmra.mxu0 %v4035
    %v4115 = vpop.f32.mrf.mxu0
    %v4116 = vadd.f32 0.0, %v4115
    %v4117 = vpop.f32.mrf.mxu0
    %4118 = vmatprep.mubr.f32.mxu0 0.0
    %4119 = vmatmul.mubr.f32.gmra.mxu0 %v4037
    %v4120 = vpop.f32.mrf.mxu0
    %v4121 = vadd.f32 0.0, %v4120
    %v4122 = vpop.f32.mrf.mxu0
    %4123 = vmatprep.mubr.f32.mxu0 0.0
    %4124 = vmatmul.mubr.f32.gmra.mxu0 %v4039
    %v4125 = vpop.f32.mrf.mxu0
    %v4126 = vadd.f32 0.0, %v4125
    %v4127 = vpop.f32.mrf.mxu0
    %4128 = vdwg.mxu0
    %v4129 = vadd.f32 %v4013, %v4111
    %v4130 = vadd.f32 %v4014, %v4116
    %v4131 = vadd.f32 %v4015, %v4121
    %v4132 = vadd.f32 %v4016, %v4126
    %s4133 = scalar_lea.vmem %s4, 320
    %v4134 = vld [vmem:[%s4133] sm:$0xff]
    %v4135 = vld [vmem:[%s4133 + $0x8] sm:$0xff]
    %v4136 = vld [vmem:[%s4133 + $0x10] sm:$0xff]
    %v4137 = vld [vmem:[%s4133 + $0x18] sm:$0xff]
    %v4138 = vld [vmem:[%s4133 + $0x20] sm:$0xf]
    %v4140 = vsel %vm1014, %v3182, 0
    %v4143 = vsel %vm1014, %v3187, 0
    %v4146 = vsel %vm1014, %v3192, 0
    %v4149 = vsel %vm1014, %v3197, 0
    %v4152 = vsel %vm1176, %v4138, 0
    %4154 = vmatprep.subr.mxu0 0.0
    %4155 = vmatpush1.msra.mxu0 0.0
    %4156 = vmatprep.subr.mxu0 0.0
    %4157 = vmatpush1.msra.mxu0 0.0
    %4158 = vmatprep.subr.mxu0 0.0
    %4159 = vmatpush1.msra.mxu0 0.0
    %4160 = vmatprep.subr.mxu0 0.0
    %4161 = vmatpush1.msra.mxu0 0.0
    %4162 = vmatprep.subr.mxu0 0.0
    %4163 = vmatpush1.msra.mxu0 0.0
    %4164 = vmatprep.subr.mxu0 0.0
    %4165 = vmatpush1.msra.mxu0 0.0
    %4166 = vmatprep.subr.mxu0 0.0
    %4167 = vmatpush1.msra.mxu0 0.0
    %4168 = vmatprep.subr.mxu0 0.0
    %4169 = vmatpush1.msra.mxu0 0.0
    %4170 = vmatprep.subr.mxu0 0.0
    %4171 = vmatpush1.msra.mxu0 0.0
    %4172 = vmatprep.subr.mxu0 0.0
    %4173 = vmatpush1.msra.mxu0 0.0
    %4174 = vmatprep.subr.mxu0 0.0
    %4175 = vmatpush1.msra.mxu0 0.0
    %4176 = vmatprep.subr.mxu0 0.0
    %4177 = vmatpush1.msra.mxu0 %v4152
    %4178 = vmatprep.subr.mxu0 0.0
    %4179 = vmatpush1.msra.mxu0 %v4137
    %4180 = vmatprep.subr.mxu0 0.0
    %4181 = vmatpush1.msra.mxu0 %v4136
    %4182 = vmatprep.subr.mxu0 0.0
    %4183 = vmatpush1.msra.mxu0 %v4135
    %4184 = vmatprep.subr.mxu0 0.0
    %4185 = vmatpush1.msra.mxu0 %v4134
    %4186 = vmatprep.subr.mxu0 0.0
    %4187 = vmatpush2.msra.mxu0 0.0
    %4188 = vmatprep.subr.mxu0 0.0
    %4189 = vmatpush2.msra.mxu0 0.0
    %4190 = vmatprep.subr.mxu0 0.0
    %4191 = vmatpush2.msra.mxu0 0.0
    %4192 = vmatprep.subr.mxu0 0.0
    %4193 = vmatpush2.msra.mxu0 0.0
    %4194 = vmatprep.subr.mxu0 0.0
    %4195 = vmatpush2.msra.mxu0 0.0
    %4196 = vmatprep.subr.mxu0 0.0
    %4197 = vmatpush2.msra.mxu0 0.0
    %4198 = vmatprep.subr.mxu0 0.0
    %4199 = vmatpush2.msra.mxu0 0.0
    %4200 = vmatprep.subr.mxu0 0.0
    %4201 = vmatpush2.msra.mxu0 0.0
    %4202 = vmatprep.subr.mxu0 0.0
    %4203 = vmatpush2.msra.mxu0 0.0
    %4204 = vmatprep.subr.mxu0 0.0
    %4205 = vmatpush2.msra.mxu0 0.0
    %4206 = vmatprep.subr.mxu0 0.0
    %4207 = vmatpush2.msra.mxu0 0.0
    %4208 = vmatprep.subr.mxu0 0.0
    %4209 = vmatpush2.msra.mxu0 0.0
    %4210 = vmatprep.subr.mxu0 0.0
    %4211 = vmatpush2.msra.mxu0 0.0
    %4212 = vmatprep.subr.mxu0 0.0
    %4213 = vmatpush2.msra.mxu0 0.0
    %4214 = vmatprep.subr.mxu0 0.0
    %4215 = vmatpush2.msra.mxu0 0.0
    %4216 = vmatprep.subr.mxu0 0.0
    %4217 = vmatpush2.msra.mxu0 0.0
    %4218 = vmatprep.mubr.f32.mxu0 0.0
    %4219 = vmatmul.mubr.f32.gmra.mxu0 %v4140
    %v4220 = vpop.f32.mrf.mxu0
    %v4221 = vadd.f32 0.0, %v4220
    %v4222 = vpop.f32.mrf.mxu0
    %4223 = vmatprep.mubr.f32.mxu0 0.0
    %4224 = vmatmul.mubr.f32.gmra.mxu0 %v4143
    %v4225 = vpop.f32.mrf.mxu0
    %v4226 = vadd.f32 0.0, %v4225
    %v4227 = vpop.f32.mrf.mxu0
    %4228 = vmatprep.mubr.f32.mxu0 0.0
    %4229 = vmatmul.mubr.f32.gmra.mxu0 %v4146
    %v4230 = vpop.f32.mrf.mxu0
    %v4231 = vadd.f32 0.0, %v4230
    %v4232 = vpop.f32.mrf.mxu0
    %4233 = vmatprep.mubr.f32.mxu0 0.0
    %4234 = vmatmul.mubr.f32.gmra.mxu0 %v4149
    %v4235 = vpop.f32.mrf.mxu0
    %v4236 = vadd.f32 0.0, %v4235
    %v4237 = vpop.f32.mrf.mxu0
    %4238 = vdwg.mxu0
    %v4239 = vadd.f32 %v4129, %v4221
    %v4240 = vadd.f32 %v4130, %v4226
    %v4241 = vadd.f32 %v4131, %v4231
    %v4242 = vadd.f32 %v4132, %v4236
    %4243 = vst.msk [vmem:[#allocation3] sm:$0xff] %vm1014, %v4239
    %4244 = vst.msk [vmem:[#allocation3 + $0x8] sm:$0xff] %vm1014, %v4240
    %4245 = vst.msk [vmem:[#allocation3 + $0x10] sm:$0xff] %vm1014, %v4241
    %vm4246 = vcmask 286720
    %4247 = vst.msk [vmem:[#allocation3 + $0x18] sm:$0x1] %vm4246, %v4242
    %v4248 = vld [vmem:[%s3] sm:$0x1]
    %v4250 = vlaneseq
    %v4251 = vshrl.u32 %v4250, 7
    %v4252 = vsub.s32 0, %v4251
    %v4253 = vrot.slane %v4248, %v4252
    %v4255 = vadd.f32 %v4253, 0.0
    %v4256 = vld [vmem:[#allocation2 + $0x2bc] sm:$0xff]
    %v4257 = vld [vmem:[#allocation2 + $0x2c4] sm:$0xff]
    %v4258 = vld [vmem:[#allocation2 + $0x2cc] sm:$0xff]
    %v4259 = vld [vmem:[#allocation2 + $0x2d4] sm:$0xff]
    %v4260 = vld [vmem:[#allocation2 + $0x2dc] sm:$0xff]
    %v4261 = vld [vmem:[#allocation2 + $0x2e4] sm:$0xff]
    %v4262 = vld [vmem:[#allocation2 + $0x2ec] sm:$0xff]
    %v4263 = vld [vmem:[#allocation2 + $0x2f4] sm:$0xff]
    %v4264 = vld [vmem:[#allocation2 + $0x2fc] sm:$0xff]
    %v4265 = vld [vmem:[#allocation2 + $0x304] sm:$0xff]
    %v4266 = vld [vmem:[#allocation2 + $0x30c] sm:$0xff]
    %v4267 = vld [vmem:[#allocation2 + $0x314] sm:$0x1]
    %v4268 = vld [vmem:[%s2] sm:$0xff]
    %v4269 = vld [vmem:[%s2 + $0x8] sm:$0xff]
    %v4270 = vld [vmem:[%s2 + $0x10] sm:$0xff]
    %v4271 = vld [vmem:[%s2 + $0x18] sm:$0xff]
    %v4272 = vld [vmem:[%s2 + $0x20] sm:$0xf]
    %v4274 = vsel %vm1014, %v4256, 0
    %v4277 = vsel %vm1014, %v4257, 0
    %v4280 = vsel %vm1014, %v4258, 0
    %v4283 = vsel %vm1014, %v4259, 0
    %v4286 = vsel %vm1014, %v4260, 0
    %v4289 = vsel %vm1014, %v4261, 0
    %v4292 = vsel %vm1014, %v4262, 0
    %v4295 = vsel %vm1014, %v4263, 0
    %v4298 = vsel %vm1014, %v4264, 0
    %v4301 = vsel %vm1014, %v4265, 0
    %v4304 = vsel %vm1014, %v4266, 0
    %v4307 = vsel %vm1014, %v4267, 0
    %v4310 = vsel %vm1176, %v4272, 0
    %4312 = vmatprep.subr.mxu0 0.0
    %4313 = vmatpush1.msra.mxu0 0.0
    %4314 = vmatprep.subr.mxu0 0.0
    %4315 = vmatpush1.msra.mxu0 0.0
    %4316 = vmatprep.subr.mxu0 0.0
    %4317 = vmatpush1.msra.mxu0 0.0
    %4318 = vmatprep.subr.mxu0 0.0
    %4319 = vmatpush1.msra.mxu0 0.0
    %4320 = vmatprep.subr.mxu0 0.0
    %4321 = vmatpush1.msra.mxu0 0.0
    %4322 = vmatprep.subr.mxu0 0.0
    %4323 = vmatpush1.msra.mxu0 0.0
    %4324 = vmatprep.subr.mxu0 0.0
    %4325 = vmatpush1.msra.mxu0 0.0
    %4326 = vmatprep.subr.mxu0 0.0
    %4327 = vmatpush1.msra.mxu0 0.0
    %4328 = vmatprep.subr.mxu0 0.0
    %4329 = vmatpush1.msra.mxu0 0.0
    %4330 = vmatprep.subr.mxu0 0.0
    %4331 = vmatpush1.msra.mxu0 0.0
    %4332 = vmatprep.subr.mxu0 0.0
    %4333 = vmatpush1.msra.mxu0 0.0
    %4334 = vmatprep.subr.mxu0 0.0
    %4335 = vmatpush1.msra.mxu0 %v4310
    %4336 = vmatprep.subr.mxu0 0.0
    %4337 = vmatpush1.msra.mxu0 %v4271
    %4338 = vmatprep.subr.mxu0 0.0
    %4339 = vmatpush1.msra.mxu0 %v4270
    %4340 = vmatprep.subr.mxu0 0.0
    %4341 = vmatpush1.msra.mxu0 %v4269
    %4342 = vmatprep.subr.mxu0 0.0
    %4343 = vmatpush1.msra.mxu0 %v4268
    %4344 = vmatprep.subr.mxu0 0.0
    %4345 = vmatpush2.msra.mxu0 0.0
    %4346 = vmatprep.subr.mxu0 0.0
    %4347 = vmatpush2.msra.mxu0 0.0
    %4348 = vmatprep.subr.mxu0 0.0
    %4349 = vmatpush2.msra.mxu0 0.0
    %4350 = vmatprep.subr.mxu0 0.0
    %4351 = vmatpush2.msra.mxu0 0.0
    %4352 = vmatprep.subr.mxu0 0.0
    %4353 = vmatpush2.msra.mxu0 0.0
    %4354 = vmatprep.subr.mxu0 0.0
    %4355 = vmatpush2.msra.mxu0 0.0
    %4356 = vmatprep.subr.mxu0 0.0
    %4357 = vmatpush2.msra.mxu0 0.0
    %4358 = vmatprep.subr.mxu0 0.0
    %4359 = vmatpush2.msra.mxu0 0.0
    %4360 = vmatprep.subr.mxu0 0.0
    %4361 = vmatpush2.msra.mxu0 0.0
    %4362 = vmatprep.subr.mxu0 0.0
    %4363 = vmatpush2.msra.mxu0 0.0
    %4364 = vmatprep.subr.mxu0 0.0
    %4365 = vmatpush2.msra.mxu0 0.0
    %4366 = vmatprep.subr.mxu0 0.0
    %4367 = vmatpush2.msra.mxu0 0.0
    %4368 = vmatprep.subr.mxu0 0.0
    %4369 = vmatpush2.msra.mxu0 0.0
    %4370 = vmatprep.subr.mxu0 0.0
    %4371 = vmatpush2.msra.mxu0 0.0
    %4372 = vmatprep.subr.mxu0 0.0
    %4373 = vmatpush2.msra.mxu0 0.0
    %4374 = vmatprep.subr.mxu0 0.0
    %4375 = vmatpush2.msra.mxu0 0.0
    %4376 = vmatprep.mubr.f32.mxu0 0.0
    %4377 = vmatmul.mubr.f32.gmra.mxu0 %v4274
    %v4378 = vpop.f32.mrf.mxu0
    %v4379 = vadd.f32 0.0, %v4378
    %v4380 = vpop.f32.mrf.mxu0
    %4381 = vmatprep.mubr.f32.mxu0 0.0
    %4382 = vmatmul.mubr.f32.gmra.mxu0 %v4277
    %v4383 = vpop.f32.mrf.mxu0
    %v4384 = vadd.f32 0.0, %v4383
    %v4385 = vpop.f32.mrf.mxu0
    %4386 = vmatprep.mubr.f32.mxu0 0.0
    %4387 = vmatmul.mubr.f32.gmra.mxu0 %v4280
    %v4388 = vpop.f32.mrf.mxu0
    %v4389 = vadd.f32 0.0, %v4388
    %v4390 = vpop.f32.mrf.mxu0
    %4391 = vmatprep.mubr.f32.mxu0 0.0
    %4392 = vmatmul.mubr.f32.gmra.mxu0 %v4283
    %v4393 = vpop.f32.mrf.mxu0
    %v4394 = vadd.f32 0.0, %v4393
    %v4395 = vpop.f32.mrf.mxu0
    %4396 = vmatprep.mubr.f32.mxu0 0.0
    %4397 = vmatmul.mubr.f32.gmra.mxu0 %v4286
    %v4398 = vpop.f32.mrf.mxu0
    %v4399 = vadd.f32 0.0, %v4398
    %v4400 = vpop.f32.mrf.mxu0
    %4401 = vmatprep.mubr.f32.mxu0 0.0
    %4402 = vmatmul.mubr.f32.gmra.mxu0 %v4289
    %v4403 = vpop.f32.mrf.mxu0
    %v4404 = vadd.f32 0.0, %v4403
    %v4405 = vpop.f32.mrf.mxu0
    %4406 = vmatprep.mubr.f32.mxu0 0.0
    %4407 = vmatmul.mubr.f32.gmra.mxu0 %v4292
    %v4408 = vpop.f32.mrf.mxu0
    %v4409 = vadd.f32 0.0, %v4408
    %v4410 = vpop.f32.mrf.mxu0
    %4411 = vmatprep.mubr.f32.mxu0 0.0
    %4412 = vmatmul.mubr.f32.gmra.mxu0 %v4295
    %v4413 = vpop.f32.mrf.mxu0
    %v4414 = vadd.f32 0.0, %v4413
    %v4415 = vpop.f32.mrf.mxu0
    %4416 = vmatprep.mubr.f32.mxu0 0.0
    %4417 = vmatmul.mubr.f32.gmra.mxu0 %v4298
    %v4418 = vpop.f32.mrf.mxu0
    %v4419 = vadd.f32 0.0, %v4418
    %v4420 = vpop.f32.mrf.mxu0
    %4421 = vmatprep.mubr.f32.mxu0 0.0
    %4422 = vmatmul.mubr.f32.gmra.mxu0 %v4301
    %v4423 = vpop.f32.mrf.mxu0
    %v4424 = vadd.f32 0.0, %v4423
    %v4425 = vpop.f32.mrf.mxu0
    %4426 = vmatprep.mubr.f32.mxu0 0.0
    %4427 = vmatmul.mubr.f32.gmra.mxu0 %v4304
    %v4428 = vpop.f32.mrf.mxu0
    %v4429 = vadd.f32 0.0, %v4428
    %v4430 = vpop.f32.mrf.mxu0
    %4431 = vmatprep.mubr.f32.mxu0 0.0
    %4432 = vmatmul.mubr.f32.gmra.mxu0 %v4307
    %v4433 = vpop.f32.mrf.mxu0
    %v4434 = vadd.f32 0.0, %v4433
    %v4435 = vpop.f32.mrf.mxu0
    %4436 = vdwg.mxu0
    %v4437 = vadd.f32 %v4255, %v4379
    %v4438 = vadd.f32 %v4255, %v4384
    %v4439 = vadd.f32 %v4255, %v4389
    %v4440 = vadd.f32 %v4255, %v4394
    %v4441 = vadd.f32 %v4255, %v4399
    %v4442 = vadd.f32 %v4255, %v4404
    %v4443 = vadd.f32 %v4255, %v4409
    %v4444 = vadd.f32 %v4255, %v4414
    %v4445 = vadd.f32 %v4255, %v4419
    %v4446 = vadd.f32 %v4255, %v4424
    %v4447 = vadd.f32 %v4255, %v4429
    %v4448 = vadd.f32 %v4255, %v4434
    %v4449 = vld [vmem:[#allocation2 + $0x259] sm:$0xff]
    %v4450 = vld [vmem:[#allocation2 + $0x261] sm:$0xff]
    %v4451 = vld [vmem:[#allocation2 + $0x269] sm:$0xff]
    %v4452 = vld [vmem:[#allocation2 + $0x271] sm:$0xff]
    %v4453 = vld [vmem:[#allocation2 + $0x279] sm:$0xff]
    %v4454 = vld [vmem:[#allocation2 + $0x281] sm:$0xff]
    %v4455 = vld [vmem:[#allocation2 + $0x289] sm:$0xff]
    %v4456 = vld [vmem:[#allocation2 + $0x291] sm:$0xff]
    %v4457 = vld [vmem:[#allocation2 + $0x299] sm:$0xff]
    %v4458 = vld [vmem:[#allocation2 + $0x2a1] sm:$0xff]
    %v4459 = vld [vmem:[#allocation2 + $0x2a9] sm:$0xff]
    %v4460 = vld [vmem:[#allocation2 + $0x2b1] sm:$0x1]
    %v4461 = vld [vmem:[%s1329] sm:$0xff]
    %v4462 = vld [vmem:[%s1329 + $0x8] sm:$0xff]
    %v4463 = vld [vmem:[%s1329 + $0x10] sm:$0xff]
    %v4464 = vld [vmem:[%s1329 + $0x18] sm:$0xff]
    %v4465 = vld [vmem:[%s1329 + $0x20] sm:$0xf]
    %v4467 = vsel %vm1014, %v4449, 0
    %v4470 = vsel %vm1014, %v4450, 0
    %v4473 = vsel %vm1014, %v4451, 0
    %v4476 = vsel %vm1014, %v4452, 0
    %v4479 = vsel %vm1014, %v4453, 0
    %v4482 = vsel %vm1014, %v4454, 0
    %v4485 = vsel %vm1014, %v4455, 0
    %v4488 = vsel %vm1014, %v4456, 0
    %v4491 = vsel %vm1014, %v4457, 0
    %v4494 = vsel %vm1014, %v4458, 0
    %v4497 = vsel %vm1014, %v4459, 0
    %v4500 = vsel %vm1014, %v4460, 0
    %v4503 = vsel %vm1176, %v4465, 0
    %4505 = vmatprep.subr.mxu0 0.0
    %4506 = vmatpush1.msra.mxu0 0.0
    %4507 = vmatprep.subr.mxu0 0.0
    %4508 = vmatpush1.msra.mxu0 0.0
    %4509 = vmatprep.subr.mxu0 0.0
    %4510 = vmatpush1.msra.mxu0 0.0
    %4511 = vmatprep.subr.mxu0 0.0
    %4512 = vmatpush1.msra.mxu0 0.0
    %4513 = vmatprep.subr.mxu0 0.0
    %4514 = vmatpush1.msra.mxu0 0.0
    %4515 = vmatprep.subr.mxu0 0.0
    %4516 = vmatpush1.msra.mxu0 0.0
    %4517 = vmatprep.subr.mxu0 0.0
    %4518 = vmatpush1.msra.mxu0 0.0
    %4519 = vmatprep.subr.mxu0 0.0
    %4520 = vmatpush1.msra.mxu0 0.0
    %4521 = vmatprep.subr.mxu0 0.0
    %4522 = vmatpush1.msra.mxu0 0.0
    %4523 = vmatprep.subr.mxu0 0.0
    %4524 = vmatpush1.msra.mxu0 0.0
    %4525 = vmatprep.subr.mxu0 0.0
    %4526 = vmatpush1.msra.mxu0 0.0
    %4527 = vmatprep.subr.mxu0 0.0
    %4528 = vmatpush1.msra.mxu0 %v4503
    %4529 = vmatprep.subr.mxu0 0.0
    %4530 = vmatpush1.msra.mxu0 %v4464
    %4531 = vmatprep.subr.mxu0 0.0
    %4532 = vmatpush1.msra.mxu0 %v4463
    %4533 = vmatprep.subr.mxu0 0.0
    %4534 = vmatpush1.msra.mxu0 %v4462
    %4535 = vmatprep.subr.mxu0 0.0
    %4536 = vmatpush1.msra.mxu0 %v4461
    %4537 = vmatprep.subr.mxu0 0.0
    %4538 = vmatpush2.msra.mxu0 0.0
    %4539 = vmatprep.subr.mxu0 0.0
    %4540 = vmatpush2.msra.mxu0 0.0
    %4541 = vmatprep.subr.mxu0 0.0
    %4542 = vmatpush2.msra.mxu0 0.0
    %4543 = vmatprep.subr.mxu0 0.0
    %4544 = vmatpush2.msra.mxu0 0.0
    %4545 = vmatprep.subr.mxu0 0.0
    %4546 = vmatpush2.msra.mxu0 0.0
    %4547 = vmatprep.subr.mxu0 0.0
    %4548 = vmatpush2.msra.mxu0 0.0
    %4549 = vmatprep.subr.mxu0 0.0
    %4550 = vmatpush2.msra.mxu0 0.0
    %4551 = vmatprep.subr.mxu0 0.0
    %4552 = vmatpush2.msra.mxu0 0.0
    %4553 = vmatprep.subr.mxu0 0.0
    %4554 = vmatpush2.msra.mxu0 0.0
    %4555 = vmatprep.subr.mxu0 0.0
    %4556 = vmatpush2.msra.mxu0 0.0
    %4557 = vmatprep.subr.mxu0 0.0
    %4558 = vmatpush2.msra.mxu0 0.0
    %4559 = vmatprep.subr.mxu0 0.0
    %4560 = vmatpush2.msra.mxu0 0.0
    %4561 = vmatprep.subr.mxu0 0.0
    %4562 = vmatpush2.msra.mxu0 0.0
    %4563 = vmatprep.subr.mxu0 0.0
    %4564 = vmatpush2.msra.mxu0 0.0
    %4565 = vmatprep.subr.mxu0 0.0
    %4566 = vmatpush2.msra.mxu0 0.0
    %4567 = vmatprep.subr.mxu0 0.0
    %4568 = vmatpush2.msra.mxu0 0.0
    %4569 = vmatprep.mubr.f32.mxu0 0.0
    %4570 = vmatmul.mubr.f32.gmra.mxu0 %v4467
    %v4571 = vpop.f32.mrf.mxu0
    %v4572 = vadd.f32 0.0, %v4571
    %v4573 = vpop.f32.mrf.mxu0
    %4574 = vmatprep.mubr.f32.mxu0 0.0
    %4575 = vmatmul.mubr.f32.gmra.mxu0 %v4470
    %v4576 = vpop.f32.mrf.mxu0
    %v4577 = vadd.f32 0.0, %v4576
    %v4578 = vpop.f32.mrf.mxu0
    %4579 = vmatprep.mubr.f32.mxu0 0.0
    %4580 = vmatmul.mubr.f32.gmra.mxu0 %v4473
    %v4581 = vpop.f32.mrf.mxu0
    %v4582 = vadd.f32 0.0, %v4581
    %v4583 = vpop.f32.mrf.mxu0
    %4584 = vmatprep.mubr.f32.mxu0 0.0
    %4585 = vmatmul.mubr.f32.gmra.mxu0 %v4476
    %v4586 = vpop.f32.mrf.mxu0
    %v4587 = vadd.f32 0.0, %v4586
    %v4588 = vpop.f32.mrf.mxu0
    %4589 = vmatprep.mubr.f32.mxu0 0.0
    %4590 = vmatmul.mubr.f32.gmra.mxu0 %v4479
    %v4591 = vpop.f32.mrf.mxu0
    %v4592 = vadd.f32 0.0, %v4591
    %v4593 = vpop.f32.mrf.mxu0
    %4594 = vmatprep.mubr.f32.mxu0 0.0
    %4595 = vmatmul.mubr.f32.gmra.mxu0 %v4482
    %v4596 = vpop.f32.mrf.mxu0
    %v4597 = vadd.f32 0.0, %v4596
    %v4598 = vpop.f32.mrf.mxu0
    %4599 = vmatprep.mubr.f32.mxu0 0.0
    %4600 = vmatmul.mubr.f32.gmra.mxu0 %v4485
    %v4601 = vpop.f32.mrf.mxu0
    %v4602 = vadd.f32 0.0, %v4601
    %v4603 = vpop.f32.mrf.mxu0
    %4604 = vmatprep.mubr.f32.mxu0 0.0
    %4605 = vmatmul.mubr.f32.gmra.mxu0 %v4488
    %v4606 = vpop.f32.mrf.mxu0
    %v4607 = vadd.f32 0.0, %v4606
    %v4608 = vpop.f32.mrf.mxu0
    %4609 = vmatprep.mubr.f32.mxu0 0.0
    %4610 = vmatmul.mubr.f32.gmra.mxu0 %v4491
    %v4611 = vpop.f32.mrf.mxu0
    %v4612 = vadd.f32 0.0, %v4611
    %v4613 = vpop.f32.mrf.mxu0
    %4614 = vmatprep.mubr.f32.mxu0 0.0
    %4615 = vmatmul.mubr.f32.gmra.mxu0 %v4494
    %v4616 = vpop.f32.mrf.mxu0
    %v4617 = vadd.f32 0.0, %v4616
    %v4618 = vpop.f32.mrf.mxu0
    %4619 = vmatprep.mubr.f32.mxu0 0.0
    %4620 = vmatmul.mubr.f32.gmra.mxu0 %v4497
    %v4621 = vpop.f32.mrf.mxu0
    %v4622 = vadd.f32 0.0, %v4621
    %v4623 = vpop.f32.mrf.mxu0
    %4624 = vmatprep.mubr.f32.mxu0 0.0
    %4625 = vmatmul.mubr.f32.gmra.mxu0 %v4500
    %v4626 = vpop.f32.mrf.mxu0
    %v4627 = vadd.f32 0.0, %v4626
    %v4628 = vpop.f32.mrf.mxu0
    %4629 = vdwg.mxu0
    %v4630 = vadd.f32 %v4437, %v4572
    %v4631 = vadd.f32 %v4438, %v4577
    %v4632 = vadd.f32 %v4439, %v4582
    %v4633 = vadd.f32 %v4440, %v4587
    %v4634 = vadd.f32 %v4441, %v4592
    %v4635 = vadd.f32 %v4442, %v4597
    %v4636 = vadd.f32 %v4443, %v4602
    %v4637 = vadd.f32 %v4444, %v4607
    %v4638 = vadd.f32 %v4445, %v4612
    %v4639 = vadd.f32 %v4446, %v4617
    %v4640 = vadd.f32 %v4447, %v4622
    %v4641 = vadd.f32 %v4448, %v4627
    %v4642 = vld [vmem:[#allocation2 + $0x2bd] sm:$0xff]
    %v4643 = vld [vmem:[#allocation2 + $0x2c5] sm:$0xff]
    %v4644 = vld [vmem:[#allocation2 + $0x2cd] sm:$0xff]
    %v4645 = vld [vmem:[#allocation2 + $0x2d5] sm:$0xff]
    %v4646 = vld [vmem:[#allocation2 + $0x2dd] sm:$0xff]
    %v4647 = vld [vmem:[#allocation2 + $0x2e5] sm:$0xff]
    %v4648 = vld [vmem:[#allocation2 + $0x2ed] sm:$0xff]
    %v4649 = vld [vmem:[#allocation2 + $0x2f5] sm:$0xff]
    %v4650 = vld [vmem:[#allocation2 + $0x2fd] sm:$0xff]
    %v4651 = vld [vmem:[#allocation2 + $0x305] sm:$0xff]
    %v4652 = vld [vmem:[#allocation2 + $0x30d] sm:$0xff]
    %v4653 = vld [vmem:[#allocation2 + $0x315] sm:$0x1]
    %v4654 = vld [vmem:[%s1523] sm:$0xff]
    %v4655 = vld [vmem:[%s1523 + $0x8] sm:$0xff]
    %v4656 = vld [vmem:[%s1523 + $0x10] sm:$0xff]
    %v4657 = vld [vmem:[%s1523 + $0x18] sm:$0xff]
    %v4658 = vld [vmem:[%s1523 + $0x20] sm:$0xf]
    %v4660 = vsel %vm1014, %v4642, 0
    %v4663 = vsel %vm1014, %v4643, 0
    %v4666 = vsel %vm1014, %v4644, 0
    %v4669 = vsel %vm1014, %v4645, 0
    %v4672 = vsel %vm1014, %v4646, 0
    %v4675 = vsel %vm1014, %v4647, 0
    %v4678 = vsel %vm1014, %v4648, 0
    %v4681 = vsel %vm1014, %v4649, 0
    %v4684 = vsel %vm1014, %v4650, 0
    %v4687 = vsel %vm1014, %v4651, 0
    %v4690 = vsel %vm1014, %v4652, 0
    %v4693 = vsel %vm1014, %v4653, 0
    %v4696 = vsel %vm1176, %v4658, 0
    %4698 = vmatprep.subr.mxu0 0.0
    %4699 = vmatpush1.msra.mxu0 0.0
    %4700 = vmatprep.subr.mxu0 0.0
    %4701 = vmatpush1.msra.mxu0 0.0
    %4702 = vmatprep.subr.mxu0 0.0
    %4703 = vmatpush1.msra.mxu0 0.0
    %4704 = vmatprep.subr.mxu0 0.0
    %4705 = vmatpush1.msra.mxu0 0.0
    %4706 = vmatprep.subr.mxu0 0.0
    %4707 = vmatpush1.msra.mxu0 0.0
    %4708 = vmatprep.subr.mxu0 0.0
    %4709 = vmatpush1.msra.mxu0 0.0
    %4710 = vmatprep.subr.mxu0 0.0
    %4711 = vmatpush1.msra.mxu0 0.0
    %4712 = vmatprep.subr.mxu0 0.0
    %4713 = vmatpush1.msra.mxu0 0.0
    %4714 = vmatprep.subr.mxu0 0.0
    %4715 = vmatpush1.msra.mxu0 0.0
    %4716 = vmatprep.subr.mxu0 0.0
    %4717 = vmatpush1.msra.mxu0 0.0
    %4718 = vmatprep.subr.mxu0 0.0
    %4719 = vmatpush1.msra.mxu0 0.0
    %4720 = vmatprep.subr.mxu0 0.0
    %4721 = vmatpush1.msra.mxu0 %v4696
    %4722 = vmatprep.subr.mxu0 0.0
    %4723 = vmatpush1.msra.mxu0 %v4657
    %4724 = vmatprep.subr.mxu0 0.0
    %4725 = vmatpush1.msra.mxu0 %v4656
    %4726 = vmatprep.subr.mxu0 0.0
    %4727 = vmatpush1.msra.mxu0 %v4655
    %4728 = vmatprep.subr.mxu0 0.0
    %4729 = vmatpush1.msra.mxu0 %v4654
    %4730 = vmatprep.subr.mxu0 0.0
    %4731 = vmatpush2.msra.mxu0 0.0
    %4732 = vmatprep.subr.mxu0 0.0
    %4733 = vmatpush2.msra.mxu0 0.0
    %4734 = vmatprep.subr.mxu0 0.0
    %4735 = vmatpush2.msra.mxu0 0.0
    %4736 = vmatprep.subr.mxu0 0.0
    %4737 = vmatpush2.msra.mxu0 0.0
    %4738 = vmatprep.subr.mxu0 0.0
    %4739 = vmatpush2.msra.mxu0 0.0
    %4740 = vmatprep.subr.mxu0 0.0
    %4741 = vmatpush2.msra.mxu0 0.0
    %4742 = vmatprep.subr.mxu0 0.0
    %4743 = vmatpush2.msra.mxu0 0.0
    %4744 = vmatprep.subr.mxu0 0.0
    %4745 = vmatpush2.msra.mxu0 0.0
    %4746 = vmatprep.subr.mxu0 0.0
    %4747 = vmatpush2.msra.mxu0 0.0
    %4748 = vmatprep.subr.mxu0 0.0
    %4749 = vmatpush2.msra.mxu0 0.0
    %4750 = vmatprep.subr.mxu0 0.0
    %4751 = vmatpush2.msra.mxu0 0.0
    %4752 = vmatprep.subr.mxu0 0.0
    %4753 = vmatpush2.msra.mxu0 0.0
    %4754 = vmatprep.subr.mxu0 0.0
    %4755 = vmatpush2.msra.mxu0 0.0
    %4756 = vmatprep.subr.mxu0 0.0
    %4757 = vmatpush2.msra.mxu0 0.0
    %4758 = vmatprep.subr.mxu0 0.0
    %4759 = vmatpush2.msra.mxu0 0.0
    %4760 = vmatprep.subr.mxu0 0.0
    %4761 = vmatpush2.msra.mxu0 0.0
    %4762 = vmatprep.mubr.f32.mxu0 0.0
    %4763 = vmatmul.mubr.f32.gmra.mxu0 %v4660
    %v4764 = vpop.f32.mrf.mxu0
    %v4765 = vadd.f32 0.0, %v4764
    %v4766 = vpop.f32.mrf.mxu0
    %4767 = vmatprep.mubr.f32.mxu0 0.0
    %4768 = vmatmul.mubr.f32.gmra.mxu0 %v4663
    %v4769 = vpop.f32.mrf.mxu0
    %v4770 = vadd.f32 0.0, %v4769
    %v4771 = vpop.f32.mrf.mxu0
    %4772 = vmatprep.mubr.f32.mxu0 0.0
    %4773 = vmatmul.mubr.f32.gmra.mxu0 %v4666
    %v4774 = vpop.f32.mrf.mxu0
    %v4775 = vadd.f32 0.0, %v4774
    %v4776 = vpop.f32.mrf.mxu0
    %4777 = vmatprep.mubr.f32.mxu0 0.0
    %4778 = vmatmul.mubr.f32.gmra.mxu0 %v4669
    %v4779 = vpop.f32.mrf.mxu0
    %v4780 = vadd.f32 0.0, %v4779
    %v4781 = vpop.f32.mrf.mxu0
    %4782 = vmatprep.mubr.f32.mxu0 0.0
    %4783 = vmatmul.mubr.f32.gmra.mxu0 %v4672
    %v4784 = vpop.f32.mrf.mxu0
    %v4785 = vadd.f32 0.0, %v4784
    %v4786 = vpop.f32.mrf.mxu0
    %4787 = vmatprep.mubr.f32.mxu0 0.0
    %4788 = vmatmul.mubr.f32.gmra.mxu0 %v4675
    %v4789 = vpop.f32.mrf.mxu0
    %v4790 = vadd.f32 0.0, %v4789
    %v4791 = vpop.f32.mrf.mxu0
    %4792 = vmatprep.mubr.f32.mxu0 0.0
    %4793 = vmatmul.mubr.f32.gmra.mxu0 %v4678
    %v4794 = vpop.f32.mrf.mxu0
    %v4795 = vadd.f32 0.0, %v4794
    %v4796 = vpop.f32.mrf.mxu0
    %4797 = vmatprep.mubr.f32.mxu0 0.0
    %4798 = vmatmul.mubr.f32.gmra.mxu0 %v4681
    %v4799 = vpop.f32.mrf.mxu0
    %v4800 = vadd.f32 0.0, %v4799
    %v4801 = vpop.f32.mrf.mxu0
    %4802 = vmatprep.mubr.f32.mxu0 0.0
    %4803 = vmatmul.mubr.f32.gmra.mxu0 %v4684
    %v4804 = vpop.f32.mrf.mxu0
    %v4805 = vadd.f32 0.0, %v4804
    %v4806 = vpop.f32.mrf.mxu0
    %4807 = vmatprep.mubr.f32.mxu0 0.0
    %4808 = vmatmul.mubr.f32.gmra.mxu0 %v4687
    %v4809 = vpop.f32.mrf.mxu0
    %v4810 = vadd.f32 0.0, %v4809
    %v4811 = vpop.f32.mrf.mxu0
    %4812 = vmatprep.mubr.f32.mxu0 0.0
    %4813 = vmatmul.mubr.f32.gmra.mxu0 %v4690
    %v4814 = vpop.f32.mrf.mxu0
    %v4815 = vadd.f32 0.0, %v4814
    %v4816 = vpop.f32.mrf.mxu0
    %4817 = vmatprep.mubr.f32.mxu0 0.0
    %4818 = vmatmul.mubr.f32.gmra.mxu0 %v4693
    %v4819 = vpop.f32.mrf.mxu0
    %v4820 = vadd.f32 0.0, %v4819
    %v4821 = vpop.f32.mrf.mxu0
    %4822 = vdwg.mxu0
    %v4823 = vadd.f32 %v4630, %v4765
    %v4824 = vadd.f32 %v4631, %v4770
    %v4825 = vadd.f32 %v4632, %v4775
    %v4826 = vadd.f32 %v4633, %v4780
    %v4827 = vadd.f32 %v4634, %v4785
    %v4828 = vadd.f32 %v4635, %v4790
    %v4829 = vadd.f32 %v4636, %v4795
    %v4830 = vadd.f32 %v4637, %v4800
    %v4831 = vadd.f32 %v4638, %v4805
    %v4832 = vadd.f32 %v4639, %v4810
    %v4833 = vadd.f32 %v4640, %v4815
    %v4834 = vadd.f32 %v4641, %v4820
    %v4835 = vld [vmem:[#allocation2 + $0x1fe] sm:$0xff]
    %v4836 = vld [vmem:[#allocation2 + $0x206] sm:$0xff]
    %v4837 = vld [vmem:[#allocation2 + $0x20e] sm:$0xff]
    %v4838 = vld [vmem:[#allocation2 + $0x216] sm:$0xff]
    %v4839 = vld [vmem:[#allocation2 + $0x21e] sm:$0xff]
    %v4840 = vld [vmem:[#allocation2 + $0x226] sm:$0xff]
    %v4841 = vld [vmem:[#allocation2 + $0x22e] sm:$0xff]
    %v4842 = vld [vmem:[#allocation2 + $0x236] sm:$0xff]
    %v4843 = vld [vmem:[#allocation2 + $0x23e] sm:$0xff]
    %v4844 = vld [vmem:[#allocation2 + $0x246] sm:$0xff]
    %v4845 = vld [vmem:[#allocation2 + $0x24e] sm:$0xff]
    %v4846 = vld [vmem:[#allocation2 + $0x256] sm:$0x1]
    %v4847 = vld [vmem:[%s1717] sm:$0xff]
    %v4848 = vld [vmem:[%s1717 + $0x8] sm:$0xff]
    %v4849 = vld [vmem:[%s1717 + $0x10] sm:$0xff]
    %v4850 = vld [vmem:[%s1717 + $0x18] sm:$0xff]
    %v4851 = vld [vmem:[%s1717 + $0x20] sm:$0xf]
    %v4853 = vsel %vm1014, %v4835, 0
    %v4856 = vsel %vm1014, %v4836, 0
    %v4859 = vsel %vm1014, %v4837, 0
    %v4862 = vsel %vm1014, %v4838, 0
    %v4865 = vsel %vm1014, %v4839, 0
    %v4868 = vsel %vm1014, %v4840, 0
    %v4871 = vsel %vm1014, %v4841, 0
    %v4874 = vsel %vm1014, %v4842, 0
    %v4877 = vsel %vm1014, %v4843, 0
    %v4880 = vsel %vm1014, %v4844, 0
    %v4883 = vsel %vm1014, %v4845, 0
    %v4886 = vsel %vm1014, %v4846, 0
    %v4889 = vsel %vm1176, %v4851, 0
    %4891 = vmatprep.subr.mxu0 0.0
    %4892 = vmatpush1.msra.mxu0 0.0
    %4893 = vmatprep.subr.mxu0 0.0
    %4894 = vmatpush1.msra.mxu0 0.0
    %4895 = vmatprep.subr.mxu0 0.0
    %4896 = vmatpush1.msra.mxu0 0.0
    %4897 = vmatprep.subr.mxu0 0.0
    %4898 = vmatpush1.msra.mxu0 0.0
    %4899 = vmatprep.subr.mxu0 0.0
    %4900 = vmatpush1.msra.mxu0 0.0
    %4901 = vmatprep.subr.mxu0 0.0
    %4902 = vmatpush1.msra.mxu0 0.0
    %4903 = vmatprep.subr.mxu0 0.0
    %4904 = vmatpush1.msra.mxu0 0.0
    %4905 = vmatprep.subr.mxu0 0.0
    %4906 = vmatpush1.msra.mxu0 0.0
    %4907 = vmatprep.subr.mxu0 0.0
    %4908 = vmatpush1.msra.mxu0 0.0
    %4909 = vmatprep.subr.mxu0 0.0
    %4910 = vmatpush1.msra.mxu0 0.0
    %4911 = vmatprep.subr.mxu0 0.0
    %4912 = vmatpush1.msra.mxu0 0.0
    %4913 = vmatprep.subr.mxu0 0.0
    %4914 = vmatpush1.msra.mxu0 %v4889
    %4915 = vmatprep.subr.mxu0 0.0
    %4916 = vmatpush1.msra.mxu0 %v4850
    %4917 = vmatprep.subr.mxu0 0.0
    %4918 = vmatpush1.msra.mxu0 %v4849
    %4919 = vmatprep.subr.mxu0 0.0
    %4920 = vmatpush1.msra.mxu0 %v4848
    %4921 = vmatprep.subr.mxu0 0.0
    %4922 = vmatpush1.msra.mxu0 %v4847
    %4923 = vmatprep.subr.mxu0 0.0
    %4924 = vmatpush2.msra.mxu0 0.0
    %4925 = vmatprep.subr.mxu0 0.0
    %4926 = vmatpush2.msra.mxu0 0.0
    %4927 = vmatprep.subr.mxu0 0.0
    %4928 = vmatpush2.msra.mxu0 0.0
    %4929 = vmatprep.subr.mxu0 0.0
    %4930 = vmatpush2.msra.mxu0 0.0
    %4931 = vmatprep.subr.mxu0 0.0
    %4932 = vmatpush2.msra.mxu0 0.0
    %4933 = vmatprep.subr.mxu0 0.0
    %4934 = vmatpush2.msra.mxu0 0.0
    %4935 = vmatprep.subr.mxu0 0.0
    %4936 = vmatpush2.msra.mxu0 0.0
    %4937 = vmatprep.subr.mxu0 0.0
    %4938 = vmatpush2.msra.mxu0 0.0
    %4939 = vmatprep.subr.mxu0 0.0
    %4940 = vmatpush2.msra.mxu0 0.0
    %4941 = vmatprep.subr.mxu0 0.0
    %4942 = vmatpush2.msra.mxu0 0.0
    %4943 = vmatprep.subr.mxu0 0.0
    %4944 = vmatpush2.msra.mxu0 0.0
    %4945 = vmatprep.subr.mxu0 0.0
    %4946 = vmatpush2.msra.mxu0 0.0
    %4947 = vmatprep.subr.mxu0 0.0
    %4948 = vmatpush2.msra.mxu0 0.0
    %4949 = vmatprep.subr.mxu0 0.0
    %4950 = vmatpush2.msra.mxu0 0.0
    %4951 = vmatprep.subr.mxu0 0.0
    %4952 = vmatpush2.msra.mxu0 0.0
    %4953 = vmatprep.subr.mxu0 0.0
    %4954 = vmatpush2.msra.mxu0 0.0
    %4955 = vmatprep.mubr.f32.mxu0 0.0
    %4956 = vmatmul.mubr.f32.gmra.mxu0 %v4853
    %v4957 = vpop.f32.mrf.mxu0
    %v4958 = vadd.f32 0.0, %v4957
    %v4959 = vpop.f32.mrf.mxu0
    %4960 = vmatprep.mubr.f32.mxu0 0.0
    %4961 = vmatmul.mubr.f32.gmra.mxu0 %v4856
    %v4962 = vpop.f32.mrf.mxu0
    %v4963 = vadd.f32 0.0, %v4962
    %v4964 = vpop.f32.mrf.mxu0
    %4965 = vmatprep.mubr.f32.mxu0 0.0
    %4966 = vmatmul.mubr.f32.gmra.mxu0 %v4859
    %v4967 = vpop.f32.mrf.mxu0
    %v4968 = vadd.f32 0.0, %v4967
    %v4969 = vpop.f32.mrf.mxu0
    %4970 = vmatprep.mubr.f32.mxu0 0.0
    %4971 = vmatmul.mubr.f32.gmra.mxu0 %v4862
    %v4972 = vpop.f32.mrf.mxu0
    %v4973 = vadd.f32 0.0, %v4972
    %v4974 = vpop.f32.mrf.mxu0
    %4975 = vmatprep.mubr.f32.mxu0 0.0
    %4976 = vmatmul.mubr.f32.gmra.mxu0 %v4865
    %v4977 = vpop.f32.mrf.mxu0
    %v4978 = vadd.f32 0.0, %v4977
    %v4979 = vpop.f32.mrf.mxu0
    %4980 = vmatprep.mubr.f32.mxu0 0.0
    %4981 = vmatmul.mubr.f32.gmra.mxu0 %v4868
    %v4982 = vpop.f32.mrf.mxu0
    %v4983 = vadd.f32 0.0, %v4982
    %v4984 = vpop.f32.mrf.mxu0
    %4985 = vmatprep.mubr.f32.mxu0 0.0
    %4986 = vmatmul.mubr.f32.gmra.mxu0 %v4871
    %v4987 = vpop.f32.mrf.mxu0
    %v4988 = vadd.f32 0.0, %v4987
    %v4989 = vpop.f32.mrf.mxu0
    %4990 = vmatprep.mubr.f32.mxu0 0.0
    %4991 = vmatmul.mubr.f32.gmra.mxu0 %v4874
    %v4992 = vpop.f32.mrf.mxu0
    %v4993 = vadd.f32 0.0, %v4992
    %v4994 = vpop.f32.mrf.mxu0
    %4995 = vmatprep.mubr.f32.mxu0 0.0
    %4996 = vmatmul.mubr.f32.gmra.mxu0 %v4877
    %v4997 = vpop.f32.mrf.mxu0
    %v4998 = vadd.f32 0.0, %v4997
    %v4999 = vpop.f32.mrf.mxu0
    %5000 = vmatprep.mubr.f32.mxu0 0.0
    %5001 = vmatmul.mubr.f32.gmra.mxu0 %v4880
    %v5002 = vpop.f32.mrf.mxu0
    %v5003 = vadd.f32 0.0, %v5002
    %v5004 = vpop.f32.mrf.mxu0
    %5005 = vmatprep.mubr.f32.mxu0 0.0
    %5006 = vmatmul.mubr.f32.gmra.mxu0 %v4883
    %v5007 = vpop.f32.mrf.mxu0
    %v5008 = vadd.f32 0.0, %v5007
    %v5009 = vpop.f32.mrf.mxu0
    %5010 = vmatprep.mubr.f32.mxu0 0.0
    %5011 = vmatmul.mubr.f32.gmra.mxu0 %v4886
    %v5012 = vpop.f32.mrf.mxu0
    %v5013 = vadd.f32 0.0, %v5012
    %v5014 = vpop.f32.mrf.mxu0
    %5015 = vdwg.mxu0
    %v5016 = vadd.f32 %v4823, %v4958
    %v5017 = vadd.f32 %v4824, %v4963
    %v5018 = vadd.f32 %v4825, %v4968
    %v5019 = vadd.f32 %v4826, %v4973
    %v5020 = vadd.f32 %v4827, %v4978
    %v5021 = vadd.f32 %v4828, %v4983
    %v5022 = vadd.f32 %v4829, %v4988
    %v5023 = vadd.f32 %v4830, %v4993
    %v5024 = vadd.f32 %v4831, %v4998
    %v5025 = vadd.f32 %v4832, %v5003
    %v5026 = vadd.f32 %v4833, %v5008
    %v5027 = vadd.f32 %v4834, %v5013
    %v5028 = vld [vmem:[#allocation2 + $0x19b] sm:$0xff]
    %v5029 = vld [vmem:[#allocation2 + $0x1a3] sm:$0xff]
    %v5030 = vld [vmem:[#allocation2 + $0x1ab] sm:$0xff]
    %v5031 = vld [vmem:[#allocation2 + $0x1b3] sm:$0xff]
    %v5032 = vld [vmem:[#allocation2 + $0x1bb] sm:$0xff]
    %v5033 = vld [vmem:[#allocation2 + $0x1c3] sm:$0xff]
    %v5034 = vld [vmem:[#allocation2 + $0x1cb] sm:$0xff]
    %v5035 = vld [vmem:[#allocation2 + $0x1d3] sm:$0xff]
    %v5036 = vld [vmem:[#allocation2 + $0x1db] sm:$0xff]
    %v5037 = vld [vmem:[#allocation2 + $0x1e3] sm:$0xff]
    %v5038 = vld [vmem:[#allocation2 + $0x1eb] sm:$0xff]
    %v5039 = vld [vmem:[#allocation2 + $0x1f3] sm:$0x1]
    %v5040 = vld [vmem:[%s1911] sm:$0xff]
    %v5041 = vld [vmem:[%s1911 + $0x8] sm:$0xff]
    %v5042 = vld [vmem:[%s1911 + $0x10] sm:$0xff]
    %v5043 = vld [vmem:[%s1911 + $0x18] sm:$0xff]
    %v5044 = vld [vmem:[%s1911 + $0x20] sm:$0xf]
    %v5046 = vsel %vm1014, %v5028, 0
    %v5049 = vsel %vm1014, %v5029, 0
    %v5052 = vsel %vm1014, %v5030, 0
    %v5055 = vsel %vm1014, %v5031, 0
    %v5058 = vsel %vm1014, %v5032, 0
    %v5061 = vsel %vm1014, %v5033, 0
    %v5064 = vsel %vm1014, %v5034, 0
    %v5067 = vsel %vm1014, %v5035, 0
    %v5070 = vsel %vm1014, %v5036, 0
    %v5073 = vsel %vm1014, %v5037, 0
    %v5076 = vsel %vm1014, %v5038, 0
    %v5079 = vsel %vm1014, %v5039, 0
    %v5082 = vsel %vm1176, %v5044, 0
    %5084 = vmatprep.subr.mxu0 0.0
    %5085 = vmatpush1.msra.mxu0 0.0
    %5086 = vmatprep.subr.mxu0 0.0
    %5087 = vmatpush1.msra.mxu0 0.0
    %5088 = vmatprep.subr.mxu0 0.0
    %5089 = vmatpush1.msra.mxu0 0.0
    %5090 = vmatprep.subr.mxu0 0.0
    %5091 = vmatpush1.msra.mxu0 0.0
    %5092 = vmatprep.subr.mxu0 0.0
    %5093 = vmatpush1.msra.mxu0 0.0
    %5094 = vmatprep.subr.mxu0 0.0
    %5095 = vmatpush1.msra.mxu0 0.0
    %5096 = vmatprep.subr.mxu0 0.0
    %5097 = vmatpush1.msra.mxu0 0.0
    %5098 = vmatprep.subr.mxu0 0.0
    %5099 = vmatpush1.msra.mxu0 0.0
    %5100 = vmatprep.subr.mxu0 0.0
    %5101 = vmatpush1.msra.mxu0 0.0
    %5102 = vmatprep.subr.mxu0 0.0
    %5103 = vmatpush1.msra.mxu0 0.0
    %5104 = vmatprep.subr.mxu0 0.0
    %5105 = vmatpush1.msra.mxu0 0.0
    %5106 = vmatprep.subr.mxu0 0.0
    %5107 = vmatpush1.msra.mxu0 %v5082
    %5108 = vmatprep.subr.mxu0 0.0
    %5109 = vmatpush1.msra.mxu0 %v5043
    %5110 = vmatprep.subr.mxu0 0.0
    %5111 = vmatpush1.msra.mxu0 %v5042
    %5112 = vmatprep.subr.mxu0 0.0
    %5113 = vmatpush1.msra.mxu0 %v5041
    %5114 = vmatprep.subr.mxu0 0.0
    %5115 = vmatpush1.msra.mxu0 %v5040
    %5116 = vmatprep.subr.mxu0 0.0
    %5117 = vmatpush2.msra.mxu0 0.0
    %5118 = vmatprep.subr.mxu0 0.0
    %5119 = vmatpush2.msra.mxu0 0.0
    %5120 = vmatprep.subr.mxu0 0.0
    %5121 = vmatpush2.msra.mxu0 0.0
    %5122 = vmatprep.subr.mxu0 0.0
    %5123 = vmatpush2.msra.mxu0 0.0
    %5124 = vmatprep.subr.mxu0 0.0
    %5125 = vmatpush2.msra.mxu0 0.0
    %5126 = vmatprep.subr.mxu0 0.0
    %5127 = vmatpush2.msra.mxu0 0.0
    %5128 = vmatprep.subr.mxu0 0.0
    %5129 = vmatpush2.msra.mxu0 0.0
    %5130 = vmatprep.subr.mxu0 0.0
    %5131 = vmatpush2.msra.mxu0 0.0
    %5132 = vmatprep.subr.mxu0 0.0
    %5133 = vmatpush2.msra.mxu0 0.0
    %5134 = vmatprep.subr.mxu0 0.0
    %5135 = vmatpush2.msra.mxu0 0.0
    %5136 = vmatprep.subr.mxu0 0.0
    %5137 = vmatpush2.msra.mxu0 0.0
    %5138 = vmatprep.subr.mxu0 0.0
    %5139 = vmatpush2.msra.mxu0 0.0
    %5140 = vmatprep.subr.mxu0 0.0
    %5141 = vmatpush2.msra.mxu0 0.0
    %5142 = vmatprep.subr.mxu0 0.0
    %5143 = vmatpush2.msra.mxu0 0.0
    %5144 = vmatprep.subr.mxu0 0.0
    %5145 = vmatpush2.msra.mxu0 0.0
    %5146 = vmatprep.subr.mxu0 0.0
    %5147 = vmatpush2.msra.mxu0 0.0
    %5148 = vmatprep.mubr.f32.mxu0 0.0
    %5149 = vmatmul.mubr.f32.gmra.mxu0 %v5046
    %v5150 = vpop.f32.mrf.mxu0
    %v5151 = vadd.f32 0.0, %v5150
    %v5152 = vpop.f32.mrf.mxu0
    %5153 = vmatprep.mubr.f32.mxu0 0.0
    %5154 = vmatmul.mubr.f32.gmra.mxu0 %v5049
    %v5155 = vpop.f32.mrf.mxu0
    %v5156 = vadd.f32 0.0, %v5155
    %v5157 = vpop.f32.mrf.mxu0
    %5158 = vmatprep.mubr.f32.mxu0 0.0
    %5159 = vmatmul.mubr.f32.gmra.mxu0 %v5052
    %v5160 = vpop.f32.mrf.mxu0
    %v5161 = vadd.f32 0.0, %v5160
    %v5162 = vpop.f32.mrf.mxu0
    %5163 = vmatprep.mubr.f32.mxu0 0.0
    %5164 = vmatmul.mubr.f32.gmra.mxu0 %v5055
    %v5165 = vpop.f32.mrf.mxu0
    %v5166 = vadd.f32 0.0, %v5165
    %v5167 = vpop.f32.mrf.mxu0
    %5168 = vmatprep.mubr.f32.mxu0 0.0
    %5169 = vmatmul.mubr.f32.gmra.mxu0 %v5058
    %v5170 = vpop.f32.mrf.mxu0
    %v5171 = vadd.f32 0.0, %v5170
    %v5172 = vpop.f32.mrf.mxu0
    %5173 = vmatprep.mubr.f32.mxu0 0.0
    %5174 = vmatmul.mubr.f32.gmra.mxu0 %v5061
    %v5175 = vpop.f32.mrf.mxu0
    %v5176 = vadd.f32 0.0, %v5175
    %v5177 = vpop.f32.mrf.mxu0
    %5178 = vmatprep.mubr.f32.mxu0 0.0
    %5179 = vmatmul.mubr.f32.gmra.mxu0 %v5064
    %v5180 = vpop.f32.mrf.mxu0
    %v5181 = vadd.f32 0.0, %v5180
    %v5182 = vpop.f32.mrf.mxu0
    %5183 = vmatprep.mubr.f32.mxu0 0.0
    %5184 = vmatmul.mubr.f32.gmra.mxu0 %v5067
    %v5185 = vpop.f32.mrf.mxu0
    %v5186 = vadd.f32 0.0, %v5185
    %v5187 = vpop.f32.mrf.mxu0
    %5188 = vmatprep.mubr.f32.mxu0 0.0
    %5189 = vmatmul.mubr.f32.gmra.mxu0 %v5070
    %v5190 = vpop.f32.mrf.mxu0
    %v5191 = vadd.f32 0.0, %v5190
    %v5192 = vpop.f32.mrf.mxu0
    %5193 = vmatprep.mubr.f32.mxu0 0.0
    %5194 = vmatmul.mubr.f32.gmra.mxu0 %v5073
    %v5195 = vpop.f32.mrf.mxu0
    %v5196 = vadd.f32 0.0, %v5195
    %v5197 = vpop.f32.mrf.mxu0
    %5198 = vmatprep.mubr.f32.mxu0 0.0
    %5199 = vmatmul.mubr.f32.gmra.mxu0 %v5076
    %v5200 = vpop.f32.mrf.mxu0
    %v5201 = vadd.f32 0.0, %v5200
    %v5202 = vpop.f32.mrf.mxu0
    %5203 = vmatprep.mubr.f32.mxu0 0.0
    %5204 = vmatmul.mubr.f32.gmra.mxu0 %v5079
    %v5205 = vpop.f32.mrf.mxu0
    %v5206 = vadd.f32 0.0, %v5205
    %v5207 = vpop.f32.mrf.mxu0
    %5208 = vdwg.mxu0
    %v5209 = vadd.f32 %v5016, %v5151
    %v5210 = vadd.f32 %v5017, %v5156
    %v5211 = vadd.f32 %v5018, %v5161
    %v5212 = vadd.f32 %v5019, %v5166
    %v5213 = vadd.f32 %v5020, %v5171
    %v5214 = vadd.f32 %v5021, %v5176
    %v5215 = vadd.f32 %v5022, %v5181
    %v5216 = vadd.f32 %v5023, %v5186
    %v5217 = vadd.f32 %v5024, %v5191
    %v5218 = vadd.f32 %v5025, %v5196
    %v5219 = vadd.f32 %v5026, %v5201
    %v5220 = vadd.f32 %v5027, %v5206
    %v5221 = vld [vmem:[#allocation2 + $0x1ff] sm:$0xff]
    %v5222 = vld [vmem:[#allocation2 + $0x207] sm:$0xff]
    %v5223 = vld [vmem:[#allocation2 + $0x20f] sm:$0xff]
    %v5224 = vld [vmem:[#allocation2 + $0x217] sm:$0xff]
    %v5225 = vld [vmem:[#allocation2 + $0x21f] sm:$0xff]
    %v5226 = vld [vmem:[#allocation2 + $0x227] sm:$0xff]
    %v5227 = vld [vmem:[#allocation2 + $0x22f] sm:$0xff]
    %v5228 = vld [vmem:[#allocation2 + $0x237] sm:$0xff]
    %v5229 = vld [vmem:[#allocation2 + $0x23f] sm:$0xff]
    %v5230 = vld [vmem:[#allocation2 + $0x247] sm:$0xff]
    %v5231 = vld [vmem:[#allocation2 + $0x24f] sm:$0xff]
    %v5232 = vld [vmem:[#allocation2 + $0x257] sm:$0x1]
    %v5233 = vld [vmem:[%s2105] sm:$0xff]
    %v5234 = vld [vmem:[%s2105 + $0x8] sm:$0xff]
    %v5235 = vld [vmem:[%s2105 + $0x10] sm:$0xff]
    %v5236 = vld [vmem:[%s2105 + $0x18] sm:$0xff]
    %v5237 = vld [vmem:[%s2105 + $0x20] sm:$0xf]
    %v5239 = vsel %vm1014, %v5221, 0
    %v5242 = vsel %vm1014, %v5222, 0
    %v5245 = vsel %vm1014, %v5223, 0
    %v5248 = vsel %vm1014, %v5224, 0
    %v5251 = vsel %vm1014, %v5225, 0
    %v5254 = vsel %vm1014, %v5226, 0
    %v5257 = vsel %vm1014, %v5227, 0
    %v5260 = vsel %vm1014, %v5228, 0
    %v5263 = vsel %vm1014, %v5229, 0
    %v5266 = vsel %vm1014, %v5230, 0
    %v5269 = vsel %vm1014, %v5231, 0
    %v5272 = vsel %vm1014, %v5232, 0
    %v5275 = vsel %vm1176, %v5237, 0
    %5277 = vmatprep.subr.mxu0 0.0
    %5278 = vmatpush1.msra.mxu0 0.0
    %5279 = vmatprep.subr.mxu0 0.0
    %5280 = vmatpush1.msra.mxu0 0.0
    %5281 = vmatprep.subr.mxu0 0.0
    %5282 = vmatpush1.msra.mxu0 0.0
    %5283 = vmatprep.subr.mxu0 0.0
    %5284 = vmatpush1.msra.mxu0 0.0
    %5285 = vmatprep.subr.mxu0 0.0
    %5286 = vmatpush1.msra.mxu0 0.0
    %5287 = vmatprep.subr.mxu0 0.0
    %5288 = vmatpush1.msra.mxu0 0.0
    %5289 = vmatprep.subr.mxu0 0.0
    %5290 = vmatpush1.msra.mxu0 0.0
    %5291 = vmatprep.subr.mxu0 0.0
    %5292 = vmatpush1.msra.mxu0 0.0
    %5293 = vmatprep.subr.mxu0 0.0
    %5294 = vmatpush1.msra.mxu0 0.0
    %5295 = vmatprep.subr.mxu0 0.0
    %5296 = vmatpush1.msra.mxu0 0.0
    %5297 = vmatprep.subr.mxu0 0.0
    %5298 = vmatpush1.msra.mxu0 0.0
    %5299 = vmatprep.subr.mxu0 0.0
    %5300 = vmatpush1.msra.mxu0 %v5275
    %5301 = vmatprep.subr.mxu0 0.0
    %5302 = vmatpush1.msra.mxu0 %v5236
    %5303 = vmatprep.subr.mxu0 0.0
    %5304 = vmatpush1.msra.mxu0 %v5235
    %5305 = vmatprep.subr.mxu0 0.0
    %5306 = vmatpush1.msra.mxu0 %v5234
    %5307 = vmatprep.subr.mxu0 0.0
    %5308 = vmatpush1.msra.mxu0 %v5233
    %5309 = vmatprep.subr.mxu0 0.0
    %5310 = vmatpush2.msra.mxu0 0.0
    %5311 = vmatprep.subr.mxu0 0.0
    %5312 = vmatpush2.msra.mxu0 0.0
    %5313 = vmatprep.subr.mxu0 0.0
    %5314 = vmatpush2.msra.mxu0 0.0
    %5315 = vmatprep.subr.mxu0 0.0
    %5316 = vmatpush2.msra.mxu0 0.0
    %5317 = vmatprep.subr.mxu0 0.0
    %5318 = vmatpush2.msra.mxu0 0.0
    %5319 = vmatprep.subr.mxu0 0.0
    %5320 = vmatpush2.msra.mxu0 0.0
    %5321 = vmatprep.subr.mxu0 0.0
    %5322 = vmatpush2.msra.mxu0 0.0
    %5323 = vmatprep.subr.mxu0 0.0
    %5324 = vmatpush2.msra.mxu0 0.0
    %5325 = vmatprep.subr.mxu0 0.0
    %5326 = vmatpush2.msra.mxu0 0.0
    %5327 = vmatprep.subr.mxu0 0.0
    %5328 = vmatpush2.msra.mxu0 0.0
    %5329 = vmatprep.subr.mxu0 0.0
    %5330 = vmatpush2.msra.mxu0 0.0
    %5331 = vmatprep.subr.mxu0 0.0
    %5332 = vmatpush2.msra.mxu0 0.0
    %5333 = vmatprep.subr.mxu0 0.0
    %5334 = vmatpush2.msra.mxu0 0.0
    %5335 = vmatprep.subr.mxu0 0.0
    %5336 = vmatpush2.msra.mxu0 0.0
    %5337 = vmatprep.subr.mxu0 0.0
    %5338 = vmatpush2.msra.mxu0 0.0
    %5339 = vmatprep.subr.mxu0 0.0
    %5340 = vmatpush2.msra.mxu0 0.0
    %5341 = vmatprep.mubr.f32.mxu0 0.0
    %5342 = vmatmul.mubr.f32.gmra.mxu0 %v5239
    %v5343 = vpop.f32.mrf.mxu0
    %v5344 = vadd.f32 0.0, %v5343
    %v5345 = vpop.f32.mrf.mxu0
    %5346 = vmatprep.mubr.f32.mxu0 0.0
    %5347 = vmatmul.mubr.f32.gmra.mxu0 %v5242
    %v5348 = vpop.f32.mrf.mxu0
    %v5349 = vadd.f32 0.0, %v5348
    %v5350 = vpop.f32.mrf.mxu0
    %5351 = vmatprep.mubr.f32.mxu0 0.0
    %5352 = vmatmul.mubr.f32.gmra.mxu0 %v5245
    %v5353 = vpop.f32.mrf.mxu0
    %v5354 = vadd.f32 0.0, %v5353
    %v5355 = vpop.f32.mrf.mxu0
    %5356 = vmatprep.mubr.f32.mxu0 0.0
    %5357 = vmatmul.mubr.f32.gmra.mxu0 %v5248
    %v5358 = vpop.f32.mrf.mxu0
    %v5359 = vadd.f32 0.0, %v5358
    %v5360 = vpop.f32.mrf.mxu0
    %5361 = vmatprep.mubr.f32.mxu0 0.0
    %5362 = vmatmul.mubr.f32.gmra.mxu0 %v5251
    %v5363 = vpop.f32.mrf.mxu0
    %v5364 = vadd.f32 0.0, %v5363
    %v5365 = vpop.f32.mrf.mxu0
    %5366 = vmatprep.mubr.f32.mxu0 0.0
    %5367 = vmatmul.mubr.f32.gmra.mxu0 %v5254
    %v5368 = vpop.f32.mrf.mxu0
    %v5369 = vadd.f32 0.0, %v5368
    %v5370 = vpop.f32.mrf.mxu0
    %5371 = vmatprep.mubr.f32.mxu0 0.0
    %5372 = vmatmul.mubr.f32.gmra.mxu0 %v5257
    %v5373 = vpop.f32.mrf.mxu0
    %v5374 = vadd.f32 0.0, %v5373
    %v5375 = vpop.f32.mrf.mxu0
    %5376 = vmatprep.mubr.f32.mxu0 0.0
    %5377 = vmatmul.mubr.f32.gmra.mxu0 %v5260
    %v5378 = vpop.f32.mrf.mxu0
    %v5379 = vadd.f32 0.0, %v5378
    %v5380 = vpop.f32.mrf.mxu0
    %5381 = vmatprep.mubr.f32.mxu0 0.0
    %5382 = vmatmul.mubr.f32.gmra.mxu0 %v5263
    %v5383 = vpop.f32.mrf.mxu0
    %v5384 = vadd.f32 0.0, %v5383
    %v5385 = vpop.f32.mrf.mxu0
    %5386 = vmatprep.mubr.f32.mxu0 0.0
    %5387 = vmatmul.mubr.f32.gmra.mxu0 %v5266
    %v5388 = vpop.f32.mrf.mxu0
    %v5389 = vadd.f32 0.0, %v5388
    %v5390 = vpop.f32.mrf.mxu0
    %5391 = vmatprep.mubr.f32.mxu0 0.0
    %5392 = vmatmul.mubr.f32.gmra.mxu0 %v5269
    %v5393 = vpop.f32.mrf.mxu0
    %v5394 = vadd.f32 0.0, %v5393
    %v5395 = vpop.f32.mrf.mxu0
    %5396 = vmatprep.mubr.f32.mxu0 0.0
    %5397 = vmatmul.mubr.f32.gmra.mxu0 %v5272
    %v5398 = vpop.f32.mrf.mxu0
    %v5399 = vadd.f32 0.0, %v5398
    %v5400 = vpop.f32.mrf.mxu0
    %5401 = vdwg.mxu0
    %v5402 = vadd.f32 %v5209, %v5344
    %v5403 = vadd.f32 %v5210, %v5349
    %v5404 = vadd.f32 %v5211, %v5354
    %v5405 = vadd.f32 %v5212, %v5359
    %v5406 = vadd.f32 %v5213, %v5364
    %v5407 = vadd.f32 %v5214, %v5369
    %v5408 = vadd.f32 %v5215, %v5374
    %v5409 = vadd.f32 %v5216, %v5379
    %v5410 = vadd.f32 %v5217, %v5384
    %v5411 = vadd.f32 %v5218, %v5389
    %v5412 = vadd.f32 %v5219, %v5394
    %v5413 = vadd.f32 %v5220, %v5399
    %v5414 = vld [vmem:[#allocation2 + $0x2c6] sm:$0xff]
    %v5415 = vld [vmem:[#allocation2 + $0x2ce] sm:$0xff]
    %v5416 = vld [vmem:[#allocation2 + $0x2d6] sm:$0xff]
    %v5417 = vld [vmem:[#allocation2 + $0x2de] sm:$0xff]
    %v5418 = vld [vmem:[#allocation2 + $0x2e6] sm:$0xff]
    %v5419 = vld [vmem:[#allocation2 + $0x2ee] sm:$0xff]
    %v5420 = vld [vmem:[#allocation2 + $0x2f6] sm:$0xff]
    %v5421 = vld [vmem:[#allocation2 + $0x2fe] sm:$0xff]
    %v5422 = vld [vmem:[#allocation2 + $0x306] sm:$0xff]
    %v5423 = vld [vmem:[#allocation2 + $0x30e] sm:$0xff]
    %v5424 = vld [vmem:[#allocation2 + $0x316] sm:$0xff]
    %v5425 = vld [vmem:[#allocation2 + $0x31e] sm:$0x1]
    %v5426 = vld [vmem:[%s2299] sm:$0xff]
    %v5427 = vld [vmem:[%s2299 + $0x8] sm:$0xff]
    %v5428 = vld [vmem:[%s2299 + $0x10] sm:$0xff]
    %v5429 = vld [vmem:[%s2299 + $0x18] sm:$0xff]
    %v5430 = vld [vmem:[%s2299 + $0x20] sm:$0xf]
    %v5432 = vsel %vm1014, %v5414, 0
    %v5435 = vsel %vm1014, %v5415, 0
    %v5438 = vsel %vm1014, %v5416, 0
    %v5441 = vsel %vm1014, %v5417, 0
    %v5444 = vsel %vm1014, %v5418, 0
    %v5447 = vsel %vm1014, %v5419, 0
    %v5450 = vsel %vm1014, %v5420, 0
    %v5453 = vsel %vm1014, %v5421, 0
    %v5456 = vsel %vm1014, %v5422, 0
    %v5459 = vsel %vm1014, %v5423, 0
    %v5462 = vsel %vm1014, %v5424, 0
    %v5465 = vsel %vm1014, %v5425, 0
    %v5468 = vsel %vm1176, %v5430, 0
    %5470 = vmatprep.subr.mxu0 0.0
    %5471 = vmatpush1.msra.mxu0 0.0
    %5472 = vmatprep.subr.mxu0 0.0
    %5473 = vmatpush1.msra.mxu0 0.0
    %5474 = vmatprep.subr.mxu0 0.0
    %5475 = vmatpush1.msra.mxu0 0.0
    %5476 = vmatprep.subr.mxu0 0.0
    %5477 = vmatpush1.msra.mxu0 0.0
    %5478 = vmatprep.subr.mxu0 0.0
    %5479 = vmatpush1.msra.mxu0 0.0
    %5480 = vmatprep.subr.mxu0 0.0
    %5481 = vmatpush1.msra.mxu0 0.0
    %5482 = vmatprep.subr.mxu0 0.0
    %5483 = vmatpush1.msra.mxu0 0.0
    %5484 = vmatprep.subr.mxu0 0.0
    %5485 = vmatpush1.msra.mxu0 0.0
    %5486 = vmatprep.subr.mxu0 0.0
    %5487 = vmatpush1.msra.mxu0 0.0
    %5488 = vmatprep.subr.mxu0 0.0
    %5489 = vmatpush1.msra.mxu0 0.0
    %5490 = vmatprep.subr.mxu0 0.0
    %5491 = vmatpush1.msra.mxu0 0.0
    %5492 = vmatprep.subr.mxu0 0.0
    %5493 = vmatpush1.msra.mxu0 %v5468
    %5494 = vmatprep.subr.mxu0 0.0
    %5495 = vmatpush1.msra.mxu0 %v5429
    %5496 = vmatprep.subr.mxu0 0.0
    %5497 = vmatpush1.msra.mxu0 %v5428
    %5498 = vmatprep.subr.mxu0 0.0
    %5499 = vmatpush1.msra.mxu0 %v5427
    %5500 = vmatprep.subr.mxu0 0.0
    %5501 = vmatpush1.msra.mxu0 %v5426
    %5502 = vmatprep.subr.mxu0 0.0
    %5503 = vmatpush2.msra.mxu0 0.0
    %5504 = vmatprep.subr.mxu0 0.0
    %5505 = vmatpush2.msra.mxu0 0.0
    %5506 = vmatprep.subr.mxu0 0.0
    %5507 = vmatpush2.msra.mxu0 0.0
    %5508 = vmatprep.subr.mxu0 0.0
    %5509 = vmatpush2.msra.mxu0 0.0
    %5510 = vmatprep.subr.mxu0 0.0
    %5511 = vmatpush2.msra.mxu0 0.0
    %5512 = vmatprep.subr.mxu0 0.0
    %5513 = vmatpush2.msra.mxu0 0.0
    %5514 = vmatprep.subr.mxu0 0.0
    %5515 = vmatpush2.msra.mxu0 0.0
    %5516 = vmatprep.subr.mxu0 0.0
    %5517 = vmatpush2.msra.mxu0 0.0
    %5518 = vmatprep.subr.mxu0 0.0
    %5519 = vmatpush2.msra.mxu0 0.0
    %5520 = vmatprep.subr.mxu0 0.0
    %5521 = vmatpush2.msra.mxu0 0.0
    %5522 = vmatprep.subr.mxu0 0.0
    %5523 = vmatpush2.msra.mxu0 0.0
    %5524 = vmatprep.subr.mxu0 0.0
    %5525 = vmatpush2.msra.mxu0 0.0
    %5526 = vmatprep.subr.mxu0 0.0
    %5527 = vmatpush2.msra.mxu0 0.0
    %5528 = vmatprep.subr.mxu0 0.0
    %5529 = vmatpush2.msra.mxu0 0.0
    %5530 = vmatprep.subr.mxu0 0.0
    %5531 = vmatpush2.msra.mxu0 0.0
    %5532 = vmatprep.subr.mxu0 0.0
    %5533 = vmatpush2.msra.mxu0 0.0
    %5534 = vmatprep.mubr.f32.mxu0 0.0
    %5535 = vmatmul.mubr.f32.gmra.mxu0 %v5432
    %v5536 = vpop.f32.mrf.mxu0
    %v5537 = vadd.f32 0.0, %v5536
    %v5538 = vpop.f32.mrf.mxu0
    %5539 = vmatprep.mubr.f32.mxu0 0.0
    %5540 = vmatmul.mubr.f32.gmra.mxu0 %v5435
    %v5541 = vpop.f32.mrf.mxu0
    %v5542 = vadd.f32 0.0, %v5541
    %v5543 = vpop.f32.mrf.mxu0
    %5544 = vmatprep.mubr.f32.mxu0 0.0
    %5545 = vmatmul.mubr.f32.gmra.mxu0 %v5438
    %v5546 = vpop.f32.mrf.mxu0
    %v5547 = vadd.f32 0.0, %v5546
    %v5548 = vpop.f32.mrf.mxu0
    %5549 = vmatprep.mubr.f32.mxu0 0.0
    %5550 = vmatmul.mubr.f32.gmra.mxu0 %v5441
    %v5551 = vpop.f32.mrf.mxu0
    %v5552 = vadd.f32 0.0, %v5551
    %v5553 = vpop.f32.mrf.mxu0
    %5554 = vmatprep.mubr.f32.mxu0 0.0
    %5555 = vmatmul.mubr.f32.gmra.mxu0 %v5444
    %v5556 = vpop.f32.mrf.mxu0
    %v5557 = vadd.f32 0.0, %v5556
    %v5558 = vpop.f32.mrf.mxu0
    %5559 = vmatprep.mubr.f32.mxu0 0.0
    %5560 = vmatmul.mubr.f32.gmra.mxu0 %v5447
    %v5561 = vpop.f32.mrf.mxu0
    %v5562 = vadd.f32 0.0, %v5561
    %v5563 = vpop.f32.mrf.mxu0
    %5564 = vmatprep.mubr.f32.mxu0 0.0
    %5565 = vmatmul.mubr.f32.gmra.mxu0 %v5450
    %v5566 = vpop.f32.mrf.mxu0
    %v5567 = vadd.f32 0.0, %v5566
    %v5568 = vpop.f32.mrf.mxu0
    %5569 = vmatprep.mubr.f32.mxu0 0.0
    %5570 = vmatmul.mubr.f32.gmra.mxu0 %v5453
    %v5571 = vpop.f32.mrf.mxu0
    %v5572 = vadd.f32 0.0, %v5571
    %v5573 = vpop.f32.mrf.mxu0
    %5574 = vmatprep.mubr.f32.mxu0 0.0
    %5575 = vmatmul.mubr.f32.gmra.mxu0 %v5456
    %v5576 = vpop.f32.mrf.mxu0
    %v5577 = vadd.f32 0.0, %v5576
    %v5578 = vpop.f32.mrf.mxu0
    %5579 = vmatprep.mubr.f32.mxu0 0.0
    %5580 = vmatmul.mubr.f32.gmra.mxu0 %v5459
    %v5581 = vpop.f32.mrf.mxu0
    %v5582 = vadd.f32 0.0, %v5581
    %v5583 = vpop.f32.mrf.mxu0
    %5584 = vmatprep.mubr.f32.mxu0 0.0
    %5585 = vmatmul.mubr.f32.gmra.mxu0 %v5462
    %v5586 = vpop.f32.mrf.mxu0
    %v5587 = vadd.f32 0.0, %v5586
    %v5588 = vpop.f32.mrf.mxu0
    %5589 = vmatprep.mubr.f32.mxu0 0.0
    %5590 = vmatmul.mubr.f32.gmra.mxu0 %v5465
    %v5591 = vpop.f32.mrf.mxu0
    %v5592 = vadd.f32 0.0, %v5591
    %v5593 = vpop.f32.mrf.mxu0
    %5594 = vdwg.mxu0
    %v5595 = vadd.f32 %v5402, %v5537
    %v5596 = vadd.f32 %v5403, %v5542
    %v5597 = vadd.f32 %v5404, %v5547
    %v5598 = vadd.f32 %v5405, %v5552
    %v5599 = vadd.f32 %v5406, %v5557
    %v5600 = vadd.f32 %v5407, %v5562
    %v5601 = vadd.f32 %v5408, %v5567
    %v5602 = vadd.f32 %v5409, %v5572
    %v5603 = vadd.f32 %v5410, %v5577
    %v5604 = vadd.f32 %v5411, %v5582
    %v5605 = vadd.f32 %v5412, %v5587
    %v5606 = vadd.f32 %v5413, %v5592
    %v5607 = vld [vmem:[#allocation2 + $0x263] sm:$0xff]
    %v5608 = vld [vmem:[#allocation2 + $0x26b] sm:$0xff]
    %v5609 = vld [vmem:[#allocation2 + $0x273] sm:$0xff]
    %v5610 = vld [vmem:[#allocation2 + $0x27b] sm:$0xff]
    %v5611 = vld [vmem:[#allocation2 + $0x283] sm:$0xff]
    %v5612 = vld [vmem:[#allocation2 + $0x28b] sm:$0xff]
    %v5613 = vld [vmem:[#allocation2 + $0x293] sm:$0xff]
    %v5614 = vld [vmem:[#allocation2 + $0x29b] sm:$0xff]
    %v5615 = vld [vmem:[#allocation2 + $0x2a3] sm:$0xff]
    %v5616 = vld [vmem:[#allocation2 + $0x2ab] sm:$0xff]
    %v5617 = vld [vmem:[#allocation2 + $0x2b3] sm:$0xff]
    %v5618 = vld [vmem:[#allocation2 + $0x2bb] sm:$0x1]
    %v5619 = vld [vmem:[%s2493] sm:$0xff]
    %v5620 = vld [vmem:[%s2493 + $0x8] sm:$0xff]
    %v5621 = vld [vmem:[%s2493 + $0x10] sm:$0xff]
    %v5622 = vld [vmem:[%s2493 + $0x18] sm:$0xff]
    %v5623 = vld [vmem:[%s2493 + $0x20] sm:$0xf]
    %v5625 = vsel %vm1014, %v5607, 0
    %v5628 = vsel %vm1014, %v5608, 0
    %v5631 = vsel %vm1014, %v5609, 0
    %v5634 = vsel %vm1014, %v5610, 0
    %v5637 = vsel %vm1014, %v5611, 0
    %v5640 = vsel %vm1014, %v5612, 0
    %v5643 = vsel %vm1014, %v5613, 0
    %v5646 = vsel %vm1014, %v5614, 0
    %v5649 = vsel %vm1014, %v5615, 0
    %v5652 = vsel %vm1014, %v5616, 0
    %v5655 = vsel %vm1014, %v5617, 0
    %v5658 = vsel %vm1014, %v5618, 0
    %v5661 = vsel %vm1176, %v5623, 0
    %5663 = vmatprep.subr.mxu0 0.0
    %5664 = vmatpush1.msra.mxu0 0.0
    %5665 = vmatprep.subr.mxu0 0.0
    %5666 = vmatpush1.msra.mxu0 0.0
    %5667 = vmatprep.subr.mxu0 0.0
    %5668 = vmatpush1.msra.mxu0 0.0
    %5669 = vmatprep.subr.mxu0 0.0
    %5670 = vmatpush1.msra.mxu0 0.0
    %5671 = vmatprep.subr.mxu0 0.0
    %5672 = vmatpush1.msra.mxu0 0.0
    %5673 = vmatprep.subr.mxu0 0.0
    %5674 = vmatpush1.msra.mxu0 0.0
    %5675 = vmatprep.subr.mxu0 0.0
    %5676 = vmatpush1.msra.mxu0 0.0
    %5677 = vmatprep.subr.mxu0 0.0
    %5678 = vmatpush1.msra.mxu0 0.0
    %5679 = vmatprep.subr.mxu0 0.0
    %5680 = vmatpush1.msra.mxu0 0.0
    %5681 = vmatprep.subr.mxu0 0.0
    %5682 = vmatpush1.msra.mxu0 0.0
    %5683 = vmatprep.subr.mxu0 0.0
    %5684 = vmatpush1.msra.mxu0 0.0
    %5685 = vmatprep.subr.mxu0 0.0
    %5686 = vmatpush1.msra.mxu0 %v5661
    %5687 = vmatprep.subr.mxu0 0.0
    %5688 = vmatpush1.msra.mxu0 %v5622
    %5689 = vmatprep.subr.mxu0 0.0
    %5690 = vmatpush1.msra.mxu0 %v5621
    %5691 = vmatprep.subr.mxu0 0.0
    %5692 = vmatpush1.msra.mxu0 %v5620
    %5693 = vmatprep.subr.mxu0 0.0
    %5694 = vmatpush1.msra.mxu0 %v5619
    %5695 = vmatprep.subr.mxu0 0.0
    %5696 = vmatpush2.msra.mxu0 0.0
    %5697 = vmatprep.subr.mxu0 0.0
    %5698 = vmatpush2.msra.mxu0 0.0
    %5699 = vmatprep.subr.mxu0 0.0
    %5700 = vmatpush2.msra.mxu0 0.0
    %5701 = vmatprep.subr.mxu0 0.0
    %5702 = vmatpush2.msra.mxu0 0.0
    %5703 = vmatprep.subr.mxu0 0.0
    %5704 = vmatpush2.msra.mxu0 0.0
    %5705 = vmatprep.subr.mxu0 0.0
    %5706 = vmatpush2.msra.mxu0 0.0
    %5707 = vmatprep.subr.mxu0 0.0
    %5708 = vmatpush2.msra.mxu0 0.0
    %5709 = vmatprep.subr.mxu0 0.0
    %5710 = vmatpush2.msra.mxu0 0.0
    %5711 = vmatprep.subr.mxu0 0.0
    %5712 = vmatpush2.msra.mxu0 0.0
    %5713 = vmatprep.subr.mxu0 0.0
    %5714 = vmatpush2.msra.mxu0 0.0
    %5715 = vmatprep.subr.mxu0 0.0
    %5716 = vmatpush2.msra.mxu0 0.0
    %5717 = vmatprep.subr.mxu0 0.0
    %5718 = vmatpush2.msra.mxu0 0.0
    %5719 = vmatprep.subr.mxu0 0.0
    %5720 = vmatpush2.msra.mxu0 0.0
    %5721 = vmatprep.subr.mxu0 0.0
    %5722 = vmatpush2.msra.mxu0 0.0
    %5723 = vmatprep.subr.mxu0 0.0
    %5724 = vmatpush2.msra.mxu0 0.0
    %5725 = vmatprep.subr.mxu0 0.0
    %5726 = vmatpush2.msra.mxu0 0.0
    %5727 = vmatprep.mubr.f32.mxu0 0.0
    %5728 = vmatmul.mubr.f32.gmra.mxu0 %v5625
    %v5729 = vpop.f32.mrf.mxu0
    %v5730 = vadd.f32 0.0, %v5729
    %v5731 = vpop.f32.mrf.mxu0
    %5732 = vmatprep.mubr.f32.mxu0 0.0
    %5733 = vmatmul.mubr.f32.gmra.mxu0 %v5628
    %v5734 = vpop.f32.mrf.mxu0
    %v5735 = vadd.f32 0.0, %v5734
    %v5736 = vpop.f32.mrf.mxu0
    %5737 = vmatprep.mubr.f32.mxu0 0.0
    %5738 = vmatmul.mubr.f32.gmra.mxu0 %v5631
    %v5739 = vpop.f32.mrf.mxu0
    %v5740 = vadd.f32 0.0, %v5739
    %v5741 = vpop.f32.mrf.mxu0
    %5742 = vmatprep.mubr.f32.mxu0 0.0
    %5743 = vmatmul.mubr.f32.gmra.mxu0 %v5634
    %v5744 = vpop.f32.mrf.mxu0
    %v5745 = vadd.f32 0.0, %v5744
    %v5746 = vpop.f32.mrf.mxu0
    %5747 = vmatprep.mubr.f32.mxu0 0.0
    %5748 = vmatmul.mubr.f32.gmra.mxu0 %v5637
    %v5749 = vpop.f32.mrf.mxu0
    %v5750 = vadd.f32 0.0, %v5749
    %v5751 = vpop.f32.mrf.mxu0
    %5752 = vmatprep.mubr.f32.mxu0 0.0
    %5753 = vmatmul.mubr.f32.gmra.mxu0 %v5640
    %v5754 = vpop.f32.mrf.mxu0
    %v5755 = vadd.f32 0.0, %v5754
    %v5756 = vpop.f32.mrf.mxu0
    %5757 = vmatprep.mubr.f32.mxu0 0.0
    %5758 = vmatmul.mubr.f32.gmra.mxu0 %v5643
    %v5759 = vpop.f32.mrf.mxu0
    %v5760 = vadd.f32 0.0, %v5759
    %v5761 = vpop.f32.mrf.mxu0
    %5762 = vmatprep.mubr.f32.mxu0 0.0
    %5763 = vmatmul.mubr.f32.gmra.mxu0 %v5646
    %v5764 = vpop.f32.mrf.mxu0
    %v5765 = vadd.f32 0.0, %v5764
    %v5766 = vpop.f32.mrf.mxu0
    %5767 = vmatprep.mubr.f32.mxu0 0.0
    %5768 = vmatmul.mubr.f32.gmra.mxu0 %v5649
    %v5769 = vpop.f32.mrf.mxu0
    %v5770 = vadd.f32 0.0, %v5769
    %v5771 = vpop.f32.mrf.mxu0
    %5772 = vmatprep.mubr.f32.mxu0 0.0
    %5773 = vmatmul.mubr.f32.gmra.mxu0 %v5652
    %v5774 = vpop.f32.mrf.mxu0
    %v5775 = vadd.f32 0.0, %v5774
    %v5776 = vpop.f32.mrf.mxu0
    %5777 = vmatprep.mubr.f32.mxu0 0.0
    %5778 = vmatmul.mubr.f32.gmra.mxu0 %v5655
    %v5779 = vpop.f32.mrf.mxu0
    %v5780 = vadd.f32 0.0, %v5779
    %v5781 = vpop.f32.mrf.mxu0
    %5782 = vmatprep.mubr.f32.mxu0 0.0
    %5783 = vmatmul.mubr.f32.gmra.mxu0 %v5658
    %v5784 = vpop.f32.mrf.mxu0
    %v5785 = vadd.f32 0.0, %v5784
    %v5786 = vpop.f32.mrf.mxu0
    %5787 = vdwg.mxu0
    %v5788 = vadd.f32 %v5595, %v5730
    %v5789 = vadd.f32 %v5596, %v5735
    %v5790 = vadd.f32 %v5597, %v5740
    %v5791 = vadd.f32 %v5598, %v5745
    %v5792 = vadd.f32 %v5599, %v5750
    %v5793 = vadd.f32 %v5600, %v5755
    %v5794 = vadd.f32 %v5601, %v5760
    %v5795 = vadd.f32 %v5602, %v5765
    %v5796 = vadd.f32 %v5603, %v5770
    %v5797 = vadd.f32 %v5604, %v5775
    %v5798 = vadd.f32 %v5605, %v5780
    %v5799 = vadd.f32 %v5606, %v5785
    %v5800 = vld [vmem:[#allocation2 + $0x2c7] sm:$0xff]
    %v5801 = vld [vmem:[#allocation2 + $0x2cf] sm:$0xff]
    %v5802 = vld [vmem:[#allocation2 + $0x2d7] sm:$0xff]
    %v5803 = vld [vmem:[#allocation2 + $0x2df] sm:$0xff]
    %v5804 = vld [vmem:[#allocation2 + $0x2e7] sm:$0xff]
    %v5805 = vld [vmem:[#allocation2 + $0x2ef] sm:$0xff]
    %v5806 = vld [vmem:[#allocation2 + $0x2f7] sm:$0xff]
    %v5807 = vld [vmem:[#allocation2 + $0x2ff] sm:$0xff]
    %v5808 = vld [vmem:[#allocation2 + $0x307] sm:$0xff]
    %v5809 = vld [vmem:[#allocation2 + $0x30f] sm:$0xff]
    %v5810 = vld [vmem:[#allocation2 + $0x317] sm:$0xff]
    %v5811 = vld [vmem:[#allocation2 + $0x31f] sm:$0x1]
    %v5812 = vld [vmem:[%s2687] sm:$0xff]
    %v5813 = vld [vmem:[%s2687 + $0x8] sm:$0xff]
    %v5814 = vld [vmem:[%s2687 + $0x10] sm:$0xff]
    %v5815 = vld [vmem:[%s2687 + $0x18] sm:$0xff]
    %v5816 = vld [vmem:[%s2687 + $0x20] sm:$0xf]
    %v5818 = vsel %vm1014, %v5800, 0
    %v5821 = vsel %vm1014, %v5801, 0
    %v5824 = vsel %vm1014, %v5802, 0
    %v5827 = vsel %vm1014, %v5803, 0
    %v5830 = vsel %vm1014, %v5804, 0
    %v5833 = vsel %vm1014, %v5805, 0
    %v5836 = vsel %vm1014, %v5806, 0
    %v5839 = vsel %vm1014, %v5807, 0
    %v5842 = vsel %vm1014, %v5808, 0
    %v5845 = vsel %vm1014, %v5809, 0
    %v5848 = vsel %vm1014, %v5810, 0
    %v5851 = vsel %vm1014, %v5811, 0
    %v5854 = vsel %vm1176, %v5816, 0
    %5856 = vmatprep.subr.mxu0 0.0
    %5857 = vmatpush1.msra.mxu0 0.0
    %5858 = vmatprep.subr.mxu0 0.0
    %5859 = vmatpush1.msra.mxu0 0.0
    %5860 = vmatprep.subr.mxu0 0.0
    %5861 = vmatpush1.msra.mxu0 0.0
    %5862 = vmatprep.subr.mxu0 0.0
    %5863 = vmatpush1.msra.mxu0 0.0
    %5864 = vmatprep.subr.mxu0 0.0
    %5865 = vmatpush1.msra.mxu0 0.0
    %5866 = vmatprep.subr.mxu0 0.0
    %5867 = vmatpush1.msra.mxu0 0.0
    %5868 = vmatprep.subr.mxu0 0.0
    %5869 = vmatpush1.msra.mxu0 0.0
    %5870 = vmatprep.subr.mxu0 0.0
    %5871 = vmatpush1.msra.mxu0 0.0
    %5872 = vmatprep.subr.mxu0 0.0
    %5873 = vmatpush1.msra.mxu0 0.0
    %5874 = vmatprep.subr.mxu0 0.0
    %5875 = vmatpush1.msra.mxu0 0.0
    %5876 = vmatprep.subr.mxu0 0.0
    %5877 = vmatpush1.msra.mxu0 0.0
    %5878 = vmatprep.subr.mxu0 0.0
    %5879 = vmatpush1.msra.mxu0 %v5854
    %5880 = vmatprep.subr.mxu0 0.0
    %5881 = vmatpush1.msra.mxu0 %v5815
    %5882 = vmatprep.subr.mxu0 0.0
    %5883 = vmatpush1.msra.mxu0 %v5814
    %5884 = vmatprep.subr.mxu0 0.0
    %5885 = vmatpush1.msra.mxu0 %v5813
    %5886 = vmatprep.subr.mxu0 0.0
    %5887 = vmatpush1.msra.mxu0 %v5812
    %5888 = vmatprep.subr.mxu0 0.0
    %5889 = vmatpush2.msra.mxu0 0.0
    %5890 = vmatprep.subr.mxu0 0.0
    %5891 = vmatpush2.msra.mxu0 0.0
    %5892 = vmatprep.subr.mxu0 0.0
    %5893 = vmatpush2.msra.mxu0 0.0
    %5894 = vmatprep.subr.mxu0 0.0
    %5895 = vmatpush2.msra.mxu0 0.0
    %5896 = vmatprep.subr.mxu0 0.0
    %5897 = vmatpush2.msra.mxu0 0.0
    %5898 = vmatprep.subr.mxu0 0.0
    %5899 = vmatpush2.msra.mxu0 0.0
    %5900 = vmatprep.subr.mxu0 0.0
    %5901 = vmatpush2.msra.mxu0 0.0
    %5902 = vmatprep.subr.mxu0 0.0
    %5903 = vmatpush2.msra.mxu0 0.0
    %5904 = vmatprep.subr.mxu0 0.0
    %5905 = vmatpush2.msra.mxu0 0.0
    %5906 = vmatprep.subr.mxu0 0.0
    %5907 = vmatpush2.msra.mxu0 0.0
    %5908 = vmatprep.subr.mxu0 0.0
    %5909 = vmatpush2.msra.mxu0 0.0
    %5910 = vmatprep.subr.mxu0 0.0
    %5911 = vmatpush2.msra.mxu0 0.0
    %5912 = vmatprep.subr.mxu0 0.0
    %5913 = vmatpush2.msra.mxu0 0.0
    %5914 = vmatprep.subr.mxu0 0.0
    %5915 = vmatpush2.msra.mxu0 0.0
    %5916 = vmatprep.subr.mxu0 0.0
    %5917 = vmatpush2.msra.mxu0 0.0
    %5918 = vmatprep.subr.mxu0 0.0
    %5919 = vmatpush2.msra.mxu0 0.0
    %5920 = vmatprep.mubr.f32.mxu0 0.0
    %5921 = vmatmul.mubr.f32.gmra.mxu0 %v5818
    %v5922 = vpop.f32.mrf.mxu0
    %v5923 = vadd.f32 0.0, %v5922
    %v5924 = vpop.f32.mrf.mxu0
    %5925 = vmatprep.mubr.f32.mxu0 0.0
    %5926 = vmatmul.mubr.f32.gmra.mxu0 %v5821
    %v5927 = vpop.f32.mrf.mxu0
    %v5928 = vadd.f32 0.0, %v5927
    %v5929 = vpop.f32.mrf.mxu0
    %5930 = vmatprep.mubr.f32.mxu0 0.0
    %5931 = vmatmul.mubr.f32.gmra.mxu0 %v5824
    %v5932 = vpop.f32.mrf.mxu0
    %v5933 = vadd.f32 0.0, %v5932
    %v5934 = vpop.f32.mrf.mxu0
    %5935 = vmatprep.mubr.f32.mxu0 0.0
    %5936 = vmatmul.mubr.f32.gmra.mxu0 %v5827
    %v5937 = vpop.f32.mrf.mxu0
    %v5938 = vadd.f32 0.0, %v5937
    %v5939 = vpop.f32.mrf.mxu0
    %5940 = vmatprep.mubr.f32.mxu0 0.0
    %5941 = vmatmul.mubr.f32.gmra.mxu0 %v5830
    %v5942 = vpop.f32.mrf.mxu0
    %v5943 = vadd.f32 0.0, %v5942
    %v5944 = vpop.f32.mrf.mxu0
    %5945 = vmatprep.mubr.f32.mxu0 0.0
    %5946 = vmatmul.mubr.f32.gmra.mxu0 %v5833
    %v5947 = vpop.f32.mrf.mxu0
    %v5948 = vadd.f32 0.0, %v5947
    %v5949 = vpop.f32.mrf.mxu0
    %5950 = vmatprep.mubr.f32.mxu0 0.0
    %5951 = vmatmul.mubr.f32.gmra.mxu0 %v5836
    %v5952 = vpop.f32.mrf.mxu0
    %v5953 = vadd.f32 0.0, %v5952
    %v5954 = vpop.f32.mrf.mxu0
    %5955 = vmatprep.mubr.f32.mxu0 0.0
    %5956 = vmatmul.mubr.f32.gmra.mxu0 %v5839
    %v5957 = vpop.f32.mrf.mxu0
    %v5958 = vadd.f32 0.0, %v5957
    %v5959 = vpop.f32.mrf.mxu0
    %5960 = vmatprep.mubr.f32.mxu0 0.0
    %5961 = vmatmul.mubr.f32.gmra.mxu0 %v5842
    %v5962 = vpop.f32.mrf.mxu0
    %v5963 = vadd.f32 0.0, %v5962
    %v5964 = vpop.f32.mrf.mxu0
    %5965 = vmatprep.mubr.f32.mxu0 0.0
    %5966 = vmatmul.mubr.f32.gmra.mxu0 %v5845
    %v5967 = vpop.f32.mrf.mxu0
    %v5968 = vadd.f32 0.0, %v5967
    %v5969 = vpop.f32.mrf.mxu0
    %5970 = vmatprep.mubr.f32.mxu0 0.0
    %5971 = vmatmul.mubr.f32.gmra.mxu0 %v5848
    %v5972 = vpop.f32.mrf.mxu0
    %v5973 = vadd.f32 0.0, %v5972
    %v5974 = vpop.f32.mrf.mxu0
    %5975 = vmatprep.mubr.f32.mxu0 0.0
    %5976 = vmatmul.mubr.f32.gmra.mxu0 %v5851
    %v5977 = vpop.f32.mrf.mxu0
    %v5978 = vadd.f32 0.0, %v5977
    %v5979 = vpop.f32.mrf.mxu0
    %5980 = vdwg.mxu0
    %v5981 = vadd.f32 %v5788, %v5923
    %v5982 = vadd.f32 %v5789, %v5928
    %v5983 = vadd.f32 %v5790, %v5933
    %v5984 = vadd.f32 %v5791, %v5938
    %v5985 = vadd.f32 %v5792, %v5943
    %v5986 = vadd.f32 %v5793, %v5948
    %v5987 = vadd.f32 %v5794, %v5953
    %v5988 = vadd.f32 %v5795, %v5958
    %v5989 = vadd.f32 %v5796, %v5963
    %v5990 = vadd.f32 %v5797, %v5968
    %v5991 = vadd.f32 %v5798, %v5973
    %v5992 = vadd.f32 %v5799, %v5978
    %v5993 = vld [vmem:[%s6] sm:$0xff]
    %v5994 = vld [vmem:[%s6 + $0x8] sm:$0xff]
    %v5995 = vld [vmem:[%s6 + $0x10] sm:$0xff]
    %v5996 = vld [vmem:[%s6 + $0x18] sm:$0xff]
    %v5997 = vld [vmem:[%s6 + $0x20] sm:$0xff]
    %v5998 = vld [vmem:[%s6 + $0x28] sm:$0xff]
    %v5999 = vld [vmem:[%s6 + $0x30] sm:$0xff]
    %v6000 = vld [vmem:[%s6 + $0x38] sm:$0xff]
    %v6001 = vld [vmem:[%s6 + $0x40] sm:$0xff]
    %v6002 = vld [vmem:[%s6 + $0x48] sm:$0xff]
    %v6003 = vld [vmem:[%s6 + $0x50] sm:$0xff]
    %v6004 = vld [vmem:[%s6 + $0x58] sm:$0xff]
    %v6005 = vld [vmem:[%s6 + $0x60] sm:$0xff]
    %v6006 = vld [vmem:[%s6 + $0x68] sm:$0xff]
    %v6007 = vld [vmem:[%s6 + $0x70] sm:$0xff]
    %v6008 = vld [vmem:[%s6 + $0x78] sm:$0xff]
    %v6009 = vld [vmem:[%s6 + $0x80] sm:$0xff]
    %v6010 = vld [vmem:[%s6 + $0x88] sm:$0xff]
    %v6011 = vld [vmem:[%s6 + $0x90] sm:$0xff]
    %v6012 = vld [vmem:[%s6 + $0x98] sm:$0xff]
    %v6013 = vld [vmem:[%s6 + $0xa0] sm:$0xff]
    %v6014 = vld [vmem:[%s6 + $0xa8] sm:$0xff]
    %v6015 = vld [vmem:[%s6 + $0xb0] sm:$0xff]
    %v6016 = vld [vmem:[%s6 + $0xb8] sm:$0xff]
    %v6017 = vld [vmem:[%s6 + $0xc0] sm:$0xff]
    %v6018 = vld [vmem:[%s6 + $0xc8] sm:$0xff]
    %v6019 = vld [vmem:[%s6 + $0xd0] sm:$0xff]
    %v6020 = vld [vmem:[%s6 + $0xd8] sm:$0xff]
    %v6021 = vld [vmem:[%s6 + $0xe0] sm:$0x1]
    %v6023 = vsel %vm2898, %v5993, 0
    %v6026 = vsel %vm2898, %v5994, 0
    %v6029 = vsel %vm2898, %v5995, 0
    %v6032 = vsel %vm2898, %v5996, 0
    %v6035 = vsel %vm2898, %v5997, 0
    %v6038 = vsel %vm2898, %v5998, 0
    %v6041 = vsel %vm2898, %v5999, 0
    %v6044 = vsel %vm2898, %v6000, 0
    %v6047 = vsel %vm2898, %v6001, 0
    %v6050 = vsel %vm2898, %v6002, 0
    %v6053 = vsel %vm2898, %v6003, 0
    %v6056 = vsel %vm2898, %v6004, 0
    %v6059 = vsel %vm2898, %v6005, 0
    %v6062 = vsel %vm2898, %v6006, 0
    %v6065 = vsel %vm2898, %v6007, 0
    %v6068 = vsel %vm2898, %v6008, 0
    %v6071 = vsel %vm2898, %v6009, 0
    %v6074 = vsel %vm2898, %v6010, 0
    %v6077 = vsel %vm2898, %v6011, 0
    %v6080 = vsel %vm2898, %v6012, 0
    %v6083 = vsel %vm2898, %v6013, 0
    %v6086 = vsel %vm2898, %v6014, 0
    %v6089 = vsel %vm2898, %v6015, 0
    %v6092 = vsel %vm2898, %v6016, 0
    %v6095 = vsel %vm2898, %v6017, 0
    %v6098 = vsel %vm2898, %v6018, 0
    %v6101 = vsel %vm2898, %v6019, 0
    %v6104 = vsel %vm2898, %v6020, 0
    %v6107 = vsel %vm2898, %v6021, 0
    %v6110 = vsel %vm2986, %v5992, 0
    %6112 = vmatprep.subr.mxu0 0.0
    %6113 = vmatpush1.msra.mxu0 0.0
    %6114 = vmatprep.subr.mxu0 0.0
    %6115 = vmatpush1.msra.mxu0 0.0
    %6116 = vmatprep.subr.mxu0 0.0
    %6117 = vmatpush1.msra.mxu0 0.0
    %6118 = vmatprep.subr.mxu0 0.0
    %6119 = vmatpush1.msra.mxu0 0.0
    %6120 = vmatprep.subr.mxu0 0.0
    %6121 = vmatpush1.msra.mxu0 %v6110
    %6122 = vmatprep.subr.mxu0 0.0
    %6123 = vmatpush1.msra.mxu0 %v5991
    %6124 = vmatprep.subr.mxu0 0.0
    %6125 = vmatpush1.msra.mxu0 %v5990
    %6126 = vmatprep.subr.mxu0 0.0
    %6127 = vmatpush1.msra.mxu0 %v5989
    %6128 = vmatprep.subr.mxu0 0.0
    %6129 = vmatpush1.msra.mxu0 %v5988
    %6130 = vmatprep.subr.mxu0 0.0
    %6131 = vmatpush1.msra.mxu0 %v5987
    %6132 = vmatprep.subr.mxu0 0.0
    %6133 = vmatpush1.msra.mxu0 %v5986
    %6134 = vmatprep.subr.mxu0 0.0
    %6135 = vmatpush1.msra.mxu0 %v5985
    %6136 = vmatprep.subr.mxu0 0.0
    %6137 = vmatpush1.msra.mxu0 %v5984
    %6138 = vmatprep.subr.mxu0 0.0
    %6139 = vmatpush1.msra.mxu0 %v5983
    %6140 = vmatprep.subr.mxu0 0.0
    %6141 = vmatpush1.msra.mxu0 %v5982
    %6142 = vmatprep.subr.mxu0 0.0
    %6143 = vmatpush1.msra.mxu0 %v5981
    %6144 = vmatprep.subr.mxu0 0.0
    %6145 = vmatpush2.msra.mxu0 0.0
    %6146 = vmatprep.subr.mxu0 0.0
    %6147 = vmatpush2.msra.mxu0 0.0
    %6148 = vmatprep.subr.mxu0 0.0
    %6149 = vmatpush2.msra.mxu0 0.0
    %6150 = vmatprep.subr.mxu0 0.0
    %6151 = vmatpush2.msra.mxu0 0.0
    %6152 = vmatprep.subr.mxu0 0.0
    %6153 = vmatpush2.msra.mxu0 0.0
    %6154 = vmatprep.subr.mxu0 0.0
    %6155 = vmatpush2.msra.mxu0 0.0
    %6156 = vmatprep.subr.mxu0 0.0
    %6157 = vmatpush2.msra.mxu0 0.0
    %6158 = vmatprep.subr.mxu0 0.0
    %6159 = vmatpush2.msra.mxu0 0.0
    %6160 = vmatprep.subr.mxu0 0.0
    %6161 = vmatpush2.msra.mxu0 0.0
    %6162 = vmatprep.subr.mxu0 0.0
    %6163 = vmatpush2.msra.mxu0 0.0
    %6164 = vmatprep.subr.mxu0 0.0
    %6165 = vmatpush2.msra.mxu0 0.0
    %6166 = vmatprep.subr.mxu0 0.0
    %6167 = vmatpush2.msra.mxu0 0.0
    %6168 = vmatprep.subr.mxu0 0.0
    %6169 = vmatpush2.msra.mxu0 0.0
    %6170 = vmatprep.subr.mxu0 0.0
    %6171 = vmatpush2.msra.mxu0 0.0
    %6172 = vmatprep.subr.mxu0 0.0
    %6173 = vmatpush2.msra.mxu0 0.0
    %6174 = vmatprep.subr.mxu0 0.0
    %6175 = vmatpush2.msra.mxu0 0.0
    %6176 = vmatprep.mubr.f32.mxu0 0.0
    %6177 = vmatmul.mubr.f32.gmra.mxu0 %v6023
    %v6178 = vpop.f32.mrf.mxu0
    %v6179 = vadd.f32 0.0, %v6178
    %v6180 = vpop.f32.mrf.mxu0
    %6181 = vmatprep.mubr.f32.mxu0 0.0
    %6182 = vmatmul.mubr.f32.gmra.mxu0 %v6026
    %v6183 = vpop.f32.mrf.mxu0
    %v6184 = vadd.f32 0.0, %v6183
    %v6185 = vpop.f32.mrf.mxu0
    %6186 = vmatprep.mubr.f32.mxu0 0.0
    %6187 = vmatmul.mubr.f32.gmra.mxu0 %v6029
    %v6188 = vpop.f32.mrf.mxu0
    %v6189 = vadd.f32 0.0, %v6188
    %v6190 = vpop.f32.mrf.mxu0
    %6191 = vmatprep.mubr.f32.mxu0 0.0
    %6192 = vmatmul.mubr.f32.gmra.mxu0 %v6032
    %v6193 = vpop.f32.mrf.mxu0
    %v6194 = vadd.f32 0.0, %v6193
    %v6195 = vpop.f32.mrf.mxu0
    %6196 = vmatprep.mubr.f32.mxu0 0.0
    %6197 = vmatmul.mubr.f32.gmra.mxu0 %v6035
    %v6198 = vpop.f32.mrf.mxu0
    %v6199 = vadd.f32 0.0, %v6198
    %v6200 = vpop.f32.mrf.mxu0
    %6201 = vmatprep.mubr.f32.mxu0 0.0
    %6202 = vmatmul.mubr.f32.gmra.mxu0 %v6038
    %v6203 = vpop.f32.mrf.mxu0
    %v6204 = vadd.f32 0.0, %v6203
    %v6205 = vpop.f32.mrf.mxu0
    %6206 = vmatprep.mubr.f32.mxu0 0.0
    %6207 = vmatmul.mubr.f32.gmra.mxu0 %v6041
    %v6208 = vpop.f32.mrf.mxu0
    %v6209 = vadd.f32 0.0, %v6208
    %v6210 = vpop.f32.mrf.mxu0
    %6211 = vmatprep.mubr.f32.mxu0 0.0
    %6212 = vmatmul.mubr.f32.gmra.mxu0 %v6044
    %v6213 = vpop.f32.mrf.mxu0
    %v6214 = vadd.f32 0.0, %v6213
    %v6215 = vpop.f32.mrf.mxu0
    %6216 = vmatprep.mubr.f32.mxu0 0.0
    %6217 = vmatmul.mubr.f32.gmra.mxu0 %v6047
    %v6218 = vpop.f32.mrf.mxu0
    %v6219 = vadd.f32 0.0, %v6218
    %v6220 = vpop.f32.mrf.mxu0
    %6221 = vmatprep.mubr.f32.mxu0 0.0
    %6222 = vmatmul.mubr.f32.gmra.mxu0 %v6050
    %v6223 = vpop.f32.mrf.mxu0
    %v6224 = vadd.f32 0.0, %v6223
    %v6225 = vpop.f32.mrf.mxu0
    %6226 = vmatprep.mubr.f32.mxu0 0.0
    %6227 = vmatmul.mubr.f32.gmra.mxu0 %v6053
    %v6228 = vpop.f32.mrf.mxu0
    %v6229 = vadd.f32 0.0, %v6228
    %v6230 = vpop.f32.mrf.mxu0
    %6231 = vmatprep.mubr.f32.mxu0 0.0
    %6232 = vmatmul.mubr.f32.gmra.mxu0 %v6056
    %v6233 = vpop.f32.mrf.mxu0
    %v6234 = vadd.f32 0.0, %v6233
    %v6235 = vpop.f32.mrf.mxu0
    %6236 = vmatprep.mubr.f32.mxu0 0.0
    %6237 = vmatmul.mubr.f32.gmra.mxu0 %v6059
    %v6238 = vpop.f32.mrf.mxu0
    %v6239 = vadd.f32 0.0, %v6238
    %v6240 = vpop.f32.mrf.mxu0
    %6241 = vmatprep.mubr.f32.mxu0 0.0
    %6242 = vmatmul.mubr.f32.gmra.mxu0 %v6062
    %v6243 = vpop.f32.mrf.mxu0
    %v6244 = vadd.f32 0.0, %v6243
    %v6245 = vpop.f32.mrf.mxu0
    %6246 = vmatprep.mubr.f32.mxu0 0.0
    %6247 = vmatmul.mubr.f32.gmra.mxu0 %v6065
    %v6248 = vpop.f32.mrf.mxu0
    %v6249 = vadd.f32 0.0, %v6248
    %v6250 = vpop.f32.mrf.mxu0
    %6251 = vmatprep.mubr.f32.mxu0 0.0
    %6252 = vmatmul.mubr.f32.gmra.mxu0 %v6068
    %v6253 = vpop.f32.mrf.mxu0
    %v6254 = vadd.f32 0.0, %v6253
    %v6255 = vpop.f32.mrf.mxu0
    %6256 = vmatprep.mubr.f32.mxu0 0.0
    %6257 = vmatmul.mubr.f32.gmra.mxu0 %v6071
    %v6258 = vpop.f32.mrf.mxu0
    %v6259 = vadd.f32 0.0, %v6258
    %v6260 = vpop.f32.mrf.mxu0
    %6261 = vmatprep.mubr.f32.mxu0 0.0
    %6262 = vmatmul.mubr.f32.gmra.mxu0 %v6074
    %v6263 = vpop.f32.mrf.mxu0
    %v6264 = vadd.f32 0.0, %v6263
    %v6265 = vpop.f32.mrf.mxu0
    %6266 = vmatprep.mubr.f32.mxu0 0.0
    %6267 = vmatmul.mubr.f32.gmra.mxu0 %v6077
    %v6268 = vpop.f32.mrf.mxu0
    %v6269 = vadd.f32 0.0, %v6268
    %v6270 = vpop.f32.mrf.mxu0
    %6271 = vmatprep.mubr.f32.mxu0 0.0
    %6272 = vmatmul.mubr.f32.gmra.mxu0 %v6080
    %v6273 = vpop.f32.mrf.mxu0
    %v6274 = vadd.f32 0.0, %v6273
    %v6275 = vpop.f32.mrf.mxu0
    %6276 = vmatprep.mubr.f32.mxu0 0.0
    %6277 = vmatmul.mubr.f32.gmra.mxu0 %v6083
    %v6278 = vpop.f32.mrf.mxu0
    %v6279 = vadd.f32 0.0, %v6278
    %v6280 = vpop.f32.mrf.mxu0
    %6281 = vmatprep.mubr.f32.mxu0 0.0
    %6282 = vmatmul.mubr.f32.gmra.mxu0 %v6086
    %v6283 = vpop.f32.mrf.mxu0
    %v6284 = vadd.f32 0.0, %v6283
    %v6285 = vpop.f32.mrf.mxu0
    %6286 = vmatprep.mubr.f32.mxu0 0.0
    %6287 = vmatmul.mubr.f32.gmra.mxu0 %v6089
    %v6288 = vpop.f32.mrf.mxu0
    %v6289 = vadd.f32 0.0, %v6288
    %v6290 = vpop.f32.mrf.mxu0
    %6291 = vmatprep.mubr.f32.mxu0 0.0
    %6292 = vmatmul.mubr.f32.gmra.mxu0 %v6092
    %v6293 = vpop.f32.mrf.mxu0
    %v6294 = vadd.f32 0.0, %v6293
    %v6295 = vpop.f32.mrf.mxu0
    %6296 = vmatprep.mubr.f32.mxu0 0.0
    %6297 = vmatmul.mubr.f32.gmra.mxu0 %v6095
    %v6298 = vpop.f32.mrf.mxu0
    %v6299 = vadd.f32 0.0, %v6298
    %v6300 = vpop.f32.mrf.mxu0
    %6301 = vmatprep.mubr.f32.mxu0 0.0
    %6302 = vmatmul.mubr.f32.gmra.mxu0 %v6098
    %v6303 = vpop.f32.mrf.mxu0
    %v6304 = vadd.f32 0.0, %v6303
    %v6305 = vpop.f32.mrf.mxu0
    %6306 = vmatprep.mubr.f32.mxu0 0.0
    %6307 = vmatmul.mubr.f32.gmra.mxu0 %v6101
    %v6308 = vpop.f32.mrf.mxu0
    %v6309 = vadd.f32 0.0, %v6308
    %v6310 = vpop.f32.mrf.mxu0
    %6311 = vmatprep.mubr.f32.mxu0 0.0
    %6312 = vmatmul.mubr.f32.gmra.mxu0 %v6104
    %v6313 = vpop.f32.mrf.mxu0
    %v6314 = vadd.f32 0.0, %v6313
    %v6315 = vpop.f32.mrf.mxu0
    %6316 = vmatprep.mubr.f32.mxu0 0.0
    %6317 = vmatmul.mubr.f32.gmra.mxu0 %v6107
    %v6318 = vpop.f32.mrf.mxu0
    %v6319 = vadd.f32 0.0, %v6318
    %v6320 = vpop.f32.mrf.mxu0
    %6321 = vdwg.mxu0
    %v6322 = vld [vmem:[%s5] sm:$0x1]
    %v6324 = vlaneseq
    %v6325 = vshrl.u32 %v6324, 7
    %v6326 = vsub.s32 0, %v6325
    %v6327 = vrot.slane %v6322, %v6326
    %v6329 = vadd.f32 %v6327, 0.0
    %v6330 = vld [vmem:[%s4] sm:$0xff]
    %v6331 = vld [vmem:[%s4 + $0x8] sm:$0xff]
    %v6332 = vld [vmem:[%s4 + $0x10] sm:$0xff]
    %v6333 = vld [vmem:[%s4 + $0x18] sm:$0xff]
    %v6334 = vld [vmem:[%s4 + $0x20] sm:$0xf]
    %v6336 = vsel %vm1014, %v6179, 0
    %v6339 = vsel %vm1014, %v6184, 0
    %v6342 = vsel %vm1014, %v6189, 0
    %v6345 = vsel %vm1014, %v6194, 0
    %v6348 = vsel %vm1176, %v6334, 0
    %6350 = vmatprep.subr.mxu0 0.0
    %6351 = vmatpush1.msra.mxu0 0.0
    %6352 = vmatprep.subr.mxu0 0.0
    %6353 = vmatpush1.msra.mxu0 0.0
    %6354 = vmatprep.subr.mxu0 0.0
    %6355 = vmatpush1.msra.mxu0 0.0
    %6356 = vmatprep.subr.mxu0 0.0
    %6357 = vmatpush1.msra.mxu0 0.0
    %6358 = vmatprep.subr.mxu0 0.0
    %6359 = vmatpush1.msra.mxu0 0.0
    %6360 = vmatprep.subr.mxu0 0.0
    %6361 = vmatpush1.msra.mxu0 0.0
    %6362 = vmatprep.subr.mxu0 0.0
    %6363 = vmatpush1.msra.mxu0 0.0
    %6364 = vmatprep.subr.mxu0 0.0
    %6365 = vmatpush1.msra.mxu0 0.0
    %6366 = vmatprep.subr.mxu0 0.0
    %6367 = vmatpush1.msra.mxu0 0.0
    %6368 = vmatprep.subr.mxu0 0.0
    %6369 = vmatpush1.msra.mxu0 0.0
    %6370 = vmatprep.subr.mxu0 0.0
    %6371 = vmatpush1.msra.mxu0 0.0
    %6372 = vmatprep.subr.mxu0 0.0
    %6373 = vmatpush1.msra.mxu0 %v6348
    %6374 = vmatprep.subr.mxu0 0.0
    %6375 = vmatpush1.msra.mxu0 %v6333
    %6376 = vmatprep.subr.mxu0 0.0
    %6377 = vmatpush1.msra.mxu0 %v6332
    %6378 = vmatprep.subr.mxu0 0.0
    %6379 = vmatpush1.msra.mxu0 %v6331
    %6380 = vmatprep.subr.mxu0 0.0
    %6381 = vmatpush1.msra.mxu0 %v6330
    %6382 = vmatprep.subr.mxu0 0.0
    %6383 = vmatpush2.msra.mxu0 0.0
    %6384 = vmatprep.subr.mxu0 0.0
    %6385 = vmatpush2.msra.mxu0 0.0
    %6386 = vmatprep.subr.mxu0 0.0
    %6387 = vmatpush2.msra.mxu0 0.0
    %6388 = vmatprep.subr.mxu0 0.0
    %6389 = vmatpush2.msra.mxu0 0.0
    %6390 = vmatprep.subr.mxu0 0.0
    %6391 = vmatpush2.msra.mxu0 0.0
    %6392 = vmatprep.subr.mxu0 0.0
    %6393 = vmatpush2.msra.mxu0 0.0
    %6394 = vmatprep.subr.mxu0 0.0
    %6395 = vmatpush2.msra.mxu0 0.0
    %6396 = vmatprep.subr.mxu0 0.0
    %6397 = vmatpush2.msra.mxu0 0.0
    %6398 = vmatprep.subr.mxu0 0.0
    %6399 = vmatpush2.msra.mxu0 0.0
    %6400 = vmatprep.subr.mxu0 0.0
    %6401 = vmatpush2.msra.mxu0 0.0
    %6402 = vmatprep.subr.mxu0 0.0
    %6403 = vmatpush2.msra.mxu0 0.0
    %6404 = vmatprep.subr.mxu0 0.0
    %6405 = vmatpush2.msra.mxu0 0.0
    %6406 = vmatprep.subr.mxu0 0.0
    %6407 = vmatpush2.msra.mxu0 0.0
    %6408 = vmatprep.subr.mxu0 0.0
    %6409 = vmatpush2.msra.mxu0 0.0
    %6410 = vmatprep.subr.mxu0 0.0
    %6411 = vmatpush2.msra.mxu0 0.0
    %6412 = vmatprep.subr.mxu0 0.0
    %6413 = vmatpush2.msra.mxu0 0.0
    %6414 = vmatprep.mubr.f32.mxu0 0.0
    %6415 = vmatmul.mubr.f32.gmra.mxu0 %v6336
    %v6416 = vpop.f32.mrf.mxu0
    %v6417 = vadd.f32 0.0, %v6416
    %v6418 = vpop.f32.mrf.mxu0
    %6419 = vmatprep.mubr.f32.mxu0 0.0
    %6420 = vmatmul.mubr.f32.gmra.mxu0 %v6339
    %v6421 = vpop.f32.mrf.mxu0
    %v6422 = vadd.f32 0.0, %v6421
    %v6423 = vpop.f32.mrf.mxu0
    %6424 = vmatprep.mubr.f32.mxu0 0.0
    %6425 = vmatmul.mubr.f32.gmra.mxu0 %v6342
    %v6426 = vpop.f32.mrf.mxu0
    %v6427 = vadd.f32 0.0, %v6426
    %v6428 = vpop.f32.mrf.mxu0
    %6429 = vmatprep.mubr.f32.mxu0 0.0
    %6430 = vmatmul.mubr.f32.gmra.mxu0 %v6345
    %v6431 = vpop.f32.mrf.mxu0
    %v6432 = vadd.f32 0.0, %v6431
    %v6433 = vpop.f32.mrf.mxu0
    %6434 = vdwg.mxu0
    %v6435 = vadd.f32 %v6329, %v6417
    %v6436 = vadd.f32 %v6329, %v6422
    %v6437 = vadd.f32 %v6329, %v6427
    %v6438 = vadd.f32 %v6329, %v6432
    %v6439 = vld [vmem:[%s3317] sm:$0xff]
    %v6440 = vld [vmem:[%s3317 + $0x8] sm:$0xff]
    %v6441 = vld [vmem:[%s3317 + $0x10] sm:$0xff]
    %v6442 = vld [vmem:[%s3317 + $0x18] sm:$0xff]
    %v6443 = vld [vmem:[%s3317 + $0x20] sm:$0xf]
    %v6447 = vrot.slane %v6194, 1
    %v6448 = vrot.slane %v6199, 1
    %v6449 = vsel %vm3326, %v6447, %v6448
    %v6450 = vrot.slane %v6204, 1
    %v6451 = vsel %vm3326, %v6448, %v6450
    %v6452 = vrot.slane %v6209, 1
    %v6453 = vsel %vm3326, %v6450, %v6452
    %v6454 = vsel %vm1014, %v6449, 0
    %v6456 = vsel %vm1014, %v6451, 0
    %v6458 = vsel %vm1014, %v6453, 0
    %v6460 = vsel %vm1014, %v6452, 0
    %v6463 = vsel %vm1176, %v6443, 0
    %6465 = vmatprep.subr.mxu0 0.0
    %6466 = vmatpush1.msra.mxu0 0.0
    %6467 = vmatprep.subr.mxu0 0.0
    %6468 = vmatpush1.msra.mxu0 0.0
    %6469 = vmatprep.subr.mxu0 0.0
    %6470 = vmatpush1.msra.mxu0 0.0
    %6471 = vmatprep.subr.mxu0 0.0
    %6472 = vmatpush1.msra.mxu0 0.0
    %6473 = vmatprep.subr.mxu0 0.0
    %6474 = vmatpush1.msra.mxu0 0.0
    %6475 = vmatprep.subr.mxu0 0.0
    %6476 = vmatpush1.msra.mxu0 0.0
    %6477 = vmatprep.subr.mxu0 0.0
    %6478 = vmatpush1.msra.mxu0 0.0
    %6479 = vmatprep.subr.mxu0 0.0
    %6480 = vmatpush1.msra.mxu0 0.0
    %6481 = vmatprep.subr.mxu0 0.0
    %6482 = vmatpush1.msra.mxu0 0.0
    %6483 = vmatprep.subr.mxu0 0.0
    %6484 = vmatpush1.msra.mxu0 0.0
    %6485 = vmatprep.subr.mxu0 0.0
    %6486 = vmatpush1.msra.mxu0 0.0
    %6487 = vmatprep.subr.mxu0 0.0
    %6488 = vmatpush1.msra.mxu0 %v6463
    %6489 = vmatprep.subr.mxu0 0.0
    %6490 = vmatpush1.msra.mxu0 %v6442
    %6491 = vmatprep.subr.mxu0 0.0
    %6492 = vmatpush1.msra.mxu0 %v6441
    %6493 = vmatprep.subr.mxu0 0.0
    %6494 = vmatpush1.msra.mxu0 %v6440
    %6495 = vmatprep.subr.mxu0 0.0
    %6496 = vmatpush1.msra.mxu0 %v6439
    %6497 = vmatprep.subr.mxu0 0.0
    %6498 = vmatpush2.msra.mxu0 0.0
    %6499 = vmatprep.subr.mxu0 0.0
    %6500 = vmatpush2.msra.mxu0 0.0
    %6501 = vmatprep.subr.mxu0 0.0
    %6502 = vmatpush2.msra.mxu0 0.0
    %6503 = vmatprep.subr.mxu0 0.0
    %6504 = vmatpush2.msra.mxu0 0.0
    %6505 = vmatprep.subr.mxu0 0.0
    %6506 = vmatpush2.msra.mxu0 0.0
    %6507 = vmatprep.subr.mxu0 0.0
    %6508 = vmatpush2.msra.mxu0 0.0
    %6509 = vmatprep.subr.mxu0 0.0
    %6510 = vmatpush2.msra.mxu0 0.0
    %6511 = vmatprep.subr.mxu0 0.0
    %6512 = vmatpush2.msra.mxu0 0.0
    %6513 = vmatprep.subr.mxu0 0.0
    %6514 = vmatpush2.msra.mxu0 0.0
    %6515 = vmatprep.subr.mxu0 0.0
    %6516 = vmatpush2.msra.mxu0 0.0
    %6517 = vmatprep.subr.mxu0 0.0
    %6518 = vmatpush2.msra.mxu0 0.0
    %6519 = vmatprep.subr.mxu0 0.0
    %6520 = vmatpush2.msra.mxu0 0.0
    %6521 = vmatprep.subr.mxu0 0.0
    %6522 = vmatpush2.msra.mxu0 0.0
    %6523 = vmatprep.subr.mxu0 0.0
    %6524 = vmatpush2.msra.mxu0 0.0
    %6525 = vmatprep.subr.mxu0 0.0
    %6526 = vmatpush2.msra.mxu0 0.0
    %6527 = vmatprep.subr.mxu0 0.0
    %6528 = vmatpush2.msra.mxu0 0.0
    %6529 = vmatprep.mubr.f32.mxu0 0.0
    %6530 = vmatmul.mubr.f32.gmra.mxu0 %v6454
    %v6531 = vpop.f32.mrf.mxu0
    %v6532 = vadd.f32 0.0, %v6531
    %v6533 = vpop.f32.mrf.mxu0
    %6534 = vmatprep.mubr.f32.mxu0 0.0
    %6535 = vmatmul.mubr.f32.gmra.mxu0 %v6456
    %v6536 = vpop.f32.mrf.mxu0
    %v6537 = vadd.f32 0.0, %v6536
    %v6538 = vpop.f32.mrf.mxu0
    %6539 = vmatprep.mubr.f32.mxu0 0.0
    %6540 = vmatmul.mubr.f32.gmra.mxu0 %v6458
    %v6541 = vpop.f32.mrf.mxu0
    %v6542 = vadd.f32 0.0, %v6541
    %v6543 = vpop.f32.mrf.mxu0
    %6544 = vmatprep.mubr.f32.mxu0 0.0
    %6545 = vmatmul.mubr.f32.gmra.mxu0 %v6460
    %v6546 = vpop.f32.mrf.mxu0
    %v6547 = vadd.f32 0.0, %v6546
    %v6548 = vpop.f32.mrf.mxu0
    %6549 = vdwg.mxu0
    %v6550 = vadd.f32 %v6435, %v6532
    %v6551 = vadd.f32 %v6436, %v6537
    %v6552 = vadd.f32 %v6437, %v6542
    %v6553 = vadd.f32 %v6438, %v6547
    %v6554 = vld [vmem:[%s3434] sm:$0xff]
    %v6555 = vld [vmem:[%s3434 + $0x8] sm:$0xff]
    %v6556 = vld [vmem:[%s3434 + $0x10] sm:$0xff]
    %v6557 = vld [vmem:[%s3434 + $0x18] sm:$0xff]
    %v6558 = vld [vmem:[%s3434 + $0x20] sm:$0xf]
    %v6562 = vrot.slane %v6209, 2
    %v6563 = vrot.slane %v6214, 2
    %v6564 = vsel %vm3443, %v6562, %v6563
    %v6565 = vrot.slane %v6219, 2
    %v6566 = vsel %vm3443, %v6563, %v6565
    %v6567 = vrot.slane %v6224, 2
    %v6568 = vsel %vm3443, %v6565, %v6567
    %v6569 = vsel %vm1014, %v6564, 0
    %v6571 = vsel %vm1014, %v6566, 0
    %v6573 = vsel %vm1014, %v6568, 0
    %v6575 = vsel %vm1014, %v6567, 0
    %v6578 = vsel %vm1176, %v6558, 0
    %6580 = vmatprep.subr.mxu0 0.0
    %6581 = vmatpush1.msra.mxu0 0.0
    %6582 = vmatprep.subr.mxu0 0.0
    %6583 = vmatpush1.msra.mxu0 0.0
    %6584 = vmatprep.subr.mxu0 0.0
    %6585 = vmatpush1.msra.mxu0 0.0
    %6586 = vmatprep.subr.mxu0 0.0
    %6587 = vmatpush1.msra.mxu0 0.0
    %6588 = vmatprep.subr.mxu0 0.0
    %6589 = vmatpush1.msra.mxu0 0.0
    %6590 = vmatprep.subr.mxu0 0.0
    %6591 = vmatpush1.msra.mxu0 0.0
    %6592 = vmatprep.subr.mxu0 0.0
    %6593 = vmatpush1.msra.mxu0 0.0
    %6594 = vmatprep.subr.mxu0 0.0
    %6595 = vmatpush1.msra.mxu0 0.0
    %6596 = vmatprep.subr.mxu0 0.0
    %6597 = vmatpush1.msra.mxu0 0.0
    %6598 = vmatprep.subr.mxu0 0.0
    %6599 = vmatpush1.msra.mxu0 0.0
    %6600 = vmatprep.subr.mxu0 0.0
    %6601 = vmatpush1.msra.mxu0 0.0
    %6602 = vmatprep.subr.mxu0 0.0
    %6603 = vmatpush1.msra.mxu0 %v6578
    %6604 = vmatprep.subr.mxu0 0.0
    %6605 = vmatpush1.msra.mxu0 %v6557
    %6606 = vmatprep.subr.mxu0 0.0
    %6607 = vmatpush1.msra.mxu0 %v6556
    %6608 = vmatprep.subr.mxu0 0.0
    %6609 = vmatpush1.msra.mxu0 %v6555
    %6610 = vmatprep.subr.mxu0 0.0
    %6611 = vmatpush1.msra.mxu0 %v6554
    %6612 = vmatprep.subr.mxu0 0.0
    %6613 = vmatpush2.msra.mxu0 0.0
    %6614 = vmatprep.subr.mxu0 0.0
    %6615 = vmatpush2.msra.mxu0 0.0
    %6616 = vmatprep.subr.mxu0 0.0
    %6617 = vmatpush2.msra.mxu0 0.0
    %6618 = vmatprep.subr.mxu0 0.0
    %6619 = vmatpush2.msra.mxu0 0.0
    %6620 = vmatprep.subr.mxu0 0.0
    %6621 = vmatpush2.msra.mxu0 0.0
    %6622 = vmatprep.subr.mxu0 0.0
    %6623 = vmatpush2.msra.mxu0 0.0
    %6624 = vmatprep.subr.mxu0 0.0
    %6625 = vmatpush2.msra.mxu0 0.0
    %6626 = vmatprep.subr.mxu0 0.0
    %6627 = vmatpush2.msra.mxu0 0.0
    %6628 = vmatprep.subr.mxu0 0.0
    %6629 = vmatpush2.msra.mxu0 0.0
    %6630 = vmatprep.subr.mxu0 0.0
    %6631 = vmatpush2.msra.mxu0 0.0
    %6632 = vmatprep.subr.mxu0 0.0
    %6633 = vmatpush2.msra.mxu0 0.0
    %6634 = vmatprep.subr.mxu0 0.0
    %6635 = vmatpush2.msra.mxu0 0.0
    %6636 = vmatprep.subr.mxu0 0.0
    %6637 = vmatpush2.msra.mxu0 0.0
    %6638 = vmatprep.subr.mxu0 0.0
    %6639 = vmatpush2.msra.mxu0 0.0
    %6640 = vmatprep.subr.mxu0 0.0
    %6641 = vmatpush2.msra.mxu0 0.0
    %6642 = vmatprep.subr.mxu0 0.0
    %6643 = vmatpush2.msra.mxu0 0.0
    %6644 = vmatprep.mubr.f32.mxu0 0.0
    %6645 = vmatmul.mubr.f32.gmra.mxu0 %v6569
    %v6646 = vpop.f32.mrf.mxu0
    %v6647 = vadd.f32 0.0, %v6646
    %v6648 = vpop.f32.mrf.mxu0
    %6649 = vmatprep.mubr.f32.mxu0 0.0
    %6650 = vmatmul.mubr.f32.gmra.mxu0 %v6571
    %v6651 = vpop.f32.mrf.mxu0
    %v6652 = vadd.f32 0.0, %v6651
    %v6653 = vpop.f32.mrf.mxu0
    %6654 = vmatprep.mubr.f32.mxu0 0.0
    %6655 = vmatmul.mubr.f32.gmra.mxu0 %v6573
    %v6656 = vpop.f32.mrf.mxu0
    %v6657 = vadd.f32 0.0, %v6656
    %v6658 = vpop.f32.mrf.mxu0
    %6659 = vmatprep.mubr.f32.mxu0 0.0
    %6660 = vmatmul.mubr.f32.gmra.mxu0 %v6575
    %v6661 = vpop.f32.mrf.mxu0
    %v6662 = vadd.f32 0.0, %v6661
    %v6663 = vpop.f32.mrf.mxu0
    %6664 = vdwg.mxu0
    %v6665 = vadd.f32 %v6550, %v6647
    %v6666 = vadd.f32 %v6551, %v6652
    %v6667 = vadd.f32 %v6552, %v6657
    %v6668 = vadd.f32 %v6553, %v6662
    %v6669 = vld [vmem:[%s3551] sm:$0xff]
    %v6670 = vld [vmem:[%s3551 + $0x8] sm:$0xff]
    %v6671 = vld [vmem:[%s3551 + $0x10] sm:$0xff]
    %v6672 = vld [vmem:[%s3551 + $0x18] sm:$0xff]
    %v6673 = vld [vmem:[%s3551 + $0x20] sm:$0xf]
    %v6677 = vrot.slane %v6224, 3
    %v6678 = vrot.slane %v6229, 3
    %v6679 = vsel %vm3560, %v6677, %v6678
    %v6680 = vrot.slane %v6234, 3
    %v6681 = vsel %vm3560, %v6678, %v6680
    %v6682 = vrot.slane %v6239, 3
    %v6683 = vsel %vm3560, %v6680, %v6682
    %v6684 = vsel %vm1014, %v6679, 0
    %v6686 = vsel %vm1014, %v6681, 0
    %v6688 = vsel %vm1014, %v6683, 0
    %v6690 = vsel %vm1014, %v6682, 0
    %v6693 = vsel %vm1176, %v6673, 0
    %6695 = vmatprep.subr.mxu0 0.0
    %6696 = vmatpush1.msra.mxu0 0.0
    %6697 = vmatprep.subr.mxu0 0.0
    %6698 = vmatpush1.msra.mxu0 0.0
    %6699 = vmatprep.subr.mxu0 0.0
    %6700 = vmatpush1.msra.mxu0 0.0
    %6701 = vmatprep.subr.mxu0 0.0
    %6702 = vmatpush1.msra.mxu0 0.0
    %6703 = vmatprep.subr.mxu0 0.0
    %6704 = vmatpush1.msra.mxu0 0.0
    %6705 = vmatprep.subr.mxu0 0.0
    %6706 = vmatpush1.msra.mxu0 0.0
    %6707 = vmatprep.subr.mxu0 0.0
    %6708 = vmatpush1.msra.mxu0 0.0
    %6709 = vmatprep.subr.mxu0 0.0
    %6710 = vmatpush1.msra.mxu0 0.0
    %6711 = vmatprep.subr.mxu0 0.0
    %6712 = vmatpush1.msra.mxu0 0.0
    %6713 = vmatprep.subr.mxu0 0.0
    %6714 = vmatpush1.msra.mxu0 0.0
    %6715 = vmatprep.subr.mxu0 0.0
    %6716 = vmatpush1.msra.mxu0 0.0
    %6717 = vmatprep.subr.mxu0 0.0
    %6718 = vmatpush1.msra.mxu0 %v6693
    %6719 = vmatprep.subr.mxu0 0.0
    %6720 = vmatpush1.msra.mxu0 %v6672
    %6721 = vmatprep.subr.mxu0 0.0
    %6722 = vmatpush1.msra.mxu0 %v6671
    %6723 = vmatprep.subr.mxu0 0.0
    %6724 = vmatpush1.msra.mxu0 %v6670
    %6725 = vmatprep.subr.mxu0 0.0
    %6726 = vmatpush1.msra.mxu0 %v6669
    %6727 = vmatprep.subr.mxu0 0.0
    %6728 = vmatpush2.msra.mxu0 0.0
    %6729 = vmatprep.subr.mxu0 0.0
    %6730 = vmatpush2.msra.mxu0 0.0
    %6731 = vmatprep.subr.mxu0 0.0
    %6732 = vmatpush2.msra.mxu0 0.0
    %6733 = vmatprep.subr.mxu0 0.0
    %6734 = vmatpush2.msra.mxu0 0.0
    %6735 = vmatprep.subr.mxu0 0.0
    %6736 = vmatpush2.msra.mxu0 0.0
    %6737 = vmatprep.subr.mxu0 0.0
    %6738 = vmatpush2.msra.mxu0 0.0
    %6739 = vmatprep.subr.mxu0 0.0
    %6740 = vmatpush2.msra.mxu0 0.0
    %6741 = vmatprep.subr.mxu0 0.0
    %6742 = vmatpush2.msra.mxu0 0.0
    %6743 = vmatprep.subr.mxu0 0.0
    %6744 = vmatpush2.msra.mxu0 0.0
    %6745 = vmatprep.subr.mxu0 0.0
    %6746 = vmatpush2.msra.mxu0 0.0
    %6747 = vmatprep.subr.mxu0 0.0
    %6748 = vmatpush2.msra.mxu0 0.0
    %6749 = vmatprep.subr.mxu0 0.0
    %6750 = vmatpush2.msra.mxu0 0.0
    %6751 = vmatprep.subr.mxu0 0.0
    %6752 = vmatpush2.msra.mxu0 0.0
    %6753 = vmatprep.subr.mxu0 0.0
    %6754 = vmatpush2.msra.mxu0 0.0
    %6755 = vmatprep.subr.mxu0 0.0
    %6756 = vmatpush2.msra.mxu0 0.0
    %6757 = vmatprep.subr.mxu0 0.0
    %6758 = vmatpush2.msra.mxu0 0.0
    %6759 = vmatprep.mubr.f32.mxu0 0.0
    %6760 = vmatmul.mubr.f32.gmra.mxu0 %v6684
    %v6761 = vpop.f32.mrf.mxu0
    %v6762 = vadd.f32 0.0, %v6761
    %v6763 = vpop.f32.mrf.mxu0
    %6764 = vmatprep.mubr.f32.mxu0 0.0
    %6765 = vmatmul.mubr.f32.gmra.mxu0 %v6686
    %v6766 = vpop.f32.mrf.mxu0
    %v6767 = vadd.f32 0.0, %v6766
    %v6768 = vpop.f32.mrf.mxu0
    %6769 = vmatprep.mubr.f32.mxu0 0.0
    %6770 = vmatmul.mubr.f32.gmra.mxu0 %v6688
    %v6771 = vpop.f32.mrf.mxu0
    %v6772 = vadd.f32 0.0, %v6771
    %v6773 = vpop.f32.mrf.mxu0
    %6774 = vmatprep.mubr.f32.mxu0 0.0
    %6775 = vmatmul.mubr.f32.gmra.mxu0 %v6690
    %v6776 = vpop.f32.mrf.mxu0
    %v6777 = vadd.f32 0.0, %v6776
    %v6778 = vpop.f32.mrf.mxu0
    %6779 = vdwg.mxu0
    %v6780 = vadd.f32 %v6665, %v6762
    %v6781 = vadd.f32 %v6666, %v6767
    %v6782 = vadd.f32 %v6667, %v6772
    %v6783 = vadd.f32 %v6668, %v6777
    %v6784 = vld [vmem:[%s3668] sm:$0xff]
    %v6785 = vld [vmem:[%s3668 + $0x8] sm:$0xff]
    %v6786 = vld [vmem:[%s3668 + $0x10] sm:$0xff]
    %v6787 = vld [vmem:[%s3668 + $0x18] sm:$0xff]
    %v6788 = vld [vmem:[%s3668 + $0x20] sm:$0xf]
    %v6792 = vrot.slane %v6239, 4
    %v6793 = vrot.slane %v6244, 4
    %v6794 = vsel %vm1176, %v6792, %v6793
    %v6795 = vrot.slane %v6249, 4
    %v6796 = vsel %vm1176, %v6793, %v6795
    %v6797 = vrot.slane %v6254, 4
    %v6798 = vsel %vm1176, %v6795, %v6797
    %v6799 = vsel %vm1014, %v6794, 0
    %v6801 = vsel %vm1014, %v6796, 0
    %v6803 = vsel %vm1014, %v6798, 0
    %v6805 = vsel %vm1014, %v6797, 0
    %v6808 = vsel %vm1176, %v6788, 0
    %6810 = vmatprep.subr.mxu0 0.0
    %6811 = vmatpush1.msra.mxu0 0.0
    %6812 = vmatprep.subr.mxu0 0.0
    %6813 = vmatpush1.msra.mxu0 0.0
    %6814 = vmatprep.subr.mxu0 0.0
    %6815 = vmatpush1.msra.mxu0 0.0
    %6816 = vmatprep.subr.mxu0 0.0
    %6817 = vmatpush1.msra.mxu0 0.0
    %6818 = vmatprep.subr.mxu0 0.0
    %6819 = vmatpush1.msra.mxu0 0.0
    %6820 = vmatprep.subr.mxu0 0.0
    %6821 = vmatpush1.msra.mxu0 0.0
    %6822 = vmatprep.subr.mxu0 0.0
    %6823 = vmatpush1.msra.mxu0 0.0
    %6824 = vmatprep.subr.mxu0 0.0
    %6825 = vmatpush1.msra.mxu0 0.0
    %6826 = vmatprep.subr.mxu0 0.0
    %6827 = vmatpush1.msra.mxu0 0.0
    %6828 = vmatprep.subr.mxu0 0.0
    %6829 = vmatpush1.msra.mxu0 0.0
    %6830 = vmatprep.subr.mxu0 0.0
    %6831 = vmatpush1.msra.mxu0 0.0
    %6832 = vmatprep.subr.mxu0 0.0
    %6833 = vmatpush1.msra.mxu0 %v6808
    %6834 = vmatprep.subr.mxu0 0.0
    %6835 = vmatpush1.msra.mxu0 %v6787
    %6836 = vmatprep.subr.mxu0 0.0
    %6837 = vmatpush1.msra.mxu0 %v6786
    %6838 = vmatprep.subr.mxu0 0.0
    %6839 = vmatpush1.msra.mxu0 %v6785
    %6840 = vmatprep.subr.mxu0 0.0
    %6841 = vmatpush1.msra.mxu0 %v6784
    %6842 = vmatprep.subr.mxu0 0.0
    %6843 = vmatpush2.msra.mxu0 0.0
    %6844 = vmatprep.subr.mxu0 0.0
    %6845 = vmatpush2.msra.mxu0 0.0
    %6846 = vmatprep.subr.mxu0 0.0
    %6847 = vmatpush2.msra.mxu0 0.0
    %6848 = vmatprep.subr.mxu0 0.0
    %6849 = vmatpush2.msra.mxu0 0.0
    %6850 = vmatprep.subr.mxu0 0.0
    %6851 = vmatpush2.msra.mxu0 0.0
    %6852 = vmatprep.subr.mxu0 0.0
    %6853 = vmatpush2.msra.mxu0 0.0
    %6854 = vmatprep.subr.mxu0 0.0
    %6855 = vmatpush2.msra.mxu0 0.0
    %6856 = vmatprep.subr.mxu0 0.0
    %6857 = vmatpush2.msra.mxu0 0.0
    %6858 = vmatprep.subr.mxu0 0.0
    %6859 = vmatpush2.msra.mxu0 0.0
    %6860 = vmatprep.subr.mxu0 0.0
    %6861 = vmatpush2.msra.mxu0 0.0
    %6862 = vmatprep.subr.mxu0 0.0
    %6863 = vmatpush2.msra.mxu0 0.0
    %6864 = vmatprep.subr.mxu0 0.0
    %6865 = vmatpush2.msra.mxu0 0.0
    %6866 = vmatprep.subr.mxu0 0.0
    %6867 = vmatpush2.msra.mxu0 0.0
    %6868 = vmatprep.subr.mxu0 0.0
    %6869 = vmatpush2.msra.mxu0 0.0
    %6870 = vmatprep.subr.mxu0 0.0
    %6871 = vmatpush2.msra.mxu0 0.0
    %6872 = vmatprep.subr.mxu0 0.0
    %6873 = vmatpush2.msra.mxu0 0.0
    %6874 = vmatprep.mubr.f32.mxu0 0.0
    %6875 = vmatmul.mubr.f32.gmra.mxu0 %v6799
    %v6876 = vpop.f32.mrf.mxu0
    %v6877 = vadd.f32 0.0, %v6876
    %v6878 = vpop.f32.mrf.mxu0
    %6879 = vmatprep.mubr.f32.mxu0 0.0
    %6880 = vmatmul.mubr.f32.gmra.mxu0 %v6801
    %v6881 = vpop.f32.mrf.mxu0
    %v6882 = vadd.f32 0.0, %v6881
    %v6883 = vpop.f32.mrf.mxu0
    %6884 = vmatprep.mubr.f32.mxu0 0.0
    %6885 = vmatmul.mubr.f32.gmra.mxu0 %v6803
    %v6886 = vpop.f32.mrf.mxu0
    %v6887 = vadd.f32 0.0, %v6886
    %v6888 = vpop.f32.mrf.mxu0
    %6889 = vmatprep.mubr.f32.mxu0 0.0
    %6890 = vmatmul.mubr.f32.gmra.mxu0 %v6805
    %v6891 = vpop.f32.mrf.mxu0
    %v6892 = vadd.f32 0.0, %v6891
    %v6893 = vpop.f32.mrf.mxu0
    %6894 = vdwg.mxu0
    %v6895 = vadd.f32 %v6780, %v6877
    %v6896 = vadd.f32 %v6781, %v6882
    %v6897 = vadd.f32 %v6782, %v6887
    %v6898 = vadd.f32 %v6783, %v6892
    %v6899 = vld [vmem:[%s3784] sm:$0xff]
    %v6900 = vld [vmem:[%s3784 + $0x8] sm:$0xff]
    %v6901 = vld [vmem:[%s3784 + $0x10] sm:$0xff]
    %v6902 = vld [vmem:[%s3784 + $0x18] sm:$0xff]
    %v6903 = vld [vmem:[%s3784 + $0x20] sm:$0xf]
    %v6907 = vrot.slane %v6254, 5
    %v6908 = vrot.slane %v6259, 5
    %v6909 = vsel %vm3793, %v6907, %v6908
    %v6910 = vrot.slane %v6264, 5
    %v6911 = vsel %vm3793, %v6908, %v6910
    %v6912 = vrot.slane %v6269, 5
    %v6913 = vsel %vm3793, %v6910, %v6912
    %v6914 = vsel %vm1014, %v6909, 0
    %v6916 = vsel %vm1014, %v6911, 0
    %v6918 = vsel %vm1014, %v6913, 0
    %v6920 = vsel %vm1014, %v6912, 0
    %v6923 = vsel %vm1176, %v6903, 0
    %6925 = vmatprep.subr.mxu0 0.0
    %6926 = vmatpush1.msra.mxu0 0.0
    %6927 = vmatprep.subr.mxu0 0.0
    %6928 = vmatpush1.msra.mxu0 0.0
    %6929 = vmatprep.subr.mxu0 0.0
    %6930 = vmatpush1.msra.mxu0 0.0
    %6931 = vmatprep.subr.mxu0 0.0
    %6932 = vmatpush1.msra.mxu0 0.0
    %6933 = vmatprep.subr.mxu0 0.0
    %6934 = vmatpush1.msra.mxu0 0.0
    %6935 = vmatprep.subr.mxu0 0.0
    %6936 = vmatpush1.msra.mxu0 0.0
    %6937 = vmatprep.subr.mxu0 0.0
    %6938 = vmatpush1.msra.mxu0 0.0
    %6939 = vmatprep.subr.mxu0 0.0
    %6940 = vmatpush1.msra.mxu0 0.0
    %6941 = vmatprep.subr.mxu0 0.0
    %6942 = vmatpush1.msra.mxu0 0.0
    %6943 = vmatprep.subr.mxu0 0.0
    %6944 = vmatpush1.msra.mxu0 0.0
    %6945 = vmatprep.subr.mxu0 0.0
    %6946 = vmatpush1.msra.mxu0 0.0
    %6947 = vmatprep.subr.mxu0 0.0
    %6948 = vmatpush1.msra.mxu0 %v6923
    %6949 = vmatprep.subr.mxu0 0.0
    %6950 = vmatpush1.msra.mxu0 %v6902
    %6951 = vmatprep.subr.mxu0 0.0
    %6952 = vmatpush1.msra.mxu0 %v6901
    %6953 = vmatprep.subr.mxu0 0.0
    %6954 = vmatpush1.msra.mxu0 %v6900
    %6955 = vmatprep.subr.mxu0 0.0
    %6956 = vmatpush1.msra.mxu0 %v6899
    %6957 = vmatprep.subr.mxu0 0.0
    %6958 = vmatpush2.msra.mxu0 0.0
    %6959 = vmatprep.subr.mxu0 0.0
    %6960 = vmatpush2.msra.mxu0 0.0
    %6961 = vmatprep.subr.mxu0 0.0
    %6962 = vmatpush2.msra.mxu0 0.0
    %6963 = vmatprep.subr.mxu0 0.0
    %6964 = vmatpush2.msra.mxu0 0.0
    %6965 = vmatprep.subr.mxu0 0.0
    %6966 = vmatpush2.msra.mxu0 0.0
    %6967 = vmatprep.subr.mxu0 0.0
    %6968 = vmatpush2.msra.mxu0 0.0
    %6969 = vmatprep.subr.mxu0 0.0
    %6970 = vmatpush2.msra.mxu0 0.0
    %6971 = vmatprep.subr.mxu0 0.0
    %6972 = vmatpush2.msra.mxu0 0.0
    %6973 = vmatprep.subr.mxu0 0.0
    %6974 = vmatpush2.msra.mxu0 0.0
    %6975 = vmatprep.subr.mxu0 0.0
    %6976 = vmatpush2.msra.mxu0 0.0
    %6977 = vmatprep.subr.mxu0 0.0
    %6978 = vmatpush2.msra.mxu0 0.0
    %6979 = vmatprep.subr.mxu0 0.0
    %6980 = vmatpush2.msra.mxu0 0.0
    %6981 = vmatprep.subr.mxu0 0.0
    %6982 = vmatpush2.msra.mxu0 0.0
    %6983 = vmatprep.subr.mxu0 0.0
    %6984 = vmatpush2.msra.mxu0 0.0
    %6985 = vmatprep.subr.mxu0 0.0
    %6986 = vmatpush2.msra.mxu0 0.0
    %6987 = vmatprep.subr.mxu0 0.0
    %6988 = vmatpush2.msra.mxu0 0.0
    %6989 = vmatprep.mubr.f32.mxu0 0.0
    %6990 = vmatmul.mubr.f32.gmra.mxu0 %v6914
    %v6991 = vpop.f32.mrf.mxu0
    %v6992 = vadd.f32 0.0, %v6991
    %v6993 = vpop.f32.mrf.mxu0
    %6994 = vmatprep.mubr.f32.mxu0 0.0
    %6995 = vmatmul.mubr.f32.gmra.mxu0 %v6916
    %v6996 = vpop.f32.mrf.mxu0
    %v6997 = vadd.f32 0.0, %v6996
    %v6998 = vpop.f32.mrf.mxu0
    %6999 = vmatprep.mubr.f32.mxu0 0.0
    %7000 = vmatmul.mubr.f32.gmra.mxu0 %v6918
    %v7001 = vpop.f32.mrf.mxu0
    %v7002 = vadd.f32 0.0, %v7001
    %v7003 = vpop.f32.mrf.mxu0
    %7004 = vmatprep.mubr.f32.mxu0 0.0
    %7005 = vmatmul.mubr.f32.gmra.mxu0 %v6920
    %v7006 = vpop.f32.mrf.mxu0
    %v7007 = vadd.f32 0.0, %v7006
    %v7008 = vpop.f32.mrf.mxu0
    %7009 = vdwg.mxu0
    %v7010 = vadd.f32 %v6895, %v6992
    %v7011 = vadd.f32 %v6896, %v6997
    %v7012 = vadd.f32 %v6897, %v7002
    %v7013 = vadd.f32 %v6898, %v7007
    %v7014 = vld [vmem:[%s3901] sm:$0xff]
    %v7015 = vld [vmem:[%s3901 + $0x8] sm:$0xff]
    %v7016 = vld [vmem:[%s3901 + $0x10] sm:$0xff]
    %v7017 = vld [vmem:[%s3901 + $0x18] sm:$0xff]
    %v7018 = vld [vmem:[%s3901 + $0x20] sm:$0xf]
    %v7022 = vrot.slane %v6269, 6
    %v7023 = vrot.slane %v6274, 6
    %v7024 = vsel %vm445, %v7022, %v7023
    %v7025 = vrot.slane %v6279, 6
    %v7026 = vsel %vm445, %v7023, %v7025
    %v7027 = vrot.slane %v6284, 6
    %v7028 = vsel %vm445, %v7025, %v7027
    %v7029 = vsel %vm1014, %v7024, 0
    %v7031 = vsel %vm1014, %v7026, 0
    %v7033 = vsel %vm1014, %v7028, 0
    %v7035 = vsel %vm1014, %v7027, 0
    %v7038 = vsel %vm1176, %v7018, 0
    %7040 = vmatprep.subr.mxu0 0.0
    %7041 = vmatpush1.msra.mxu0 0.0
    %7042 = vmatprep.subr.mxu0 0.0
    %7043 = vmatpush1.msra.mxu0 0.0
    %7044 = vmatprep.subr.mxu0 0.0
    %7045 = vmatpush1.msra.mxu0 0.0
    %7046 = vmatprep.subr.mxu0 0.0
    %7047 = vmatpush1.msra.mxu0 0.0
    %7048 = vmatprep.subr.mxu0 0.0
    %7049 = vmatpush1.msra.mxu0 0.0
    %7050 = vmatprep.subr.mxu0 0.0
    %7051 = vmatpush1.msra.mxu0 0.0
    %7052 = vmatprep.subr.mxu0 0.0
    %7053 = vmatpush1.msra.mxu0 0.0
    %7054 = vmatprep.subr.mxu0 0.0
    %7055 = vmatpush1.msra.mxu0 0.0
    %7056 = vmatprep.subr.mxu0 0.0
    %7057 = vmatpush1.msra.mxu0 0.0
    %7058 = vmatprep.subr.mxu0 0.0
    %7059 = vmatpush1.msra.mxu0 0.0
    %7060 = vmatprep.subr.mxu0 0.0
    %7061 = vmatpush1.msra.mxu0 0.0
    %7062 = vmatprep.subr.mxu0 0.0
    %7063 = vmatpush1.msra.mxu0 %v7038
    %7064 = vmatprep.subr.mxu0 0.0
    %7065 = vmatpush1.msra.mxu0 %v7017
    %7066 = vmatprep.subr.mxu0 0.0
    %7067 = vmatpush1.msra.mxu0 %v7016
    %7068 = vmatprep.subr.mxu0 0.0
    %7069 = vmatpush1.msra.mxu0 %v7015
    %7070 = vmatprep.subr.mxu0 0.0
    %7071 = vmatpush1.msra.mxu0 %v7014
    %7072 = vmatprep.subr.mxu0 0.0
    %7073 = vmatpush2.msra.mxu0 0.0
    %7074 = vmatprep.subr.mxu0 0.0
    %7075 = vmatpush2.msra.mxu0 0.0
    %7076 = vmatprep.subr.mxu0 0.0
    %7077 = vmatpush2.msra.mxu0 0.0
    %7078 = vmatprep.subr.mxu0 0.0
    %7079 = vmatpush2.msra.mxu0 0.0
    %7080 = vmatprep.subr.mxu0 0.0
    %7081 = vmatpush2.msra.mxu0 0.0
    %7082 = vmatprep.subr.mxu0 0.0
    %7083 = vmatpush2.msra.mxu0 0.0
    %7084 = vmatprep.subr.mxu0 0.0
    %7085 = vmatpush2.msra.mxu0 0.0
    %7086 = vmatprep.subr.mxu0 0.0
    %7087 = vmatpush2.msra.mxu0 0.0
    %7088 = vmatprep.subr.mxu0 0.0
    %7089 = vmatpush2.msra.mxu0 0.0
    %7090 = vmatprep.subr.mxu0 0.0
    %7091 = vmatpush2.msra.mxu0 0.0
    %7092 = vmatprep.subr.mxu0 0.0
    %7093 = vmatpush2.msra.mxu0 0.0
    %7094 = vmatprep.subr.mxu0 0.0
    %7095 = vmatpush2.msra.mxu0 0.0
    %7096 = vmatprep.subr.mxu0 0.0
    %7097 = vmatpush2.msra.mxu0 0.0
    %7098 = vmatprep.subr.mxu0 0.0
    %7099 = vmatpush2.msra.mxu0 0.0
    %7100 = vmatprep.subr.mxu0 0.0
    %7101 = vmatpush2.msra.mxu0 0.0
    %7102 = vmatprep.subr.mxu0 0.0
    %7103 = vmatpush2.msra.mxu0 0.0
    %7104 = vmatprep.mubr.f32.mxu0 0.0
    %7105 = vmatmul.mubr.f32.gmra.mxu0 %v7029
    %v7106 = vpop.f32.mrf.mxu0
    %v7107 = vadd.f32 0.0, %v7106
    %v7108 = vpop.f32.mrf.mxu0
    %7109 = vmatprep.mubr.f32.mxu0 0.0
    %7110 = vmatmul.mubr.f32.gmra.mxu0 %v7031
    %v7111 = vpop.f32.mrf.mxu0
    %v7112 = vadd.f32 0.0, %v7111
    %v7113 = vpop.f32.mrf.mxu0
    %7114 = vmatprep.mubr.f32.mxu0 0.0
    %7115 = vmatmul.mubr.f32.gmra.mxu0 %v7033
    %v7116 = vpop.f32.mrf.mxu0
    %v7117 = vadd.f32 0.0, %v7116
    %v7118 = vpop.f32.mrf.mxu0
    %7119 = vmatprep.mubr.f32.mxu0 0.0
    %7120 = vmatmul.mubr.f32.gmra.mxu0 %v7035
    %v7121 = vpop.f32.mrf.mxu0
    %v7122 = vadd.f32 0.0, %v7121
    %v7123 = vpop.f32.mrf.mxu0
    %7124 = vdwg.mxu0
    %v7125 = vadd.f32 %v7010, %v7107
    %v7126 = vadd.f32 %v7011, %v7112
    %v7127 = vadd.f32 %v7012, %v7117
    %v7128 = vadd.f32 %v7013, %v7122
    %v7129 = vld [vmem:[%s4017] sm:$0xff]
    %v7130 = vld [vmem:[%s4017 + $0x8] sm:$0xff]
    %v7131 = vld [vmem:[%s4017 + $0x10] sm:$0xff]
    %v7132 = vld [vmem:[%s4017 + $0x18] sm:$0xff]
    %v7133 = vld [vmem:[%s4017 + $0x20] sm:$0xf]
    %v7137 = vrot.slane %v6284, 7
    %v7138 = vrot.slane %v6289, 7
    %v7139 = vsel %vm2986, %v7137, %v7138
    %v7140 = vrot.slane %v6294, 7
    %v7141 = vsel %vm2986, %v7138, %v7140
    %v7142 = vrot.slane %v6299, 7
    %v7143 = vsel %vm2986, %v7140, %v7142
    %v7144 = vsel %vm1014, %v7139, 0
    %v7146 = vsel %vm1014, %v7141, 0
    %v7148 = vsel %vm1014, %v7143, 0
    %v7150 = vsel %vm1014, %v7142, 0
    %v7153 = vsel %vm1176, %v7133, 0
    %7155 = vmatprep.subr.mxu0 0.0
    %7156 = vmatpush1.msra.mxu0 0.0
    %7157 = vmatprep.subr.mxu0 0.0
    %7158 = vmatpush1.msra.mxu0 0.0
    %7159 = vmatprep.subr.mxu0 0.0
    %7160 = vmatpush1.msra.mxu0 0.0
    %7161 = vmatprep.subr.mxu0 0.0
    %7162 = vmatpush1.msra.mxu0 0.0
    %7163 = vmatprep.subr.mxu0 0.0
    %7164 = vmatpush1.msra.mxu0 0.0
    %7165 = vmatprep.subr.mxu0 0.0
    %7166 = vmatpush1.msra.mxu0 0.0
    %7167 = vmatprep.subr.mxu0 0.0
    %7168 = vmatpush1.msra.mxu0 0.0
    %7169 = vmatprep.subr.mxu0 0.0
    %7170 = vmatpush1.msra.mxu0 0.0
    %7171 = vmatprep.subr.mxu0 0.0
    %7172 = vmatpush1.msra.mxu0 0.0
    %7173 = vmatprep.subr.mxu0 0.0
    %7174 = vmatpush1.msra.mxu0 0.0
    %7175 = vmatprep.subr.mxu0 0.0
    %7176 = vmatpush1.msra.mxu0 0.0
    %7177 = vmatprep.subr.mxu0 0.0
    %7178 = vmatpush1.msra.mxu0 %v7153
    %7179 = vmatprep.subr.mxu0 0.0
    %7180 = vmatpush1.msra.mxu0 %v7132
    %7181 = vmatprep.subr.mxu0 0.0
    %7182 = vmatpush1.msra.mxu0 %v7131
    %7183 = vmatprep.subr.mxu0 0.0
    %7184 = vmatpush1.msra.mxu0 %v7130
    %7185 = vmatprep.subr.mxu0 0.0
    %7186 = vmatpush1.msra.mxu0 %v7129
    %7187 = vmatprep.subr.mxu0 0.0
    %7188 = vmatpush2.msra.mxu0 0.0
    %7189 = vmatprep.subr.mxu0 0.0
    %7190 = vmatpush2.msra.mxu0 0.0
    %7191 = vmatprep.subr.mxu0 0.0
    %7192 = vmatpush2.msra.mxu0 0.0
    %7193 = vmatprep.subr.mxu0 0.0
    %7194 = vmatpush2.msra.mxu0 0.0
    %7195 = vmatprep.subr.mxu0 0.0
    %7196 = vmatpush2.msra.mxu0 0.0
    %7197 = vmatprep.subr.mxu0 0.0
    %7198 = vmatpush2.msra.mxu0 0.0
    %7199 = vmatprep.subr.mxu0 0.0
    %7200 = vmatpush2.msra.mxu0 0.0
    %7201 = vmatprep.subr.mxu0 0.0
    %7202 = vmatpush2.msra.mxu0 0.0
    %7203 = vmatprep.subr.mxu0 0.0
    %7204 = vmatpush2.msra.mxu0 0.0
    %7205 = vmatprep.subr.mxu0 0.0
    %7206 = vmatpush2.msra.mxu0 0.0
    %7207 = vmatprep.subr.mxu0 0.0
    %7208 = vmatpush2.msra.mxu0 0.0
    %7209 = vmatprep.subr.mxu0 0.0
    %7210 = vmatpush2.msra.mxu0 0.0
    %7211 = vmatprep.subr.mxu0 0.0
    %7212 = vmatpush2.msra.mxu0 0.0
    %7213 = vmatprep.subr.mxu0 0.0
    %7214 = vmatpush2.msra.mxu0 0.0
    %7215 = vmatprep.subr.mxu0 0.0
    %7216 = vmatpush2.msra.mxu0 0.0
    %7217 = vmatprep.subr.mxu0 0.0
    %7218 = vmatpush2.msra.mxu0 0.0
    %7219 = vmatprep.mubr.f32.mxu0 0.0
    %7220 = vmatmul.mubr.f32.gmra.mxu0 %v7144
    %v7221 = vpop.f32.mrf.mxu0
    %v7222 = vadd.f32 0.0, %v7221
    %v7223 = vpop.f32.mrf.mxu0
    %7224 = vmatprep.mubr.f32.mxu0 0.0
    %7225 = vmatmul.mubr.f32.gmra.mxu0 %v7146
    %v7226 = vpop.f32.mrf.mxu0
    %v7227 = vadd.f32 0.0, %v7226
    %v7228 = vpop.f32.mrf.mxu0
    %7229 = vmatprep.mubr.f32.mxu0 0.0
    %7230 = vmatmul.mubr.f32.gmra.mxu0 %v7148
    %v7231 = vpop.f32.mrf.mxu0
    %v7232 = vadd.f32 0.0, %v7231
    %v7233 = vpop.f32.mrf.mxu0
    %7234 = vmatprep.mubr.f32.mxu0 0.0
    %7235 = vmatmul.mubr.f32.gmra.mxu0 %v7150
    %v7236 = vpop.f32.mrf.mxu0
    %v7237 = vadd.f32 0.0, %v7236
    %v7238 = vpop.f32.mrf.mxu0
    %7239 = vdwg.mxu0
    %v7240 = vadd.f32 %v7125, %v7222
    %v7241 = vadd.f32 %v7126, %v7227
    %v7242 = vadd.f32 %v7127, %v7232
    %v7243 = vadd.f32 %v7128, %v7237
    %v7244 = vld [vmem:[%s4133] sm:$0xff]
    %v7245 = vld [vmem:[%s4133 + $0x8] sm:$0xff]
    %v7246 = vld [vmem:[%s4133 + $0x10] sm:$0xff]
    %v7247 = vld [vmem:[%s4133 + $0x18] sm:$0xff]
    %v7248 = vld [vmem:[%s4133 + $0x20] sm:$0xf]
    %v7250 = vsel %vm1014, %v6304, 0
    %v7253 = vsel %vm1014, %v6309, 0
    %v7256 = vsel %vm1014, %v6314, 0
    %v7259 = vsel %vm1014, %v6319, 0
    %v7262 = vsel %vm1176, %v7248, 0
    %7264 = vmatprep.subr.mxu0 0.0
    %7265 = vmatpush1.msra.mxu0 0.0
    %7266 = vmatprep.subr.mxu0 0.0
    %7267 = vmatpush1.msra.mxu0 0.0
    %7268 = vmatprep.subr.mxu0 0.0
    %7269 = vmatpush1.msra.mxu0 0.0
    %7270 = vmatprep.subr.mxu0 0.0
    %7271 = vmatpush1.msra.mxu0 0.0
    %7272 = vmatprep.subr.mxu0 0.0
    %7273 = vmatpush1.msra.mxu0 0.0
    %7274 = vmatprep.subr.mxu0 0.0
    %7275 = vmatpush1.msra.mxu0 0.0
    %7276 = vmatprep.subr.mxu0 0.0
    %7277 = vmatpush1.msra.mxu0 0.0
    %7278 = vmatprep.subr.mxu0 0.0
    %7279 = vmatpush1.msra.mxu0 0.0
    %7280 = vmatprep.subr.mxu0 0.0
    %7281 = vmatpush1.msra.mxu0 0.0
    %7282 = vmatprep.subr.mxu0 0.0
    %7283 = vmatpush1.msra.mxu0 0.0
    %7284 = vmatprep.subr.mxu0 0.0
    %7285 = vmatpush1.msra.mxu0 0.0
    %7286 = vmatprep.subr.mxu0 0.0
    %7287 = vmatpush1.msra.mxu0 %v7262
    %7288 = vmatprep.subr.mxu0 0.0
    %7289 = vmatpush1.msra.mxu0 %v7247
    %7290 = vmatprep.subr.mxu0 0.0
    %7291 = vmatpush1.msra.mxu0 %v7246
    %7292 = vmatprep.subr.mxu0 0.0
    %7293 = vmatpush1.msra.mxu0 %v7245
    %7294 = vmatprep.subr.mxu0 0.0
    %7295 = vmatpush1.msra.mxu0 %v7244
    %7296 = vmatprep.subr.mxu0 0.0
    %7297 = vmatpush2.msra.mxu0 0.0
    %7298 = vmatprep.subr.mxu0 0.0
    %7299 = vmatpush2.msra.mxu0 0.0
    %7300 = vmatprep.subr.mxu0 0.0
    %7301 = vmatpush2.msra.mxu0 0.0
    %7302 = vmatprep.subr.mxu0 0.0
    %7303 = vmatpush2.msra.mxu0 0.0
    %7304 = vmatprep.subr.mxu0 0.0
    %7305 = vmatpush2.msra.mxu0 0.0
    %7306 = vmatprep.subr.mxu0 0.0
    %7307 = vmatpush2.msra.mxu0 0.0
    %7308 = vmatprep.subr.mxu0 0.0
    %7309 = vmatpush2.msra.mxu0 0.0
    %7310 = vmatprep.subr.mxu0 0.0
    %7311 = vmatpush2.msra.mxu0 0.0
    %7312 = vmatprep.subr.mxu0 0.0
    %7313 = vmatpush2.msra.mxu0 0.0
    %7314 = vmatprep.subr.mxu0 0.0
    %7315 = vmatpush2.msra.mxu0 0.0
    %7316 = vmatprep.subr.mxu0 0.0
    %7317 = vmatpush2.msra.mxu0 0.0
    %7318 = vmatprep.subr.mxu0 0.0
    %7319 = vmatpush2.msra.mxu0 0.0
    %7320 = vmatprep.subr.mxu0 0.0
    %7321 = vmatpush2.msra.mxu0 0.0
    %7322 = vmatprep.subr.mxu0 0.0
    %7323 = vmatpush2.msra.mxu0 0.0
    %7324 = vmatprep.subr.mxu0 0.0
    %7325 = vmatpush2.msra.mxu0 0.0
    %7326 = vmatprep.subr.mxu0 0.0
    %7327 = vmatpush2.msra.mxu0 0.0
    %7328 = vmatprep.mubr.f32.mxu0 0.0
    %7329 = vmatmul.mubr.f32.gmra.mxu0 %v7250
    %v7330 = vpop.f32.mrf.mxu0
    %v7331 = vadd.f32 0.0, %v7330
    %v7332 = vpop.f32.mrf.mxu0
    %7333 = vmatprep.mubr.f32.mxu0 0.0
    %7334 = vmatmul.mubr.f32.gmra.mxu0 %v7253
    %v7335 = vpop.f32.mrf.mxu0
    %v7336 = vadd.f32 0.0, %v7335
    %v7337 = vpop.f32.mrf.mxu0
    %7338 = vmatprep.mubr.f32.mxu0 0.0
    %7339 = vmatmul.mubr.f32.gmra.mxu0 %v7256
    %v7340 = vpop.f32.mrf.mxu0
    %v7341 = vadd.f32 0.0, %v7340
    %v7342 = vpop.f32.mrf.mxu0
    %7343 = vmatprep.mubr.f32.mxu0 0.0
    %7344 = vmatmul.mubr.f32.gmra.mxu0 %v7259
    %v7345 = vpop.f32.mrf.mxu0
    %v7346 = vadd.f32 0.0, %v7345
    %v7347 = vpop.f32.mrf.mxu0
    %7348 = vdwg.mxu0
    %v7349 = vadd.f32 %v7240, %v7331
    %v7350 = vadd.f32 %v7241, %v7336
    %v7351 = vadd.f32 %v7242, %v7341
    %v7352 = vadd.f32 %v7243, %v7346
    %7353 = vst.msk [vmem:[#allocation3 + $0x19] sm:$0xff] %vm1014, %v7349
    %7354 = vst.msk [vmem:[#allocation3 + $0x21] sm:$0xff] %vm1014, %v7350
    %7355 = vst.msk [vmem:[#allocation3 + $0x29] sm:$0xff] %vm1014, %v7351
    %7356 = vst.msk [vmem:[#allocation3 + $0x31] sm:$0x1] %vm4246, %v7352
    %v7357 = vld [vmem:[#allocation3] sm:$0xff]
    %v7358 = vld [vmem:[#allocation3 + $0x8] sm:$0xff]
    %v7359 = vld [vmem:[#allocation3 + $0x10] sm:$0xff]
    %v7360 = vld [vmem:[#allocation3 + $0x18] sm:$0xff]
    %v7361 = vld [vmem:[#allocation3 + $0x20] sm:$0xff]
    %v7362 = vld [vmem:[#allocation3 + $0x28] sm:$0xff]
    %v7363 = vld [vmem:[#allocation3 + $0x30] sm:$0x3]
    %v7364 = vld [vmem:[%s7] sm:$0xff]
    %v7365 = vld [vmem:[%s7 + $0x8] sm:$0xff]
    %v7366 = vld [vmem:[%s7 + $0x10] sm:$0xff]
    %v7367 = vld [vmem:[%s7 + $0x18] sm:$0xff]
    %v7368 = vld [vmem:[%s7 + $0x20] sm:$0xff]
    %v7369 = vld [vmem:[%s7 + $0x28] sm:$0xff]
    %v7370 = vld [vmem:[%s7 + $0x30] sm:$0xff]
    %v7371 = vld [vmem:[%s7 + $0x38] sm:$0xff]
    %v7372 = vld [vmem:[%s7 + $0x40] sm:$0xf]
    %v7373 = vld [vmem:[%s7 + $0x48] sm:$0xf]
    %v7375 = vsel %vm1014, %v7357, 0
    %v7378 = vsel %vm1014, %v7358, 0
    %v7381 = vsel %vm1014, %v7359, 0
    %v7384 = vsel %vm1014, %v7360, 0
    %v7387 = vsel %vm1014, %v7361, 0
    %v7390 = vsel %vm1014, %v7362, 0
    %v7393 = vsel %vm1014, %v7363, 0
    %v7396 = vsel %vm1176, %v7372, 0
    %v7399 = vsel %vm1176, %v7373, 0
    %7401 = vmatprep.subr.mxu0 0.0
    %7402 = vmatpush1.msra.mxu0 0.0
    %7403 = vmatprep.subr.mxu0 0.0
    %7404 = vmatpush1.msra.mxu0 0.0
    %7405 = vmatprep.subr.mxu0 0.0
    %7406 = vmatpush1.msra.mxu0 0.0
    %7407 = vmatprep.subr.mxu0 0.0
    %7408 = vmatpush1.msra.mxu0 0.0
    %7409 = vmatprep.subr.mxu0 0.0
    %7410 = vmatpush1.msra.mxu0 0.0
    %7411 = vmatprep.subr.mxu0 0.0
    %7412 = vmatpush1.msra.mxu0 0.0
    %7413 = vmatprep.subr.mxu0 0.0
    %7414 = vmatpush1.msra.mxu0 0.0
    %7415 = vmatprep.subr.mxu0 0.0
    %7416 = vmatpush1.msra.mxu0 0.0
    %7417 = vmatprep.subr.mxu0 0.0
    %7418 = vmatpush1.msra.mxu0 0.0
    %7419 = vmatprep.subr.mxu0 0.0
    %7420 = vmatpush1.msra.mxu0 0.0
    %7421 = vmatprep.subr.mxu0 0.0
    %7422 = vmatpush1.msra.mxu0 0.0
    %7423 = vmatprep.subr.mxu0 %v7399
    %7424 = vmatpush1.msra.mxu0 %v7396
    %7425 = vmatprep.subr.mxu0 %v7371
    %7426 = vmatpush1.msra.mxu0 %v7370
    %7427 = vmatprep.subr.mxu0 %v7369
    %7428 = vmatpush1.msra.mxu0 %v7368
    %7429 = vmatprep.subr.mxu0 %v7367
    %7430 = vmatpush1.msra.mxu0 %v7366
    %7431 = vmatprep.subr.mxu0 %v7365
    %7432 = vmatpush1.msra.mxu0 %v7364
    %7433 = vmatprep.subr.mxu0 0.0
    %7434 = vmatpush2.msra.mxu0 0.0
    %7435 = vmatprep.subr.mxu0 0.0
    %7436 = vmatpush2.msra.mxu0 0.0
    %7437 = vmatprep.subr.mxu0 0.0
    %7438 = vmatpush2.msra.mxu0 0.0
    %7439 = vmatprep.subr.mxu0 0.0
    %7440 = vmatpush2.msra.mxu0 0.0
    %7441 = vmatprep.subr.mxu0 0.0
    %7442 = vmatpush2.msra.mxu0 0.0
    %7443 = vmatprep.subr.mxu0 0.0
    %7444 = vmatpush2.msra.mxu0 0.0
    %7445 = vmatprep.subr.mxu0 0.0
    %7446 = vmatpush2.msra.mxu0 0.0
    %7447 = vmatprep.subr.mxu0 0.0
    %7448 = vmatpush2.msra.mxu0 0.0
    %7449 = vmatprep.subr.mxu0 0.0
    %7450 = vmatpush2.msra.mxu0 0.0
    %7451 = vmatprep.subr.mxu0 0.0
    %7452 = vmatpush2.msra.mxu0 0.0
    %7453 = vmatprep.subr.mxu0 0.0
    %7454 = vmatpush2.msra.mxu0 0.0
    %7455 = vmatprep.subr.mxu0 0.0
    %7456 = vmatpush2.msra.mxu0 0.0
    %7457 = vmatprep.subr.mxu0 0.0
    %7458 = vmatpush2.msra.mxu0 0.0
    %7459 = vmatprep.subr.mxu0 0.0
    %7460 = vmatpush2.msra.mxu0 0.0
    %7461 = vmatprep.subr.mxu0 0.0
    %7462 = vmatpush2.msra.mxu0 0.0
    %7463 = vmatprep.subr.mxu0 0.0
    %7464 = vmatpush2.msra.mxu0 0.0
    %7465 = vmatprep.mubr.f32.mxu0 0.0
    %7466 = vmatmul.mubr.f32.gmra.mxu0 %v7375
    %v7467 = vpop.f32.mrf.mxu0
    %v7468 = vadd.f32 0.0, %v7467
    %v7469 = vpop.f32.mrf.mxu0
    %v7470 = vadd.f32 0.0, %v7469
    %7471 = vmatprep.mubr.f32.mxu0 0.0
    %7472 = vmatmul.mubr.f32.gmra.mxu0 %v7378
    %v7473 = vpop.f32.mrf.mxu0
    %v7474 = vadd.f32 0.0, %v7473
    %v7475 = vpop.f32.mrf.mxu0
    %v7476 = vadd.f32 0.0, %v7475
    %7477 = vmatprep.mubr.f32.mxu0 0.0
    %7478 = vmatmul.mubr.f32.gmra.mxu0 %v7381
    %v7479 = vpop.f32.mrf.mxu0
    %v7480 = vadd.f32 0.0, %v7479
    %v7481 = vpop.f32.mrf.mxu0
    %v7482 = vadd.f32 0.0, %v7481
    %7483 = vmatprep.mubr.f32.mxu0 0.0
    %7484 = vmatmul.mubr.f32.gmra.mxu0 %v7384
    %v7485 = vpop.f32.mrf.mxu0
    %v7486 = vadd.f32 0.0, %v7485
    %v7487 = vpop.f32.mrf.mxu0
    %v7488 = vadd.f32 0.0, %v7487
    %7489 = vmatprep.mubr.f32.mxu0 0.0
    %7490 = vmatmul.mubr.f32.gmra.mxu0 %v7387
    %v7491 = vpop.f32.mrf.mxu0
    %v7492 = vadd.f32 0.0, %v7491
    %v7493 = vpop.f32.mrf.mxu0
    %v7494 = vadd.f32 0.0, %v7493
    %7495 = vmatprep.mubr.f32.mxu0 0.0
    %7496 = vmatmul.mubr.f32.gmra.mxu0 %v7390
    %v7497 = vpop.f32.mrf.mxu0
    %v7498 = vadd.f32 0.0, %v7497
    %v7499 = vpop.f32.mrf.mxu0
    %v7500 = vadd.f32 0.0, %v7499
    %7501 = vmatprep.mubr.f32.mxu0 0.0
    %7502 = vmatmul.mubr.f32.gmra.mxu0 %v7393
    %v7503 = vpop.f32.mrf.mxu0
    %v7504 = vadd.f32 0.0, %v7503
    %v7505 = vpop.f32.mrf.mxu0
    %v7506 = vadd.f32 0.0, %v7505
    %7507 = vdwg.mxu0
    %v7508 = vld [vmem:[%s8] sm:$0xff]
    %v7509 = vld [vmem:[%s8 + $0x8] sm:$0xff]
    %v7510 = vld [vmem:[%s8 + $0x10] sm:$0xff]
    %v7511 = vld [vmem:[%s8 + $0x18] sm:$0xff]
    %v7512 = vld [vmem:[%s8 + $0x20] sm:$0xff]
    %v7513 = vld [vmem:[%s8 + $0x28] sm:$0xff]
    %v7514 = vld [vmem:[%s8 + $0x30] sm:$0xff]
    %v7515 = vld [vmem:[%s8 + $0x38] sm:$0xff]
    %v7516 = vld [vmem:[%s8 + $0x40] sm:$0xff]
    %v7517 = vld [vmem:[%s8 + $0x48] sm:$0xff]
    %v7518 = vld [vmem:[%s8 + $0x50] sm:$0xff]
    %v7519 = vld [vmem:[%s8 + $0x58] sm:$0xff]
    %v7520 = vld [vmem:[%s8 + $0x60] sm:$0x3]
    %v7521 = vld [vmem:[%s8 + $0x68] sm:$0x3]
    %v7522 = vmul.f32 %v7468, %v7508
    %v7523 = vmul.f32 %v7470, %v7509
    %v7524 = vmul.f32 %v7474, %v7510
    %v7525 = vmul.f32 %v7476, %v7511
    %v7526 = vmul.f32 %v7480, %v7512
    %v7527 = vmul.f32 %v7482, %v7513
    %v7528 = vmul.f32 %v7486, %v7514
    %v7529 = vmul.f32 %v7488, %v7515
    %v7530 = vmul.f32 %v7492, %v7516
    %v7531 = vmul.f32 %v7494, %v7517
    %v7532 = vmul.f32 %v7498, %v7518
    %v7533 = vmul.f32 %v7500, %v7519
    %v7534 = vmul.f32 %v7504, %v7520
    %v7535 = vmul.f32 %v7506, %v7521
    %v7536 = vld [vmem:[%s9] sm:$0x3]
    %vm7537 = vcmask 408576
    %v7539 = vsel %vm7537, %v7536, 0
    %v7542 = vsel %vm445, %v7534, 0
    %v7545 = vsel %vm445, %v7535, 0
    %7547 = vmatprep.subr.mxu0 0.0
    %7548 = vmatpush1.msra.mxu0 0.0
    %7549 = vmatprep.subr.mxu0 0.0
    %7550 = vmatpush1.msra.mxu0 0.0
    %7551 = vmatprep.subr.mxu0 0.0
    %7552 = vmatpush1.msra.mxu0 0.0
    %7553 = vmatprep.subr.mxu0 0.0
    %7554 = vmatpush1.msra.mxu0 0.0
    %7555 = vmatprep.subr.mxu0 0.0
    %7556 = vmatpush1.msra.mxu0 0.0
    %7557 = vmatprep.subr.mxu0 0.0
    %7558 = vmatpush1.msra.mxu0 0.0
    %7559 = vmatprep.subr.mxu0 0.0
    %7560 = vmatpush1.msra.mxu0 0.0
    %7561 = vmatprep.subr.mxu0 0.0
    %7562 = vmatpush1.msra.mxu0 0.0
    %7563 = vmatprep.subr.mxu0 0.0
    %7564 = vmatpush1.msra.mxu0 0.0
    %7565 = vmatprep.subr.mxu0 %v7545
    %7566 = vmatpush1.msra.mxu0 %v7542
    %7567 = vmatprep.subr.mxu0 %v7533
    %7568 = vmatpush1.msra.mxu0 %v7532
    %7569 = vmatprep.subr.mxu0 %v7531
    %7570 = vmatpush1.msra.mxu0 %v7530
    %7571 = vmatprep.subr.mxu0 %v7529
    %7572 = vmatpush1.msra.mxu0 %v7528
    %7573 = vmatprep.subr.mxu0 %v7527
    %7574 = vmatpush1.msra.mxu0 %v7526
    %7575 = vmatprep.subr.mxu0 %v7525
    %7576 = vmatpush1.msra.mxu0 %v7524
    %7577 = vmatprep.subr.mxu0 %v7523
    %7578 = vmatpush1.msra.mxu0 %v7522
    %7579 = vmatprep.subr.mxu0 0.0
    %7580 = vmatpush2.msra.mxu0 0.0
    %7581 = vmatprep.subr.mxu0 0.0
    %7582 = vmatpush2.msra.mxu0 0.0
    %7583 = vmatprep.subr.mxu0 0.0
    %7584 = vmatpush2.msra.mxu0 0.0
    %7585 = vmatprep.subr.mxu0 0.0
    %7586 = vmatpush2.msra.mxu0 0.0
    %7587 = vmatprep.subr.mxu0 0.0
    %7588 = vmatpush2.msra.mxu0 0.0
    %7589 = vmatprep.subr.mxu0 0.0
    %7590 = vmatpush2.msra.mxu0 0.0
    %7591 = vmatprep.subr.mxu0 0.0
    %7592 = vmatpush2.msra.mxu0 0.0
    %7593 = vmatprep.subr.mxu0 0.0
    %7594 = vmatpush2.msra.mxu0 0.0
    %7595 = vmatprep.subr.mxu0 0.0
    %7596 = vmatpush2.msra.mxu0 0.0
    %7597 = vmatprep.subr.mxu0 0.0
    %7598 = vmatpush2.msra.mxu0 0.0
    %7599 = vmatprep.subr.mxu0 0.0
    %7600 = vmatpush2.msra.mxu0 0.0
    %7601 = vmatprep.subr.mxu0 0.0
    %7602 = vmatpush2.msra.mxu0 0.0
    %7603 = vmatprep.subr.mxu0 0.0
    %7604 = vmatpush2.msra.mxu0 0.0
    %7605 = vmatprep.subr.mxu0 0.0
    %7606 = vmatpush2.msra.mxu0 0.0
    %7607 = vmatprep.subr.mxu0 0.0
    %7608 = vmatpush2.msra.mxu0 0.0
    %7609 = vmatprep.subr.mxu0 0.0
    %7610 = vmatpush2.msra.mxu0 0.0
    %7611 = vmatprep.mubr.f32.mxu0 0.0
    %7612 = vmatmul.mubr.f32.gmra.mxu0 %v7539
    %v7613 = vpop.f32.mrf.mxu0
    %v7614 = vadd.f32 0.0, %v7613
    %v7615 = vpop.f32.mrf.mxu0
    %v7616 = vadd.f32 0.0, %v7615
    %7617 = vdwg.mxu0
    %v7618 = vld [vmem:[%s10] sm:$0xff]
    %v7619 = vld [vmem:[%s10 + $0x8] sm:$0xff]
    %v7620 = vld [vmem:[%s10 + $0x10] sm:$0xff]
    %v7621 = vld [vmem:[%s10 + $0x18] sm:$0xff]
    %v7622 = vld [vmem:[%s10 + $0x20] sm:$0xff]
    %v7623 = vld [vmem:[%s10 + $0x28] sm:$0xff]
    %v7624 = vld [vmem:[%s10 + $0x30] sm:$0xff]
    %v7625 = vld [vmem:[%s10 + $0x38] sm:$0xff]
    %v7626 = vld [vmem:[%s10 + $0x40] sm:$0xff]
    %v7627 = vld [vmem:[%s10 + $0x48] sm:$0xff]
    %v7628 = vld [vmem:[%s10 + $0x50] sm:$0xff]
    %v7629 = vld [vmem:[%s10 + $0x58] sm:$0xff]
    %v7630 = vld [vmem:[%s10 + $0x60] sm:$0xff]
    %v7631 = vld [vmem:[%s10 + $0x68] sm:$0xff]
    %v7632 = vld [vmem:[%s10 + $0x70] sm:$0xff]
    %v7633 = vld [vmem:[%s10 + $0x78] sm:$0xff]
    %v7634 = vld [vmem:[%s10 + $0x80] sm:$0xff]
    %v7635 = vld [vmem:[%s10 + $0x88] sm:$0xff]
    %v7636 = vld [vmem:[%s10 + $0x90] sm:$0xff]
    %v7637 = vld [vmem:[%s10 + $0x98] sm:$0xff]
    %v7638 = vld [vmem:[%s10 + $0xa0] sm:$0xff]
    %v7639 = vld [vmem:[%s10 + $0xa8] sm:$0xff]
    %v7640 = vld [vmem:[%s10 + $0xb0] sm:$0xff]
    %v7641 = vld [vmem:[%s10 + $0xb8] sm:$0xff]
    %v7642 = vld [vmem:[%s10 + $0xc0] sm:$0xff]
    %v7643 = vld [vmem:[%s11] sm:$0x1]
    %v7645 = vlaneseq
    %v7646 = vshrl.u32 %v7645, 7
    %v7647 = vsub.s32 0, %v7646
    %v7648 = vrot.slane %v7643, %v7647
    %vm7650 = vcmask 588800
    %v7652 = vsel %vm7650, %v7616, 0
    %7654 = vmatprep.subr.mxu0 0.0
    %7655 = vmatpush1.msra.mxu0 %v7633
    %7656 = vmatprep.subr.mxu0 0.0
    %7657 = vmatpush1.msra.mxu0 %v7632
    %7658 = vmatprep.subr.mxu0 0.0
    %7659 = vmatpush1.msra.mxu0 %v7631
    %7660 = vmatprep.subr.mxu0 0.0
    %7661 = vmatpush1.msra.mxu0 %v7630
    %7662 = vmatprep.subr.mxu0 0.0
    %7663 = vmatpush1.msra.mxu0 %v7629
    %7664 = vmatprep.subr.mxu0 0.0
    %7665 = vmatpush1.msra.mxu0 %v7628
    %7666 = vmatprep.subr.mxu0 0.0
    %7667 = vmatpush1.msra.mxu0 %v7627
    %7668 = vmatprep.subr.mxu0 0.0
    %7669 = vmatpush1.msra.mxu0 %v7626
    %7670 = vmatprep.subr.mxu0 0.0
    %7671 = vmatpush1.msra.mxu0 %v7625
    %7672 = vmatprep.subr.mxu0 0.0
    %7673 = vmatpush1.msra.mxu0 %v7624
    %7674 = vmatprep.subr.mxu0 0.0
    %7675 = vmatpush1.msra.mxu0 %v7623
    %7676 = vmatprep.subr.mxu0 0.0
    %7677 = vmatpush1.msra.mxu0 %v7622
    %7678 = vmatprep.subr.mxu0 0.0
    %7679 = vmatpush1.msra.mxu0 %v7621
    %7680 = vmatprep.subr.mxu0 0.0
    %7681 = vmatpush1.msra.mxu0 %v7620
    %7682 = vmatprep.subr.mxu0 0.0
    %7683 = vmatpush1.msra.mxu0 %v7619
    %7684 = vmatprep.subr.mxu0 0.0
    %7685 = vmatpush1.msra.mxu0 %v7618
    %7686 = vmatprep.subr.mxu0 0.0
    %7687 = vmatpush2.msra.mxu0 0.0
    %7688 = vmatprep.subr.mxu0 0.0
    %7689 = vmatpush2.msra.mxu0 0.0
    %7690 = vmatprep.subr.mxu0 0.0
    %7691 = vmatpush2.msra.mxu0 0.0
    %7692 = vmatprep.subr.mxu0 0.0
    %7693 = vmatpush2.msra.mxu0 0.0
    %7694 = vmatprep.subr.mxu0 0.0
    %7695 = vmatpush2.msra.mxu0 0.0
    %7696 = vmatprep.subr.mxu0 0.0
    %7697 = vmatpush2.msra.mxu0 0.0
    %7698 = vmatprep.subr.mxu0 0.0
    %7699 = vmatpush2.msra.mxu0 0.0
    %7700 = vmatprep.subr.mxu0 0.0
    %7701 = vmatpush2.msra.mxu0 %v7642
    %7702 = vmatprep.subr.mxu0 0.0
    %7703 = vmatpush2.msra.mxu0 %v7641
    %7704 = vmatprep.subr.mxu0 0.0
    %7705 = vmatpush2.msra.mxu0 %v7640
    %7706 = vmatprep.subr.mxu0 0.0
    %7707 = vmatpush2.msra.mxu0 %v7639
    %7708 = vmatprep.subr.mxu0 0.0
    %7709 = vmatpush2.msra.mxu0 %v7638
    %7710 = vmatprep.subr.mxu0 0.0
    %7711 = vmatpush2.msra.mxu0 %v7637
    %7712 = vmatprep.subr.mxu0 0.0
    %7713 = vmatpush2.msra.mxu0 %v7636
    %7714 = vmatprep.subr.mxu0 0.0
    %7715 = vmatpush2.msra.mxu0 %v7635
    %7716 = vmatprep.subr.mxu0 0.0
    %7717 = vmatpush2.msra.mxu0 %v7634
    %7718 = vmatprep.mubr.f32.mxu0 %v7652
    %7719 = vmatmul.mubr.f32.gmra.mxu0 %v7614
    %v7720 = vpop.f32.mrf.mxu0
    %v7721 = vadd.f32 %v7648, %v7720
    %v7722 = vpop.f32.mrf.mxu0
    %7723 = vdwg.mxu0
    %vm7724 = vcmask 58368
    %v7725 = vsel %vm7724, %v7721, -inf
    %7726 = vmax.xlane.f32.xlu0 %v7725
    %v7727 = vpop.xlane.xlu0 %7726
    %v7728 = vsub.f32 %v7721, %v7727
    %v7729 = vmul.f32 %v7728, 1.442695
    %v7730 = vpow.pop %v7729
    %v7731 = vsel %vm7724, %v7730, 0.0
    %7732 = vadd.xlane.f32.xlu0 %v7731
    %v7733 = vpop.xlane.xlu0 %7732
    %v7734 = vrcp.pop %v7733
    %v7735 = vmul.f32 %v7730, %v7734
    %7736 = vst.msk [vmem:[#allocation4] sm:$0x3] %vm7724, %v7735
    // Predicated region
    $region50: #{shape_classifier_forward.1} parent=1 // pred_check
      _
    $region51: #{shape_classifier_forward.1} parent=1 // pred_check_branch
      %7738 = sbr.rel (0) target = $region53
    $region52: #{shape_classifier_forward.1} parent=1 // pred_region
      %s7740 = ssub.s32 32, 32
      %7741 = vsyncadd [#allocation5], %s7740
      %s7743 = sshll.u32 [#allocation4], 4
      %s7744 = int_to_ptr.vmem [resolvable:$true] %s7743
      %7746 = dma.vmem_to_hbm [thread:$0]  %s7744, 32, %s12, [#allocation5]
    $region53: #{shape_classifier_forward.1} parent=1 // pred_fallthru
      _
    // Predicated region
    $region54: #{shape_classifier_forward.1} parent=1 // pred_check
      _
    $region55: #{shape_classifier_forward.1} parent=1 // pred_check_branch
      %7748 = sbr.rel (0) target = $region57
    $region56: #{shape_classifier_forward.1} parent=1 // pred_region
      %7749 = dma.done [#allocation5], 32
    $region57: #{shape_classifier_forward.1} parent=1 // pred_fallthru
      _
    %7750 = vsyncpa [#allocation5], 1

</llo_original>
